<compile_context>
chip_gen: v6e
topology: v6e:2x2x1
jax: 0.10.0
libtpu: 0.0.40
codegen_flags: <defaults>
</compile_context>

<pallas_src>
import functools

import jax
import jax.numpy as jnp
from jax import lax
from jax.experimental import pallas as pl
from jax.experimental.pallas import tpu as pltpu

NEG_SLOPE = 0.01


def _leaky(x):
    return jnp.where(x >= 0, x, NEG_SLOPE * x)


def _round_up(v, m):
    return (v + m - 1) // m * m


def _double_conv_kernel(x_ref, w1_ref, w2_ref, s1_ref, b1_ref, s2_ref, b2_ref,
                        out_ref, mid_ref, *, TH, W, Cin_p, Cout_p):
    # x_ref  : (H+4, W+2, Cin_p) bf16  whole padded image for this batch element
    #          (2-row top/bottom pad, 1-col left/right pad, channel pad)
    # w1_ref : (9, Cin_p,  Cout_p) bf16   tap-major (dy*3 + dx)
    # w2_ref : (9, Cout_p, Cout_p) bf16
    # s*/b*  : (1, Cout_p) f32           folded BN scale / bias
    # out_ref: (TH, W, Cout_p) f32       this row strip of the output
    # mid_ref: VMEM (TH+2, W+2, Cout_p) bf16 scratch (conv1 output + halo)
    s_idx = pl.program_id(1)
    n_strips = pl.num_programs(1)
    r0 = pl.multiple_of(s_idx * TH, TH)
    rows1 = TH + 2  # conv1 rows needed for this strip (1-row halo each side)

    # ------------- conv1 + BN1 + LeakyReLU (register accumulation) -------------
    acc1 = None
    for dy in range(3):
        for dx in range(3):
            patch = x_ref[pl.ds(r0 + dy, rows1), dx:dx + W, :].reshape(rows1 * W, Cin_p)
            c = jnp.dot(patch, w1_ref[dy * 3 + dx], preferred_element_type=jnp.float32)
            acc1 = c if acc1 is None else acc1 + c
    y1 = _leaky(acc1 * s1_ref[...] + b1_ref[...])
    mid_ref[:, 1:W + 1, :] = y1.reshape(rows1, W, Cout_p).astype(mid_ref.dtype)

    # Zero only the halo ring (2 columns always; boundary rows only at image edges).
    zero_col = jnp.zeros((rows1, 1, Cout_p), mid_ref.dtype)
    mid_ref[:, 0:1, :] = zero_col
    mid_ref[:, W + 1:W + 2, :] = zero_col

    @pl.when(s_idx == 0)
    def _():
        mid_ref[0:1, :, :] = jnp.zeros((1, W + 2, Cout_p), mid_ref.dtype)

    @pl.when(s_idx == n_strips - 1)
    def _():
        mid_ref[TH + 1:TH + 2, :, :] = jnp.zeros((1, W + 2, Cout_p), mid_ref.dtype)

    # ------------- conv2 + BN2 + LeakyReLU (register accumulation) -------------
    acc2 = None
    for dy in range(3):
        for dx in range(3):
            patch = mid_ref[dy:dy + TH, dx:dx + W, :].reshape(TH * W, Cout_p)
            c = jnp.dot(patch, w2_ref[dy * 3 + dx], preferred_element_type=jnp.float32)
            acc2 = c if acc2 is None else acc2 + c
    y2 = _leaky(acc2 * s2_ref[...] + b2_ref[...])
    out_ref[...] = y2.reshape(TH, W, Cout_p).astype(out_ref.dtype)


def double_conv_pallas(x_nhwc, w1, w2, scale1, bias1, scale2, bias2):
    """x_nhwc: (N, H, W, Cin) f32. w1: (3,3,Cin,Cout) HWIO. w2: (3,3,Cout,Cout)."""
    N, H, W, Cin = x_nhwc.shape
    Cout = w1.shape[-1]
    Cin_p = _round_up(Cin, 128)    # lane-dense channels (biggest single lever)
    Cout_p = _round_up(Cout, 128)
    TH = 8 if H % 8 == 0 else H    # row-strip height (divides H)
    S = H // TH

    # One fused pad/cast in the wrapper: bf16 for the MXU, 2-row top/bottom and
    # 1-col left/right spatial halo, channel pad to 128 multiples. (The channel
    # pad requires a materialized copy anyway, so spatial pad is fused into it.)
    xb = x_nhwc.astype(jnp.bfloat16)
    x_pad = jnp.pad(xb, ((0, 0), (2, 2), (1, 1), (0, Cin_p - Cin)))

    w1_p = jnp.pad(w1.astype(jnp.bfloat16),
                   ((0, 0), (0, 0), (0, Cin_p - Cin), (0, Cout_p - Cout))
                   ).reshape(9, Cin_p, Cout_p)
    w2_p = jnp.pad(w2.astype(jnp.bfloat16),
                   ((0, 0), (0, 0), (0, Cout_p - Cout), (0, Cout_p - Cout))
                   ).reshape(9, Cout_p, Cout_p)
    s1 = jnp.pad(scale1.astype(jnp.float32), (0, Cout_p - Cout)).reshape(1, Cout_p)
    b1 = jnp.pad(bias1.astype(jnp.float32), (0, Cout_p - Cout)).reshape(1, Cout_p)
    s2 = jnp.pad(scale2.astype(jnp.float32), (0, Cout_p - Cout)).reshape(1, Cout_p)
    b2 = jnp.pad(bias2.astype(jnp.float32), (0, Cout_p - Cout)).reshape(1, Cout_p)

    kernel = functools.partial(_double_conv_kernel, TH=TH, W=W,
                               Cin_p=Cin_p, Cout_p=Cout_p)

    flops = int(2 * N * H * W * 9 * (Cin_p * Cout_p + Cout_p * Cout_p))
    bytes_accessed = int(x_pad.size * 2 + w1_p.size * 2 + w2_p.size * 2
                         + N * H * W * Cout_p * 4)

    out = pl.pallas_call(
        kernel,
        out_shape=jax.ShapeDtypeStruct((N, H, W, Cout_p), jnp.float32),
        grid_spec=pltpu.PrefetchScalarGridSpec(
            num_scalar_prefetch=0,
            grid=(N, S),
            in_specs=[
                pl.BlockSpec((pl.Squeezed(), H + 4, W + 2, Cin_p),
                             lambda n, s: (n, 0, 0, 0)),
                pl.BlockSpec((9, Cin_p, Cout_p), lambda n, s: (0, 0, 0)),
                pl.BlockSpec((9, Cout_p, Cout_p), lambda n, s: (0, 0, 0)),
                pl.BlockSpec((1, Cout_p), lambda n, s: (0, 0)),
                pl.BlockSpec((1, Cout_p), lambda n, s: (0, 0)),
                pl.BlockSpec((1, Cout_p), lambda n, s: (0, 0)),
                pl.BlockSpec((1, Cout_p), lambda n, s: (0, 0)),
            ],
            out_specs=pl.BlockSpec((pl.Squeezed(), TH, W, Cout_p),
                                   lambda n, s: (n, s, 0, 0)),
            scratch_shapes=[pltpu.VMEM((TH + 2, W + 2, Cout_p), jnp.bfloat16)],
        ),
        compiler_params=pltpu.CompilerParams(
            dimension_semantics=("parallel", "parallel")),
        cost_estimate=pl.CostEstimate(flops=flops, transcendentals=0,
                                      bytes_accessed=bytes_accessed),
    )(x_pad, w1_p, w2_p, s1, b1, s2, b2)

    return out[:, :, :, :Cout]


def double_conv_ref(x_nhwc, w1, w2, scale1, bias1, scale2, bias2):
    """Pure-JAX reference (NHWC, HWIO) mimicking the kernel's bf16 rounding."""
    f32 = jnp.float32
    xb = x_nhwc.astype(jnp.bfloat16).astype(f32)
    w1b = w1.astype(jnp.bfloat16).astype(f32)
    w2b = w2.astype(jnp.bfloat16).astype(f32)
    dn = lax.conv_dimension_numbers(xb.shape, w1b.shape, ("NHWC", "HWIO", "NHWC"))
    y = lax.conv_general_dilated(xb, w1b, (1, 1), ((1, 1), (1, 1)),
                                 dimension_numbers=dn)
    y = _leaky(y * scale1 + bias1)
    y = y.astype(jnp.bfloat16).astype(f32)   # kernel keeps the intermediate in bf16
    dn2 = lax.conv_dimension_numbers(y.shape, w2b.shape, ("NHWC", "HWIO", "NHWC"))
    y = lax.conv_general_dilated(y, w2b, (1, 1), ((1, 1), (1, 1)),
                                 dimension_numbers=dn2)
    y = _leaky(y * scale2 + bias2)
    return y


if __name__ == "__main__":
    # Small, deterministic shapes consistent with the module.
    N, Cin, Cout, H, W = 2, 4, 8, 16, 16
    eps = 1e-5

    key = jax.random.PRNGKey(0)
    keys = jax.random.split(key, 13)

    # Input in PyTorch's NCHW convention, transposed to NHWC for the kernel.
    x_nchw = jax.random.normal(keys[0], (N, Cin, H, W), dtype=jnp.float32)
    x_nhwc = jnp.transpose(x_nchw, (0, 2, 3, 1))

    # Synthetic parameters (shapes match nn.Conv2d / nn.BatchNorm2d).
    w1_oihw = 0.2 * jax.random.normal(keys[1], (Cout, Cin, 3, 3), dtype=jnp.float32)
    w2_oihw = 0.2 * jax.random.normal(keys[2], (Cout, Cout, 3, 3), dtype=jnp.float32)
    cb1 = 0.1 * jax.random.normal(keys[3], (Cout,), dtype=jnp.float32)
    cb2 = 0.1 * jax.random.normal(keys[4], (Cout,), dtype=jnp.float32)
    gamma1 = 1.0 + 0.1 * jax.random.normal(keys[5], (Cout,), dtype=jnp.float32)
    beta1 = 0.1 * jax.random.normal(keys[6], (Cout,), dtype=jnp.float32)
    gamma2 = 1.0 + 0.1 * jax.random.normal(keys[7], (Cout,), dtype=jnp.float32)
    beta2 = 0.1 * jax.random.normal(keys[8], (Cout,), dtype=jnp.float32)
    # Nontrivial running stats to exercise the BN fold.
    mean1 = 0.1 * jax.random.normal(keys[9], (Cout,), dtype=jnp.float32)
    var1 = jax.random.uniform(keys[10], (Cout,), jnp.float32, 0.5, 1.5)
    mean2 = 0.1 * jax.random.normal(keys[11], (Cout,), dtype=jnp.float32)
    var2 = jax.random.uniform(keys[12], (Cout,), jnp.float32, 0.5, 1.5)

    # Fold BN (inference mode, running stats) + conv bias into scale/bias.
    # TODO(synk): training-mode BatchNorm (batch statistics) is not implemented.
    scale1 = gamma1 / jnp.sqrt(var1 + eps)
    bias1 = beta1 + (cb1 - mean1) * scale1
    scale2 = gamma2 / jnp.sqrt(var2 + eps)
    bias2 = beta2 + (cb2 - mean2) * scale2

    # OIHW -> HWIO for NHWC convolution.
    w1 = jnp.transpose(w1_oihw, (2, 3, 1, 0))
    w2 = jnp.transpose(w2_oihw, (2, 3, 1, 0))

    out = double_conv_pallas(x_nhwc, w1, w2, scale1, bias1, scale2, bias2)
    out = jax.block_until_ready(out)

    ref = double_conv_ref(x_nhwc, w1, w2, scale1, bias1, scale2, bias2)
    assert out.shape == (N, H, W, Cout)
    assert jnp.allclose(out, ref, atol=2e-2, rtol=2e-2), (
        f"mismatch vs JAX reference, max abs err {jnp.max(jnp.abs(out - ref))}")

    # back to NCHW if a caller wants PyTorch convention
    _ = jnp.transpose(out, (0, 3, 1, 2))
    print("KERNEL_OK")
</pallas_src>

<mosaic_0001>
module attributes {stable_mosaic.version = 11 : i64} {
  func.func @_double_conv_kernel(%arg0: i32, %arg1: i32, %arg2: memref<1x20x18x128xbf16, #tpu.memory_space<vmem>>, %arg3: memref<9x128x128xbf16, #tpu.memory_space<vmem>>, %arg4: memref<9x128x128xbf16, #tpu.memory_space<vmem>>, %arg5: memref<1x128xf32, #tpu.memory_space<vmem>>, %arg6: memref<1x128xf32, #tpu.memory_space<vmem>>, %arg7: memref<1x128xf32, #tpu.memory_space<vmem>>, %arg8: memref<1x128xf32, #tpu.memory_space<vmem>>, %arg9: memref<1x8x16x128xf32, #tpu.memory_space<vmem>>, %arg10: memref<10x18x128xbf16, #tpu.memory_space<vmem>>) attributes {dimension_semantics = [#tpu.dimension_semantics<parallel>, #tpu.dimension_semantics<parallel>], iteration_bounds = array<i64: 2, 2>, scalar_prefetch = 0 : i64, scratch_operands = 1 : i64, tpu.core_type = #tpu.core_type<tc>, window_params = [{transform_indices = @transform_0, window_bounds = array<i64: 1, 20, 18, 128>}, {pipeline_mode = #tpu.pipeline_mode<synchronous>, transform_indices = @transform_1, window_bounds = array<i64: 9, 128, 128>}, {pipeline_mode = #tpu.pipeline_mode<synchronous>, transform_indices = @transform_2, window_bounds = array<i64: 9, 128, 128>}, {pipeline_mode = #tpu.pipeline_mode<synchronous>, transform_indices = @transform_3, window_bounds = array<i64: 1, 128>}, {pipeline_mode = #tpu.pipeline_mode<synchronous>, transform_indices = @transform_4, window_bounds = array<i64: 1, 128>}, {pipeline_mode = #tpu.pipeline_mode<synchronous>, transform_indices = @transform_5, window_bounds = array<i64: 1, 128>}, {pipeline_mode = #tpu.pipeline_mode<synchronous>, transform_indices = @transform_6, window_bounds = array<i64: 1, 128>}, {transform_indices = @transform_7, window_bounds = array<i64: 1, 8, 16, 128>}]} {
    %c8_i32 = arith.constant 8 : i32
    %0 = arith.muli %arg1, %c8_i32 : i32
    %1 = tpu.assume_multiple %0, 8 : i32
    %c0_i32 = arith.constant 0 : i32
    %2 = arith.addi %1, %c0_i32 : i32
    %c0 = arith.constant 0 : index
    %3 = arith.index_cast %2 : i32 to index
    %c0_0 = arith.constant 0 : index
    %c0_1 = arith.constant 0 : index
    %4 = vector.load %arg2[%c0, %3, %c0_0, %c0_1] : memref<1x20x18x128xbf16, #tpu.memory_space<vmem>>, vector<1x10x16x128xbf16>
    %5 = vector.shape_cast %4 : vector<1x10x16x128xbf16> to vector<10x16x128xbf16>
    %6 = vector.shape_cast %5 : vector<10x16x128xbf16> to vector<160x128xbf16>
    %c0_2 = arith.constant 0 : index
    %c0_3 = arith.constant 0 : index
    %c0_4 = arith.constant 0 : index
    %7 = vector.load %arg3[%c0_2, %c0_3, %c0_4] : memref<9x128x128xbf16, #tpu.memory_space<vmem>>, vector<1x128x128xbf16>
    %8 = vector.shape_cast %7 : vector<1x128x128xbf16> to vector<128x128xbf16>
    %cst = arith.constant dense<0.000000e+00> : vector<160x128xf32>
    %9 = tpu.matmul %6, %8, %cst {dimension_numbers = #tpu.dot_dimension_numbers<[1], [0], [0], [1], [0, 0, 1, 1], [], []>} : vector<160x128xbf16>, vector<128x128xbf16>, vector<160x128xf32> -> vector<160x128xf32>
    %c0_i32_5 = arith.constant 0 : i32
    %10 = arith.addi %1, %c0_i32_5 : i32
    %c0_6 = arith.constant 0 : index
    %11 = arith.index_cast %10 : i32 to index
    %c1 = arith.constant 1 : index
    %c0_7 = arith.constant 0 : index
    %12 = vector.load %arg2[%c0_6, %11, %c1, %c0_7] : memref<1x20x18x128xbf16, #tpu.memory_space<vmem>>, vector<1x10x16x128xbf16>
    %13 = vector.shape_cast %12 : vector<1x10x16x128xbf16> to vector<10x16x128xbf16>
    %14 = vector.shape_cast %13 : vector<10x16x128xbf16> to vector<160x128xbf16>
    %c1_8 = arith.constant 1 : index
    %c0_9 = arith.constant 0 : index
    %c0_10 = arith.constant 0 : index
    %15 = vector.load %arg3[%c1_8, %c0_9, %c0_10] : memref<9x128x128xbf16, #tpu.memory_space<vmem>>, vector<1x128x128xbf16>
    %16 = vector.shape_cast %15 : vector<1x128x128xbf16> to vector<128x128xbf16>
    %cst_11 = arith.constant dense<0.000000e+00> : vector<160x128xf32>
    %17 = tpu.matmul %14, %16, %cst_11 {dimension_numbers = #tpu.dot_dimension_numbers<[1], [0], [0], [1], [0, 0, 1, 1], [], []>} : vector<160x128xbf16>, vector<128x128xbf16>, vector<160x128xf32> -> vector<160x128xf32>
    %18 = arith.addf %9, %17 : vector<160x128xf32>
    %c0_i32_12 = arith.constant 0 : i32
    %19 = arith.addi %1, %c0_i32_12 : i32
    %c0_13 = arith.constant 0 : index
    %20 = arith.index_cast %19 : i32 to index
    %c2 = arith.constant 2 : index
    %c0_14 = arith.constant 0 : index
    %21 = vector.load %arg2[%c0_13, %20, %c2, %c0_14] : memref<1x20x18x128xbf16, #tpu.memory_space<vmem>>, vector<1x10x16x128xbf16>
    %22 = vector.shape_cast %21 : vector<1x10x16x128xbf16> to vector<10x16x128xbf16>
    %23 = vector.shape_cast %22 : vector<10x16x128xbf16> to vector<160x128xbf16>
    %c2_15 = arith.constant 2 : index
    %c0_16 = arith.constant 0 : index
    %c0_17 = arith.constant 0 : index
    %24 = vector.load %arg3[%c2_15, %c0_16, %c0_17] : memref<9x128x128xbf16, #tpu.memory_space<vmem>>, vector<1x128x128xbf16>
    %25 = vector.shape_cast %24 : vector<1x128x128xbf16> to vector<128x128xbf16>
    %cst_18 = arith.constant dense<0.000000e+00> : vector<160x128xf32>
    %26 = tpu.matmul %23, %25, %cst_18 {dimension_numbers = #tpu.dot_dimension_numbers<[1], [0], [0], [1], [0, 0, 1, 1], [], []>} : vector<160x128xbf16>, vector<128x128xbf16>, vector<160x128xf32> -> vector<160x128xf32>
    %27 = arith.addf %18, %26 : vector<160x128xf32>
    %c1_i32 = arith.constant 1 : i32
    %28 = arith.addi %1, %c1_i32 : i32
    %c0_19 = arith.constant 0 : index
    %29 = arith.index_cast %28 : i32 to index
    %c0_20 = arith.constant 0 : index
    %c0_21 = arith.constant 0 : index
    %30 = vector.load %arg2[%c0_19, %29, %c0_20, %c0_21] : memref<1x20x18x128xbf16, #tpu.memory_space<vmem>>, vector<1x10x16x128xbf16>
    %31 = vector.shape_cast %30 : vector<1x10x16x128xbf16> to vector<10x16x128xbf16>
    %32 = vector.shape_cast %31 : vector<10x16x128xbf16> to vector<160x128xbf16>
    %c3 = arith.constant 3 : index
    %c0_22 = arith.constant 0 : index
    %c0_23 = arith.constant 0 : index
    %33 = vector.load %arg3[%c3, %c0_22, %c0_23] : memref<9x128x128xbf16, #tpu.memory_space<vmem>>, vector<1x128x128xbf16>
    %34 = vector.shape_cast %33 : vector<1x128x128xbf16> to vector<128x128xbf16>
    %cst_24 = arith.constant dense<0.000000e+00> : vector<160x128xf32>
    %35 = tpu.matmul %32, %34, %cst_24 {dimension_numbers = #tpu.dot_dimension_numbers<[1], [0], [0], [1], [0, 0, 1, 1], [], []>} : vector<160x128xbf16>, vector<128x128xbf16>, vector<160x128xf32> -> vector<160x128xf32>
    %36 = arith.addf %27, %35 : vector<160x128xf32>
    %c1_i32_25 = arith.constant 1 : i32
    %37 = arith.addi %1, %c1_i32_25 : i32
    %c0_26 = arith.constant 0 : index
    %38 = arith.index_cast %37 : i32 to index
    %c1_27 = arith.constant 1 : index
    %c0_28 = arith.constant 0 : index
    %39 = vector.load %arg2[%c0_26, %38, %c1_27, %c0_28] : memref<1x20x18x128xbf16, #tpu.memory_space<vmem>>, vector<1x10x16x128xbf16>
    %40 = vector.shape_cast %39 : vector<1x10x16x128xbf16> to vector<10x16x128xbf16>
    %41 = vector.shape_cast %40 : vector<10x16x128xbf16> to vector<160x128xbf16>
    %c4 = arith.constant 4 : index
    %c0_29 = arith.constant 0 : index
    %c0_30 = arith.constant 0 : index
    %42 = vector.load %arg3[%c4, %c0_29, %c0_30] : memref<9x128x128xbf16, #tpu.memory_space<vmem>>, vector<1x128x128xbf16>
    %43 = vector.shape_cast %42 : vector<1x128x128xbf16> to vector<128x128xbf16>
    %cst_31 = arith.constant dense<0.000000e+00> : vector<160x128xf32>
    %44 = tpu.matmul %41, %43, %cst_31 {dimension_numbers = #tpu.dot_dimension_numbers<[1], [0], [0], [1], [0, 0, 1, 1], [], []>} : vector<160x128xbf16>, vector<128x128xbf16>, vector<160x128xf32> -> vector<160x128xf32>
    %45 = arith.addf %36, %44 : vector<160x128xf32>
    %c1_i32_32 = arith.constant 1 : i32
    %46 = arith.addi %1, %c1_i32_32 : i32
    %c0_33 = arith.constant 0 : index
    %47 = arith.index_cast %46 : i32 to index
    %c2_34 = arith.constant 2 : index
    %c0_35 = arith.constant 0 : index
    %48 = vector.load %arg2[%c0_33, %47, %c2_34, %c0_35] : memref<1x20x18x128xbf16, #tpu.memory_space<vmem>>, vector<1x10x16x128xbf16>
    %49 = vector.shape_cast %48 : vector<1x10x16x128xbf16> to vector<10x16x128xbf16>
    %50 = vector.shape_cast %49 : vector<10x16x128xbf16> to vector<160x128xbf16>
    %c5 = arith.constant 5 : index
    %c0_36 = arith.constant 0 : index
    %c0_37 = arith.constant 0 : index
    %51 = vector.load %arg3[%c5, %c0_36, %c0_37] : memref<9x128x128xbf16, #tpu.memory_space<vmem>>, vector<1x128x128xbf16>
    %52 = vector.shape_cast %51 : vector<1x128x128xbf16> to vector<128x128xbf16>
    %cst_38 = arith.constant dense<0.000000e+00> : vector<160x128xf32>
    %53 = tpu.matmul %50, %52, %cst_38 {dimension_numbers = #tpu.dot_dimension_numbers<[1], [0], [0], [1], [0, 0, 1, 1], [], []>} : vector<160x128xbf16>, vector<128x128xbf16>, vector<160x128xf32> -> vector<160x128xf32>
    %54 = arith.addf %45, %53 : vector<160x128xf32>
    %c2_i32 = arith.constant 2 : i32
    %55 = arith.addi %1, %c2_i32 : i32
    %c0_39 = arith.constant 0 : index
    %56 = arith.index_cast %55 : i32 to index
    %c0_40 = arith.constant 0 : index
    %c0_41 = arith.constant 0 : index
    %57 = vector.load %arg2[%c0_39, %56, %c0_40, %c0_41] : memref<1x20x18x128xbf16, #tpu.memory_space<vmem>>, vector<1x10x16x128xbf16>
    %58 = vector.shape_cast %57 : vector<1x10x16x128xbf16> to vector<10x16x128xbf16>
    %59 = vector.shape_cast %58 : vector<10x16x128xbf16> to vector<160x128xbf16>
    %c6 = arith.constant 6 : index
    %c0_42 = arith.constant 0 : index
    %c0_43 = arith.constant 0 : index
    %60 = vector.load %arg3[%c6, %c0_42, %c0_43] : memref<9x128x128xbf16, #tpu.memory_space<vmem>>, vector<1x128x128xbf16>
    %61 = vector.shape_cast %60 : vector<1x128x128xbf16> to vector<128x128xbf16>
    %cst_44 = arith.constant dense<0.000000e+00> : vector<160x128xf32>
    %62 = tpu.matmul %59, %61, %cst_44 {dimension_numbers = #tpu.dot_dimension_numbers<[1], [0], [0], [1], [0, 0, 1, 1], [], []>} : vector<160x128xbf16>, vector<128x128xbf16>, vector<160x128xf32> -> vector<160x128xf32>
    %63 = arith.addf %54, %62 : vector<160x128xf32>
    %c2_i32_45 = arith.constant 2 : i32
    %64 = arith.addi %1, %c2_i32_45 : i32
    %c0_46 = arith.constant 0 : index
    %65 = arith.index_cast %64 : i32 to index
    %c1_47 = arith.constant 1 : index
    %c0_48 = arith.constant 0 : index
    %66 = vector.load %arg2[%c0_46, %65, %c1_47, %c0_48] : memref<1x20x18x128xbf16, #tpu.memory_space<vmem>>, vector<1x10x16x128xbf16>
    %67 = vector.shape_cast %66 : vector<1x10x16x128xbf16> to vector<10x16x128xbf16>
    %68 = vector.shape_cast %67 : vector<10x16x128xbf16> to vector<160x128xbf16>
    %c7 = arith.constant 7 : index
    %c0_49 = arith.constant 0 : index
    %c0_50 = arith.constant 0 : index
    %69 = vector.load %arg3[%c7, %c0_49, %c0_50] : memref<9x128x128xbf16, #tpu.memory_space<vmem>>, vector<1x128x128xbf16>
    %70 = vector.shape_cast %69 : vector<1x128x128xbf16> to vector<128x128xbf16>
    %cst_51 = arith.constant dense<0.000000e+00> : vector<160x128xf32>
    %71 = tpu.matmul %68, %70, %cst_51 {dimension_numbers = #tpu.dot_dimension_numbers<[1], [0], [0], [1], [0, 0, 1, 1], [], []>} : vector<160x128xbf16>, vector<128x128xbf16>, vector<160x128xf32> -> vector<160x128xf32>
    %72 = arith.addf %63, %71 : vector<160x128xf32>
    %c2_i32_52 = arith.constant 2 : i32
    %73 = arith.addi %1, %c2_i32_52 : i32
    %c0_53 = arith.constant 0 : index
    %74 = arith.index_cast %73 : i32 to index
    %c2_54 = arith.constant 2 : index
    %c0_55 = arith.constant 0 : index
    %75 = vector.load %arg2[%c0_53, %74, %c2_54, %c0_55] : memref<1x20x18x128xbf16, #tpu.memory_space<vmem>>, vector<1x10x16x128xbf16>
    %76 = vector.shape_cast %75 : vector<1x10x16x128xbf16> to vector<10x16x128xbf16>
    %77 = vector.shape_cast %76 : vector<10x16x128xbf16> to vector<160x128xbf16>
    %c8 = arith.constant 8 : index
    %c0_56 = arith.constant 0 : index
    %c0_57 = arith.constant 0 : index
    %78 = vector.load %arg3[%c8, %c0_56, %c0_57] : memref<9x128x128xbf16, #tpu.memory_space<vmem>>, vector<1x128x128xbf16>
    %79 = vector.shape_cast %78 : vector<1x128x128xbf16> to vector<128x128xbf16>
    %cst_58 = arith.constant dense<0.000000e+00> : vector<160x128xf32>
    %80 = tpu.matmul %77, %79, %cst_58 {dimension_numbers = #tpu.dot_dimension_numbers<[1], [0], [0], [1], [0, 0, 1, 1], [], []>} : vector<160x128xbf16>, vector<128x128xbf16>, vector<160x128xf32> -> vector<160x128xf32>
    %81 = arith.addf %72, %80 : vector<160x128xf32>
    %c0_59 = arith.constant 0 : index
    %c0_60 = arith.constant 0 : index
    %82 = vector.load %arg5[%c0_59, %c0_60] : memref<1x128xf32, #tpu.memory_space<vmem>>, vector<1x128xf32>
    %83 = vector.broadcast %82 : vector<1x128xf32> to vector<160x128xf32>
    %84 = arith.mulf %81, %83 : vector<160x128xf32>
    %c0_61 = arith.constant 0 : index
    %c0_62 = arith.constant 0 : index
    %85 = vector.load %arg6[%c0_61, %c0_62] : memref<1x128xf32, #tpu.memory_space<vmem>>, vector<1x128xf32>
    %86 = vector.broadcast %85 : vector<1x128xf32> to vector<160x128xf32>
    %87 = arith.addf %84, %86 : vector<160x128xf32>
    %cst_63 = arith.constant 0.000000e+00 : f32
    %88 = vector.broadcast %cst_63 : f32 to vector<160x128xf32>
    %89 = arith.cmpf oge, %87, %88 : vector<160x128xf32>
    %cst_64 = arith.constant 0.00999999977 : f32
    %90 = vector.broadcast %cst_64 : f32 to vector<160x128xf32>
    %91 = arith.mulf %90, %87 : vector<160x128xf32>
    %92 = arith.select %89, %87, %91 : vector<160x128xi1>, vector<160x128xf32>
    %93 = vector.shape_cast %92 : vector<160x128xf32> to vector<10x16x128xf32>
    %94 = arith.truncf %93 : vector<10x16x128xf32> to vector<10x16x128xbf16>
    %c0_65 = arith.constant 0 : index
    %c1_66 = arith.constant 1 : index
    %c0_67 = arith.constant 0 : index
    %95 = vector.load %arg10[%c0_65, %c1_66, %c0_67] : memref<10x18x128xbf16, #tpu.memory_space<vmem>>, vector<10x16x128xbf16>
    tpu.vector_store %arg10[%c0_65, %c1_66, %c0_67], %94 {strides = array<i32>} : memref<10x18x128xbf16, #tpu.memory_space<vmem>>, vector<10x16x128xbf16>,
    %cst_68 = arith.constant 0.000000e+00 : bf16
    %96 = vector.broadcast %cst_68 : bf16 to vector<10x1x128xbf16>
    %c0_69 = arith.constant 0 : index
    %c0_70 = arith.constant 0 : index
    %c0_71 = arith.constant 0 : index
    %97 = vector.load %arg10[%c0_69, %c0_70, %c0_71] : memref<10x18x128xbf16, #tpu.memory_space<vmem>>, vector<10x1x128xbf16>
    tpu.vector_store %arg10[%c0_69, %c0_70, %c0_71], %96 {strides = array<i32>} : memref<10x18x128xbf16, #tpu.memory_space<vmem>>, vector<10x1x128xbf16>,
    %c0_72 = arith.constant 0 : index
    %c17 = arith.constant 17 : index
    %c0_73 = arith.constant 0 : index
    %98 = vector.load %arg10[%c0_72, %c17, %c0_73] : memref<10x18x128xbf16, #tpu.memory_space<vmem>>, vector<10x1x128xbf16>
    tpu.vector_store %arg10[%c0_72, %c17, %c0_73], %96 {strides = array<i32>} : memref<10x18x128xbf16, #tpu.memory_space<vmem>>, vector<10x1x128xbf16>,
    %c0_i32_74 = arith.constant 0 : i32
    %99 = arith.cmpi eq, %arg1, %c0_i32_74 : i32
    %100 = arith.extui %99 : i1 to i32
    %c0_i32_75 = arith.constant 0 : i32
    %101 = arith.cmpi ne, %100, %c0_i32_75 : i32
    scf.if %101 {
      %cst_151 = arith.constant 0.000000e+00 : bf16
      %173 = vector.broadcast %cst_151 : bf16 to vector<1x18x128xbf16>
      %c0_152 = arith.constant 0 : index
      %c0_153 = arith.constant 0 : index
      %c0_154 = arith.constant 0 : index
      %174 = vector.load %arg10[%c0_152, %c0_153, %c0_154] : memref<10x18x128xbf16, #tpu.memory_space<vmem>>, vector<1x18x128xbf16>
      tpu.vector_store %arg10[%c0_152, %c0_153, %c0_154], %173 {strides = array<i32>} : memref<10x18x128xbf16, #tpu.memory_space<vmem>>, vector<1x18x128xbf16>,
    } else {
    }
    %c1_i32_76 = arith.constant 1 : i32
    %102 = arith.cmpi eq, %arg1, %c1_i32_76 : i32
    %103 = arith.extui %102 : i1 to i32
    %c0_i32_77 = arith.constant 0 : i32
    %104 = arith.cmpi ne, %103, %c0_i32_77 : i32
    scf.if %104 {
      %cst_151 = arith.constant 0.000000e+00 : bf16
      %173 = vector.broadcast %cst_151 : bf16 to vector<1x18x128xbf16>
      %c9 = arith.constant 9 : index
      %c0_152 = arith.constant 0 : index
      %c0_153 = arith.constant 0 : index
      %174 = vector.load %arg10[%c9, %c0_152, %c0_153] : memref<10x18x128xbf16, #tpu.memory_space<vmem>>, vector<1x18x128xbf16>
      tpu.vector_store %arg10[%c9, %c0_152, %c0_153], %173 {strides = array<i32>} : memref<10x18x128xbf16, #tpu.memory_space<vmem>>, vector<1x18x128xbf16>,
    } else {
    }
    %c0_78 = arith.constant 0 : index
    %c0_79 = arith.constant 0 : index
    %c0_80 = arith.constant 0 : index
    %105 = vector.load %arg10[%c0_78, %c0_79, %c0_80] : memref<10x18x128xbf16, #tpu.memory_space<vmem>>, vector<8x16x128xbf16>
    %106 = vector.shape_cast %105 : vector<8x16x128xbf16> to vector<128x128xbf16>
    %c0_81 = arith.constant 0 : index
    %c0_82 = arith.constant 0 : index
    %c0_83 = arith.constant 0 : index
    %107 = vector.load %arg4[%c0_81, %c0_82, %c0_83] : memref<9x128x128xbf16, #tpu.memory_space<vmem>>, vector<1x128x128xbf16>
    %108 = vector.shape_cast %107 : vector<1x128x128xbf16> to vector<128x128xbf16>
    %cst_84 = arith.constant dense<0.000000e+00> : vector<128x128xf32>
    %109 = tpu.matmul %106, %108, %cst_84 {dimension_numbers = #tpu.dot_dimension_numbers<[1], [0], [0], [1], [0, 0, 1, 1], [], []>} : vector<128x128xbf16>, vector<128x128xbf16>, vector<128x128xf32> -> vector<128x128xf32>
    %c0_85 = arith.constant 0 : index
    %c1_86 = arith.constant 1 : index
    %c0_87 = arith.constant 0 : index
    %110 = vector.load %arg10[%c0_85, %c1_86, %c0_87] : memref<10x18x128xbf16, #tpu.memory_space<vmem>>, vector<8x16x128xbf16>
    %111 = vector.shape_cast %110 : vector<8x16x128xbf16> to vector<128x128xbf16>
    %c1_88 = arith.constant 1 : index
    %c0_89 = arith.constant 0 : index
    %c0_90 = arith.constant 0 : index
    %112 = vector.load %arg4[%c1_88, %c0_89, %c0_90] : memref<9x128x128xbf16, #tpu.memory_space<vmem>>, vector<1x128x128xbf16>
    %113 = vector.shape_cast %112 : vector<1x128x128xbf16> to vector<128x128xbf16>
    %cst_91 = arith.constant dense<0.000000e+00> : vector<128x128xf32>
    %114 = tpu.matmul %111, %113, %cst_91 {dimension_numbers = #tpu.dot_dimension_numbers<[1], [0], [0], [1], [0, 0, 1, 1], [], []>} : vector<128x128xbf16>, vector<128x128xbf16>, vector<128x128xf32> -> vector<128x128xf32>
    %115 = arith.addf %109, %114 : vector<128x128xf32>
    %c0_92 = arith.constant 0 : index
    %c2_93 = arith.constant 2 : index
    %c0_94 = arith.constant 0 : index
    %116 = vector.load %arg10[%c0_92, %c2_93, %c0_94] : memref<10x18x128xbf16, #tpu.memory_space<vmem>>, vector<8x16x128xbf16>
    %117 = vector.shape_cast %116 : vector<8x16x128xbf16> to vector<128x128xbf16>
    %c2_95 = arith.constant 2 : index
    %c0_96 = arith.constant 0 : index
    %c0_97 = arith.constant 0 : index
    %118 = vector.load %arg4[%c2_95, %c0_96, %c0_97] : memref<9x128x128xbf16, #tpu.memory_space<vmem>>, vector<1x128x128xbf16>
    %119 = vector.shape_cast %118 : vector<1x128x128xbf16> to vector<128x128xbf16>
    %cst_98 = arith.constant dense<0.000000e+00> : vector<128x128xf32>
    %120 = tpu.matmul %117, %119, %cst_98 {dimension_numbers = #tpu.dot_dimension_numbers<[1], [0], [0], [1], [0, 0, 1, 1], [], []>} : vector<128x128xbf16>, vector<128x128xbf16>, vector<128x128xf32> -> vector<128x128xf32>
    %121 = arith.addf %115, %120 : vector<128x128xf32>
    %c1_99 = arith.constant 1 : index
    %c0_100 = arith.constant 0 : index
    %c0_101 = arith.constant 0 : index
    %122 = vector.load %arg10[%c1_99, %c0_100, %c0_101] : memref<10x18x128xbf16, #tpu.memory_space<vmem>>, vector<8x16x128xbf16>
    %123 = vector.shape_cast %122 : vector<8x16x128xbf16> to vector<128x128xbf16>
    %c3_102 = arith.constant 3 : index
    %c0_103 = arith.constant 0 : index
    %c0_104 = arith.constant 0 : index
    %124 = vector.load %arg4[%c3_102, %c0_103, %c0_104] : memref<9x128x128xbf16, #tpu.memory_space<vmem>>, vector<1x128x128xbf16>
    %125 = vector.shape_cast %124 : vector<1x128x128xbf16> to vector<128x128xbf16>
    %cst_105 = arith.constant dense<0.000000e+00> : vector<128x128xf32>
    %126 = tpu.matmul %123, %125, %cst_105 {dimension_numbers = #tpu.dot_dimension_numbers<[1], [0], [0], [1], [0, 0, 1, 1], [], []>} : vector<128x128xbf16>, vector<128x128xbf16>, vector<128x128xf32> -> vector<128x128xf32>
    %127 = arith.addf %121, %126 : vector<128x128xf32>
    %c1_106 = arith.constant 1 : index
    %c1_107 = arith.constant 1 : index
    %c0_108 = arith.constant 0 : index
    %128 = vector.load %arg10[%c1_106, %c1_107, %c0_108] : memref<10x18x128xbf16, #tpu.memory_space<vmem>>, vector<8x16x128xbf16>
    %129 = vector.shape_cast %128 : vector<8x16x128xbf16> to vector<128x128xbf16>
    %c4_109 = arith.constant 4 : index
    %c0_110 = arith.constant 0 : index
    %c0_111 = arith.constant 0 : index
    %130 = vector.load %arg4[%c4_109, %c0_110, %c0_111] : memref<9x128x128xbf16, #tpu.memory_space<vmem>>, vector<1x128x128xbf16>
    %131 = vector.shape_cast %130 : vector<1x128x128xbf16> to vector<128x128xbf16>
    %cst_112 = arith.constant dense<0.000000e+00> : vector<128x128xf32>
    %132 = tpu.matmul %129, %131, %cst_112 {dimension_numbers = #tpu.dot_dimension_numbers<[1], [0], [0], [1], [0, 0, 1, 1], [], []>} : vector<128x128xbf16>, vector<128x128xbf16>, vector<128x128xf32> -> vector<128x128xf32>
    %133 = arith.addf %127, %132 : vector<128x128xf32>
    %c1_113 = arith.constant 1 : index
    %c2_114 = arith.constant 2 : index
    %c0_115 = arith.constant 0 : index
    %134 = vector.load %arg10[%c1_113, %c2_114, %c0_115] : memref<10x18x128xbf16, #tpu.memory_space<vmem>>, vector<8x16x128xbf16>
    %135 = vector.shape_cast %134 : vector<8x16x128xbf16> to vector<128x128xbf16>
    %c5_116 = arith.constant 5 : index
    %c0_117 = arith.constant 0 : index
    %c0_118 = arith.constant 0 : index
    %136 = vector.load %arg4[%c5_116, %c0_117, %c0_118] : memref<9x128x128xbf16, #tpu.memory_space<vmem>>, vector<1x128x128xbf16>
    %137 = vector.shape_cast %136 : vector<1x128x128xbf16> to vector<128x128xbf16>
    %cst_119 = arith.constant dense<0.000000e+00> : vector<128x128xf32>
    %138 = tpu.matmul %135, %137, %cst_119 {dimension_numbers = #tpu.dot_dimension_numbers<[1], [0], [0], [1], [0, 0, 1, 1], [], []>} : vector<128x128xbf16>, vector<128x128xbf16>, vector<128x128xf32> -> vector<128x128xf32>
    %139 = arith.addf %133, %138 : vector<128x128xf32>
    %c2_120 = arith.constant 2 : index
    %c0_121 = arith.constant 0 : index
    %c0_122 = arith.constant 0 : index
    %140 = vector.load %arg10[%c2_120, %c0_121, %c0_122] : memref<10x18x128xbf16, #tpu.memory_space<vmem>>, vector<8x16x128xbf16>
    %141 = vector.shape_cast %140 : vector<8x16x128xbf16> to vector<128x128xbf16>
    %c6_123 = arith.constant 6 : index
    %c0_124 = arith.constant 0 : index
    %c0_125 = arith.constant 0 : index
    %142 = vector.load %arg4[%c6_123, %c0_124, %c0_125] : memref<9x128x128xbf16, #tpu.memory_space<vmem>>, vector<1x128x128xbf16>
    %143 = vector.shape_cast %142 : vector<1x128x128xbf16> to vector<128x128xbf16>
    %cst_126 = arith.constant dense<0.000000e+00> : vector<128x128xf32>
    %144 = tpu.matmul %141, %143, %cst_126 {dimension_numbers = #tpu.dot_dimension_numbers<[1], [0], [0], [1], [0, 0, 1, 1], [], []>} : vector<128x128xbf16>, vector<128x128xbf16>, vector<128x128xf32> -> vector<128x128xf32>
    %145 = arith.addf %139, %144 : vector<128x128xf32>
    %c2_127 = arith.constant 2 : index
    %c1_128 = arith.constant 1 : index
    %c0_129 = arith.constant 0 : index
    %146 = vector.load %arg10[%c2_127, %c1_128, %c0_129] : memref<10x18x128xbf16, #tpu.memory_space<vmem>>, vector<8x16x128xbf16>
    %147 = vector.shape_cast %146 : vector<8x16x128xbf16> to vector<128x128xbf16>
    %c7_130 = arith.constant 7 : index
    %c0_131 = arith.constant 0 : index
    %c0_132 = arith.constant 0 : index
    %148 = vector.load %arg4[%c7_130, %c0_131, %c0_132] : memref<9x128x128xbf16, #tpu.memory_space<vmem>>, vector<1x128x128xbf16>
    %149 = vector.shape_cast %148 : vector<1x128x128xbf16> to vector<128x128xbf16>
    %cst_133 = arith.constant dense<0.000000e+00> : vector<128x128xf32>
    %150 = tpu.matmul %147, %149, %cst_133 {dimension_numbers = #tpu.dot_dimension_numbers<[1], [0], [0], [1], [0, 0, 1, 1], [], []>} : vector<128x128xbf16>, vector<128x128xbf16>, vector<128x128xf32> -> vector<128x128xf32>
    %151 = arith.addf %145, %150 : vector<128x128xf32>
    %c2_134 = arith.constant 2 : index
    %c2_135 = arith.constant 2 : index
    %c0_136 = arith.constant 0 : index
    %152 = vector.load %arg10[%c2_134, %c2_135, %c0_136] : memref<10x18x128xbf16, #tpu.memory_space<vmem>>, vector<8x16x128xbf16>
    %153 = vector.shape_cast %152 : vector<8x16x128xbf16> to vector<128x128xbf16>
    %c8_137 = arith.constant 8 : index
    %c0_138 = arith.constant 0 : index
    %c0_139 = arith.constant 0 : index
    %154 = vector.load %arg4[%c8_137, %c0_138, %c0_139] : memref<9x128x128xbf16, #tpu.memory_space<vmem>>, vector<1x128x128xbf16>
    %155 = vector.shape_cast %154 : vector<1x128x128xbf16> to vector<128x128xbf16>
    %cst_140 = arith.constant dense<0.000000e+00> : vector<128x128xf32>
    %156 = tpu.matmul %153, %155, %cst_140 {dimension_numbers = #tpu.dot_dimension_numbers<[1], [0], [0], [1], [0, 0, 1, 1], [], []>} : vector<128x128xbf16>, vector<128x128xbf16>, vector<128x128xf32> -> vector<128x128xf32>
    %157 = arith.addf %151, %156 : vector<128x128xf32>
    %c0_141 = arith.constant 0 : index
    %c0_142 = arith.constant 0 : index
    %158 = vector.load %arg7[%c0_141, %c0_142] : memref<1x128xf32, #tpu.memory_space<vmem>>, vector<1x128xf32>
    %159 = vector.broadcast %158 : vector<1x128xf32> to vector<128x128xf32>
    %160 = arith.mulf %157, %159 : vector<128x128xf32>
    %c0_143 = arith.constant 0 : index
    %c0_144 = arith.constant 0 : index
    %161 = vector.load %arg8[%c0_143, %c0_144] : memref<1x128xf32, #tpu.memory_space<vmem>>, vector<1x128xf32>
    %162 = vector.broadcast %161 : vector<1x128xf32> to vector<128x128xf32>
    %163 = arith.addf %160, %162 : vector<128x128xf32>
    %cst_145 = arith.constant 0.000000e+00 : f32
    %164 = vector.broadcast %cst_145 : f32 to vector<128x128xf32>
    %165 = arith.cmpf oge, %163, %164 : vector<128x128xf32>
    %cst_146 = arith.constant 0.00999999977 : f32
    %166 = vector.broadcast %cst_146 : f32 to vector<128x128xf32>
    %167 = arith.mulf %166, %163 : vector<128x128xf32>
    %168 = arith.select %165, %163, %167 : vector<128x128xi1>, vector<128x128xf32>
    %169 = vector.shape_cast %168 : vector<128x128xf32> to vector<8x16x128xf32>
    %c0_147 = arith.constant 0 : index
    %c0_148 = arith.constant 0 : index
    %c0_149 = arith.constant 0 : index
    %c0_150 = arith.constant 0 : index
    %170 = vector.load %arg9[%c0_147, %c0_148, %c0_149, %c0_150] : memref<1x8x16x128xf32, #tpu.memory_space<vmem>>, vector<1x8x16x128xf32>
    %171 = vector.shape_cast %170 : vector<1x8x16x128xf32> to vector<8x16x128xf32>
    %172 = vector.shape_cast %169 : vector<8x16x128xf32> to vector<1x8x16x128xf32>
    tpu.vector_store %arg9[%c0_147, %c0_148, %c0_149, %c0_150], %172 {strides = array<i32>} : memref<1x8x16x128xf32, #tpu.memory_space<vmem>>, vector<1x8x16x128xf32>,
    return
  }
  func.func @transform_0(%arg0: i32, %arg1: i32) -> (i32, i32, i32, i32) {
    %c0_i32 = arith.constant 0 : i32
    %c0_i32_0 = arith.constant 0 : i32
    %c0_i32_1 = arith.constant 0 : i32
    %c0_i32_2 = arith.constant 0 : i32
    return %arg0, %c0_i32, %c0_i32_0, %c0_i32_1 : i32, i32, i32, i32
  }
  func.func @transform_1(%arg0: i32, %arg1: i32) -> (i32, i32, i32) {
    %c0_i32 = arith.constant 0 : i32
    %c0_i32_0 = arith.constant 0 : i32
    %c0_i32_1 = arith.constant 0 : i32
    %c0_i32_2 = arith.constant 0 : i32
    return %c0_i32, %c0_i32_0, %c0_i32_1 : i32, i32, i32
  }
  func.func @transform_2(%arg0: i32, %arg1: i32) -> (i32, i32, i32) {
    %c0_i32 = arith.constant 0 : i32
    %c0_i32_0 = arith.constant 0 : i32
    %c0_i32_1 = arith.constant 0 : i32
    %c0_i32_2 = arith.constant 0 : i32
    return %c0_i32, %c0_i32_0, %c0_i32_1 : i32, i32, i32
  }
  func.func @transform_3(%arg0: i32, %arg1: i32) -> (i32, i32) {
    %c0_i32 = arith.constant 0 : i32
    %c0_i32_0 = arith.constant 0 : i32
    %c0_i32_1 = arith.constant 0 : i32
    return %c0_i32, %c0_i32_0 : i32, i32
  }
  func.func @transform_4(%arg0: i32, %arg1: i32) -> (i32, i32) {
    %c0_i32 = arith.constant 0 : i32
    %c0_i32_0 = arith.constant 0 : i32
    %c0_i32_1 = arith.constant 0 : i32
    return %c0_i32, %c0_i32_0 : i32, i32
  }
  func.func @transform_5(%arg0: i32, %arg1: i32) -> (i32, i32) {
    %c0_i32 = arith.constant 0 : i32
    %c0_i32_0 = arith.constant 0 : i32
    %c0_i32_1 = arith.constant 0 : i32
    return %c0_i32, %c0_i32_0 : i32, i32
  }
  func.func @transform_6(%arg0: i32, %arg1: i32) -> (i32, i32) {
    %c0_i32 = arith.constant 0 : i32
    %c0_i32_0 = arith.constant 0 : i32
    %c0_i32_1 = arith.constant 0 : i32
    return %c0_i32, %c0_i32_0 : i32, i32
  }
  func.func @transform_7(%arg0: i32, %arg1: i32) -> (i32, i32, i32, i32) {
    %c0_i32 = arith.constant 0 : i32
    %c0_i32_0 = arith.constant 0 : i32
    %c0_i32_1 = arith.constant 0 : i32
    return %arg0, %arg1, %c0_i32, %c0_i32_0 : i32, i32, i32, i32
  }
}

</mosaic_0001>

<llo_original>
// kernel: tpu_custom_call.1
$region0: #{tpu_custom_call.1}
  #allocation0 [shape = 'u32[]', space=smem, size = 0x4, offset = 0x4, fixed_abs, tag = 'smem constant byte address 0x4 - core index']
  #allocation1 [shape = 'u32[144,128]{1,0:T(1,128)}', space=vmem, size = 0x12000, scoped, tag = 'internal scratch']
  #allocation2 [shape = 'bf16[10,18,128]{2,1,0:T(8,128)(2,1)}', space=vmem, size = 0xf000, scoped, tag = 'scratch operand']
  %s0 = inlined_call_operand.vmem [shape: bf16[2,20,18,128], index: 0, kind: input, shape index: {}]
  %s1 = inlined_call_operand.vmem [shape: bf16[9,128,128], index: 1, kind: input, shape index: {}]
  %s2 = inlined_call_operand.hbm [shape: bf16[9,128,128], index: 2, kind: input, shape index: {}]
  %s3 = inlined_call_operand.vmem [shape: f32[1,128], index: 3, kind: input, shape index: {}]
  %s4 = inlined_call_operand.vmem [shape: f32[1,128], index: 4, kind: input, shape index: {}]
  %s5 = inlined_call_operand.vmem [shape: f32[1,128], index: 5, kind: input, shape index: {}]
  %s6 = inlined_call_operand.vmem [shape: f32[1,128], index: 6, kind: input, shape index: {}]
  %s7 = inlined_call_operand.hbm [shape: f32[2,16,16,128], index: 7, kind: output, shape index: {}]
  %s8 = sld [smem:[#allocation0]]
  $region73: #{tpu_custom_call.1} parent=0
    _
  %s10 = ssub.s32 1, %s8
  %s11 = scalar_select 0, %s10, %s8
  $region1: #{tpu_custom_call.1} parent=0
    #allocation3 [shape = 'u8[294912]{0}', space=vmem, size = 0x48000, scoped, tag = 'input window, operand 2, single buffered']
    #allocation4 [shape = 's32[2]{0}', space=sflag, size = 0x8, scoped, tag = 'scoped memory for tpu_custom_call.1']
    #allocation5 [shape = 's32[2]{0}', space=sflag, size = 0x8, scoped, tag = 'scoped memory for tpu_custom_call.1']
    #allocation6 [shape = 'u8[131072]{0}', space=vmem, size = 0x20000, scoped, tag = 'output window, operand 0']
    %12 = vsyncpa [#allocation4], 0
    %13 = vsyncpa [#allocation5], 0
    %s14 = scalar_lea.sflag [#allocation5], 1
    %15 = vsyncpa %s14, 0
    loop: start=0, step=1, limit=6
    $region2: #{tpu_custom_call.1} parent=1 // loop_pre_header
      _
    $region3: #{tpu_custom_call.1} parent=1 // loop_header
      %s17 = sphi 0, %s21
      %p18 = scmp.ge.s32.totalorder %s17, 6
      %s24 = sphi 0, %s36
      %s25 = sphi 0, %s32
      %s26 = sphi 0, %s24
      %s27 = sphi 0, %s25
      %s28 = sphi 0, %s26
      %s29 = sphi 0, %s27
      %s39 = sphi 0, %s41
      %s42 = sphi 0, %s39
      %s43 = sphi 0, %s42
      %s59 = sphi 0, %s43
      %s63 = sphi 0, %s63
      %s65 = sphi 0, %s63
      %s66 = sphi 0, %s65
      %s80 = sphi 0, %s66
      %s84 = sphi 0, %s84
      %s86 = sphi 0, %s84
      %s87 = sphi 0, %s86
      %s101 = sphi 0, %s87
      %s105 = sphi 0, %s105
      %s107 = sphi 0, %s105
      %s108 = sphi 0, %s107
      %s122 = sphi 0, %s108
      %s126 = sphi 0, %s126
      %s128 = sphi 0, %s126
      %s129 = sphi 0, %s128
      %s143 = sphi 0, %s129
      %s147 = sphi 0, %s147
      %s149 = sphi 0, %s147
      %s150 = sphi 0, %s149
      %s164 = sphi 0, %s150
      %s168 = sphi 0, %s168
      %s170 = sphi 0, %s168
      %s171 = sphi 0, %s170
      %s185 = sphi 0, %s171
      %s193 = sphi 0, %s195
      %s196 = sphi 0, %s193
      %s197 = sphi 0, %s196
      %s213 = sphi 0, %s197
    $region4: #{tpu_custom_call.1} parent=1 // loop_header_branch
      %20 = sbr.rel (%p18) target = $region8
    $region5: #{tpu_custom_call.1} parent=1 // loop_body
      %s22 = ssub.s32 %s17, 1
      %s23 = ssub.s32 %s17, 2
      %s30 = sadd.s32 1, %s25
      %p31 = scmp.ge.s32.totalorder %s30, 2
      %s32 = scalar_select %p31, 0, %s30
      %s33 = sadd.s32 1, %s24
      %s34 = scalar_select %p31, %s33, %s24
      %p35 = scmp.ge.s32.totalorder %s34, 2
      %s36 = scalar_select %p35, 0, %s34
      %s37 = ssub.s32 %s24, %s36
      %p38 = scmp.eq.s32.totalorder %s37, 0
      %s40 = sadd.s32 %s39, 1
      %s41 = scalar_select %p38, %s39, %s40
      %p44 = pneg %p38
      %p45 = scmp.eq.s32.totalorder %s17, 3
      %p46 = por %p44, %p45
      %p47 = scmp.ne.s32.totalorder %s39, %s42
      %p48 = scmp.eq.s32.totalorder %s17, 0
      %p49 = por %p47, %p48
      %p50 = scmp.ne.s32.totalorder %s39, %s42
      %p51 = scmp.eq.s32.totalorder %s22, 3
      %p52 = por %p50, %p51
      %p53 = scmp.ne.s32.totalorder %s42, %s43
      %p54 = scmp.eq.s32.totalorder %s22, 0
      %p55 = por %p53, %p54
      %p56 = scmp.ne.s32.totalorder %s42, %s43
      %p57 = scmp.eq.s32.totalorder %s23, 3
      %p58 = por %p56, %p57
      %p60 = scmp.ne.s32.totalorder %s43, %s59
      %p61 = scmp.eq.s32.totalorder %s23, 0
      %p62 = por %p60, %p61
      %s64 = sadd.s32 %s63, 1
      %p67 = scmp.eq.s32.totalorder %s17, 3
      %p68 = scmp.ne.s32.totalorder %s63, %s65
      %p69 = scmp.eq.s32.totalorder %s17, 0
      %p70 = por %p68, %p69
      %p71 = scmp.ne.s32.totalorder %s63, %s65
      %p72 = scmp.eq.s32.totalorder %s22, 3
      %p73 = por %p71, %p72
      %p74 = scmp.ne.s32.totalorder %s65, %s66
      %p75 = scmp.eq.s32.totalorder %s22, 0
      %p76 = por %p74, %p75
      %p77 = scmp.ne.s32.totalorder %s65, %s66
      %p78 = scmp.eq.s32.totalorder %s23, 3
      %p79 = por %p77, %p78
      %p81 = scmp.ne.s32.totalorder %s66, %s80
      %p82 = scmp.eq.s32.totalorder %s23, 0
      %p83 = por %p81, %p82
      %s85 = sadd.s32 %s84, 1
      %p88 = scmp.eq.s32.totalorder %s17, 3
      %p89 = scmp.ne.s32.totalorder %s84, %s86
      %p90 = scmp.eq.s32.totalorder %s17, 0
      %p91 = por %p89, %p90
      %p92 = scmp.ne.s32.totalorder %s84, %s86
      %p93 = scmp.eq.s32.totalorder %s22, 3
      %p94 = por %p92, %p93
      %p95 = scmp.ne.s32.totalorder %s86, %s87
      %p96 = scmp.eq.s32.totalorder %s22, 0
      %p97 = por %p95, %p96
      %p98 = scmp.ne.s32.totalorder %s86, %s87
      %p99 = scmp.eq.s32.totalorder %s23, 3
      %p100 = por %p98, %p99
      %p102 = scmp.ne.s32.totalorder %s87, %s101
      %p103 = scmp.eq.s32.totalorder %s23, 0
      %p104 = por %p102, %p103
      %s106 = sadd.s32 %s105, 1
      %p109 = scmp.eq.s32.totalorder %s17, 3
      %p110 = scmp.ne.s32.totalorder %s105, %s107
      %p111 = scmp.eq.s32.totalorder %s17, 0
      %p112 = por %p110, %p111
      %p113 = scmp.ne.s32.totalorder %s105, %s107
      %p114 = scmp.eq.s32.totalorder %s22, 3
      %p115 = por %p113, %p114
      %p116 = scmp.ne.s32.totalorder %s107, %s108
      %p117 = scmp.eq.s32.totalorder %s22, 0
      %p118 = por %p116, %p117
      %p119 = scmp.ne.s32.totalorder %s107, %s108
      %p120 = scmp.eq.s32.totalorder %s23, 3
      %p121 = por %p119, %p120
      %p123 = scmp.ne.s32.totalorder %s108, %s122
      %p124 = scmp.eq.s32.totalorder %s23, 0
      %p125 = por %p123, %p124
      %s127 = sadd.s32 %s126, 1
      %p130 = scmp.eq.s32.totalorder %s17, 3
      %p131 = scmp.ne.s32.totalorder %s126, %s128
      %p132 = scmp.eq.s32.totalorder %s17, 0
      %p133 = por %p131, %p132
      %p134 = scmp.ne.s32.totalorder %s126, %s128
      %p135 = scmp.eq.s32.totalorder %s22, 3
      %p136 = por %p134, %p135
      %p137 = scmp.ne.s32.totalorder %s128, %s129
      %p138 = scmp.eq.s32.totalorder %s22, 0
      %p139 = por %p137, %p138
      %p140 = scmp.ne.s32.totalorder %s128, %s129
      %p141 = scmp.eq.s32.totalorder %s23, 3
      %p142 = por %p140, %p141
      %p144 = scmp.ne.s32.totalorder %s129, %s143
      %p145 = scmp.eq.s32.totalorder %s23, 0
      %p146 = por %p144, %p145
      %s148 = sadd.s32 %s147, 1
      %p151 = scmp.eq.s32.totalorder %s17, 3
      %p152 = scmp.ne.s32.totalorder %s147, %s149
      %p153 = scmp.eq.s32.totalorder %s17, 0
      %p154 = por %p152, %p153
      %p155 = scmp.ne.s32.totalorder %s147, %s149
      %p156 = scmp.eq.s32.totalorder %s22, 3
      %p157 = por %p155, %p156
      %p158 = scmp.ne.s32.totalorder %s149, %s150
      %p159 = scmp.eq.s32.totalorder %s22, 0
      %p160 = por %p158, %p159
      %p161 = scmp.ne.s32.totalorder %s149, %s150
      %p162 = scmp.eq.s32.totalorder %s23, 3
      %p163 = por %p161, %p162
      %p165 = scmp.ne.s32.totalorder %s150, %s164
      %p166 = scmp.eq.s32.totalorder %s23, 0
      %p167 = por %p165, %p166
      %s169 = sadd.s32 %s168, 1
      %p172 = scmp.eq.s32.totalorder %s17, 3
      %p173 = scmp.ne.s32.totalorder %s168, %s170
      %p174 = scmp.eq.s32.totalorder %s17, 0
      %p175 = por %p173, %p174
      %p176 = scmp.ne.s32.totalorder %s168, %s170
      %p177 = scmp.eq.s32.totalorder %s22, 3
      %p178 = por %p176, %p177
      %p179 = scmp.ne.s32.totalorder %s170, %s171
      %p180 = scmp.eq.s32.totalorder %s22, 0
      %p181 = por %p179, %p180
      %p182 = scmp.ne.s32.totalorder %s170, %s171
      %p183 = scmp.eq.s32.totalorder %s23, 3
      %p184 = por %p182, %p183
      %p186 = scmp.ne.s32.totalorder %s171, %s185
      %p187 = scmp.eq.s32.totalorder %s23, 0
      %p188 = por %p186, %p187
      %s189 = ssub.s32 %s24, %s36
      %s190 = ssub.s32 %s25, %s32
      %s191 = sor.u32 %s189, %s190
      %p192 = scmp.eq.s32.totalorder %s191, 0
      %s194 = sadd.s32 %s193, 1
      %s195 = scalar_select %p192, %s193, %s194
      %p198 = pneg %p192
      %p199 = scmp.eq.s32.totalorder %s17, 3
      %p200 = por %p198, %p199
      %p201 = scmp.ne.s32.totalorder %s193, %s196
      %p202 = scmp.eq.s32.totalorder %s17, 0
      %p203 = por %p201, %p202
      %p204 = scmp.ne.s32.totalorder %s193, %s196
      %p205 = scmp.eq.s32.totalorder %s22, 3
      %p206 = por %p204, %p205
      %p207 = scmp.ne.s32.totalorder %s196, %s197
      %p208 = scmp.eq.s32.totalorder %s22, 0
      %p209 = por %p207, %p208
      %p210 = scmp.ne.s32.totalorder %s196, %s197
      %p211 = scmp.eq.s32.totalorder %s23, 3
      %p212 = por %p210, %p211
      %p214 = scmp.ne.s32.totalorder %s197, %s213
      %p215 = scmp.eq.s32.totalorder %s23, 0
      %p216 = por %p214, %p215
      %p217 = scmp.le.s32.totalorder 1, %s17
      %p218 = scmp.lt.s32.totalorder %s17, 5
      %p219 = pnand %p217, %p218
      %p220 = pneg %p219
      // Predicated region
      $region9: #{tpu_custom_call.1} parent=5 // pred_check
        _
      $region10: #{tpu_custom_call.1} parent=5 // pred_check_branch
        %222 = sbr.rel (%p219) target = $region12
      $region11: #{tpu_custom_call.1} parent=5 // pred_region
        %s223 = ssub.s32 %s17, 1
        // Predicated region
        $region13: #{tpu_custom_call.1} parent=11 // pred_check
          %p224 = pneg %p76
        $region14: #{tpu_custom_call.1} parent=11 // pred_check_branch
          %226 = sbr.rel (%p224) target = $region16
        $region15: #{tpu_custom_call.1} parent=11 // pred_region
          _
        $region16: #{tpu_custom_call.1} parent=11 // pred_fallthru
          _
        // Predicated region
        $region17: #{tpu_custom_call.1} parent=11 // pred_check
          %p227 = pneg %p97
        $region18: #{tpu_custom_call.1} parent=11 // pred_check_branch
          %229 = sbr.rel (%p227) target = $region20
        $region19: #{tpu_custom_call.1} parent=11 // pred_region
          %s231 = ssub.s32 9216, 9216
          %232 = vsyncadd [#allocation4], %s231
          %s233 = sshll.u32 [#allocation3], 4
          %s234 = int_to_ptr.vmem [resolvable:$true] %s233
          %239 = dma.hbm_to_vmem [thread:$0]  %s2, 9216, %s234, [#allocation4], 64, 64, 4
        $region20: #{tpu_custom_call.1} parent=11 // pred_fallthru
          _
        // Predicated region
        $region21: #{tpu_custom_call.1} parent=11 // pred_check
          %p240 = pneg %p118
        $region22: #{tpu_custom_call.1} parent=11 // pred_check_branch
          %242 = sbr.rel (%p240) target = $region24
        $region23: #{tpu_custom_call.1} parent=11 // pred_region
          _
        $region24: #{tpu_custom_call.1} parent=11 // pred_fallthru
          _
        // Predicated region
        $region25: #{tpu_custom_call.1} parent=11 // pred_check
          %p243 = pneg %p139
        $region26: #{tpu_custom_call.1} parent=11 // pred_check_branch
          %245 = sbr.rel (%p243) target = $region28
        $region27: #{tpu_custom_call.1} parent=11 // pred_region
          _
        $region28: #{tpu_custom_call.1} parent=11 // pred_fallthru
          _
        // Predicated region
        $region29: #{tpu_custom_call.1} parent=11 // pred_check
          %p246 = pneg %p160
        $region30: #{tpu_custom_call.1} parent=11 // pred_check_branch
          %248 = sbr.rel (%p246) target = $region32
        $region31: #{tpu_custom_call.1} parent=11 // pred_region
          _
        $region32: #{tpu_custom_call.1} parent=11 // pred_fallthru
          _
        // Predicated region
        $region33: #{tpu_custom_call.1} parent=11 // pred_check
          %p249 = pneg %p181
        $region34: #{tpu_custom_call.1} parent=11 // pred_check_branch
          %251 = sbr.rel (%p249) target = $region36
        $region35: #{tpu_custom_call.1} parent=11 // pred_region
          _
        $region36: #{tpu_custom_call.1} parent=11 // pred_fallthru
          _
      $region12: #{tpu_custom_call.1} parent=5 // pred_fallthru
        _
      %p252 = scmp.lt.s32.totalorder %s17, 4
      // Predicated region
      $region37: #{tpu_custom_call.1} parent=5 // pred_check
        %p253 = pneg %p252
      $region38: #{tpu_custom_call.1} parent=5 // pred_check_branch
        %255 = sbr.rel (%p253) target = $region40
      $region39: #{tpu_custom_call.1} parent=5 // pred_region
        // Predicated region
        $region41: #{tpu_custom_call.1} parent=39 // pred_check
          %p256 = pneg %p49
        $region42: #{tpu_custom_call.1} parent=39 // pred_check_branch
          %258 = sbr.rel (%p256) target = $region44
        $region43: #{tpu_custom_call.1} parent=39 // pred_region
          %p259 = scmp.lt.s32.totalorder %s24, 1
          %s260 = scalar_select %p259, %s24, 1
          %s261 = smul.addr %s260, 60
          %s262 = smul.addr %s261, 4
          %s263 = scalar_lea.vmem %s0, %s262
        $region44: #{tpu_custom_call.1} parent=39 // pred_fallthru
          _
      $region40: #{tpu_custom_call.1} parent=5 // pred_fallthru
        _
      %p264 = scmp.le.s32.totalorder 1, %s17
      %p265 = scmp.lt.s32.totalorder %s17, 5
      %p266 = pnand %p264, %p265
      %p267 = pneg %p266
      // Predicated region
      $region45: #{tpu_custom_call.1} parent=5 // pred_check
        _
      $region46: #{tpu_custom_call.1} parent=5 // pred_check_branch
        %269 = sbr.rel (%p266) target = $region48
      $region47: #{tpu_custom_call.1} parent=5 // pred_region
        %s270 = ssub.s32 %s17, 1
        // Predicated region
        $region49: #{tpu_custom_call.1} parent=47 // pred_check
          %p271 = pneg %p97
        $region50: #{tpu_custom_call.1} parent=47 // pred_check_branch
          %273 = sbr.rel (%p271) target = $region52
        $region51: #{tpu_custom_call.1} parent=47 // pred_region
          %274 = dma.done [#allocation4], 9216
        $region52: #{tpu_custom_call.1} parent=47 // pred_fallthru
          _
        %p275 = scmp.lt.s32.totalorder %s26, 1
        %s276 = scalar_select %p275, %s26, 1
        %s277 = smul.addr %s276, 60
        %s278 = smul.addr %s277, 4
        %s279 = scalar_lea.vmem %s0, %s278
        %p280 = pneg %p55
        %p281 = pneg %p52
        %p282 = pneg %p76
        %p283 = pneg %p73
        %p284 = pneg %p97
        %p285 = pneg %p94
        %p286 = pneg %p118
        %p287 = pneg %p115
        %p288 = pneg %p139
        %p289 = pneg %p136
        %p290 = pneg %p160
        %p291 = pneg %p157
        %p292 = pneg %p181
        %p293 = pneg %p178
        %p294 = pneg %p209
        %p295 = pneg %p206
        %s296 = sand.u32 %s196, 1
        %s297 = scalar_lea.sflag [#allocation5], %s296
        %s298 = sand.u32 %s196, 1
        %s299 = smul.addr %s298, 128
        %s300 = scalar_lea.vmem [#allocation6], %s299
        %p301 = scmp.lt.s32.totalorder %s26, 1
        %s302 = scalar_select %p301, %s26, 1
        %s303 = smul.addr %s302, 60
        %s304 = smul.addr %s303, 4
        %s305 = scalar_lea.vmem %s0, %s304
        %s306 = smul.u32 8, %s27
        %s308 = smul.u32 %s27, 8
        %s309 = smul.u32 %s308, 3
        %s310 = smul.addr %s309, 4
        %s311 = scalar_lea.vmem %s305, %s310
        %v312 = vld [vmem:[%s311] sm:$0xf]
        %v313 = vld [vmem:[%s311 + $0x4] sm:$0xf]
        %v314 = vld [vmem:[%s311 + $0xc] sm:$0xf]
        %v315 = vld [vmem:[%s311 + $0x10] sm:$0xf]
        %v316 = vld [vmem:[%s311 + $0x18] sm:$0xf]
        %v317 = vld [vmem:[%s311 + $0x1c] sm:$0xf]
        %v318 = vld [vmem:[%s311 + $0x24] sm:$0xf]
        %v319 = vld [vmem:[%s311 + $0x28] sm:$0xf]
        %v320 = vld [vmem:[%s311 + $0x30] sm:$0xf]
        %v321 = vld [vmem:[%s311 + $0x34] sm:$0xf]
        %v322 = vld [vmem:[%s311 + $0x3c] sm:$0xf]
        %v323 = vld [vmem:[%s311 + $0x40] sm:$0xf]
        %v324 = vld [vmem:[%s311 + $0x48] sm:$0xf]
        %v325 = vld [vmem:[%s311 + $0x4c] sm:$0xf]
        %v326 = vld [vmem:[%s311 + $0x54] sm:$0xf]
        %v327 = vld [vmem:[%s311 + $0x58] sm:$0xf]
        %v328 = vld [vmem:[%s311 + $0x60] sm:$0xf]
        %v329 = vld [vmem:[%s311 + $0x64] sm:$0xf]
        %v330 = vld [vmem:[%s311 + $0x6c] sm:$0xf]
        %v331 = vld [vmem:[%s311 + $0x70] sm:$0xf]
        %v332 = vld [vmem:[%s1] sm:$0xf]
        %v333 = vld [vmem:[%s1 + $0x4] sm:$0xf]
        %v334 = vld [vmem:[%s1 + $0x8] sm:$0xf]
        %v335 = vld [vmem:[%s1 + $0xc] sm:$0xf]
        %v336 = vld [vmem:[%s1 + $0x10] sm:$0xf]
        %v337 = vld [vmem:[%s1 + $0x14] sm:$0xf]
        %v338 = vld [vmem:[%s1 + $0x18] sm:$0xf]
        %v339 = vld [vmem:[%s1 + $0x1c] sm:$0xf]
        %v340 = vld [vmem:[%s1 + $0x20] sm:$0xf]
        %v341 = vld [vmem:[%s1 + $0x24] sm:$0xf]
        %v342 = vld [vmem:[%s1 + $0x28] sm:$0xf]
        %v343 = vld [vmem:[%s1 + $0x2c] sm:$0xf]
        %v344 = vld [vmem:[%s1 + $0x30] sm:$0xf]
        %v345 = vld [vmem:[%s1 + $0x34] sm:$0xf]
        %v346 = vld [vmem:[%s1 + $0x38] sm:$0xf]
        %v347 = vld [vmem:[%s1 + $0x3c] sm:$0xf]
        %v348 = vld [vmem:[%s311 + $0x8] sm:$0x1]
        %v349 = vld [vmem:[%s311 + $0x14] sm:$0x1]
        %v350 = vld [vmem:[%s311 + $0x20] sm:$0x1]
        %v351 = vld [vmem:[%s311 + $0x2c] sm:$0x1]
        %v352 = vld [vmem:[%s311 + $0x38] sm:$0x1]
        %v353 = vld [vmem:[%s311 + $0x44] sm:$0x1]
        %v354 = vld [vmem:[%s311 + $0x50] sm:$0x1]
        %v355 = vld [vmem:[%s311 + $0x5c] sm:$0x1]
        %v356 = vld [vmem:[%s311 + $0x68] sm:$0x1]
        %v357 = vld [vmem:[%s311 + $0x74] sm:$0x1]
        %vm358 = vsmask.f32 3328
        %vm359 = vsmask.f32 7440
        %vm360 = vmor %vm358, %vm359
        %v362 = vshrl.u32 %v312, 16
        %v364 = vrot.slane %v362, 4
        %v365 = vshll.u32 %v312, 16
        %v367 = vrot.slane %v365, 5
        %v368 = vor.u32 %v364, %v367
        %v369 = vrot.slane %v368, 4
        %v371 = vshll.u32 %v313, 16
        %v373 = vrot.slane %v371, 5
        %v374 = vsel %vm360, %v369, %v373
        %v375 = vshrl.u32 %v313, 16
        %v377 = vrot.slane %v375, 4
        %v378 = vor.u32 %v377, %v373
        %v379 = vrot.slane %v378, 4
        %v381 = vshll.u32 %v348, 16
        %v383 = vrot.slane %v381, 5
        %v384 = vsel %vm360, %v379, %v383
        %v386 = vshrl.u32 %v314, 16
        %v388 = vrot.slane %v386, 4
        %v389 = vshll.u32 %v314, 16
        %v391 = vrot.slane %v389, 5
        %v392 = vor.u32 %v388, %v391
        %v393 = vrot.slane %v392, 4
        %v395 = vshll.u32 %v315, 16
        %v397 = vrot.slane %v395, 5
        %v398 = vsel %vm360, %v393, %v397
        %v399 = vshrl.u32 %v315, 16
        %v401 = vrot.slane %v399, 4
        %v402 = vor.u32 %v401, %v397
        %v403 = vrot.slane %v402, 4
        %v405 = vshll.u32 %v349, 16
        %v407 = vrot.slane %v405, 5
        %v408 = vsel %vm360, %v403, %v407
        %v410 = vshrl.u32 %v316, 16
        %v412 = vrot.slane %v410, 4
        %v413 = vshll.u32 %v316, 16
        %v415 = vrot.slane %v413, 5
        %v416 = vor.u32 %v412, %v415
        %v417 = vrot.slane %v416, 4
        %v419 = vshll.u32 %v317, 16
        %v421 = vrot.slane %v419, 5
        %v422 = vsel %vm360, %v417, %v421
        %v423 = vshrl.u32 %v317, 16
        %v425 = vrot.slane %v423, 4
        %v426 = vor.u32 %v425, %v421
        %v427 = vrot.slane %v426, 4
        %v429 = vshll.u32 %v350, 16
        %v431 = vrot.slane %v429, 5
        %v432 = vsel %vm360, %v427, %v431
        %v434 = vshrl.u32 %v318, 16
        %v436 = vrot.slane %v434, 4
        %v437 = vshll.u32 %v318, 16
        %v439 = vrot.slane %v437, 5
        %v440 = vor.u32 %v436, %v439
        %v441 = vrot.slane %v440, 4
        %v443 = vshll.u32 %v319, 16
        %v445 = vrot.slane %v443, 5
        %v446 = vsel %vm360, %v441, %v445
        %v447 = vshrl.u32 %v319, 16
        %v449 = vrot.slane %v447, 4
        %v450 = vor.u32 %v449, %v445
        %v451 = vrot.slane %v450, 4
        %v453 = vshll.u32 %v351, 16
        %v455 = vrot.slane %v453, 5
        %v456 = vsel %vm360, %v451, %v455
        %v458 = vshrl.u32 %v320, 16
        %v460 = vrot.slane %v458, 4
        %v461 = vshll.u32 %v320, 16
        %v463 = vrot.slane %v461, 5
        %v464 = vor.u32 %v460, %v463
        %v465 = vrot.slane %v464, 4
        %v467 = vshll.u32 %v321, 16
        %v469 = vrot.slane %v467, 5
        %v470 = vsel %vm360, %v465, %v469
        %v471 = vshrl.u32 %v321, 16
        %v473 = vrot.slane %v471, 4
        %v474 = vor.u32 %v473, %v469
        %v475 = vrot.slane %v474, 4
        %v477 = vshll.u32 %v352, 16
        %v479 = vrot.slane %v477, 5
        %v480 = vsel %vm360, %v475, %v479
        %v482 = vshrl.u32 %v322, 16
        %v484 = vrot.slane %v482, 4
        %v485 = vshll.u32 %v322, 16
        %v487 = vrot.slane %v485, 5
        %v488 = vor.u32 %v484, %v487
        %v489 = vrot.slane %v488, 4
        %v491 = vshll.u32 %v323, 16
        %v493 = vrot.slane %v491, 5
        %v494 = vsel %vm360, %v489, %v493
        %v495 = vshrl.u32 %v323, 16
        %v497 = vrot.slane %v495, 4
        %v498 = vor.u32 %v497, %v493
        %v499 = vrot.slane %v498, 4
        %v501 = vshll.u32 %v353, 16
        %v503 = vrot.slane %v501, 5
        %v504 = vsel %vm360, %v499, %v503
        %v506 = vshrl.u32 %v324, 16
        %v508 = vrot.slane %v506, 4
        %v509 = vshll.u32 %v324, 16
        %v511 = vrot.slane %v509, 5
        %v512 = vor.u32 %v508, %v511
        %v513 = vrot.slane %v512, 4
        %v515 = vshll.u32 %v325, 16
        %v517 = vrot.slane %v515, 5
        %v518 = vsel %vm360, %v513, %v517
        %v519 = vshrl.u32 %v325, 16
        %v521 = vrot.slane %v519, 4
        %v522 = vor.u32 %v521, %v517
        %v523 = vrot.slane %v522, 4
        %v525 = vshll.u32 %v354, 16
        %v527 = vrot.slane %v525, 5
        %v528 = vsel %vm360, %v523, %v527
        %v530 = vshrl.u32 %v326, 16
        %v532 = vrot.slane %v530, 4
        %v533 = vshll.u32 %v326, 16
        %v535 = vrot.slane %v533, 5
        %v536 = vor.u32 %v532, %v535
        %v537 = vrot.slane %v536, 4
        %v539 = vshll.u32 %v327, 16
        %v541 = vrot.slane %v539, 5
        %v542 = vsel %vm360, %v537, %v541
        %v543 = vshrl.u32 %v327, 16
        %v545 = vrot.slane %v543, 4
        %v546 = vor.u32 %v545, %v541
        %v547 = vrot.slane %v546, 4
        %v549 = vshll.u32 %v355, 16
        %v551 = vrot.slane %v549, 5
        %v552 = vsel %vm360, %v547, %v551
        %v554 = vshrl.u32 %v328, 16
        %v556 = vrot.slane %v554, 4
        %v557 = vshll.u32 %v328, 16
        %v559 = vrot.slane %v557, 5
        %v560 = vor.u32 %v556, %v559
        %v561 = vrot.slane %v560, 4
        %v563 = vshll.u32 %v329, 16
        %v565 = vrot.slane %v563, 5
        %v566 = vsel %vm360, %v561, %v565
        %v567 = vshrl.u32 %v329, 16
        %v569 = vrot.slane %v567, 4
        %v570 = vor.u32 %v569, %v565
        %v571 = vrot.slane %v570, 4
        %v573 = vshll.u32 %v356, 16
        %v575 = vrot.slane %v573, 5
        %v576 = vsel %vm360, %v571, %v575
        %v578 = vshrl.u32 %v330, 16
        %v580 = vrot.slane %v578, 4
        %v581 = vshll.u32 %v330, 16
        %v583 = vrot.slane %v581, 5
        %v584 = vor.u32 %v580, %v583
        %v585 = vrot.slane %v584, 4
        %v587 = vshll.u32 %v331, 16
        %v589 = vrot.slane %v587, 5
        %v590 = vsel %vm360, %v585, %v589
        %v591 = vshrl.u32 %v331, 16
        %v593 = vrot.slane %v591, 4
        %v594 = vor.u32 %v593, %v589
        %v595 = vrot.slane %v594, 4
        %v597 = vshll.u32 %v357, 16
        %v599 = vrot.slane %v597, 5
        %v600 = vsel %vm360, %v595, %v599
        %s601 = scalar_lea.vmem %s1, 64
        %v602 = vld [vmem:[%s601] sm:$0xf]
        %v603 = vld [vmem:[%s601 + $0x4] sm:$0xf]
        %v604 = vld [vmem:[%s601 + $0x8] sm:$0xf]
        %v605 = vld [vmem:[%s601 + $0xc] sm:$0xf]
        %v606 = vld [vmem:[%s601 + $0x10] sm:$0xf]
        %v607 = vld [vmem:[%s601 + $0x14] sm:$0xf]
        %v608 = vld [vmem:[%s601 + $0x18] sm:$0xf]
        %v609 = vld [vmem:[%s601 + $0x1c] sm:$0xf]
        %v610 = vld [vmem:[%s601 + $0x20] sm:$0xf]
        %v611 = vld [vmem:[%s601 + $0x24] sm:$0xf]
        %v612 = vld [vmem:[%s601 + $0x28] sm:$0xf]
        %v613 = vld [vmem:[%s601 + $0x2c] sm:$0xf]
        %v614 = vld [vmem:[%s601 + $0x30] sm:$0xf]
        %v615 = vld [vmem:[%s601 + $0x34] sm:$0xf]
        %v616 = vld [vmem:[%s601 + $0x38] sm:$0xf]
        %v617 = vld [vmem:[%s601 + $0x3c] sm:$0xf]
        %v618 = vunpack.c.l.b16 %v374
        %v619 = vunpack.c.l.b16 %v384
        %v620 = vunpack.c.l.b16 %v398
        %v621 = vunpack.c.l.b16 %v408
        %v622 = vunpack.c.l.b16 %v422
        %v623 = vunpack.c.l.b16 %v432
        %v624 = vunpack.c.l.b16 %v446
        %v625 = vunpack.c.l.b16 %v456
        %v626 = vunpack.c.l.b16 %v470
        %v627 = vunpack.c.l.b16 %v480
        %v628 = vunpack.c.l.b16 %v494
        %v629 = vunpack.c.l.b16 %v504
        %v630 = vunpack.c.l.b16 %v518
        %v631 = vunpack.c.l.b16 %v528
        %v632 = vunpack.c.l.b16 %v542
        %v633 = vunpack.c.l.b16 %v552
        %v634 = vunpack.c.l.b16 %v566
        %v635 = vunpack.c.l.b16 %v576
        %v636 = vunpack.c.l.b16 %v590
        %v637 = vunpack.c.l.b16 %v600
        %v638 = vpack.c.b16 %v619, %v618
        %v639 = vpack.c.b16 %v621, %v620
        %v640 = vpack.c.b16 %v623, %v622
        %v641 = vpack.c.b16 %v625, %v624
        %v642 = vpack.c.b16 %v627, %v626
        %v643 = vpack.c.b16 %v629, %v628
        %v644 = vpack.c.b16 %v631, %v630
        %v645 = vpack.c.b16 %v633, %v632
        %v646 = vpack.c.b16 %v635, %v634
        %v647 = vpack.c.b16 %v637, %v636
        %v674 = vunpack.c.l.b16 %v602
        %v675 = vunpack.c.l.b16 %v603
        %v676 = vunpack.c.l.b16 %v604
        %v677 = vunpack.c.l.b16 %v605
        %v678 = vunpack.c.l.b16 %v606
        %v679 = vunpack.c.l.b16 %v607
        %v680 = vunpack.c.l.b16 %v608
        %v681 = vunpack.c.l.b16 %v609
        %v682 = vunpack.c.l.b16 %v610
        %v683 = vunpack.c.l.b16 %v611
        %v684 = vunpack.c.l.b16 %v612
        %v685 = vunpack.c.l.b16 %v613
        %v686 = vunpack.c.l.b16 %v614
        %v687 = vunpack.c.l.b16 %v615
        %v688 = vunpack.c.l.b16 %v616
        %v689 = vunpack.c.l.b16 %v617
        %v690 = vpack.c.b16 %v675, %v674
        %v691 = vpack.c.b16 %v677, %v676
        %v692 = vpack.c.b16 %v679, %v678
        %v693 = vpack.c.b16 %v681, %v680
        %v694 = vpack.c.b16 %v683, %v682
        %v695 = vpack.c.b16 %v685, %v684
        %v696 = vpack.c.b16 %v687, %v686
        %v697 = vpack.c.b16 %v689, %v688
        %706 = vmatprep.subr.bf16.mxu0 0
        %707 = vmatpush1.bf16.msra.mxu0 %v697
        %708 = vmatprep.subr.bf16.mxu0 0
        %709 = vmatpush1.bf16.msra.mxu0 %v696
        %710 = vmatprep.subr.bf16.mxu0 0
        %711 = vmatpush1.bf16.msra.mxu0 %v695
        %712 = vmatprep.subr.bf16.mxu0 0
        %713 = vmatpush1.bf16.msra.mxu0 %v694
        %714 = vmatprep.subr.bf16.mxu0 0
        %715 = vmatpush1.bf16.msra.mxu0 %v693
        %716 = vmatprep.subr.bf16.mxu0 0
        %717 = vmatpush1.bf16.msra.mxu0 %v692
        %718 = vmatprep.subr.bf16.mxu0 0
        %719 = vmatpush1.bf16.msra.mxu0 %v691
        %720 = vmatprep.subr.bf16.mxu0 0
        %721 = vmatpush1.bf16.msra.mxu0 %v690
        %722 = vmatprep.subr.bf16.mxu0 0
        %723 = vmatpush2.bf16.msra.mxu0 0
        %724 = vmatprep.subr.bf16.mxu0 0
        %725 = vmatpush2.bf16.msra.mxu0 0
        %726 = vmatprep.subr.bf16.mxu0 0
        %727 = vmatpush2.bf16.msra.mxu0 0
        %728 = vmatprep.subr.bf16.mxu0 0
        %729 = vmatpush2.bf16.msra.mxu0 0
        %730 = vmatprep.subr.bf16.mxu0 0
        %731 = vmatpush2.bf16.msra.mxu0 0
        %732 = vmatprep.subr.bf16.mxu0 0
        %733 = vmatpush2.bf16.msra.mxu0 0
        %734 = vmatprep.subr.bf16.mxu0 0
        %735 = vmatpush2.bf16.msra.mxu0 0
        %736 = vmatprep.subr.bf16.mxu0 0
        %737 = vmatpush2.bf16.msra.mxu0 0
        %738 = vmatprep.mubr.bf16.mxu0 0
        %739 = vmatmul.mubr.bf16.gmra.mxu0 %v638
        %v740 = vpop.f32.mrf.mxu0
        %v741 = vadd.f32 0.0, %v740
        %v742 = vpop.f32.mrf.mxu0
        %v743 = vpop.f32.mrf.mxu0
        %v744 = vadd.f32 0.0, %v743
        %v745 = vpop.f32.mrf.mxu0
        %746 = vmatprep.mubr.bf16.mxu0 0
        %747 = vmatmul.mubr.bf16.gmra.mxu0 %v639
        %v748 = vpop.f32.mrf.mxu0
        %v749 = vadd.f32 0.0, %v748
        %v750 = vpop.f32.mrf.mxu0
        %v751 = vpop.f32.mrf.mxu0
        %v752 = vadd.f32 0.0, %v751
        %v753 = vpop.f32.mrf.mxu0
        %754 = vmatprep.mubr.bf16.mxu0 0
        %755 = vmatmul.mubr.bf16.gmra.mxu0 %v640
        %v756 = vpop.f32.mrf.mxu0
        %v757 = vadd.f32 0.0, %v756
        %v758 = vpop.f32.mrf.mxu0
        %v759 = vpop.f32.mrf.mxu0
        %v760 = vadd.f32 0.0, %v759
        %v761 = vpop.f32.mrf.mxu0
        %762 = vmatprep.mubr.bf16.mxu0 0
        %763 = vmatmul.mubr.bf16.gmra.mxu0 %v641
        %v764 = vpop.f32.mrf.mxu0
        %v765 = vadd.f32 0.0, %v764
        %v766 = vpop.f32.mrf.mxu0
        %v767 = vpop.f32.mrf.mxu0
        %v768 = vadd.f32 0.0, %v767
        %v769 = vpop.f32.mrf.mxu0
        %770 = vmatprep.mubr.bf16.mxu0 0
        %771 = vmatmul.mubr.bf16.gmra.mxu0 %v642
        %v772 = vpop.f32.mrf.mxu0
        %v773 = vadd.f32 0.0, %v772
        %v774 = vpop.f32.mrf.mxu0
        %v775 = vpop.f32.mrf.mxu0
        %v776 = vadd.f32 0.0, %v775
        %v777 = vpop.f32.mrf.mxu0
        %778 = vmatprep.mubr.bf16.mxu0 0
        %779 = vmatmul.mubr.bf16.gmra.mxu0 %v643
        %v780 = vpop.f32.mrf.mxu0
        %v781 = vadd.f32 0.0, %v780
        %v782 = vpop.f32.mrf.mxu0
        %v783 = vpop.f32.mrf.mxu0
        %v784 = vadd.f32 0.0, %v783
        %v785 = vpop.f32.mrf.mxu0
        %786 = vmatprep.mubr.bf16.mxu0 0
        %787 = vmatmul.mubr.bf16.gmra.mxu0 %v644
        %v788 = vpop.f32.mrf.mxu0
        %v789 = vadd.f32 0.0, %v788
        %v790 = vpop.f32.mrf.mxu0
        %v791 = vpop.f32.mrf.mxu0
        %v792 = vadd.f32 0.0, %v791
        %v793 = vpop.f32.mrf.mxu0
        %794 = vmatprep.mubr.bf16.mxu0 0
        %795 = vmatmul.mubr.bf16.gmra.mxu0 %v645
        %v796 = vpop.f32.mrf.mxu0
        %v797 = vadd.f32 0.0, %v796
        %v798 = vpop.f32.mrf.mxu0
        %v799 = vpop.f32.mrf.mxu0
        %v800 = vadd.f32 0.0, %v799
        %v801 = vpop.f32.mrf.mxu0
        %802 = vmatprep.mubr.bf16.mxu0 0
        %803 = vmatmul.mubr.bf16.gmra.mxu0 %v646
        %v804 = vpop.f32.mrf.mxu0
        %v805 = vadd.f32 0.0, %v804
        %v806 = vpop.f32.mrf.mxu0
        %v807 = vpop.f32.mrf.mxu0
        %v808 = vadd.f32 0.0, %v807
        %v809 = vpop.f32.mrf.mxu0
        %810 = vmatprep.mubr.bf16.mxu0 0
        %811 = vmatmul.mubr.bf16.gmra.mxu0 %v647
        %v812 = vpop.f32.mrf.mxu0
        %v813 = vadd.f32 0.0, %v812
        %v814 = vpop.f32.mrf.mxu0
        %v815 = vpop.f32.mrf.mxu0
        %v816 = vadd.f32 0.0, %v815
        %v817 = vpop.f32.mrf.mxu0
        %818 = vdwg.mxu0
        %v839 = vunpack.c.l.b16 %v312
        %v840 = vunpack.c.l.b16 %v313
        %v841 = vunpack.c.l.b16 %v314
        %v842 = vunpack.c.l.b16 %v315
        %v843 = vunpack.c.l.b16 %v316
        %v844 = vunpack.c.l.b16 %v317
        %v845 = vunpack.c.l.b16 %v318
        %v846 = vunpack.c.l.b16 %v319
        %v847 = vunpack.c.l.b16 %v320
        %v848 = vunpack.c.l.b16 %v321
        %v849 = vunpack.c.l.b16 %v322
        %v850 = vunpack.c.l.b16 %v323
        %v851 = vunpack.c.l.b16 %v324
        %v852 = vunpack.c.l.b16 %v325
        %v853 = vunpack.c.l.b16 %v326
        %v854 = vunpack.c.l.b16 %v327
        %v855 = vunpack.c.l.b16 %v328
        %v856 = vunpack.c.l.b16 %v329
        %v857 = vunpack.c.l.b16 %v330
        %v858 = vunpack.c.l.b16 %v331
        %v859 = vpack.c.b16 %v840, %v839
        %v860 = vpack.c.b16 %v842, %v841
        %v861 = vpack.c.b16 %v844, %v843
        %v862 = vpack.c.b16 %v846, %v845
        %v863 = vpack.c.b16 %v848, %v847
        %v864 = vpack.c.b16 %v850, %v849
        %v865 = vpack.c.b16 %v852, %v851
        %v866 = vpack.c.b16 %v854, %v853
        %v867 = vpack.c.b16 %v856, %v855
        %v868 = vpack.c.b16 %v858, %v857
        %v895 = vunpack.c.l.b16 %v332
        %v896 = vunpack.c.l.b16 %v333
        %v897 = vunpack.c.l.b16 %v334
        %v898 = vunpack.c.l.b16 %v335
        %v899 = vunpack.c.l.b16 %v336
        %v900 = vunpack.c.l.b16 %v337
        %v901 = vunpack.c.l.b16 %v338
        %v902 = vunpack.c.l.b16 %v339
        %v903 = vunpack.c.l.b16 %v340
        %v904 = vunpack.c.l.b16 %v341
        %v905 = vunpack.c.l.b16 %v342
        %v906 = vunpack.c.l.b16 %v343
        %v907 = vunpack.c.l.b16 %v344
        %v908 = vunpack.c.l.b16 %v345
        %v909 = vunpack.c.l.b16 %v346
        %v910 = vunpack.c.l.b16 %v347
        %v911 = vpack.c.b16 %v896, %v895
        %v912 = vpack.c.b16 %v898, %v897
        %v913 = vpack.c.b16 %v900, %v899
        %v914 = vpack.c.b16 %v902, %v901
        %v915 = vpack.c.b16 %v904, %v903
        %v916 = vpack.c.b16 %v906, %v905
        %v917 = vpack.c.b16 %v908, %v907
        %v918 = vpack.c.b16 %v910, %v909
        %927 = vmatprep.subr.bf16.mxu0 0
        %928 = vmatpush1.bf16.msra.mxu0 %v918
        %929 = vmatprep.subr.bf16.mxu0 0
        %930 = vmatpush1.bf16.msra.mxu0 %v917
        %931 = vmatprep.subr.bf16.mxu0 0
        %932 = vmatpush1.bf16.msra.mxu0 %v916
        %933 = vmatprep.subr.bf16.mxu0 0
        %934 = vmatpush1.bf16.msra.mxu0 %v915
        %935 = vmatprep.subr.bf16.mxu0 0
        %936 = vmatpush1.bf16.msra.mxu0 %v914
        %937 = vmatprep.subr.bf16.mxu0 0
        %938 = vmatpush1.bf16.msra.mxu0 %v913
        %939 = vmatprep.subr.bf16.mxu0 0
        %940 = vmatpush1.bf16.msra.mxu0 %v912
        %941 = vmatprep.subr.bf16.mxu0 0
        %942 = vmatpush1.bf16.msra.mxu0 %v911
        %943 = vmatprep.subr.bf16.mxu0 0
        %944 = vmatpush2.bf16.msra.mxu0 0
        %945 = vmatprep.subr.bf16.mxu0 0
        %946 = vmatpush2.bf16.msra.mxu0 0
        %947 = vmatprep.subr.bf16.mxu0 0
        %948 = vmatpush2.bf16.msra.mxu0 0
        %949 = vmatprep.subr.bf16.mxu0 0
        %950 = vmatpush2.bf16.msra.mxu0 0
        %951 = vmatprep.subr.bf16.mxu0 0
        %952 = vmatpush2.bf16.msra.mxu0 0
        %953 = vmatprep.subr.bf16.mxu0 0
        %954 = vmatpush2.bf16.msra.mxu0 0
        %955 = vmatprep.subr.bf16.mxu0 0
        %956 = vmatpush2.bf16.msra.mxu0 0
        %957 = vmatprep.subr.bf16.mxu0 0
        %958 = vmatpush2.bf16.msra.mxu0 0
        %959 = vmatprep.mubr.bf16.mxu0 0
        %960 = vmatmul.mubr.bf16.gmra.mxu0 %v859
        %v961 = vpop.f32.mrf.mxu0
        %v962 = vadd.f32 %v741, %v961
        %v963 = vpop.f32.mrf.mxu0
        %v964 = vpop.f32.mrf.mxu0
        %v965 = vadd.f32 %v744, %v964
        %v966 = vpop.f32.mrf.mxu0
        %967 = vmatprep.mubr.bf16.mxu0 0
        %968 = vmatmul.mubr.bf16.gmra.mxu0 %v860
        %v969 = vpop.f32.mrf.mxu0
        %v970 = vadd.f32 %v749, %v969
        %v971 = vpop.f32.mrf.mxu0
        %v972 = vpop.f32.mrf.mxu0
        %v973 = vadd.f32 %v752, %v972
        %v974 = vpop.f32.mrf.mxu0
        %975 = vmatprep.mubr.bf16.mxu0 0
        %976 = vmatmul.mubr.bf16.gmra.mxu0 %v861
        %v977 = vpop.f32.mrf.mxu0
        %v978 = vadd.f32 %v757, %v977
        %v979 = vpop.f32.mrf.mxu0
        %v980 = vpop.f32.mrf.mxu0
        %v981 = vadd.f32 %v760, %v980
        %v982 = vpop.f32.mrf.mxu0
        %983 = vmatprep.mubr.bf16.mxu0 0
        %984 = vmatmul.mubr.bf16.gmra.mxu0 %v862
        %v985 = vpop.f32.mrf.mxu0
        %v986 = vadd.f32 %v765, %v985
        %v987 = vpop.f32.mrf.mxu0
        %v988 = vpop.f32.mrf.mxu0
        %v989 = vadd.f32 %v768, %v988
        %v990 = vpop.f32.mrf.mxu0
        %991 = vmatprep.mubr.bf16.mxu0 0
        %992 = vmatmul.mubr.bf16.gmra.mxu0 %v863
        %v993 = vpop.f32.mrf.mxu0
        %v994 = vadd.f32 %v773, %v993
        %v995 = vpop.f32.mrf.mxu0
        %v996 = vpop.f32.mrf.mxu0
        %v997 = vadd.f32 %v776, %v996
        %v998 = vpop.f32.mrf.mxu0
        %999 = vmatprep.mubr.bf16.mxu0 0
        %1000 = vmatmul.mubr.bf16.gmra.mxu0 %v864
        %v1001 = vpop.f32.mrf.mxu0
        %v1002 = vadd.f32 %v781, %v1001
        %v1003 = vpop.f32.mrf.mxu0
        %v1004 = vpop.f32.mrf.mxu0
        %v1005 = vadd.f32 %v784, %v1004
        %v1006 = vpop.f32.mrf.mxu0
        %1007 = vmatprep.mubr.bf16.mxu0 0
        %1008 = vmatmul.mubr.bf16.gmra.mxu0 %v865
        %v1009 = vpop.f32.mrf.mxu0
        %v1010 = vadd.f32 %v789, %v1009
        %v1011 = vpop.f32.mrf.mxu0
        %v1012 = vpop.f32.mrf.mxu0
        %v1013 = vadd.f32 %v792, %v1012
        %v1014 = vpop.f32.mrf.mxu0
        %1015 = vmatprep.mubr.bf16.mxu0 0
        %1016 = vmatmul.mubr.bf16.gmra.mxu0 %v866
        %v1017 = vpop.f32.mrf.mxu0
        %v1018 = vadd.f32 %v797, %v1017
        %v1019 = vpop.f32.mrf.mxu0
        %v1020 = vpop.f32.mrf.mxu0
        %v1021 = vadd.f32 %v800, %v1020
        %v1022 = vpop.f32.mrf.mxu0
        %1023 = vmatprep.mubr.bf16.mxu0 0
        %1024 = vmatmul.mubr.bf16.gmra.mxu0 %v867
        %v1025 = vpop.f32.mrf.mxu0
        %v1026 = vadd.f32 %v805, %v1025
        %v1027 = vpop.f32.mrf.mxu0
        %v1028 = vpop.f32.mrf.mxu0
        %v1029 = vadd.f32 %v808, %v1028
        %v1030 = vpop.f32.mrf.mxu0
        %1031 = vmatprep.mubr.bf16.mxu0 0
        %1032 = vmatmul.mubr.bf16.gmra.mxu0 %v868
        %v1033 = vpop.f32.mrf.mxu0
        %v1034 = vadd.f32 %v813, %v1033
        %v1035 = vpop.f32.mrf.mxu0
        %v1036 = vpop.f32.mrf.mxu0
        %v1037 = vadd.f32 %v816, %v1036
        %v1038 = vpop.f32.mrf.mxu0
        %1039 = vdwg.mxu0
        %v1040 = vld [vmem:[%s311] sm:$0xe]
        %v1041 = vld [vmem:[%s311 + $0xc] sm:$0xe]
        %v1042 = vld [vmem:[%s311 + $0x18] sm:$0xe]
        %v1043 = vld [vmem:[%s311 + $0x24] sm:$0xe]
        %v1044 = vld [vmem:[%s311 + $0x30] sm:$0xe]
        %v1045 = vld [vmem:[%s311 + $0x3c] sm:$0xe]
        %v1046 = vld [vmem:[%s311 + $0x48] sm:$0xe]
        %v1047 = vld [vmem:[%s311 + $0x54] sm:$0xe]
        %v1048 = vld [vmem:[%s311 + $0x60] sm:$0xe]
        %v1049 = vld [vmem:[%s311 + $0x6c] sm:$0xe]
        %vm1070 = vcmask 1042432
        %vm1071 = vcmask 1046532
        %vm1072 = vmor %vm1070, %vm1071
        %v1073 = vrot.slane %v1040, 5
        %v1074 = vrot.slane %v1073, 4
        %v1075 = vrot.slane %v313, 5
        %v1076 = vsel %vm1072, %v1074, %v1075
        %v1077 = vrot.slane %v1075, 4
        %v1078 = vrot.slane %v348, 5
        %v1079 = vsel %vm1072, %v1077, %v1078
        %v1080 = vrot.slane %v1041, 5
        %v1081 = vrot.slane %v1080, 4
        %v1082 = vrot.slane %v315, 5
        %v1083 = vsel %vm1072, %v1081, %v1082
        %v1084 = vrot.slane %v1082, 4
        %v1085 = vrot.slane %v349, 5
        %v1086 = vsel %vm1072, %v1084, %v1085
        %v1087 = vrot.slane %v1042, 5
        %v1088 = vrot.slane %v1087, 4
        %v1089 = vrot.slane %v317, 5
        %v1090 = vsel %vm1072, %v1088, %v1089
        %v1091 = vrot.slane %v1089, 4
        %v1092 = vrot.slane %v350, 5
        %v1093 = vsel %vm1072, %v1091, %v1092
        %v1094 = vrot.slane %v1043, 5
        %v1095 = vrot.slane %v1094, 4
        %v1096 = vrot.slane %v319, 5
        %v1097 = vsel %vm1072, %v1095, %v1096
        %v1098 = vrot.slane %v1096, 4
        %v1099 = vrot.slane %v351, 5
        %v1100 = vsel %vm1072, %v1098, %v1099
        %v1101 = vrot.slane %v1044, 5
        %v1102 = vrot.slane %v1101, 4
        %v1103 = vrot.slane %v321, 5
        %v1104 = vsel %vm1072, %v1102, %v1103
        %v1105 = vrot.slane %v1103, 4
        %v1106 = vrot.slane %v352, 5
        %v1107 = vsel %vm1072, %v1105, %v1106
        %v1108 = vrot.slane %v1045, 5
        %v1109 = vrot.slane %v1108, 4
        %v1110 = vrot.slane %v323, 5
        %v1111 = vsel %vm1072, %v1109, %v1110
        %v1112 = vrot.slane %v1110, 4
        %v1113 = vrot.slane %v353, 5
        %v1114 = vsel %vm1072, %v1112, %v1113
        %v1115 = vrot.slane %v1046, 5
        %v1116 = vrot.slane %v1115, 4
        %v1117 = vrot.slane %v325, 5
        %v1118 = vsel %vm1072, %v1116, %v1117
        %v1119 = vrot.slane %v1117, 4
        %v1120 = vrot.slane %v354, 5
        %v1121 = vsel %vm1072, %v1119, %v1120
        %v1122 = vrot.slane %v1047, 5
        %v1123 = vrot.slane %v1122, 4
        %v1124 = vrot.slane %v327, 5
        %v1125 = vsel %vm1072, %v1123, %v1124
        %v1126 = vrot.slane %v1124, 4
        %v1127 = vrot.slane %v355, 5
        %v1128 = vsel %vm1072, %v1126, %v1127
        %v1129 = vrot.slane %v1048, 5
        %v1130 = vrot.slane %v1129, 4
        %v1131 = vrot.slane %v329, 5
        %v1132 = vsel %vm1072, %v1130, %v1131
        %v1133 = vrot.slane %v1131, 4
        %v1134 = vrot.slane %v356, 5
        %v1135 = vsel %vm1072, %v1133, %v1134
        %v1136 = vrot.slane %v1049, 5
        %v1137 = vrot.slane %v1136, 4
        %v1138 = vrot.slane %v331, 5
        %v1139 = vsel %vm1072, %v1137, %v1138
        %v1140 = vrot.slane %v1138, 4
        %v1141 = vrot.slane %v357, 5
        %v1142 = vsel %vm1072, %v1140, %v1141
        %s1143 = scalar_lea.vmem %s1, 128
        %v1144 = vld [vmem:[%s1143] sm:$0xf]
        %v1145 = vld [vmem:[%s1143 + $0x4] sm:$0xf]
        %v1146 = vld [vmem:[%s1143 + $0x8] sm:$0xf]
        %v1147 = vld [vmem:[%s1143 + $0xc] sm:$0xf]
        %v1148 = vld [vmem:[%s1143 + $0x10] sm:$0xf]
        %v1149 = vld [vmem:[%s1143 + $0x14] sm:$0xf]
        %v1150 = vld [vmem:[%s1143 + $0x18] sm:$0xf]
        %v1151 = vld [vmem:[%s1143 + $0x1c] sm:$0xf]
        %v1152 = vld [vmem:[%s1143 + $0x20] sm:$0xf]
        %v1153 = vld [vmem:[%s1143 + $0x24] sm:$0xf]
        %v1154 = vld [vmem:[%s1143 + $0x28] sm:$0xf]
        %v1155 = vld [vmem:[%s1143 + $0x2c] sm:$0xf]
        %v1156 = vld [vmem:[%s1143 + $0x30] sm:$0xf]
        %v1157 = vld [vmem:[%s1143 + $0x34] sm:$0xf]
        %v1158 = vld [vmem:[%s1143 + $0x38] sm:$0xf]
        %v1159 = vld [vmem:[%s1143 + $0x3c] sm:$0xf]
        %v1160 = vunpack.c.l.b16 %v1076
        %v1161 = vunpack.c.l.b16 %v1079
        %v1162 = vunpack.c.l.b16 %v1083
        %v1163 = vunpack.c.l.b16 %v1086
        %v1164 = vunpack.c.l.b16 %v1090
        %v1165 = vunpack.c.l.b16 %v1093
        %v1166 = vunpack.c.l.b16 %v1097
        %v1167 = vunpack.c.l.b16 %v1100
        %v1168 = vunpack.c.l.b16 %v1104
        %v1169 = vunpack.c.l.b16 %v1107
        %v1170 = vunpack.c.l.b16 %v1111
        %v1171 = vunpack.c.l.b16 %v1114
        %v1172 = vunpack.c.l.b16 %v1118
        %v1173 = vunpack.c.l.b16 %v1121
        %v1174 = vunpack.c.l.b16 %v1125
        %v1175 = vunpack.c.l.b16 %v1128
        %v1176 = vunpack.c.l.b16 %v1132
        %v1177 = vunpack.c.l.b16 %v1135
        %v1178 = vunpack.c.l.b16 %v1139
        %v1179 = vunpack.c.l.b16 %v1142
        %v1180 = vpack.c.b16 %v1161, %v1160
        %v1181 = vpack.c.b16 %v1163, %v1162
        %v1182 = vpack.c.b16 %v1165, %v1164
        %v1183 = vpack.c.b16 %v1167, %v1166
        %v1184 = vpack.c.b16 %v1169, %v1168
        %v1185 = vpack.c.b16 %v1171, %v1170
        %v1186 = vpack.c.b16 %v1173, %v1172
        %v1187 = vpack.c.b16 %v1175, %v1174
        %v1188 = vpack.c.b16 %v1177, %v1176
        %v1189 = vpack.c.b16 %v1179, %v1178
        %v1216 = vunpack.c.l.b16 %v1144
        %v1217 = vunpack.c.l.b16 %v1145
        %v1218 = vunpack.c.l.b16 %v1146
        %v1219 = vunpack.c.l.b16 %v1147
        %v1220 = vunpack.c.l.b16 %v1148
        %v1221 = vunpack.c.l.b16 %v1149
        %v1222 = vunpack.c.l.b16 %v1150
        %v1223 = vunpack.c.l.b16 %v1151
        %v1224 = vunpack.c.l.b16 %v1152
        %v1225 = vunpack.c.l.b16 %v1153
        %v1226 = vunpack.c.l.b16 %v1154
        %v1227 = vunpack.c.l.b16 %v1155
        %v1228 = vunpack.c.l.b16 %v1156
        %v1229 = vunpack.c.l.b16 %v1157
        %v1230 = vunpack.c.l.b16 %v1158
        %v1231 = vunpack.c.l.b16 %v1159
        %v1232 = vpack.c.b16 %v1217, %v1216
        %v1233 = vpack.c.b16 %v1219, %v1218
        %v1234 = vpack.c.b16 %v1221, %v1220
        %v1235 = vpack.c.b16 %v1223, %v1222
        %v1236 = vpack.c.b16 %v1225, %v1224
        %v1237 = vpack.c.b16 %v1227, %v1226
        %v1238 = vpack.c.b16 %v1229, %v1228
        %v1239 = vpack.c.b16 %v1231, %v1230
        %1248 = vmatprep.subr.bf16.mxu0 0
        %1249 = vmatpush1.bf16.msra.mxu0 %v1239
        %1250 = vmatprep.subr.bf16.mxu0 0
        %1251 = vmatpush1.bf16.msra.mxu0 %v1238
        %1252 = vmatprep.subr.bf16.mxu0 0
        %1253 = vmatpush1.bf16.msra.mxu0 %v1237
        %1254 = vmatprep.subr.bf16.mxu0 0
        %1255 = vmatpush1.bf16.msra.mxu0 %v1236
        %1256 = vmatprep.subr.bf16.mxu0 0
        %1257 = vmatpush1.bf16.msra.mxu0 %v1235
        %1258 = vmatprep.subr.bf16.mxu0 0
        %1259 = vmatpush1.bf16.msra.mxu0 %v1234
        %1260 = vmatprep.subr.bf16.mxu0 0
        %1261 = vmatpush1.bf16.msra.mxu0 %v1233
        %1262 = vmatprep.subr.bf16.mxu0 0
        %1263 = vmatpush1.bf16.msra.mxu0 %v1232
        %1264 = vmatprep.subr.bf16.mxu0 0
        %1265 = vmatpush2.bf16.msra.mxu0 0
        %1266 = vmatprep.subr.bf16.mxu0 0
        %1267 = vmatpush2.bf16.msra.mxu0 0
        %1268 = vmatprep.subr.bf16.mxu0 0
        %1269 = vmatpush2.bf16.msra.mxu0 0
        %1270 = vmatprep.subr.bf16.mxu0 0
        %1271 = vmatpush2.bf16.msra.mxu0 0
        %1272 = vmatprep.subr.bf16.mxu0 0
        %1273 = vmatpush2.bf16.msra.mxu0 0
        %1274 = vmatprep.subr.bf16.mxu0 0
        %1275 = vmatpush2.bf16.msra.mxu0 0
        %1276 = vmatprep.subr.bf16.mxu0 0
        %1277 = vmatpush2.bf16.msra.mxu0 0
        %1278 = vmatprep.subr.bf16.mxu0 0
        %1279 = vmatpush2.bf16.msra.mxu0 0
        %1280 = vmatprep.mubr.bf16.mxu0 0
        %1281 = vmatmul.mubr.bf16.gmra.mxu0 %v1180
        %v1282 = vpop.f32.mrf.mxu0
        %v1283 = vadd.f32 0.0, %v1282
        %v1284 = vpop.f32.mrf.mxu0
        %v1285 = vpop.f32.mrf.mxu0
        %v1286 = vadd.f32 0.0, %v1285
        %v1287 = vpop.f32.mrf.mxu0
        %1288 = vmatprep.mubr.bf16.mxu0 0
        %1289 = vmatmul.mubr.bf16.gmra.mxu0 %v1181
        %v1290 = vpop.f32.mrf.mxu0
        %v1291 = vadd.f32 0.0, %v1290
        %v1292 = vpop.f32.mrf.mxu0
        %v1293 = vpop.f32.mrf.mxu0
        %v1294 = vadd.f32 0.0, %v1293
        %v1295 = vpop.f32.mrf.mxu0
        %1296 = vmatprep.mubr.bf16.mxu0 0
        %1297 = vmatmul.mubr.bf16.gmra.mxu0 %v1182
        %v1298 = vpop.f32.mrf.mxu0
        %v1299 = vadd.f32 0.0, %v1298
        %v1300 = vpop.f32.mrf.mxu0
        %v1301 = vpop.f32.mrf.mxu0
        %v1302 = vadd.f32 0.0, %v1301
        %v1303 = vpop.f32.mrf.mxu0
        %1304 = vmatprep.mubr.bf16.mxu0 0
        %1305 = vmatmul.mubr.bf16.gmra.mxu0 %v1183
        %v1306 = vpop.f32.mrf.mxu0
        %v1307 = vadd.f32 0.0, %v1306
        %v1308 = vpop.f32.mrf.mxu0
        %v1309 = vpop.f32.mrf.mxu0
        %v1310 = vadd.f32 0.0, %v1309
        %v1311 = vpop.f32.mrf.mxu0
        %1312 = vmatprep.mubr.bf16.mxu0 0
        %1313 = vmatmul.mubr.bf16.gmra.mxu0 %v1184
        %v1314 = vpop.f32.mrf.mxu0
        %v1315 = vadd.f32 0.0, %v1314
        %v1316 = vpop.f32.mrf.mxu0
        %v1317 = vpop.f32.mrf.mxu0
        %v1318 = vadd.f32 0.0, %v1317
        %v1319 = vpop.f32.mrf.mxu0
        %1320 = vmatprep.mubr.bf16.mxu0 0
        %1321 = vmatmul.mubr.bf16.gmra.mxu0 %v1185
        %v1322 = vpop.f32.mrf.mxu0
        %v1323 = vadd.f32 0.0, %v1322
        %v1324 = vpop.f32.mrf.mxu0
        %v1325 = vpop.f32.mrf.mxu0
        %v1326 = vadd.f32 0.0, %v1325
        %v1327 = vpop.f32.mrf.mxu0
        %1328 = vmatprep.mubr.bf16.mxu0 0
        %1329 = vmatmul.mubr.bf16.gmra.mxu0 %v1186
        %v1330 = vpop.f32.mrf.mxu0
        %v1331 = vadd.f32 0.0, %v1330
        %v1332 = vpop.f32.mrf.mxu0
        %v1333 = vpop.f32.mrf.mxu0
        %v1334 = vadd.f32 0.0, %v1333
        %v1335 = vpop.f32.mrf.mxu0
        %1336 = vmatprep.mubr.bf16.mxu0 0
        %1337 = vmatmul.mubr.bf16.gmra.mxu0 %v1187
        %v1338 = vpop.f32.mrf.mxu0
        %v1339 = vadd.f32 0.0, %v1338
        %v1340 = vpop.f32.mrf.mxu0
        %v1341 = vpop.f32.mrf.mxu0
        %v1342 = vadd.f32 0.0, %v1341
        %v1343 = vpop.f32.mrf.mxu0
        %1344 = vmatprep.mubr.bf16.mxu0 0
        %1345 = vmatmul.mubr.bf16.gmra.mxu0 %v1188
        %v1346 = vpop.f32.mrf.mxu0
        %v1347 = vadd.f32 0.0, %v1346
        %v1348 = vpop.f32.mrf.mxu0
        %v1349 = vpop.f32.mrf.mxu0
        %v1350 = vadd.f32 0.0, %v1349
        %v1351 = vpop.f32.mrf.mxu0
        %1352 = vmatprep.mubr.bf16.mxu0 0
        %1353 = vmatmul.mubr.bf16.gmra.mxu0 %v1189
        %v1354 = vpop.f32.mrf.mxu0
        %v1355 = vadd.f32 0.0, %v1354
        %v1356 = vpop.f32.mrf.mxu0
        %v1357 = vpop.f32.mrf.mxu0
        %v1358 = vadd.f32 0.0, %v1357
        %v1359 = vpop.f32.mrf.mxu0
        %1360 = vdwg.mxu0
        %v1361 = vadd.f32 %v962, %v1283
        %v1362 = vadd.f32 %v965, %v1286
        %v1363 = vadd.f32 %v970, %v1291
        %v1364 = vadd.f32 %v973, %v1294
        %v1365 = vadd.f32 %v978, %v1299
        %v1366 = vadd.f32 %v981, %v1302
        %v1367 = vadd.f32 %v986, %v1307
        %v1368 = vadd.f32 %v989, %v1310
        %v1369 = vadd.f32 %v994, %v1315
        %v1370 = vadd.f32 %v997, %v1318
        %v1371 = vadd.f32 %v1002, %v1323
        %v1372 = vadd.f32 %v1005, %v1326
        %v1373 = vadd.f32 %v1010, %v1331
        %v1374 = vadd.f32 %v1013, %v1334
        %v1375 = vadd.f32 %v1018, %v1339
        %v1376 = vadd.f32 %v1021, %v1342
        %v1377 = vadd.f32 %v1026, %v1347
        %v1378 = vadd.f32 %v1029, %v1350
        %v1379 = vadd.f32 %v1034, %v1355
        %v1380 = vadd.f32 %v1037, %v1358
        %s1381 = sadd.s32 %s308, 1
        %s1382 = smul.u32 %s1381, 3
        %s1383 = smul.addr %s1382, 4
        %s1384 = scalar_lea.vmem %s305, %s1383
        %v1385 = vld [vmem:[%s1384] sm:$0xf]
        %v1386 = vld [vmem:[%s1384 + $0x4] sm:$0xf]
        %v1387 = vld [vmem:[%s1384 + $0xc] sm:$0xf]
        %v1388 = vld [vmem:[%s1384 + $0x10] sm:$0xf]
        %v1389 = vld [vmem:[%s1384 + $0x18] sm:$0xf]
        %v1390 = vld [vmem:[%s1384 + $0x1c] sm:$0xf]
        %v1391 = vld [vmem:[%s1384 + $0x24] sm:$0xf]
        %v1392 = vld [vmem:[%s1384 + $0x28] sm:$0xf]
        %v1393 = vld [vmem:[%s1384 + $0x30] sm:$0xf]
        %v1394 = vld [vmem:[%s1384 + $0x34] sm:$0xf]
        %v1395 = vld [vmem:[%s1384 + $0x3c] sm:$0xf]
        %v1396 = vld [vmem:[%s1384 + $0x40] sm:$0xf]
        %v1397 = vld [vmem:[%s1384 + $0x48] sm:$0xf]
        %v1398 = vld [vmem:[%s1384 + $0x4c] sm:$0xf]
        %v1399 = vld [vmem:[%s1384 + $0x54] sm:$0xf]
        %v1400 = vld [vmem:[%s1384 + $0x58] sm:$0xf]
        %v1401 = vld [vmem:[%s1384 + $0x60] sm:$0xf]
        %v1402 = vld [vmem:[%s1384 + $0x64] sm:$0xf]
        %v1403 = vld [vmem:[%s1384 + $0x6c] sm:$0xf]
        %v1404 = vld [vmem:[%s1384 + $0x70] sm:$0xf]
        %s1405 = scalar_lea.vmem %s1, 192
        %v1406 = vld [vmem:[%s1405] sm:$0xf]
        %v1407 = vld [vmem:[%s1405 + $0x4] sm:$0xf]
        %v1408 = vld [vmem:[%s1405 + $0x8] sm:$0xf]
        %v1409 = vld [vmem:[%s1405 + $0xc] sm:$0xf]
        %v1410 = vld [vmem:[%s1405 + $0x10] sm:$0xf]
        %v1411 = vld [vmem:[%s1405 + $0x14] sm:$0xf]
        %v1412 = vld [vmem:[%s1405 + $0x18] sm:$0xf]
        %v1413 = vld [vmem:[%s1405 + $0x1c] sm:$0xf]
        %v1414 = vld [vmem:[%s1405 + $0x20] sm:$0xf]
        %v1415 = vld [vmem:[%s1405 + $0x24] sm:$0xf]
        %v1416 = vld [vmem:[%s1405 + $0x28] sm:$0xf]
        %v1417 = vld [vmem:[%s1405 + $0x2c] sm:$0xf]
        %v1418 = vld [vmem:[%s1405 + $0x30] sm:$0xf]
        %v1419 = vld [vmem:[%s1405 + $0x34] sm:$0xf]
        %v1420 = vld [vmem:[%s1405 + $0x38] sm:$0xf]
        %v1421 = vld [vmem:[%s1405 + $0x3c] sm:$0xf]
        %v1442 = vunpack.c.l.b16 %v1385
        %v1443 = vunpack.c.l.b16 %v1386
        %v1444 = vunpack.c.l.b16 %v1387
        %v1445 = vunpack.c.l.b16 %v1388
        %v1446 = vunpack.c.l.b16 %v1389
        %v1447 = vunpack.c.l.b16 %v1390
        %v1448 = vunpack.c.l.b16 %v1391
        %v1449 = vunpack.c.l.b16 %v1392
        %v1450 = vunpack.c.l.b16 %v1393
        %v1451 = vunpack.c.l.b16 %v1394
        %v1452 = vunpack.c.l.b16 %v1395
        %v1453 = vunpack.c.l.b16 %v1396
        %v1454 = vunpack.c.l.b16 %v1397
        %v1455 = vunpack.c.l.b16 %v1398
        %v1456 = vunpack.c.l.b16 %v1399
        %v1457 = vunpack.c.l.b16 %v1400
        %v1458 = vunpack.c.l.b16 %v1401
        %v1459 = vunpack.c.l.b16 %v1402
        %v1460 = vunpack.c.l.b16 %v1403
        %v1461 = vunpack.c.l.b16 %v1404
        %v1462 = vpack.c.b16 %v1443, %v1442
        %v1463 = vpack.c.b16 %v1445, %v1444
        %v1464 = vpack.c.b16 %v1447, %v1446
        %v1465 = vpack.c.b16 %v1449, %v1448
        %v1466 = vpack.c.b16 %v1451, %v1450
        %v1467 = vpack.c.b16 %v1453, %v1452
        %v1468 = vpack.c.b16 %v1455, %v1454
        %v1469 = vpack.c.b16 %v1457, %v1456
        %v1470 = vpack.c.b16 %v1459, %v1458
        %v1471 = vpack.c.b16 %v1461, %v1460
        %v1498 = vunpack.c.l.b16 %v1406
        %v1499 = vunpack.c.l.b16 %v1407
        %v1500 = vunpack.c.l.b16 %v1408
        %v1501 = vunpack.c.l.b16 %v1409
        %v1502 = vunpack.c.l.b16 %v1410
        %v1503 = vunpack.c.l.b16 %v1411
        %v1504 = vunpack.c.l.b16 %v1412
        %v1505 = vunpack.c.l.b16 %v1413
        %v1506 = vunpack.c.l.b16 %v1414
        %v1507 = vunpack.c.l.b16 %v1415
        %v1508 = vunpack.c.l.b16 %v1416
        %v1509 = vunpack.c.l.b16 %v1417
        %v1510 = vunpack.c.l.b16 %v1418
        %v1511 = vunpack.c.l.b16 %v1419
        %v1512 = vunpack.c.l.b16 %v1420
        %v1513 = vunpack.c.l.b16 %v1421
        %v1514 = vpack.c.b16 %v1499, %v1498
        %v1515 = vpack.c.b16 %v1501, %v1500
        %v1516 = vpack.c.b16 %v1503, %v1502
        %v1517 = vpack.c.b16 %v1505, %v1504
        %v1518 = vpack.c.b16 %v1507, %v1506
        %v1519 = vpack.c.b16 %v1509, %v1508
        %v1520 = vpack.c.b16 %v1511, %v1510
        %v1521 = vpack.c.b16 %v1513, %v1512
        %1530 = vmatprep.subr.bf16.mxu0 0
        %1531 = vmatpush1.bf16.msra.mxu0 %v1521
        %1532 = vmatprep.subr.bf16.mxu0 0
        %1533 = vmatpush1.bf16.msra.mxu0 %v1520
        %1534 = vmatprep.subr.bf16.mxu0 0
        %1535 = vmatpush1.bf16.msra.mxu0 %v1519
        %1536 = vmatprep.subr.bf16.mxu0 0
        %1537 = vmatpush1.bf16.msra.mxu0 %v1518
        %1538 = vmatprep.subr.bf16.mxu0 0
        %1539 = vmatpush1.bf16.msra.mxu0 %v1517
        %1540 = vmatprep.subr.bf16.mxu0 0
        %1541 = vmatpush1.bf16.msra.mxu0 %v1516
        %1542 = vmatprep.subr.bf16.mxu0 0
        %1543 = vmatpush1.bf16.msra.mxu0 %v1515
        %1544 = vmatprep.subr.bf16.mxu0 0
        %1545 = vmatpush1.bf16.msra.mxu0 %v1514
        %1546 = vmatprep.subr.bf16.mxu0 0
        %1547 = vmatpush2.bf16.msra.mxu0 0
        %1548 = vmatprep.subr.bf16.mxu0 0
        %1549 = vmatpush2.bf16.msra.mxu0 0
        %1550 = vmatprep.subr.bf16.mxu0 0
        %1551 = vmatpush2.bf16.msra.mxu0 0
        %1552 = vmatprep.subr.bf16.mxu0 0
        %1553 = vmatpush2.bf16.msra.mxu0 0
        %1554 = vmatprep.subr.bf16.mxu0 0
        %1555 = vmatpush2.bf16.msra.mxu0 0
        %1556 = vmatprep.subr.bf16.mxu0 0
        %1557 = vmatpush2.bf16.msra.mxu0 0
        %1558 = vmatprep.subr.bf16.mxu0 0
        %1559 = vmatpush2.bf16.msra.mxu0 0
        %1560 = vmatprep.subr.bf16.mxu0 0
        %1561 = vmatpush2.bf16.msra.mxu0 0
        %1562 = vmatprep.mubr.bf16.mxu0 0
        %1563 = vmatmul.mubr.bf16.gmra.mxu0 %v1462
        %v1564 = vpop.f32.mrf.mxu0
        %v1565 = vadd.f32 0.0, %v1564
        %v1566 = vpop.f32.mrf.mxu0
        %v1567 = vpop.f32.mrf.mxu0
        %v1568 = vadd.f32 0.0, %v1567
        %v1569 = vpop.f32.mrf.mxu0
        %1570 = vmatprep.mubr.bf16.mxu0 0
        %1571 = vmatmul.mubr.bf16.gmra.mxu0 %v1463
        %v1572 = vpop.f32.mrf.mxu0
        %v1573 = vadd.f32 0.0, %v1572
        %v1574 = vpop.f32.mrf.mxu0
        %v1575 = vpop.f32.mrf.mxu0
        %v1576 = vadd.f32 0.0, %v1575
        %v1577 = vpop.f32.mrf.mxu0
        %1578 = vmatprep.mubr.bf16.mxu0 0
        %1579 = vmatmul.mubr.bf16.gmra.mxu0 %v1464
        %v1580 = vpop.f32.mrf.mxu0
        %v1581 = vadd.f32 0.0, %v1580
        %v1582 = vpop.f32.mrf.mxu0
        %v1583 = vpop.f32.mrf.mxu0
        %v1584 = vadd.f32 0.0, %v1583
        %v1585 = vpop.f32.mrf.mxu0
        %1586 = vmatprep.mubr.bf16.mxu0 0
        %1587 = vmatmul.mubr.bf16.gmra.mxu0 %v1465
        %v1588 = vpop.f32.mrf.mxu0
        %v1589 = vadd.f32 0.0, %v1588
        %v1590 = vpop.f32.mrf.mxu0
        %v1591 = vpop.f32.mrf.mxu0
        %v1592 = vadd.f32 0.0, %v1591
        %v1593 = vpop.f32.mrf.mxu0
        %1594 = vmatprep.mubr.bf16.mxu0 0
        %1595 = vmatmul.mubr.bf16.gmra.mxu0 %v1466
        %v1596 = vpop.f32.mrf.mxu0
        %v1597 = vadd.f32 0.0, %v1596
        %v1598 = vpop.f32.mrf.mxu0
        %v1599 = vpop.f32.mrf.mxu0
        %v1600 = vadd.f32 0.0, %v1599
        %v1601 = vpop.f32.mrf.mxu0
        %1602 = vmatprep.mubr.bf16.mxu0 0
        %1603 = vmatmul.mubr.bf16.gmra.mxu0 %v1467
        %v1604 = vpop.f32.mrf.mxu0
        %v1605 = vadd.f32 0.0, %v1604
        %v1606 = vpop.f32.mrf.mxu0
        %v1607 = vpop.f32.mrf.mxu0
        %v1608 = vadd.f32 0.0, %v1607
        %v1609 = vpop.f32.mrf.mxu0
        %1610 = vmatprep.mubr.bf16.mxu0 0
        %1611 = vmatmul.mubr.bf16.gmra.mxu0 %v1468
        %v1612 = vpop.f32.mrf.mxu0
        %v1613 = vadd.f32 0.0, %v1612
        %v1614 = vpop.f32.mrf.mxu0
        %v1615 = vpop.f32.mrf.mxu0
        %v1616 = vadd.f32 0.0, %v1615
        %v1617 = vpop.f32.mrf.mxu0
        %1618 = vmatprep.mubr.bf16.mxu0 0
        %1619 = vmatmul.mubr.bf16.gmra.mxu0 %v1469
        %v1620 = vpop.f32.mrf.mxu0
        %v1621 = vadd.f32 0.0, %v1620
        %v1622 = vpop.f32.mrf.mxu0
        %v1623 = vpop.f32.mrf.mxu0
        %v1624 = vadd.f32 0.0, %v1623
        %v1625 = vpop.f32.mrf.mxu0
        %1626 = vmatprep.mubr.bf16.mxu0 0
        %1627 = vmatmul.mubr.bf16.gmra.mxu0 %v1470
        %v1628 = vpop.f32.mrf.mxu0
        %v1629 = vadd.f32 0.0, %v1628
        %v1630 = vpop.f32.mrf.mxu0
        %v1631 = vpop.f32.mrf.mxu0
        %v1632 = vadd.f32 0.0, %v1631
        %v1633 = vpop.f32.mrf.mxu0
        %1634 = vmatprep.mubr.bf16.mxu0 0
        %1635 = vmatmul.mubr.bf16.gmra.mxu0 %v1471
        %v1636 = vpop.f32.mrf.mxu0
        %v1637 = vadd.f32 0.0, %v1636
        %v1638 = vpop.f32.mrf.mxu0
        %v1639 = vpop.f32.mrf.mxu0
        %v1640 = vadd.f32 0.0, %v1639
        %v1641 = vpop.f32.mrf.mxu0
        %1642 = vdwg.mxu0
        %v1643 = vadd.f32 %v1361, %v1565
        %v1644 = vadd.f32 %v1362, %v1568
        %v1645 = vadd.f32 %v1363, %v1573
        %v1646 = vadd.f32 %v1364, %v1576
        %v1647 = vadd.f32 %v1365, %v1581
        %v1648 = vadd.f32 %v1366, %v1584
        %v1649 = vadd.f32 %v1367, %v1589
        %v1650 = vadd.f32 %v1368, %v1592
        %v1651 = vadd.f32 %v1369, %v1597
        %v1652 = vadd.f32 %v1370, %v1600
        %v1653 = vadd.f32 %v1371, %v1605
        %v1654 = vadd.f32 %v1372, %v1608
        %v1655 = vadd.f32 %v1373, %v1613
        %v1656 = vadd.f32 %v1374, %v1616
        %v1657 = vadd.f32 %v1375, %v1621
        %v1658 = vadd.f32 %v1376, %v1624
        %v1659 = vadd.f32 %v1377, %v1629
        %v1660 = vadd.f32 %v1378, %v1632
        %v1661 = vadd.f32 %v1379, %v1637
        %v1662 = vadd.f32 %v1380, %v1640
        %v1663 = vld [vmem:[%s1384] sm:$0xf]
        %v1664 = vld [vmem:[%s1384 + $0x4] sm:$0xf]
        %v1665 = vld [vmem:[%s1384 + $0x8] sm:$0x1]
        %v1666 = vld [vmem:[%s1384 + $0xc] sm:$0xf]
        %v1667 = vld [vmem:[%s1384 + $0x10] sm:$0xf]
        %v1668 = vld [vmem:[%s1384 + $0x14] sm:$0x1]
        %v1669 = vld [vmem:[%s1384 + $0x18] sm:$0xf]
        %v1670 = vld [vmem:[%s1384 + $0x1c] sm:$0xf]
        %v1671 = vld [vmem:[%s1384 + $0x20] sm:$0x1]
        %v1672 = vld [vmem:[%s1384 + $0x24] sm:$0xf]
        %v1673 = vld [vmem:[%s1384 + $0x28] sm:$0xf]
        %v1674 = vld [vmem:[%s1384 + $0x2c] sm:$0x1]
        %v1675 = vld [vmem:[%s1384 + $0x30] sm:$0xf]
        %v1676 = vld [vmem:[%s1384 + $0x34] sm:$0xf]
        %v1677 = vld [vmem:[%s1384 + $0x38] sm:$0x1]
        %v1678 = vld [vmem:[%s1384 + $0x3c] sm:$0xf]
        %v1679 = vld [vmem:[%s1384 + $0x40] sm:$0xf]
        %v1680 = vld [vmem:[%s1384 + $0x44] sm:$0x1]
        %v1681 = vld [vmem:[%s1384 + $0x48] sm:$0xf]
        %v1682 = vld [vmem:[%s1384 + $0x4c] sm:$0xf]
        %v1683 = vld [vmem:[%s1384 + $0x50] sm:$0x1]
        %v1684 = vld [vmem:[%s1384 + $0x54] sm:$0xf]
        %v1685 = vld [vmem:[%s1384 + $0x58] sm:$0xf]
        %v1686 = vld [vmem:[%s1384 + $0x5c] sm:$0x1]
        %v1687 = vld [vmem:[%s1384 + $0x60] sm:$0xf]
        %v1688 = vld [vmem:[%s1384 + $0x64] sm:$0xf]
        %v1689 = vld [vmem:[%s1384 + $0x68] sm:$0x1]
        %v1690 = vld [vmem:[%s1384 + $0x6c] sm:$0xf]
        %v1691 = vld [vmem:[%s1384 + $0x70] sm:$0xf]
        %v1692 = vld [vmem:[%s1384 + $0x74] sm:$0x1]
        %v1694 = vshrl.u32 %v1663, 16
        %v1696 = vrot.slane %v1694, 4
        %v1697 = vshll.u32 %v1663, 16
        %v1699 = vrot.slane %v1697, 5
        %v1700 = vor.u32 %v1696, %v1699
        %v1701 = vrot.slane %v1700, 4
        %v1703 = vshll.u32 %v1664, 16
        %v1705 = vrot.slane %v1703, 5
        %v1706 = vsel %vm360, %v1701, %v1705
        %v1707 = vshrl.u32 %v1664, 16
        %v1709 = vrot.slane %v1707, 4
        %v1710 = vor.u32 %v1709, %v1705
        %v1711 = vrot.slane %v1710, 4
        %v1713 = vshll.u32 %v1665, 16
        %v1715 = vrot.slane %v1713, 5
        %v1716 = vsel %vm360, %v1711, %v1715
        %v1718 = vshrl.u32 %v1666, 16
        %v1720 = vrot.slane %v1718, 4
        %v1721 = vshll.u32 %v1666, 16
        %v1723 = vrot.slane %v1721, 5
        %v1724 = vor.u32 %v1720, %v1723
        %v1725 = vrot.slane %v1724, 4
        %v1727 = vshll.u32 %v1667, 16
        %v1729 = vrot.slane %v1727, 5
        %v1730 = vsel %vm360, %v1725, %v1729
        %v1731 = vshrl.u32 %v1667, 16
        %v1733 = vrot.slane %v1731, 4
        %v1734 = vor.u32 %v1733, %v1729
        %v1735 = vrot.slane %v1734, 4
        %v1737 = vshll.u32 %v1668, 16
        %v1739 = vrot.slane %v1737, 5
        %v1740 = vsel %vm360, %v1735, %v1739
        %v1742 = vshrl.u32 %v1669, 16
        %v1744 = vrot.slane %v1742, 4
        %v1745 = vshll.u32 %v1669, 16
        %v1747 = vrot.slane %v1745, 5
        %v1748 = vor.u32 %v1744, %v1747
        %v1749 = vrot.slane %v1748, 4
        %v1751 = vshll.u32 %v1670, 16
        %v1753 = vrot.slane %v1751, 5
        %v1754 = vsel %vm360, %v1749, %v1753
        %v1755 = vshrl.u32 %v1670, 16
        %v1757 = vrot.slane %v1755, 4
        %v1758 = vor.u32 %v1757, %v1753
        %v1759 = vrot.slane %v1758, 4
        %v1761 = vshll.u32 %v1671, 16
        %v1763 = vrot.slane %v1761, 5
        %v1764 = vsel %vm360, %v1759, %v1763
        %v1766 = vshrl.u32 %v1672, 16
        %v1768 = vrot.slane %v1766, 4
        %v1769 = vshll.u32 %v1672, 16
        %v1771 = vrot.slane %v1769, 5
        %v1772 = vor.u32 %v1768, %v1771
        %v1773 = vrot.slane %v1772, 4
        %v1775 = vshll.u32 %v1673, 16
        %v1777 = vrot.slane %v1775, 5
        %v1778 = vsel %vm360, %v1773, %v1777
        %v1779 = vshrl.u32 %v1673, 16
        %v1781 = vrot.slane %v1779, 4
        %v1782 = vor.u32 %v1781, %v1777
        %v1783 = vrot.slane %v1782, 4
        %v1785 = vshll.u32 %v1674, 16
        %v1787 = vrot.slane %v1785, 5
        %v1788 = vsel %vm360, %v1783, %v1787
        %v1790 = vshrl.u32 %v1675, 16
        %v1792 = vrot.slane %v1790, 4
        %v1793 = vshll.u32 %v1675, 16
        %v1795 = vrot.slane %v1793, 5
        %v1796 = vor.u32 %v1792, %v1795
        %v1797 = vrot.slane %v1796, 4
        %v1799 = vshll.u32 %v1676, 16
        %v1801 = vrot.slane %v1799, 5
        %v1802 = vsel %vm360, %v1797, %v1801
        %v1803 = vshrl.u32 %v1676, 16
        %v1805 = vrot.slane %v1803, 4
        %v1806 = vor.u32 %v1805, %v1801
        %v1807 = vrot.slane %v1806, 4
        %v1809 = vshll.u32 %v1677, 16
        %v1811 = vrot.slane %v1809, 5
        %v1812 = vsel %vm360, %v1807, %v1811
        %v1814 = vshrl.u32 %v1678, 16
        %v1816 = vrot.slane %v1814, 4
        %v1817 = vshll.u32 %v1678, 16
        %v1819 = vrot.slane %v1817, 5
        %v1820 = vor.u32 %v1816, %v1819
        %v1821 = vrot.slane %v1820, 4
        %v1823 = vshll.u32 %v1679, 16
        %v1825 = vrot.slane %v1823, 5
        %v1826 = vsel %vm360, %v1821, %v1825
        %v1827 = vshrl.u32 %v1679, 16
        %v1829 = vrot.slane %v1827, 4
        %v1830 = vor.u32 %v1829, %v1825
        %v1831 = vrot.slane %v1830, 4
        %v1833 = vshll.u32 %v1680, 16
        %v1835 = vrot.slane %v1833, 5
        %v1836 = vsel %vm360, %v1831, %v1835
        %v1838 = vshrl.u32 %v1681, 16
        %v1840 = vrot.slane %v1838, 4
        %v1841 = vshll.u32 %v1681, 16
        %v1843 = vrot.slane %v1841, 5
        %v1844 = vor.u32 %v1840, %v1843
        %v1845 = vrot.slane %v1844, 4
        %v1847 = vshll.u32 %v1682, 16
        %v1849 = vrot.slane %v1847, 5
        %v1850 = vsel %vm360, %v1845, %v1849
        %v1851 = vshrl.u32 %v1682, 16
        %v1853 = vrot.slane %v1851, 4
        %v1854 = vor.u32 %v1853, %v1849
        %v1855 = vrot.slane %v1854, 4
        %v1857 = vshll.u32 %v1683, 16
        %v1859 = vrot.slane %v1857, 5
        %v1860 = vsel %vm360, %v1855, %v1859
        %v1862 = vshrl.u32 %v1684, 16
        %v1864 = vrot.slane %v1862, 4
        %v1865 = vshll.u32 %v1684, 16
        %v1867 = vrot.slane %v1865, 5
        %v1868 = vor.u32 %v1864, %v1867
        %v1869 = vrot.slane %v1868, 4
        %v1871 = vshll.u32 %v1685, 16
        %v1873 = vrot.slane %v1871, 5
        %v1874 = vsel %vm360, %v1869, %v1873
        %v1875 = vshrl.u32 %v1685, 16
        %v1877 = vrot.slane %v1875, 4
        %v1878 = vor.u32 %v1877, %v1873
        %v1879 = vrot.slane %v1878, 4
        %v1881 = vshll.u32 %v1686, 16
        %v1883 = vrot.slane %v1881, 5
        %v1884 = vsel %vm360, %v1879, %v1883
        %v1886 = vshrl.u32 %v1687, 16
        %v1888 = vrot.slane %v1886, 4
        %v1889 = vshll.u32 %v1687, 16
        %v1891 = vrot.slane %v1889, 5
        %v1892 = vor.u32 %v1888, %v1891
        %v1893 = vrot.slane %v1892, 4
        %v1895 = vshll.u32 %v1688, 16
        %v1897 = vrot.slane %v1895, 5
        %v1898 = vsel %vm360, %v1893, %v1897
        %v1899 = vshrl.u32 %v1688, 16
        %v1901 = vrot.slane %v1899, 4
        %v1902 = vor.u32 %v1901, %v1897
        %v1903 = vrot.slane %v1902, 4
        %v1905 = vshll.u32 %v1689, 16
        %v1907 = vrot.slane %v1905, 5
        %v1908 = vsel %vm360, %v1903, %v1907
        %v1910 = vshrl.u32 %v1690, 16
        %v1912 = vrot.slane %v1910, 4
        %v1913 = vshll.u32 %v1690, 16
        %v1915 = vrot.slane %v1913, 5
        %v1916 = vor.u32 %v1912, %v1915
        %v1917 = vrot.slane %v1916, 4
        %v1919 = vshll.u32 %v1691, 16
        %v1921 = vrot.slane %v1919, 5
        %v1922 = vsel %vm360, %v1917, %v1921
        %v1923 = vshrl.u32 %v1691, 16
        %v1925 = vrot.slane %v1923, 4
        %v1926 = vor.u32 %v1925, %v1921
        %v1927 = vrot.slane %v1926, 4
        %v1929 = vshll.u32 %v1692, 16
        %v1931 = vrot.slane %v1929, 5
        %v1932 = vsel %vm360, %v1927, %v1931
        %s1933 = scalar_lea.vmem %s1, 256
        %v1934 = vld [vmem:[%s1933] sm:$0xf]
        %v1935 = vld [vmem:[%s1933 + $0x4] sm:$0xf]
        %v1936 = vld [vmem:[%s1933 + $0x8] sm:$0xf]
        %v1937 = vld [vmem:[%s1933 + $0xc] sm:$0xf]
        %v1938 = vld [vmem:[%s1933 + $0x10] sm:$0xf]
        %v1939 = vld [vmem:[%s1933 + $0x14] sm:$0xf]
        %v1940 = vld [vmem:[%s1933 + $0x18] sm:$0xf]
        %v1941 = vld [vmem:[%s1933 + $0x1c] sm:$0xf]
        %v1942 = vld [vmem:[%s1933 + $0x20] sm:$0xf]
        %v1943 = vld [vmem:[%s1933 + $0x24] sm:$0xf]
        %v1944 = vld [vmem:[%s1933 + $0x28] sm:$0xf]
        %v1945 = vld [vmem:[%s1933 + $0x2c] sm:$0xf]
        %v1946 = vld [vmem:[%s1933 + $0x30] sm:$0xf]
        %v1947 = vld [vmem:[%s1933 + $0x34] sm:$0xf]
        %v1948 = vld [vmem:[%s1933 + $0x38] sm:$0xf]
        %v1949 = vld [vmem:[%s1933 + $0x3c] sm:$0xf]
        %v1950 = vunpack.c.l.b16 %v1706
        %v1951 = vunpack.c.l.b16 %v1716
        %v1952 = vunpack.c.l.b16 %v1730
        %v1953 = vunpack.c.l.b16 %v1740
        %v1954 = vunpack.c.l.b16 %v1754
        %v1955 = vunpack.c.l.b16 %v1764
        %v1956 = vunpack.c.l.b16 %v1778
        %v1957 = vunpack.c.l.b16 %v1788
        %v1958 = vunpack.c.l.b16 %v1802
        %v1959 = vunpack.c.l.b16 %v1812
        %v1960 = vunpack.c.l.b16 %v1826
        %v1961 = vunpack.c.l.b16 %v1836
        %v1962 = vunpack.c.l.b16 %v1850
        %v1963 = vunpack.c.l.b16 %v1860
        %v1964 = vunpack.c.l.b16 %v1874
        %v1965 = vunpack.c.l.b16 %v1884
        %v1966 = vunpack.c.l.b16 %v1898
        %v1967 = vunpack.c.l.b16 %v1908
        %v1968 = vunpack.c.l.b16 %v1922
        %v1969 = vunpack.c.l.b16 %v1932
        %v1970 = vpack.c.b16 %v1951, %v1950
        %v1971 = vpack.c.b16 %v1953, %v1952
        %v1972 = vpack.c.b16 %v1955, %v1954
        %v1973 = vpack.c.b16 %v1957, %v1956
        %v1974 = vpack.c.b16 %v1959, %v1958
        %v1975 = vpack.c.b16 %v1961, %v1960
        %v1976 = vpack.c.b16 %v1963, %v1962
        %v1977 = vpack.c.b16 %v1965, %v1964
        %v1978 = vpack.c.b16 %v1967, %v1966
        %v1979 = vpack.c.b16 %v1969, %v1968
        %v2006 = vunpack.c.l.b16 %v1934
        %v2007 = vunpack.c.l.b16 %v1935
        %v2008 = vunpack.c.l.b16 %v1936
        %v2009 = vunpack.c.l.b16 %v1937
        %v2010 = vunpack.c.l.b16 %v1938
        %v2011 = vunpack.c.l.b16 %v1939
        %v2012 = vunpack.c.l.b16 %v1940
        %v2013 = vunpack.c.l.b16 %v1941
        %v2014 = vunpack.c.l.b16 %v1942
        %v2015 = vunpack.c.l.b16 %v1943
        %v2016 = vunpack.c.l.b16 %v1944
        %v2017 = vunpack.c.l.b16 %v1945
        %v2018 = vunpack.c.l.b16 %v1946
        %v2019 = vunpack.c.l.b16 %v1947
        %v2020 = vunpack.c.l.b16 %v1948
        %v2021 = vunpack.c.l.b16 %v1949
        %v2022 = vpack.c.b16 %v2007, %v2006
        %v2023 = vpack.c.b16 %v2009, %v2008
        %v2024 = vpack.c.b16 %v2011, %v2010
        %v2025 = vpack.c.b16 %v2013, %v2012
        %v2026 = vpack.c.b16 %v2015, %v2014
        %v2027 = vpack.c.b16 %v2017, %v2016
        %v2028 = vpack.c.b16 %v2019, %v2018
        %v2029 = vpack.c.b16 %v2021, %v2020
        %2038 = vmatprep.subr.bf16.mxu0 0
        %2039 = vmatpush1.bf16.msra.mxu0 %v2029
        %2040 = vmatprep.subr.bf16.mxu0 0
        %2041 = vmatpush1.bf16.msra.mxu0 %v2028
        %2042 = vmatprep.subr.bf16.mxu0 0
        %2043 = vmatpush1.bf16.msra.mxu0 %v2027
        %2044 = vmatprep.subr.bf16.mxu0 0
        %2045 = vmatpush1.bf16.msra.mxu0 %v2026
        %2046 = vmatprep.subr.bf16.mxu0 0
        %2047 = vmatpush1.bf16.msra.mxu0 %v2025
        %2048 = vmatprep.subr.bf16.mxu0 0
        %2049 = vmatpush1.bf16.msra.mxu0 %v2024
        %2050 = vmatprep.subr.bf16.mxu0 0
        %2051 = vmatpush1.bf16.msra.mxu0 %v2023
        %2052 = vmatprep.subr.bf16.mxu0 0
        %2053 = vmatpush1.bf16.msra.mxu0 %v2022
        %2054 = vmatprep.subr.bf16.mxu0 0
        %2055 = vmatpush2.bf16.msra.mxu0 0
        %2056 = vmatprep.subr.bf16.mxu0 0
        %2057 = vmatpush2.bf16.msra.mxu0 0
        %2058 = vmatprep.subr.bf16.mxu0 0
        %2059 = vmatpush2.bf16.msra.mxu0 0
        %2060 = vmatprep.subr.bf16.mxu0 0
        %2061 = vmatpush2.bf16.msra.mxu0 0
        %2062 = vmatprep.subr.bf16.mxu0 0
        %2063 = vmatpush2.bf16.msra.mxu0 0
        %2064 = vmatprep.subr.bf16.mxu0 0
        %2065 = vmatpush2.bf16.msra.mxu0 0
        %2066 = vmatprep.subr.bf16.mxu0 0
        %2067 = vmatpush2.bf16.msra.mxu0 0
        %2068 = vmatprep.subr.bf16.mxu0 0
        %2069 = vmatpush2.bf16.msra.mxu0 0
        %2070 = vmatprep.mubr.bf16.mxu0 0
        %2071 = vmatmul.mubr.bf16.gmra.mxu0 %v1970
        %v2072 = vpop.f32.mrf.mxu0
        %v2073 = vadd.f32 0.0, %v2072
        %v2074 = vpop.f32.mrf.mxu0
        %v2075 = vpop.f32.mrf.mxu0
        %v2076 = vadd.f32 0.0, %v2075
        %v2077 = vpop.f32.mrf.mxu0
        %2078 = vmatprep.mubr.bf16.mxu0 0
        %2079 = vmatmul.mubr.bf16.gmra.mxu0 %v1971
        %v2080 = vpop.f32.mrf.mxu0
        %v2081 = vadd.f32 0.0, %v2080
        %v2082 = vpop.f32.mrf.mxu0
        %v2083 = vpop.f32.mrf.mxu0
        %v2084 = vadd.f32 0.0, %v2083
        %v2085 = vpop.f32.mrf.mxu0
        %2086 = vmatprep.mubr.bf16.mxu0 0
        %2087 = vmatmul.mubr.bf16.gmra.mxu0 %v1972
        %v2088 = vpop.f32.mrf.mxu0
        %v2089 = vadd.f32 0.0, %v2088
        %v2090 = vpop.f32.mrf.mxu0
        %v2091 = vpop.f32.mrf.mxu0
        %v2092 = vadd.f32 0.0, %v2091
        %v2093 = vpop.f32.mrf.mxu0
        %2094 = vmatprep.mubr.bf16.mxu0 0
        %2095 = vmatmul.mubr.bf16.gmra.mxu0 %v1973
        %v2096 = vpop.f32.mrf.mxu0
        %v2097 = vadd.f32 0.0, %v2096
        %v2098 = vpop.f32.mrf.mxu0
        %v2099 = vpop.f32.mrf.mxu0
        %v2100 = vadd.f32 0.0, %v2099
        %v2101 = vpop.f32.mrf.mxu0
        %2102 = vmatprep.mubr.bf16.mxu0 0
        %2103 = vmatmul.mubr.bf16.gmra.mxu0 %v1974
        %v2104 = vpop.f32.mrf.mxu0
        %v2105 = vadd.f32 0.0, %v2104
        %v2106 = vpop.f32.mrf.mxu0
        %v2107 = vpop.f32.mrf.mxu0
        %v2108 = vadd.f32 0.0, %v2107
        %v2109 = vpop.f32.mrf.mxu0
        %2110 = vmatprep.mubr.bf16.mxu0 0
        %2111 = vmatmul.mubr.bf16.gmra.mxu0 %v1975
        %v2112 = vpop.f32.mrf.mxu0
        %v2113 = vadd.f32 0.0, %v2112
        %v2114 = vpop.f32.mrf.mxu0
        %v2115 = vpop.f32.mrf.mxu0
        %v2116 = vadd.f32 0.0, %v2115
        %v2117 = vpop.f32.mrf.mxu0
        %2118 = vmatprep.mubr.bf16.mxu0 0
        %2119 = vmatmul.mubr.bf16.gmra.mxu0 %v1976
        %v2120 = vpop.f32.mrf.mxu0
        %v2121 = vadd.f32 0.0, %v2120
        %v2122 = vpop.f32.mrf.mxu0
        %v2123 = vpop.f32.mrf.mxu0
        %v2124 = vadd.f32 0.0, %v2123
        %v2125 = vpop.f32.mrf.mxu0
        %2126 = vmatprep.mubr.bf16.mxu0 0
        %2127 = vmatmul.mubr.bf16.gmra.mxu0 %v1977
        %v2128 = vpop.f32.mrf.mxu0
        %v2129 = vadd.f32 0.0, %v2128
        %v2130 = vpop.f32.mrf.mxu0
        %v2131 = vpop.f32.mrf.mxu0
        %v2132 = vadd.f32 0.0, %v2131
        %v2133 = vpop.f32.mrf.mxu0
        %2134 = vmatprep.mubr.bf16.mxu0 0
        %2135 = vmatmul.mubr.bf16.gmra.mxu0 %v1978
        %v2136 = vpop.f32.mrf.mxu0
        %v2137 = vadd.f32 0.0, %v2136
        %v2138 = vpop.f32.mrf.mxu0
        %v2139 = vpop.f32.mrf.mxu0
        %v2140 = vadd.f32 0.0, %v2139
        %v2141 = vpop.f32.mrf.mxu0
        %2142 = vmatprep.mubr.bf16.mxu0 0
        %2143 = vmatmul.mubr.bf16.gmra.mxu0 %v1979
        %v2144 = vpop.f32.mrf.mxu0
        %v2145 = vadd.f32 0.0, %v2144
        %v2146 = vpop.f32.mrf.mxu0
        %v2147 = vpop.f32.mrf.mxu0
        %v2148 = vadd.f32 0.0, %v2147
        %v2149 = vpop.f32.mrf.mxu0
        %2150 = vdwg.mxu0
        %v2151 = vadd.f32 %v1643, %v2073
        %v2152 = vadd.f32 %v1644, %v2076
        %v2153 = vadd.f32 %v1645, %v2081
        %v2154 = vadd.f32 %v1646, %v2084
        %v2155 = vadd.f32 %v1647, %v2089
        %v2156 = vadd.f32 %v1648, %v2092
        %v2157 = vadd.f32 %v1649, %v2097
        %v2158 = vadd.f32 %v1650, %v2100
        %v2159 = vadd.f32 %v1651, %v2105
        %v2160 = vadd.f32 %v1652, %v2108
        %v2161 = vadd.f32 %v1653, %v2113
        %v2162 = vadd.f32 %v1654, %v2116
        %v2163 = vadd.f32 %v1655, %v2121
        %v2164 = vadd.f32 %v1656, %v2124
        %v2165 = vadd.f32 %v1657, %v2129
        %v2166 = vadd.f32 %v1658, %v2132
        %v2167 = vadd.f32 %v1659, %v2137
        %v2168 = vadd.f32 %v1660, %v2140
        %v2169 = vadd.f32 %v1661, %v2145
        %v2170 = vadd.f32 %v1662, %v2148
        %v2171 = vld [vmem:[%s1384] sm:$0xe]
        %v2172 = vld [vmem:[%s1384 + $0xc] sm:$0xe]
        %v2173 = vld [vmem:[%s1384 + $0x18] sm:$0xe]
        %v2174 = vld [vmem:[%s1384 + $0x24] sm:$0xe]
        %v2175 = vld [vmem:[%s1384 + $0x30] sm:$0xe]
        %v2176 = vld [vmem:[%s1384 + $0x3c] sm:$0xe]
        %v2177 = vld [vmem:[%s1384 + $0x48] sm:$0xe]
        %v2178 = vld [vmem:[%s1384 + $0x54] sm:$0xe]
        %v2179 = vld [vmem:[%s1384 + $0x60] sm:$0xe]
        %v2180 = vld [vmem:[%s1384 + $0x6c] sm:$0xe]
        %v2211 = vrot.slane %v2171, 5
        %v2212 = vrot.slane %v2211, 4
        %v2213 = vrot.slane %v1664, 5
        %v2214 = vsel %vm1072, %v2212, %v2213
        %v2215 = vrot.slane %v2213, 4
        %v2216 = vrot.slane %v1665, 5
        %v2217 = vsel %vm1072, %v2215, %v2216
        %v2218 = vrot.slane %v2172, 5
        %v2219 = vrot.slane %v2218, 4
        %v2220 = vrot.slane %v1667, 5
        %v2221 = vsel %vm1072, %v2219, %v2220
        %v2222 = vrot.slane %v2220, 4
        %v2223 = vrot.slane %v1668, 5
        %v2224 = vsel %vm1072, %v2222, %v2223
        %v2225 = vrot.slane %v2173, 5
        %v2226 = vrot.slane %v2225, 4
        %v2227 = vrot.slane %v1670, 5
        %v2228 = vsel %vm1072, %v2226, %v2227
        %v2229 = vrot.slane %v2227, 4
        %v2230 = vrot.slane %v1671, 5
        %v2231 = vsel %vm1072, %v2229, %v2230
        %v2232 = vrot.slane %v2174, 5
        %v2233 = vrot.slane %v2232, 4
        %v2234 = vrot.slane %v1673, 5
        %v2235 = vsel %vm1072, %v2233, %v2234
        %v2236 = vrot.slane %v2234, 4
        %v2237 = vrot.slane %v1674, 5
        %v2238 = vsel %vm1072, %v2236, %v2237
        %v2239 = vrot.slane %v2175, 5
        %v2240 = vrot.slane %v2239, 4
        %v2241 = vrot.slane %v1676, 5
        %v2242 = vsel %vm1072, %v2240, %v2241
        %v2243 = vrot.slane %v2241, 4
        %v2244 = vrot.slane %v1677, 5
        %v2245 = vsel %vm1072, %v2243, %v2244
        %v2246 = vrot.slane %v2176, 5
        %v2247 = vrot.slane %v2246, 4
        %v2248 = vrot.slane %v1679, 5
        %v2249 = vsel %vm1072, %v2247, %v2248
        %v2250 = vrot.slane %v2248, 4
        %v2251 = vrot.slane %v1680, 5
        %v2252 = vsel %vm1072, %v2250, %v2251
        %v2253 = vrot.slane %v2177, 5
        %v2254 = vrot.slane %v2253, 4
        %v2255 = vrot.slane %v1682, 5
        %v2256 = vsel %vm1072, %v2254, %v2255
        %v2257 = vrot.slane %v2255, 4
        %v2258 = vrot.slane %v1683, 5
        %v2259 = vsel %vm1072, %v2257, %v2258
        %v2260 = vrot.slane %v2178, 5
        %v2261 = vrot.slane %v2260, 4
        %v2262 = vrot.slane %v1685, 5
        %v2263 = vsel %vm1072, %v2261, %v2262
        %v2264 = vrot.slane %v2262, 4
        %v2265 = vrot.slane %v1686, 5
        %v2266 = vsel %vm1072, %v2264, %v2265
        %v2267 = vrot.slane %v2179, 5
        %v2268 = vrot.slane %v2267, 4
        %v2269 = vrot.slane %v1688, 5
        %v2270 = vsel %vm1072, %v2268, %v2269
        %v2271 = vrot.slane %v2269, 4
        %v2272 = vrot.slane %v1689, 5
        %v2273 = vsel %vm1072, %v2271, %v2272
        %v2274 = vrot.slane %v2180, 5
        %v2275 = vrot.slane %v2274, 4
        %v2276 = vrot.slane %v1691, 5
        %v2277 = vsel %vm1072, %v2275, %v2276
        %v2278 = vrot.slane %v2276, 4
        %v2279 = vrot.slane %v1692, 5
        %v2280 = vsel %vm1072, %v2278, %v2279
        %s2281 = scalar_lea.vmem %s1, 320
        %v2282 = vld [vmem:[%s2281] sm:$0xf]
        %v2283 = vld [vmem:[%s2281 + $0x4] sm:$0xf]
        %v2284 = vld [vmem:[%s2281 + $0x8] sm:$0xf]
        %v2285 = vld [vmem:[%s2281 + $0xc] sm:$0xf]
        %v2286 = vld [vmem:[%s2281 + $0x10] sm:$0xf]
        %v2287 = vld [vmem:[%s2281 + $0x14] sm:$0xf]
        %v2288 = vld [vmem:[%s2281 + $0x18] sm:$0xf]
        %v2289 = vld [vmem:[%s2281 + $0x1c] sm:$0xf]
        %v2290 = vld [vmem:[%s2281 + $0x20] sm:$0xf]
        %v2291 = vld [vmem:[%s2281 + $0x24] sm:$0xf]
        %v2292 = vld [vmem:[%s2281 + $0x28] sm:$0xf]
        %v2293 = vld [vmem:[%s2281 + $0x2c] sm:$0xf]
        %v2294 = vld [vmem:[%s2281 + $0x30] sm:$0xf]
        %v2295 = vld [vmem:[%s2281 + $0x34] sm:$0xf]
        %v2296 = vld [vmem:[%s2281 + $0x38] sm:$0xf]
        %v2297 = vld [vmem:[%s2281 + $0x3c] sm:$0xf]
        %v2298 = vunpack.c.l.b16 %v2214
        %v2299 = vunpack.c.l.b16 %v2217
        %v2300 = vunpack.c.l.b16 %v2221
        %v2301 = vunpack.c.l.b16 %v2224
        %v2302 = vunpack.c.l.b16 %v2228
        %v2303 = vunpack.c.l.b16 %v2231
        %v2304 = vunpack.c.l.b16 %v2235
        %v2305 = vunpack.c.l.b16 %v2238
        %v2306 = vunpack.c.l.b16 %v2242
        %v2307 = vunpack.c.l.b16 %v2245
        %v2308 = vunpack.c.l.b16 %v2249
        %v2309 = vunpack.c.l.b16 %v2252
        %v2310 = vunpack.c.l.b16 %v2256
        %v2311 = vunpack.c.l.b16 %v2259
        %v2312 = vunpack.c.l.b16 %v2263
        %v2313 = vunpack.c.l.b16 %v2266
        %v2314 = vunpack.c.l.b16 %v2270
        %v2315 = vunpack.c.l.b16 %v2273
        %v2316 = vunpack.c.l.b16 %v2277
        %v2317 = vunpack.c.l.b16 %v2280
        %v2318 = vpack.c.b16 %v2299, %v2298
        %v2319 = vpack.c.b16 %v2301, %v2300
        %v2320 = vpack.c.b16 %v2303, %v2302
        %v2321 = vpack.c.b16 %v2305, %v2304
        %v2322 = vpack.c.b16 %v2307, %v2306
        %v2323 = vpack.c.b16 %v2309, %v2308
        %v2324 = vpack.c.b16 %v2311, %v2310
        %v2325 = vpack.c.b16 %v2313, %v2312
        %v2326 = vpack.c.b16 %v2315, %v2314
        %v2327 = vpack.c.b16 %v2317, %v2316
        %v2354 = vunpack.c.l.b16 %v2282
        %v2355 = vunpack.c.l.b16 %v2283
        %v2356 = vunpack.c.l.b16 %v2284
        %v2357 = vunpack.c.l.b16 %v2285
        %v2358 = vunpack.c.l.b16 %v2286
        %v2359 = vunpack.c.l.b16 %v2287
        %v2360 = vunpack.c.l.b16 %v2288
        %v2361 = vunpack.c.l.b16 %v2289
        %v2362 = vunpack.c.l.b16 %v2290
        %v2363 = vunpack.c.l.b16 %v2291
        %v2364 = vunpack.c.l.b16 %v2292
        %v2365 = vunpack.c.l.b16 %v2293
        %v2366 = vunpack.c.l.b16 %v2294
        %v2367 = vunpack.c.l.b16 %v2295
        %v2368 = vunpack.c.l.b16 %v2296
        %v2369 = vunpack.c.l.b16 %v2297
        %v2370 = vpack.c.b16 %v2355, %v2354
        %v2371 = vpack.c.b16 %v2357, %v2356
        %v2372 = vpack.c.b16 %v2359, %v2358
        %v2373 = vpack.c.b16 %v2361, %v2360
        %v2374 = vpack.c.b16 %v2363, %v2362
        %v2375 = vpack.c.b16 %v2365, %v2364
        %v2376 = vpack.c.b16 %v2367, %v2366
        %v2377 = vpack.c.b16 %v2369, %v2368
        %2386 = vmatprep.subr.bf16.mxu0 0
        %2387 = vmatpush1.bf16.msra.mxu0 %v2377
        %2388 = vmatprep.subr.bf16.mxu0 0
        %2389 = vmatpush1.bf16.msra.mxu0 %v2376
        %2390 = vmatprep.subr.bf16.mxu0 0
        %2391 = vmatpush1.bf16.msra.mxu0 %v2375
        %2392 = vmatprep.subr.bf16.mxu0 0
        %2393 = vmatpush1.bf16.msra.mxu0 %v2374
        %2394 = vmatprep.subr.bf16.mxu0 0
        %2395 = vmatpush1.bf16.msra.mxu0 %v2373
        %2396 = vmatprep.subr.bf16.mxu0 0
        %2397 = vmatpush1.bf16.msra.mxu0 %v2372
        %2398 = vmatprep.subr.bf16.mxu0 0
        %2399 = vmatpush1.bf16.msra.mxu0 %v2371
        %2400 = vmatprep.subr.bf16.mxu0 0
        %2401 = vmatpush1.bf16.msra.mxu0 %v2370
        %2402 = vmatprep.subr.bf16.mxu0 0
        %2403 = vmatpush2.bf16.msra.mxu0 0
        %2404 = vmatprep.subr.bf16.mxu0 0
        %2405 = vmatpush2.bf16.msra.mxu0 0
        %2406 = vmatprep.subr.bf16.mxu0 0
        %2407 = vmatpush2.bf16.msra.mxu0 0
        %2408 = vmatprep.subr.bf16.mxu0 0
        %2409 = vmatpush2.bf16.msra.mxu0 0
        %2410 = vmatprep.subr.bf16.mxu0 0
        %2411 = vmatpush2.bf16.msra.mxu0 0
        %2412 = vmatprep.subr.bf16.mxu0 0
        %2413 = vmatpush2.bf16.msra.mxu0 0
        %2414 = vmatprep.subr.bf16.mxu0 0
        %2415 = vmatpush2.bf16.msra.mxu0 0
        %2416 = vmatprep.subr.bf16.mxu0 0
        %2417 = vmatpush2.bf16.msra.mxu0 0
        %2418 = vmatprep.mubr.bf16.mxu0 0
        %2419 = vmatmul.mubr.bf16.gmra.mxu0 %v2318
        %v2420 = vpop.f32.mrf.mxu0
        %v2421 = vadd.f32 0.0, %v2420
        %v2422 = vpop.f32.mrf.mxu0
        %v2423 = vpop.f32.mrf.mxu0
        %v2424 = vadd.f32 0.0, %v2423
        %v2425 = vpop.f32.mrf.mxu0
        %2426 = vmatprep.mubr.bf16.mxu0 0
        %2427 = vmatmul.mubr.bf16.gmra.mxu0 %v2319
        %v2428 = vpop.f32.mrf.mxu0
        %v2429 = vadd.f32 0.0, %v2428
        %v2430 = vpop.f32.mrf.mxu0
        %v2431 = vpop.f32.mrf.mxu0
        %v2432 = vadd.f32 0.0, %v2431
        %v2433 = vpop.f32.mrf.mxu0
        %2434 = vmatprep.mubr.bf16.mxu0 0
        %2435 = vmatmul.mubr.bf16.gmra.mxu0 %v2320
        %v2436 = vpop.f32.mrf.mxu0
        %v2437 = vadd.f32 0.0, %v2436
        %v2438 = vpop.f32.mrf.mxu0
        %v2439 = vpop.f32.mrf.mxu0
        %v2440 = vadd.f32 0.0, %v2439
        %v2441 = vpop.f32.mrf.mxu0
        %2442 = vmatprep.mubr.bf16.mxu0 0
        %2443 = vmatmul.mubr.bf16.gmra.mxu0 %v2321
        %v2444 = vpop.f32.mrf.mxu0
        %v2445 = vadd.f32 0.0, %v2444
        %v2446 = vpop.f32.mrf.mxu0
        %v2447 = vpop.f32.mrf.mxu0
        %v2448 = vadd.f32 0.0, %v2447
        %v2449 = vpop.f32.mrf.mxu0
        %2450 = vmatprep.mubr.bf16.mxu0 0
        %2451 = vmatmul.mubr.bf16.gmra.mxu0 %v2322
        %v2452 = vpop.f32.mrf.mxu0
        %v2453 = vadd.f32 0.0, %v2452
        %v2454 = vpop.f32.mrf.mxu0
        %v2455 = vpop.f32.mrf.mxu0
        %v2456 = vadd.f32 0.0, %v2455
        %v2457 = vpop.f32.mrf.mxu0
        %2458 = vmatprep.mubr.bf16.mxu0 0
        %2459 = vmatmul.mubr.bf16.gmra.mxu0 %v2323
        %v2460 = vpop.f32.mrf.mxu0
        %v2461 = vadd.f32 0.0, %v2460
        %v2462 = vpop.f32.mrf.mxu0
        %v2463 = vpop.f32.mrf.mxu0
        %v2464 = vadd.f32 0.0, %v2463
        %v2465 = vpop.f32.mrf.mxu0
        %2466 = vmatprep.mubr.bf16.mxu0 0
        %2467 = vmatmul.mubr.bf16.gmra.mxu0 %v2324
        %v2468 = vpop.f32.mrf.mxu0
        %v2469 = vadd.f32 0.0, %v2468
        %v2470 = vpop.f32.mrf.mxu0
        %v2471 = vpop.f32.mrf.mxu0
        %v2472 = vadd.f32 0.0, %v2471
        %v2473 = vpop.f32.mrf.mxu0
        %2474 = vmatprep.mubr.bf16.mxu0 0
        %2475 = vmatmul.mubr.bf16.gmra.mxu0 %v2325
        %v2476 = vpop.f32.mrf.mxu0
        %v2477 = vadd.f32 0.0, %v2476
        %v2478 = vpop.f32.mrf.mxu0
        %v2479 = vpop.f32.mrf.mxu0
        %v2480 = vadd.f32 0.0, %v2479
        %v2481 = vpop.f32.mrf.mxu0
        %2482 = vmatprep.mubr.bf16.mxu0 0
        %2483 = vmatmul.mubr.bf16.gmra.mxu0 %v2326
        %v2484 = vpop.f32.mrf.mxu0
        %v2485 = vadd.f32 0.0, %v2484
        %v2486 = vpop.f32.mrf.mxu0
        %v2487 = vpop.f32.mrf.mxu0
        %v2488 = vadd.f32 0.0, %v2487
        %v2489 = vpop.f32.mrf.mxu0
        %2490 = vmatprep.mubr.bf16.mxu0 0
        %2491 = vmatmul.mubr.bf16.gmra.mxu0 %v2327
        %v2492 = vpop.f32.mrf.mxu0
        %v2493 = vadd.f32 0.0, %v2492
        %v2494 = vpop.f32.mrf.mxu0
        %v2495 = vpop.f32.mrf.mxu0
        %v2496 = vadd.f32 0.0, %v2495
        %v2497 = vpop.f32.mrf.mxu0
        %2498 = vdwg.mxu0
        %v2499 = vadd.f32 %v2151, %v2421
        %v2500 = vadd.f32 %v2152, %v2424
        %v2501 = vadd.f32 %v2153, %v2429
        %v2502 = vadd.f32 %v2154, %v2432
        %v2503 = vadd.f32 %v2155, %v2437
        %v2504 = vadd.f32 %v2156, %v2440
        %v2505 = vadd.f32 %v2157, %v2445
        %v2506 = vadd.f32 %v2158, %v2448
        %v2507 = vadd.f32 %v2159, %v2453
        %v2508 = vadd.f32 %v2160, %v2456
        %v2509 = vadd.f32 %v2161, %v2461
        %v2510 = vadd.f32 %v2162, %v2464
        %v2511 = vadd.f32 %v2163, %v2469
        %v2512 = vadd.f32 %v2164, %v2472
        %v2513 = vadd.f32 %v2165, %v2477
        %v2514 = vadd.f32 %v2166, %v2480
        %v2515 = vadd.f32 %v2167, %v2485
        %v2516 = vadd.f32 %v2168, %v2488
        %v2517 = vadd.f32 %v2169, %v2493
        %v2518 = vadd.f32 %v2170, %v2496
        %s2519 = sadd.s32 %s308, 2
        %s2520 = smul.u32 %s2519, 3
        %s2521 = smul.addr %s2520, 4
        %s2522 = scalar_lea.vmem %s305, %s2521
        %v2523 = vld [vmem:[%s2522] sm:$0xf]
        %v2524 = vld [vmem:[%s2522 + $0x4] sm:$0xf]
        %v2525 = vld [vmem:[%s2522 + $0xc] sm:$0xf]
        %v2526 = vld [vmem:[%s2522 + $0x10] sm:$0xf]
        %v2527 = vld [vmem:[%s2522 + $0x18] sm:$0xf]
        %v2528 = vld [vmem:[%s2522 + $0x1c] sm:$0xf]
        %v2529 = vld [vmem:[%s2522 + $0x24] sm:$0xf]
        %v2530 = vld [vmem:[%s2522 + $0x28] sm:$0xf]
        %v2531 = vld [vmem:[%s2522 + $0x30] sm:$0xf]
        %v2532 = vld [vmem:[%s2522 + $0x34] sm:$0xf]
        %v2533 = vld [vmem:[%s2522 + $0x3c] sm:$0xf]
        %v2534 = vld [vmem:[%s2522 + $0x40] sm:$0xf]
        %v2535 = vld [vmem:[%s2522 + $0x48] sm:$0xf]
        %v2536 = vld [vmem:[%s2522 + $0x4c] sm:$0xf]
        %v2537 = vld [vmem:[%s2522 + $0x54] sm:$0xf]
        %v2538 = vld [vmem:[%s2522 + $0x58] sm:$0xf]
        %v2539 = vld [vmem:[%s2522 + $0x60] sm:$0xf]
        %v2540 = vld [vmem:[%s2522 + $0x64] sm:$0xf]
        %v2541 = vld [vmem:[%s2522 + $0x6c] sm:$0xf]
        %v2542 = vld [vmem:[%s2522 + $0x70] sm:$0xf]
        %s2543 = scalar_lea.vmem %s1, 384
        %v2544 = vld [vmem:[%s2543] sm:$0xf]
        %v2545 = vld [vmem:[%s2543 + $0x4] sm:$0xf]
        %v2546 = vld [vmem:[%s2543 + $0x8] sm:$0xf]
        %v2547 = vld [vmem:[%s2543 + $0xc] sm:$0xf]
        %v2548 = vld [vmem:[%s2543 + $0x10] sm:$0xf]
        %v2549 = vld [vmem:[%s2543 + $0x14] sm:$0xf]
        %v2550 = vld [vmem:[%s2543 + $0x18] sm:$0xf]
        %v2551 = vld [vmem:[%s2543 + $0x1c] sm:$0xf]
        %v2552 = vld [vmem:[%s2543 + $0x20] sm:$0xf]
        %v2553 = vld [vmem:[%s2543 + $0x24] sm:$0xf]
        %v2554 = vld [vmem:[%s2543 + $0x28] sm:$0xf]
        %v2555 = vld [vmem:[%s2543 + $0x2c] sm:$0xf]
        %v2556 = vld [vmem:[%s2543 + $0x30] sm:$0xf]
        %v2557 = vld [vmem:[%s2543 + $0x34] sm:$0xf]
        %v2558 = vld [vmem:[%s2543 + $0x38] sm:$0xf]
        %v2559 = vld [vmem:[%s2543 + $0x3c] sm:$0xf]
        %v2580 = vunpack.c.l.b16 %v2523
        %v2581 = vunpack.c.l.b16 %v2524
        %v2582 = vunpack.c.l.b16 %v2525
        %v2583 = vunpack.c.l.b16 %v2526
        %v2584 = vunpack.c.l.b16 %v2527
        %v2585 = vunpack.c.l.b16 %v2528
        %v2586 = vunpack.c.l.b16 %v2529
        %v2587 = vunpack.c.l.b16 %v2530
        %v2588 = vunpack.c.l.b16 %v2531
        %v2589 = vunpack.c.l.b16 %v2532
        %v2590 = vunpack.c.l.b16 %v2533
        %v2591 = vunpack.c.l.b16 %v2534
        %v2592 = vunpack.c.l.b16 %v2535
        %v2593 = vunpack.c.l.b16 %v2536
        %v2594 = vunpack.c.l.b16 %v2537
        %v2595 = vunpack.c.l.b16 %v2538
        %v2596 = vunpack.c.l.b16 %v2539
        %v2597 = vunpack.c.l.b16 %v2540
        %v2598 = vunpack.c.l.b16 %v2541
        %v2599 = vunpack.c.l.b16 %v2542
        %v2600 = vpack.c.b16 %v2581, %v2580
        %v2601 = vpack.c.b16 %v2583, %v2582
        %v2602 = vpack.c.b16 %v2585, %v2584
        %v2603 = vpack.c.b16 %v2587, %v2586
        %v2604 = vpack.c.b16 %v2589, %v2588
        %v2605 = vpack.c.b16 %v2591, %v2590
        %v2606 = vpack.c.b16 %v2593, %v2592
        %v2607 = vpack.c.b16 %v2595, %v2594
        %v2608 = vpack.c.b16 %v2597, %v2596
        %v2609 = vpack.c.b16 %v2599, %v2598
        %v2636 = vunpack.c.l.b16 %v2544
        %v2637 = vunpack.c.l.b16 %v2545
        %v2638 = vunpack.c.l.b16 %v2546
        %v2639 = vunpack.c.l.b16 %v2547
        %v2640 = vunpack.c.l.b16 %v2548
        %v2641 = vunpack.c.l.b16 %v2549
        %v2642 = vunpack.c.l.b16 %v2550
        %v2643 = vunpack.c.l.b16 %v2551
        %v2644 = vunpack.c.l.b16 %v2552
        %v2645 = vunpack.c.l.b16 %v2553
        %v2646 = vunpack.c.l.b16 %v2554
        %v2647 = vunpack.c.l.b16 %v2555
        %v2648 = vunpack.c.l.b16 %v2556
        %v2649 = vunpack.c.l.b16 %v2557
        %v2650 = vunpack.c.l.b16 %v2558
        %v2651 = vunpack.c.l.b16 %v2559
        %v2652 = vpack.c.b16 %v2637, %v2636
        %v2653 = vpack.c.b16 %v2639, %v2638
        %v2654 = vpack.c.b16 %v2641, %v2640
        %v2655 = vpack.c.b16 %v2643, %v2642
        %v2656 = vpack.c.b16 %v2645, %v2644
        %v2657 = vpack.c.b16 %v2647, %v2646
        %v2658 = vpack.c.b16 %v2649, %v2648
        %v2659 = vpack.c.b16 %v2651, %v2650
        %2668 = vmatprep.subr.bf16.mxu0 0
        %2669 = vmatpush1.bf16.msra.mxu0 %v2659
        %2670 = vmatprep.subr.bf16.mxu0 0
        %2671 = vmatpush1.bf16.msra.mxu0 %v2658
        %2672 = vmatprep.subr.bf16.mxu0 0
        %2673 = vmatpush1.bf16.msra.mxu0 %v2657
        %2674 = vmatprep.subr.bf16.mxu0 0
        %2675 = vmatpush1.bf16.msra.mxu0 %v2656
        %2676 = vmatprep.subr.bf16.mxu0 0
        %2677 = vmatpush1.bf16.msra.mxu0 %v2655
        %2678 = vmatprep.subr.bf16.mxu0 0
        %2679 = vmatpush1.bf16.msra.mxu0 %v2654
        %2680 = vmatprep.subr.bf16.mxu0 0
        %2681 = vmatpush1.bf16.msra.mxu0 %v2653
        %2682 = vmatprep.subr.bf16.mxu0 0
        %2683 = vmatpush1.bf16.msra.mxu0 %v2652
        %2684 = vmatprep.subr.bf16.mxu0 0
        %2685 = vmatpush2.bf16.msra.mxu0 0
        %2686 = vmatprep.subr.bf16.mxu0 0
        %2687 = vmatpush2.bf16.msra.mxu0 0
        %2688 = vmatprep.subr.bf16.mxu0 0
        %2689 = vmatpush2.bf16.msra.mxu0 0
        %2690 = vmatprep.subr.bf16.mxu0 0
        %2691 = vmatpush2.bf16.msra.mxu0 0
        %2692 = vmatprep.subr.bf16.mxu0 0
        %2693 = vmatpush2.bf16.msra.mxu0 0
        %2694 = vmatprep.subr.bf16.mxu0 0
        %2695 = vmatpush2.bf16.msra.mxu0 0
        %2696 = vmatprep.subr.bf16.mxu0 0
        %2697 = vmatpush2.bf16.msra.mxu0 0
        %2698 = vmatprep.subr.bf16.mxu0 0
        %2699 = vmatpush2.bf16.msra.mxu0 0
        %2700 = vmatprep.mubr.bf16.mxu0 0
        %2701 = vmatmul.mubr.bf16.gmra.mxu0 %v2600
        %v2702 = vpop.f32.mrf.mxu0
        %v2703 = vadd.f32 0.0, %v2702
        %v2704 = vpop.f32.mrf.mxu0
        %v2705 = vpop.f32.mrf.mxu0
        %v2706 = vadd.f32 0.0, %v2705
        %v2707 = vpop.f32.mrf.mxu0
        %2708 = vmatprep.mubr.bf16.mxu0 0
        %2709 = vmatmul.mubr.bf16.gmra.mxu0 %v2601
        %v2710 = vpop.f32.mrf.mxu0
        %v2711 = vadd.f32 0.0, %v2710
        %v2712 = vpop.f32.mrf.mxu0
        %v2713 = vpop.f32.mrf.mxu0
        %v2714 = vadd.f32 0.0, %v2713
        %v2715 = vpop.f32.mrf.mxu0
        %2716 = vmatprep.mubr.bf16.mxu0 0
        %2717 = vmatmul.mubr.bf16.gmra.mxu0 %v2602
        %v2718 = vpop.f32.mrf.mxu0
        %v2719 = vadd.f32 0.0, %v2718
        %v2720 = vpop.f32.mrf.mxu0
        %v2721 = vpop.f32.mrf.mxu0
        %v2722 = vadd.f32 0.0, %v2721
        %v2723 = vpop.f32.mrf.mxu0
        %2724 = vmatprep.mubr.bf16.mxu0 0
        %2725 = vmatmul.mubr.bf16.gmra.mxu0 %v2603
        %v2726 = vpop.f32.mrf.mxu0
        %v2727 = vadd.f32 0.0, %v2726
        %v2728 = vpop.f32.mrf.mxu0
        %v2729 = vpop.f32.mrf.mxu0
        %v2730 = vadd.f32 0.0, %v2729
        %v2731 = vpop.f32.mrf.mxu0
        %2732 = vmatprep.mubr.bf16.mxu0 0
        %2733 = vmatmul.mubr.bf16.gmra.mxu0 %v2604
        %v2734 = vpop.f32.mrf.mxu0
        %v2735 = vadd.f32 0.0, %v2734
        %v2736 = vpop.f32.mrf.mxu0
        %v2737 = vpop.f32.mrf.mxu0
        %v2738 = vadd.f32 0.0, %v2737
        %v2739 = vpop.f32.mrf.mxu0
        %2740 = vmatprep.mubr.bf16.mxu0 0
        %2741 = vmatmul.mubr.bf16.gmra.mxu0 %v2605
        %v2742 = vpop.f32.mrf.mxu0
        %v2743 = vadd.f32 0.0, %v2742
        %v2744 = vpop.f32.mrf.mxu0
        %v2745 = vpop.f32.mrf.mxu0
        %v2746 = vadd.f32 0.0, %v2745
        %v2747 = vpop.f32.mrf.mxu0
        %2748 = vmatprep.mubr.bf16.mxu0 0
        %2749 = vmatmul.mubr.bf16.gmra.mxu0 %v2606
        %v2750 = vpop.f32.mrf.mxu0
        %v2751 = vadd.f32 0.0, %v2750
        %v2752 = vpop.f32.mrf.mxu0
        %v2753 = vpop.f32.mrf.mxu0
        %v2754 = vadd.f32 0.0, %v2753
        %v2755 = vpop.f32.mrf.mxu0
        %2756 = vmatprep.mubr.bf16.mxu0 0
        %2757 = vmatmul.mubr.bf16.gmra.mxu0 %v2607
        %v2758 = vpop.f32.mrf.mxu0
        %v2759 = vadd.f32 0.0, %v2758
        %v2760 = vpop.f32.mrf.mxu0
        %v2761 = vpop.f32.mrf.mxu0
        %v2762 = vadd.f32 0.0, %v2761
        %v2763 = vpop.f32.mrf.mxu0
        %2764 = vmatprep.mubr.bf16.mxu0 0
        %2765 = vmatmul.mubr.bf16.gmra.mxu0 %v2608
        %v2766 = vpop.f32.mrf.mxu0
        %v2767 = vadd.f32 0.0, %v2766
        %v2768 = vpop.f32.mrf.mxu0
        %v2769 = vpop.f32.mrf.mxu0
        %v2770 = vadd.f32 0.0, %v2769
        %v2771 = vpop.f32.mrf.mxu0
        %2772 = vmatprep.mubr.bf16.mxu0 0
        %2773 = vmatmul.mubr.bf16.gmra.mxu0 %v2609
        %v2774 = vpop.f32.mrf.mxu0
        %v2775 = vadd.f32 0.0, %v2774
        %v2776 = vpop.f32.mrf.mxu0
        %v2777 = vpop.f32.mrf.mxu0
        %v2778 = vadd.f32 0.0, %v2777
        %v2779 = vpop.f32.mrf.mxu0
        %2780 = vdwg.mxu0
        %v2781 = vadd.f32 %v2499, %v2703
        %v2782 = vadd.f32 %v2500, %v2706
        %v2783 = vadd.f32 %v2501, %v2711
        %v2784 = vadd.f32 %v2502, %v2714
        %v2785 = vadd.f32 %v2503, %v2719
        %v2786 = vadd.f32 %v2504, %v2722
        %v2787 = vadd.f32 %v2505, %v2727
        %v2788 = vadd.f32 %v2506, %v2730
        %v2789 = vadd.f32 %v2507, %v2735
        %v2790 = vadd.f32 %v2508, %v2738
        %v2791 = vadd.f32 %v2509, %v2743
        %v2792 = vadd.f32 %v2510, %v2746
        %v2793 = vadd.f32 %v2511, %v2751
        %v2794 = vadd.f32 %v2512, %v2754
        %v2795 = vadd.f32 %v2513, %v2759
        %v2796 = vadd.f32 %v2514, %v2762
        %v2797 = vadd.f32 %v2515, %v2767
        %v2798 = vadd.f32 %v2516, %v2770
        %v2799 = vadd.f32 %v2517, %v2775
        %v2800 = vadd.f32 %v2518, %v2778
        %v2801 = vld [vmem:[%s2522] sm:$0xf]
        %v2802 = vld [vmem:[%s2522 + $0x4] sm:$0xf]
        %v2803 = vld [vmem:[%s2522 + $0x8] sm:$0x1]
        %v2804 = vld [vmem:[%s2522 + $0xc] sm:$0xf]
        %v2805 = vld [vmem:[%s2522 + $0x10] sm:$0xf]
        %v2806 = vld [vmem:[%s2522 + $0x14] sm:$0x1]
        %v2807 = vld [vmem:[%s2522 + $0x18] sm:$0xf]
        %v2808 = vld [vmem:[%s2522 + $0x1c] sm:$0xf]
        %v2809 = vld [vmem:[%s2522 + $0x20] sm:$0x1]
        %v2810 = vld [vmem:[%s2522 + $0x24] sm:$0xf]
        %v2811 = vld [vmem:[%s2522 + $0x28] sm:$0xf]
        %v2812 = vld [vmem:[%s2522 + $0x2c] sm:$0x1]
        %v2813 = vld [vmem:[%s2522 + $0x30] sm:$0xf]
        %v2814 = vld [vmem:[%s2522 + $0x34] sm:$0xf]
        %v2815 = vld [vmem:[%s2522 + $0x38] sm:$0x1]
        %v2816 = vld [vmem:[%s2522 + $0x3c] sm:$0xf]
        %v2817 = vld [vmem:[%s2522 + $0x40] sm:$0xf]
        %v2818 = vld [vmem:[%s2522 + $0x44] sm:$0x1]
        %v2819 = vld [vmem:[%s2522 + $0x48] sm:$0xf]
        %v2820 = vld [vmem:[%s2522 + $0x4c] sm:$0xf]
        %v2821 = vld [vmem:[%s2522 + $0x50] sm:$0x1]
        %v2822 = vld [vmem:[%s2522 + $0x54] sm:$0xf]
        %v2823 = vld [vmem:[%s2522 + $0x58] sm:$0xf]
        %v2824 = vld [vmem:[%s2522 + $0x5c] sm:$0x1]
        %v2825 = vld [vmem:[%s2522 + $0x60] sm:$0xf]
        %v2826 = vld [vmem:[%s2522 + $0x64] sm:$0xf]
        %v2827 = vld [vmem:[%s2522 + $0x68] sm:$0x1]
        %v2828 = vld [vmem:[%s2522 + $0x6c] sm:$0xf]
        %v2829 = vld [vmem:[%s2522 + $0x70] sm:$0xf]
        %v2830 = vld [vmem:[%s2522 + $0x74] sm:$0x1]
        %v2832 = vshrl.u32 %v2801, 16
        %v2834 = vrot.slane %v2832, 4
        %v2835 = vshll.u32 %v2801, 16
        %v2837 = vrot.slane %v2835, 5
        %v2838 = vor.u32 %v2834, %v2837
        %v2839 = vrot.slane %v2838, 4
        %v2841 = vshll.u32 %v2802, 16
        %v2843 = vrot.slane %v2841, 5
        %v2844 = vsel %vm360, %v2839, %v2843
        %v2845 = vshrl.u32 %v2802, 16
        %v2847 = vrot.slane %v2845, 4
        %v2848 = vor.u32 %v2847, %v2843
        %v2849 = vrot.slane %v2848, 4
        %v2851 = vshll.u32 %v2803, 16
        %v2853 = vrot.slane %v2851, 5
        %v2854 = vsel %vm360, %v2849, %v2853
        %v2856 = vshrl.u32 %v2804, 16
        %v2858 = vrot.slane %v2856, 4
        %v2859 = vshll.u32 %v2804, 16
        %v2861 = vrot.slane %v2859, 5
        %v2862 = vor.u32 %v2858, %v2861
        %v2863 = vrot.slane %v2862, 4
        %v2865 = vshll.u32 %v2805, 16
        %v2867 = vrot.slane %v2865, 5
        %v2868 = vsel %vm360, %v2863, %v2867
        %v2869 = vshrl.u32 %v2805, 16
        %v2871 = vrot.slane %v2869, 4
        %v2872 = vor.u32 %v2871, %v2867
        %v2873 = vrot.slane %v2872, 4
        %v2875 = vshll.u32 %v2806, 16
        %v2877 = vrot.slane %v2875, 5
        %v2878 = vsel %vm360, %v2873, %v2877
        %v2880 = vshrl.u32 %v2807, 16
        %v2882 = vrot.slane %v2880, 4
        %v2883 = vshll.u32 %v2807, 16
        %v2885 = vrot.slane %v2883, 5
        %v2886 = vor.u32 %v2882, %v2885
        %v2887 = vrot.slane %v2886, 4
        %v2889 = vshll.u32 %v2808, 16
        %v2891 = vrot.slane %v2889, 5
        %v2892 = vsel %vm360, %v2887, %v2891
        %v2893 = vshrl.u32 %v2808, 16
        %v2895 = vrot.slane %v2893, 4
        %v2896 = vor.u32 %v2895, %v2891
        %v2897 = vrot.slane %v2896, 4
        %v2899 = vshll.u32 %v2809, 16
        %v2901 = vrot.slane %v2899, 5
        %v2902 = vsel %vm360, %v2897, %v2901
        %v2904 = vshrl.u32 %v2810, 16
        %v2906 = vrot.slane %v2904, 4
        %v2907 = vshll.u32 %v2810, 16
        %v2909 = vrot.slane %v2907, 5
        %v2910 = vor.u32 %v2906, %v2909
        %v2911 = vrot.slane %v2910, 4
        %v2913 = vshll.u32 %v2811, 16
        %v2915 = vrot.slane %v2913, 5
        %v2916 = vsel %vm360, %v2911, %v2915
        %v2917 = vshrl.u32 %v2811, 16
        %v2919 = vrot.slane %v2917, 4
        %v2920 = vor.u32 %v2919, %v2915
        %v2921 = vrot.slane %v2920, 4
        %v2923 = vshll.u32 %v2812, 16
        %v2925 = vrot.slane %v2923, 5
        %v2926 = vsel %vm360, %v2921, %v2925
        %v2928 = vshrl.u32 %v2813, 16
        %v2930 = vrot.slane %v2928, 4
        %v2931 = vshll.u32 %v2813, 16
        %v2933 = vrot.slane %v2931, 5
        %v2934 = vor.u32 %v2930, %v2933
        %v2935 = vrot.slane %v2934, 4
        %v2937 = vshll.u32 %v2814, 16
        %v2939 = vrot.slane %v2937, 5
        %v2940 = vsel %vm360, %v2935, %v2939
        %v2941 = vshrl.u32 %v2814, 16
        %v2943 = vrot.slane %v2941, 4
        %v2944 = vor.u32 %v2943, %v2939
        %v2945 = vrot.slane %v2944, 4
        %v2947 = vshll.u32 %v2815, 16
        %v2949 = vrot.slane %v2947, 5
        %v2950 = vsel %vm360, %v2945, %v2949
        %v2952 = vshrl.u32 %v2816, 16
        %v2954 = vrot.slane %v2952, 4
        %v2955 = vshll.u32 %v2816, 16
        %v2957 = vrot.slane %v2955, 5
        %v2958 = vor.u32 %v2954, %v2957
        %v2959 = vrot.slane %v2958, 4
        %v2961 = vshll.u32 %v2817, 16
        %v2963 = vrot.slane %v2961, 5
        %v2964 = vsel %vm360, %v2959, %v2963
        %v2965 = vshrl.u32 %v2817, 16
        %v2967 = vrot.slane %v2965, 4
        %v2968 = vor.u32 %v2967, %v2963
        %v2969 = vrot.slane %v2968, 4
        %v2971 = vshll.u32 %v2818, 16
        %v2973 = vrot.slane %v2971, 5
        %v2974 = vsel %vm360, %v2969, %v2973
        %v2976 = vshrl.u32 %v2819, 16
        %v2978 = vrot.slane %v2976, 4
        %v2979 = vshll.u32 %v2819, 16
        %v2981 = vrot.slane %v2979, 5
        %v2982 = vor.u32 %v2978, %v2981
        %v2983 = vrot.slane %v2982, 4
        %v2985 = vshll.u32 %v2820, 16
        %v2987 = vrot.slane %v2985, 5
        %v2988 = vsel %vm360, %v2983, %v2987
        %v2989 = vshrl.u32 %v2820, 16
        %v2991 = vrot.slane %v2989, 4
        %v2992 = vor.u32 %v2991, %v2987
        %v2993 = vrot.slane %v2992, 4
        %v2995 = vshll.u32 %v2821, 16
        %v2997 = vrot.slane %v2995, 5
        %v2998 = vsel %vm360, %v2993, %v2997
        %v3000 = vshrl.u32 %v2822, 16
        %v3002 = vrot.slane %v3000, 4
        %v3003 = vshll.u32 %v2822, 16
        %v3005 = vrot.slane %v3003, 5
        %v3006 = vor.u32 %v3002, %v3005
        %v3007 = vrot.slane %v3006, 4
        %v3009 = vshll.u32 %v2823, 16
        %v3011 = vrot.slane %v3009, 5
        %v3012 = vsel %vm360, %v3007, %v3011
        %v3013 = vshrl.u32 %v2823, 16
        %v3015 = vrot.slane %v3013, 4
        %v3016 = vor.u32 %v3015, %v3011
        %v3017 = vrot.slane %v3016, 4
        %v3019 = vshll.u32 %v2824, 16
        %v3021 = vrot.slane %v3019, 5
        %v3022 = vsel %vm360, %v3017, %v3021
        %v3024 = vshrl.u32 %v2825, 16
        %v3026 = vrot.slane %v3024, 4
        %v3027 = vshll.u32 %v2825, 16
        %v3029 = vrot.slane %v3027, 5
        %v3030 = vor.u32 %v3026, %v3029
        %v3031 = vrot.slane %v3030, 4
        %v3033 = vshll.u32 %v2826, 16
        %v3035 = vrot.slane %v3033, 5
        %v3036 = vsel %vm360, %v3031, %v3035
        %v3037 = vshrl.u32 %v2826, 16
        %v3039 = vrot.slane %v3037, 4
        %v3040 = vor.u32 %v3039, %v3035
        %v3041 = vrot.slane %v3040, 4
        %v3043 = vshll.u32 %v2827, 16
        %v3045 = vrot.slane %v3043, 5
        %v3046 = vsel %vm360, %v3041, %v3045
        %v3048 = vshrl.u32 %v2828, 16
        %v3050 = vrot.slane %v3048, 4
        %v3051 = vshll.u32 %v2828, 16
        %v3053 = vrot.slane %v3051, 5
        %v3054 = vor.u32 %v3050, %v3053
        %v3055 = vrot.slane %v3054, 4
        %v3057 = vshll.u32 %v2829, 16
        %v3059 = vrot.slane %v3057, 5
        %v3060 = vsel %vm360, %v3055, %v3059
        %v3061 = vshrl.u32 %v2829, 16
        %v3063 = vrot.slane %v3061, 4
        %v3064 = vor.u32 %v3063, %v3059
        %v3065 = vrot.slane %v3064, 4
        %v3067 = vshll.u32 %v2830, 16
        %v3069 = vrot.slane %v3067, 5
        %v3070 = vsel %vm360, %v3065, %v3069
        %s3071 = scalar_lea.vmem %s1, 448
        %v3072 = vld [vmem:[%s3071] sm:$0xf]
        %v3073 = vld [vmem:[%s3071 + $0x4] sm:$0xf]
        %v3074 = vld [vmem:[%s3071 + $0x8] sm:$0xf]
        %v3075 = vld [vmem:[%s3071 + $0xc] sm:$0xf]
        %v3076 = vld [vmem:[%s3071 + $0x10] sm:$0xf]
        %v3077 = vld [vmem:[%s3071 + $0x14] sm:$0xf]
        %v3078 = vld [vmem:[%s3071 + $0x18] sm:$0xf]
        %v3079 = vld [vmem:[%s3071 + $0x1c] sm:$0xf]
        %v3080 = vld [vmem:[%s3071 + $0x20] sm:$0xf]
        %v3081 = vld [vmem:[%s3071 + $0x24] sm:$0xf]
        %v3082 = vld [vmem:[%s3071 + $0x28] sm:$0xf]
        %v3083 = vld [vmem:[%s3071 + $0x2c] sm:$0xf]
        %v3084 = vld [vmem:[%s3071 + $0x30] sm:$0xf]
        %v3085 = vld [vmem:[%s3071 + $0x34] sm:$0xf]
        %v3086 = vld [vmem:[%s3071 + $0x38] sm:$0xf]
        %v3087 = vld [vmem:[%s3071 + $0x3c] sm:$0xf]
        %v3088 = vunpack.c.l.b16 %v2844
        %v3089 = vunpack.c.l.b16 %v2854
        %v3090 = vunpack.c.l.b16 %v2868
        %v3091 = vunpack.c.l.b16 %v2878
        %v3092 = vunpack.c.l.b16 %v2892
        %v3093 = vunpack.c.l.b16 %v2902
        %v3094 = vunpack.c.l.b16 %v2916
        %v3095 = vunpack.c.l.b16 %v2926
        %v3096 = vunpack.c.l.b16 %v2940
        %v3097 = vunpack.c.l.b16 %v2950
        %v3098 = vunpack.c.l.b16 %v2964
        %v3099 = vunpack.c.l.b16 %v2974
        %v3100 = vunpack.c.l.b16 %v2988
        %v3101 = vunpack.c.l.b16 %v2998
        %v3102 = vunpack.c.l.b16 %v3012
        %v3103 = vunpack.c.l.b16 %v3022
        %v3104 = vunpack.c.l.b16 %v3036
        %v3105 = vunpack.c.l.b16 %v3046
        %v3106 = vunpack.c.l.b16 %v3060
        %v3107 = vunpack.c.l.b16 %v3070
        %v3108 = vpack.c.b16 %v3089, %v3088
        %v3109 = vpack.c.b16 %v3091, %v3090
        %v3110 = vpack.c.b16 %v3093, %v3092
        %v3111 = vpack.c.b16 %v3095, %v3094
        %v3112 = vpack.c.b16 %v3097, %v3096
        %v3113 = vpack.c.b16 %v3099, %v3098
        %v3114 = vpack.c.b16 %v3101, %v3100
        %v3115 = vpack.c.b16 %v3103, %v3102
        %v3116 = vpack.c.b16 %v3105, %v3104
        %v3117 = vpack.c.b16 %v3107, %v3106
        %v3144 = vunpack.c.l.b16 %v3072
        %v3145 = vunpack.c.l.b16 %v3073
        %v3146 = vunpack.c.l.b16 %v3074
        %v3147 = vunpack.c.l.b16 %v3075
        %v3148 = vunpack.c.l.b16 %v3076
        %v3149 = vunpack.c.l.b16 %v3077
        %v3150 = vunpack.c.l.b16 %v3078
        %v3151 = vunpack.c.l.b16 %v3079
        %v3152 = vunpack.c.l.b16 %v3080
        %v3153 = vunpack.c.l.b16 %v3081
        %v3154 = vunpack.c.l.b16 %v3082
        %v3155 = vunpack.c.l.b16 %v3083
        %v3156 = vunpack.c.l.b16 %v3084
        %v3157 = vunpack.c.l.b16 %v3085
        %v3158 = vunpack.c.l.b16 %v3086
        %v3159 = vunpack.c.l.b16 %v3087
        %v3160 = vpack.c.b16 %v3145, %v3144
        %v3161 = vpack.c.b16 %v3147, %v3146
        %v3162 = vpack.c.b16 %v3149, %v3148
        %v3163 = vpack.c.b16 %v3151, %v3150
        %v3164 = vpack.c.b16 %v3153, %v3152
        %v3165 = vpack.c.b16 %v3155, %v3154
        %v3166 = vpack.c.b16 %v3157, %v3156
        %v3167 = vpack.c.b16 %v3159, %v3158
        %3176 = vmatprep.subr.bf16.mxu0 0
        %3177 = vmatpush1.bf16.msra.mxu0 %v3167
        %3178 = vmatprep.subr.bf16.mxu0 0
        %3179 = vmatpush1.bf16.msra.mxu0 %v3166
        %3180 = vmatprep.subr.bf16.mxu0 0
        %3181 = vmatpush1.bf16.msra.mxu0 %v3165
        %3182 = vmatprep.subr.bf16.mxu0 0
        %3183 = vmatpush1.bf16.msra.mxu0 %v3164
        %3184 = vmatprep.subr.bf16.mxu0 0
        %3185 = vmatpush1.bf16.msra.mxu0 %v3163
        %3186 = vmatprep.subr.bf16.mxu0 0
        %3187 = vmatpush1.bf16.msra.mxu0 %v3162
        %3188 = vmatprep.subr.bf16.mxu0 0
        %3189 = vmatpush1.bf16.msra.mxu0 %v3161
        %3190 = vmatprep.subr.bf16.mxu0 0
        %3191 = vmatpush1.bf16.msra.mxu0 %v3160
        %3192 = vmatprep.subr.bf16.mxu0 0
        %3193 = vmatpush2.bf16.msra.mxu0 0
        %3194 = vmatprep.subr.bf16.mxu0 0
        %3195 = vmatpush2.bf16.msra.mxu0 0
        %3196 = vmatprep.subr.bf16.mxu0 0
        %3197 = vmatpush2.bf16.msra.mxu0 0
        %3198 = vmatprep.subr.bf16.mxu0 0
        %3199 = vmatpush2.bf16.msra.mxu0 0
        %3200 = vmatprep.subr.bf16.mxu0 0
        %3201 = vmatpush2.bf16.msra.mxu0 0
        %3202 = vmatprep.subr.bf16.mxu0 0
        %3203 = vmatpush2.bf16.msra.mxu0 0
        %3204 = vmatprep.subr.bf16.mxu0 0
        %3205 = vmatpush2.bf16.msra.mxu0 0
        %3206 = vmatprep.subr.bf16.mxu0 0
        %3207 = vmatpush2.bf16.msra.mxu0 0
        %3208 = vmatprep.mubr.bf16.mxu0 0
        %3209 = vmatmul.mubr.bf16.gmra.mxu0 %v3108
        %v3210 = vpop.f32.mrf.mxu0
        %v3211 = vadd.f32 0.0, %v3210
        %v3212 = vpop.f32.mrf.mxu0
        %v3213 = vpop.f32.mrf.mxu0
        %v3214 = vadd.f32 0.0, %v3213
        %v3215 = vpop.f32.mrf.mxu0
        %3216 = vmatprep.mubr.bf16.mxu0 0
        %3217 = vmatmul.mubr.bf16.gmra.mxu0 %v3109
        %v3218 = vpop.f32.mrf.mxu0
        %v3219 = vadd.f32 0.0, %v3218
        %v3220 = vpop.f32.mrf.mxu0
        %v3221 = vpop.f32.mrf.mxu0
        %v3222 = vadd.f32 0.0, %v3221
        %v3223 = vpop.f32.mrf.mxu0
        %3224 = vmatprep.mubr.bf16.mxu0 0
        %3225 = vmatmul.mubr.bf16.gmra.mxu0 %v3110
        %v3226 = vpop.f32.mrf.mxu0
        %v3227 = vadd.f32 0.0, %v3226
        %v3228 = vpop.f32.mrf.mxu0
        %v3229 = vpop.f32.mrf.mxu0
        %v3230 = vadd.f32 0.0, %v3229
        %v3231 = vpop.f32.mrf.mxu0
        %3232 = vmatprep.mubr.bf16.mxu0 0
        %3233 = vmatmul.mubr.bf16.gmra.mxu0 %v3111
        %v3234 = vpop.f32.mrf.mxu0
        %v3235 = vadd.f32 0.0, %v3234
        %v3236 = vpop.f32.mrf.mxu0
        %v3237 = vpop.f32.mrf.mxu0
        %v3238 = vadd.f32 0.0, %v3237
        %v3239 = vpop.f32.mrf.mxu0
        %3240 = vmatprep.mubr.bf16.mxu0 0
        %3241 = vmatmul.mubr.bf16.gmra.mxu0 %v3112
        %v3242 = vpop.f32.mrf.mxu0
        %v3243 = vadd.f32 0.0, %v3242
        %v3244 = vpop.f32.mrf.mxu0
        %v3245 = vpop.f32.mrf.mxu0
        %v3246 = vadd.f32 0.0, %v3245
        %v3247 = vpop.f32.mrf.mxu0
        %3248 = vmatprep.mubr.bf16.mxu0 0
        %3249 = vmatmul.mubr.bf16.gmra.mxu0 %v3113
        %v3250 = vpop.f32.mrf.mxu0
        %v3251 = vadd.f32 0.0, %v3250
        %v3252 = vpop.f32.mrf.mxu0
        %v3253 = vpop.f32.mrf.mxu0
        %v3254 = vadd.f32 0.0, %v3253
        %v3255 = vpop.f32.mrf.mxu0
        %3256 = vmatprep.mubr.bf16.mxu0 0
        %3257 = vmatmul.mubr.bf16.gmra.mxu0 %v3114
        %v3258 = vpop.f32.mrf.mxu0
        %v3259 = vadd.f32 0.0, %v3258
        %v3260 = vpop.f32.mrf.mxu0
        %v3261 = vpop.f32.mrf.mxu0
        %v3262 = vadd.f32 0.0, %v3261
        %v3263 = vpop.f32.mrf.mxu0
        %3264 = vmatprep.mubr.bf16.mxu0 0
        %3265 = vmatmul.mubr.bf16.gmra.mxu0 %v3115
        %v3266 = vpop.f32.mrf.mxu0
        %v3267 = vadd.f32 0.0, %v3266
        %v3268 = vpop.f32.mrf.mxu0
        %v3269 = vpop.f32.mrf.mxu0
        %v3270 = vadd.f32 0.0, %v3269
        %v3271 = vpop.f32.mrf.mxu0
        %3272 = vmatprep.mubr.bf16.mxu0 0
        %3273 = vmatmul.mubr.bf16.gmra.mxu0 %v3116
        %v3274 = vpop.f32.mrf.mxu0
        %v3275 = vadd.f32 0.0, %v3274
        %v3276 = vpop.f32.mrf.mxu0
        %v3277 = vpop.f32.mrf.mxu0
        %v3278 = vadd.f32 0.0, %v3277
        %v3279 = vpop.f32.mrf.mxu0
        %3280 = vmatprep.mubr.bf16.mxu0 0
        %3281 = vmatmul.mubr.bf16.gmra.mxu0 %v3117
        %v3282 = vpop.f32.mrf.mxu0
        %v3283 = vadd.f32 0.0, %v3282
        %v3284 = vpop.f32.mrf.mxu0
        %v3285 = vpop.f32.mrf.mxu0
        %v3286 = vadd.f32 0.0, %v3285
        %v3287 = vpop.f32.mrf.mxu0
        %3288 = vdwg.mxu0
        %v3289 = vadd.f32 %v2781, %v3211
        %v3290 = vadd.f32 %v2782, %v3214
        %v3291 = vadd.f32 %v2783, %v3219
        %v3292 = vadd.f32 %v2784, %v3222
        %v3293 = vadd.f32 %v2785, %v3227
        %v3294 = vadd.f32 %v2786, %v3230
        %v3295 = vadd.f32 %v2787, %v3235
        %v3296 = vadd.f32 %v2788, %v3238
        %v3297 = vadd.f32 %v2789, %v3243
        %v3298 = vadd.f32 %v2790, %v3246
        %v3299 = vadd.f32 %v2791, %v3251
        %v3300 = vadd.f32 %v2792, %v3254
        %v3301 = vadd.f32 %v2793, %v3259
        %v3302 = vadd.f32 %v2794, %v3262
        %v3303 = vadd.f32 %v2795, %v3267
        %v3304 = vadd.f32 %v2796, %v3270
        %v3305 = vadd.f32 %v2797, %v3275
        %v3306 = vadd.f32 %v2798, %v3278
        %v3307 = vadd.f32 %v2799, %v3283
        %v3308 = vadd.f32 %v2800, %v3286
        %v3309 = vld [vmem:[%s2522] sm:$0xe]
        %v3310 = vld [vmem:[%s2522 + $0xc] sm:$0xe]
        %v3311 = vld [vmem:[%s2522 + $0x18] sm:$0xe]
        %v3312 = vld [vmem:[%s2522 + $0x24] sm:$0xe]
        %v3313 = vld [vmem:[%s2522 + $0x30] sm:$0xe]
        %v3314 = vld [vmem:[%s2522 + $0x3c] sm:$0xe]
        %v3315 = vld [vmem:[%s2522 + $0x48] sm:$0xe]
        %v3316 = vld [vmem:[%s2522 + $0x54] sm:$0xe]
        %v3317 = vld [vmem:[%s2522 + $0x60] sm:$0xe]
        %v3318 = vld [vmem:[%s2522 + $0x6c] sm:$0xe]
        %v3349 = vrot.slane %v3309, 5
        %v3350 = vrot.slane %v3349, 4
        %v3351 = vrot.slane %v2802, 5
        %v3352 = vsel %vm1072, %v3350, %v3351
        %v3353 = vrot.slane %v3351, 4
        %v3354 = vrot.slane %v2803, 5
        %v3355 = vsel %vm1072, %v3353, %v3354
        %v3356 = vrot.slane %v3310, 5
        %v3357 = vrot.slane %v3356, 4
        %v3358 = vrot.slane %v2805, 5
        %v3359 = vsel %vm1072, %v3357, %v3358
        %v3360 = vrot.slane %v3358, 4
        %v3361 = vrot.slane %v2806, 5
        %v3362 = vsel %vm1072, %v3360, %v3361
        %v3363 = vrot.slane %v3311, 5
        %v3364 = vrot.slane %v3363, 4
        %v3365 = vrot.slane %v2808, 5
        %v3366 = vsel %vm1072, %v3364, %v3365
        %v3367 = vrot.slane %v3365, 4
        %v3368 = vrot.slane %v2809, 5
        %v3369 = vsel %vm1072, %v3367, %v3368
        %v3370 = vrot.slane %v3312, 5
        %v3371 = vrot.slane %v3370, 4
        %v3372 = vrot.slane %v2811, 5
        %v3373 = vsel %vm1072, %v3371, %v3372
        %v3374 = vrot.slane %v3372, 4
        %v3375 = vrot.slane %v2812, 5
        %v3376 = vsel %vm1072, %v3374, %v3375
        %v3377 = vrot.slane %v3313, 5
        %v3378 = vrot.slane %v3377, 4
        %v3379 = vrot.slane %v2814, 5
        %v3380 = vsel %vm1072, %v3378, %v3379
        %v3381 = vrot.slane %v3379, 4
        %v3382 = vrot.slane %v2815, 5
        %v3383 = vsel %vm1072, %v3381, %v3382
        %v3384 = vrot.slane %v3314, 5
        %v3385 = vrot.slane %v3384, 4
        %v3386 = vrot.slane %v2817, 5
        %v3387 = vsel %vm1072, %v3385, %v3386
        %v3388 = vrot.slane %v3386, 4
        %v3389 = vrot.slane %v2818, 5
        %v3390 = vsel %vm1072, %v3388, %v3389
        %v3391 = vrot.slane %v3315, 5
        %v3392 = vrot.slane %v3391, 4
        %v3393 = vrot.slane %v2820, 5
        %v3394 = vsel %vm1072, %v3392, %v3393
        %v3395 = vrot.slane %v3393, 4
        %v3396 = vrot.slane %v2821, 5
        %v3397 = vsel %vm1072, %v3395, %v3396
        %v3398 = vrot.slane %v3316, 5
        %v3399 = vrot.slane %v3398, 4
        %v3400 = vrot.slane %v2823, 5
        %v3401 = vsel %vm1072, %v3399, %v3400
        %v3402 = vrot.slane %v3400, 4
        %v3403 = vrot.slane %v2824, 5
        %v3404 = vsel %vm1072, %v3402, %v3403
        %v3405 = vrot.slane %v3317, 5
        %v3406 = vrot.slane %v3405, 4
        %v3407 = vrot.slane %v2826, 5
        %v3408 = vsel %vm1072, %v3406, %v3407
        %v3409 = vrot.slane %v3407, 4
        %v3410 = vrot.slane %v2827, 5
        %v3411 = vsel %vm1072, %v3409, %v3410
        %v3412 = vrot.slane %v3318, 5
        %v3413 = vrot.slane %v3412, 4
        %v3414 = vrot.slane %v2829, 5
        %v3415 = vsel %vm1072, %v3413, %v3414
        %v3416 = vrot.slane %v3414, 4
        %v3417 = vrot.slane %v2830, 5
        %v3418 = vsel %vm1072, %v3416, %v3417
        %s3419 = scalar_lea.vmem %s1, 512
        %v3420 = vld [vmem:[%s3419] sm:$0xf]
        %v3421 = vld [vmem:[%s3419 + $0x4] sm:$0xf]
        %v3422 = vld [vmem:[%s3419 + $0x8] sm:$0xf]
        %v3423 = vld [vmem:[%s3419 + $0xc] sm:$0xf]
        %v3424 = vld [vmem:[%s3419 + $0x10] sm:$0xf]
        %v3425 = vld [vmem:[%s3419 + $0x14] sm:$0xf]
        %v3426 = vld [vmem:[%s3419 + $0x18] sm:$0xf]
        %v3427 = vld [vmem:[%s3419 + $0x1c] sm:$0xf]
        %v3428 = vld [vmem:[%s3419 + $0x20] sm:$0xf]
        %v3429 = vld [vmem:[%s3419 + $0x24] sm:$0xf]
        %v3430 = vld [vmem:[%s3419 + $0x28] sm:$0xf]
        %v3431 = vld [vmem:[%s3419 + $0x2c] sm:$0xf]
        %v3432 = vld [vmem:[%s3419 + $0x30] sm:$0xf]
        %v3433 = vld [vmem:[%s3419 + $0x34] sm:$0xf]
        %v3434 = vld [vmem:[%s3419 + $0x38] sm:$0xf]
        %v3435 = vld [vmem:[%s3419 + $0x3c] sm:$0xf]
        %v3436 = vunpack.c.l.b16 %v3352
        %v3437 = vunpack.c.l.b16 %v3355
        %v3438 = vunpack.c.l.b16 %v3359
        %v3439 = vunpack.c.l.b16 %v3362
        %v3440 = vunpack.c.l.b16 %v3366
        %v3441 = vunpack.c.l.b16 %v3369
        %v3442 = vunpack.c.l.b16 %v3373
        %v3443 = vunpack.c.l.b16 %v3376
        %v3444 = vunpack.c.l.b16 %v3380
        %v3445 = vunpack.c.l.b16 %v3383
        %v3446 = vunpack.c.l.b16 %v3387
        %v3447 = vunpack.c.l.b16 %v3390
        %v3448 = vunpack.c.l.b16 %v3394
        %v3449 = vunpack.c.l.b16 %v3397
        %v3450 = vunpack.c.l.b16 %v3401
        %v3451 = vunpack.c.l.b16 %v3404
        %v3452 = vunpack.c.l.b16 %v3408
        %v3453 = vunpack.c.l.b16 %v3411
        %v3454 = vunpack.c.l.b16 %v3415
        %v3455 = vunpack.c.l.b16 %v3418
        %v3456 = vpack.c.b16 %v3437, %v3436
        %v3457 = vpack.c.b16 %v3439, %v3438
        %v3458 = vpack.c.b16 %v3441, %v3440
        %v3459 = vpack.c.b16 %v3443, %v3442
        %v3460 = vpack.c.b16 %v3445, %v3444
        %v3461 = vpack.c.b16 %v3447, %v3446
        %v3462 = vpack.c.b16 %v3449, %v3448
        %v3463 = vpack.c.b16 %v3451, %v3450
        %v3464 = vpack.c.b16 %v3453, %v3452
        %v3465 = vpack.c.b16 %v3455, %v3454
        %v3492 = vunpack.c.l.b16 %v3420
        %v3493 = vunpack.c.l.b16 %v3421
        %v3494 = vunpack.c.l.b16 %v3422
        %v3495 = vunpack.c.l.b16 %v3423
        %v3496 = vunpack.c.l.b16 %v3424
        %v3497 = vunpack.c.l.b16 %v3425
        %v3498 = vunpack.c.l.b16 %v3426
        %v3499 = vunpack.c.l.b16 %v3427
        %v3500 = vunpack.c.l.b16 %v3428
        %v3501 = vunpack.c.l.b16 %v3429
        %v3502 = vunpack.c.l.b16 %v3430
        %v3503 = vunpack.c.l.b16 %v3431
        %v3504 = vunpack.c.l.b16 %v3432
        %v3505 = vunpack.c.l.b16 %v3433
        %v3506 = vunpack.c.l.b16 %v3434
        %v3507 = vunpack.c.l.b16 %v3435
        %v3508 = vpack.c.b16 %v3493, %v3492
        %v3509 = vpack.c.b16 %v3495, %v3494
        %v3510 = vpack.c.b16 %v3497, %v3496
        %v3511 = vpack.c.b16 %v3499, %v3498
        %v3512 = vpack.c.b16 %v3501, %v3500
        %v3513 = vpack.c.b16 %v3503, %v3502
        %v3514 = vpack.c.b16 %v3505, %v3504
        %v3515 = vpack.c.b16 %v3507, %v3506
        %3524 = vmatprep.subr.bf16.mxu0 0
        %3525 = vmatpush1.bf16.msra.mxu0 %v3515
        %3526 = vmatprep.subr.bf16.mxu0 0
        %3527 = vmatpush1.bf16.msra.mxu0 %v3514
        %3528 = vmatprep.subr.bf16.mxu0 0
        %3529 = vmatpush1.bf16.msra.mxu0 %v3513
        %3530 = vmatprep.subr.bf16.mxu0 0
        %3531 = vmatpush1.bf16.msra.mxu0 %v3512
        %3532 = vmatprep.subr.bf16.mxu0 0
        %3533 = vmatpush1.bf16.msra.mxu0 %v3511
        %3534 = vmatprep.subr.bf16.mxu0 0
        %3535 = vmatpush1.bf16.msra.mxu0 %v3510
        %3536 = vmatprep.subr.bf16.mxu0 0
        %3537 = vmatpush1.bf16.msra.mxu0 %v3509
        %3538 = vmatprep.subr.bf16.mxu0 0
        %3539 = vmatpush1.bf16.msra.mxu0 %v3508
        %3540 = vmatprep.subr.bf16.mxu0 0
        %3541 = vmatpush2.bf16.msra.mxu0 0
        %3542 = vmatprep.subr.bf16.mxu0 0
        %3543 = vmatpush2.bf16.msra.mxu0 0
        %3544 = vmatprep.subr.bf16.mxu0 0
        %3545 = vmatpush2.bf16.msra.mxu0 0
        %3546 = vmatprep.subr.bf16.mxu0 0
        %3547 = vmatpush2.bf16.msra.mxu0 0
        %3548 = vmatprep.subr.bf16.mxu0 0
        %3549 = vmatpush2.bf16.msra.mxu0 0
        %3550 = vmatprep.subr.bf16.mxu0 0
        %3551 = vmatpush2.bf16.msra.mxu0 0
        %3552 = vmatprep.subr.bf16.mxu0 0
        %3553 = vmatpush2.bf16.msra.mxu0 0
        %3554 = vmatprep.subr.bf16.mxu0 0
        %3555 = vmatpush2.bf16.msra.mxu0 0
        %3556 = vmatprep.mubr.bf16.mxu0 0
        %3557 = vmatmul.mubr.bf16.gmra.mxu0 %v3456
        %v3558 = vpop.f32.mrf.mxu0
        %v3559 = vadd.f32 0.0, %v3558
        %v3560 = vpop.f32.mrf.mxu0
        %v3561 = vpop.f32.mrf.mxu0
        %v3562 = vadd.f32 0.0, %v3561
        %v3563 = vpop.f32.mrf.mxu0
        %3564 = vmatprep.mubr.bf16.mxu0 0
        %3565 = vmatmul.mubr.bf16.gmra.mxu0 %v3457
        %v3566 = vpop.f32.mrf.mxu0
        %v3567 = vadd.f32 0.0, %v3566
        %v3568 = vpop.f32.mrf.mxu0
        %v3569 = vpop.f32.mrf.mxu0
        %v3570 = vadd.f32 0.0, %v3569
        %v3571 = vpop.f32.mrf.mxu0
        %3572 = vmatprep.mubr.bf16.mxu0 0
        %3573 = vmatmul.mubr.bf16.gmra.mxu0 %v3458
        %v3574 = vpop.f32.mrf.mxu0
        %v3575 = vadd.f32 0.0, %v3574
        %v3576 = vpop.f32.mrf.mxu0
        %v3577 = vpop.f32.mrf.mxu0
        %v3578 = vadd.f32 0.0, %v3577
        %v3579 = vpop.f32.mrf.mxu0
        %3580 = vmatprep.mubr.bf16.mxu0 0
        %3581 = vmatmul.mubr.bf16.gmra.mxu0 %v3459
        %v3582 = vpop.f32.mrf.mxu0
        %v3583 = vadd.f32 0.0, %v3582
        %v3584 = vpop.f32.mrf.mxu0
        %v3585 = vpop.f32.mrf.mxu0
        %v3586 = vadd.f32 0.0, %v3585
        %v3587 = vpop.f32.mrf.mxu0
        %3588 = vmatprep.mubr.bf16.mxu0 0
        %3589 = vmatmul.mubr.bf16.gmra.mxu0 %v3460
        %v3590 = vpop.f32.mrf.mxu0
        %v3591 = vadd.f32 0.0, %v3590
        %v3592 = vpop.f32.mrf.mxu0
        %v3593 = vpop.f32.mrf.mxu0
        %v3594 = vadd.f32 0.0, %v3593
        %v3595 = vpop.f32.mrf.mxu0
        %3596 = vmatprep.mubr.bf16.mxu0 0
        %3597 = vmatmul.mubr.bf16.gmra.mxu0 %v3461
        %v3598 = vpop.f32.mrf.mxu0
        %v3599 = vadd.f32 0.0, %v3598
        %v3600 = vpop.f32.mrf.mxu0
        %v3601 = vpop.f32.mrf.mxu0
        %v3602 = vadd.f32 0.0, %v3601
        %v3603 = vpop.f32.mrf.mxu0
        %3604 = vmatprep.mubr.bf16.mxu0 0
        %3605 = vmatmul.mubr.bf16.gmra.mxu0 %v3462
        %v3606 = vpop.f32.mrf.mxu0
        %v3607 = vadd.f32 0.0, %v3606
        %v3608 = vpop.f32.mrf.mxu0
        %v3609 = vpop.f32.mrf.mxu0
        %v3610 = vadd.f32 0.0, %v3609
        %v3611 = vpop.f32.mrf.mxu0
        %3612 = vmatprep.mubr.bf16.mxu0 0
        %3613 = vmatmul.mubr.bf16.gmra.mxu0 %v3463
        %v3614 = vpop.f32.mrf.mxu0
        %v3615 = vadd.f32 0.0, %v3614
        %v3616 = vpop.f32.mrf.mxu0
        %v3617 = vpop.f32.mrf.mxu0
        %v3618 = vadd.f32 0.0, %v3617
        %v3619 = vpop.f32.mrf.mxu0
        %3620 = vmatprep.mubr.bf16.mxu0 0
        %3621 = vmatmul.mubr.bf16.gmra.mxu0 %v3464
        %v3622 = vpop.f32.mrf.mxu0
        %v3623 = vadd.f32 0.0, %v3622
        %v3624 = vpop.f32.mrf.mxu0
        %v3625 = vpop.f32.mrf.mxu0
        %v3626 = vadd.f32 0.0, %v3625
        %v3627 = vpop.f32.mrf.mxu0
        %3628 = vmatprep.mubr.bf16.mxu0 0
        %3629 = vmatmul.mubr.bf16.gmra.mxu0 %v3465
        %v3630 = vpop.f32.mrf.mxu0
        %v3631 = vadd.f32 0.0, %v3630
        %v3632 = vpop.f32.mrf.mxu0
        %v3633 = vpop.f32.mrf.mxu0
        %v3634 = vadd.f32 0.0, %v3633
        %v3635 = vpop.f32.mrf.mxu0
        %3636 = vdwg.mxu0
        %v3637 = vadd.f32 %v3289, %v3559
        %v3638 = vadd.f32 %v3290, %v3562
        %v3639 = vadd.f32 %v3291, %v3567
        %v3640 = vadd.f32 %v3292, %v3570
        %v3641 = vadd.f32 %v3293, %v3575
        %v3642 = vadd.f32 %v3294, %v3578
        %v3643 = vadd.f32 %v3295, %v3583
        %v3644 = vadd.f32 %v3296, %v3586
        %v3645 = vadd.f32 %v3297, %v3591
        %v3646 = vadd.f32 %v3298, %v3594
        %v3647 = vadd.f32 %v3299, %v3599
        %v3648 = vadd.f32 %v3300, %v3602
        %v3649 = vadd.f32 %v3301, %v3607
        %v3650 = vadd.f32 %v3302, %v3610
        %v3651 = vadd.f32 %v3303, %v3615
        %v3652 = vadd.f32 %v3304, %v3618
        %v3653 = vadd.f32 %v3305, %v3623
        %v3654 = vadd.f32 %v3306, %v3626
        %v3655 = vadd.f32 %v3307, %v3631
        %v3656 = vadd.f32 %v3308, %v3634
        %v3657 = vld [vmem:[%s3] sm:$0x1]
        %v3659 = vlaneseq
        %v3660 = vshrl.u32 %v3659, 7
        %v3661 = vsub.s32 0, %v3660
        %v3662 = vrot.slane %v3657, %v3661
        %v3664 = vmul.f32 %v3637, %v3662
        %v3665 = vmul.f32 %v3638, %v3662
        %v3666 = vmul.f32 %v3639, %v3662
        %v3667 = vmul.f32 %v3640, %v3662
        %v3668 = vmul.f32 %v3641, %v3662
        %v3669 = vmul.f32 %v3642, %v3662
        %v3670 = vmul.f32 %v3643, %v3662
        %v3671 = vmul.f32 %v3644, %v3662
        %v3672 = vmul.f32 %v3645, %v3662
        %v3673 = vmul.f32 %v3646, %v3662
        %v3674 = vmul.f32 %v3647, %v3662
        %v3675 = vmul.f32 %v3648, %v3662
        %v3676 = vmul.f32 %v3649, %v3662
        %v3677 = vmul.f32 %v3650, %v3662
        %v3678 = vmul.f32 %v3651, %v3662
        %v3679 = vmul.f32 %v3652, %v3662
        %v3680 = vmul.f32 %v3653, %v3662
        %v3681 = vmul.f32 %v3654, %v3662
        %v3682 = vmul.f32 %v3655, %v3662
        %v3683 = vmul.f32 %v3656, %v3662
        %v3684 = vld [vmem:[%s4] sm:$0x1]
        %v3686 = vlaneseq
        %v3687 = vshrl.u32 %v3686, 7
        %v3688 = vsub.s32 0, %v3687
        %v3689 = vrot.slane %v3684, %v3688
        %v3691 = vadd.f32 %v3664, %v3689
        %v3692 = vadd.f32 %v3665, %v3689
        %v3693 = vadd.f32 %v3666, %v3689
        %v3694 = vadd.f32 %v3667, %v3689
        %v3695 = vadd.f32 %v3668, %v3689
        %v3696 = vadd.f32 %v3669, %v3689
        %v3697 = vadd.f32 %v3670, %v3689
        %v3698 = vadd.f32 %v3671, %v3689
        %v3699 = vadd.f32 %v3672, %v3689
        %v3700 = vadd.f32 %v3673, %v3689
        %v3701 = vadd.f32 %v3674, %v3689
        %v3702 = vadd.f32 %v3675, %v3689
        %v3703 = vadd.f32 %v3676, %v3689
        %v3704 = vadd.f32 %v3677, %v3689
        %v3705 = vadd.f32 %v3678, %v3689
        %v3706 = vadd.f32 %v3679, %v3689
        %v3707 = vadd.f32 %v3680, %v3689
        %v3708 = vadd.f32 %v3681, %v3689
        %v3709 = vadd.f32 %v3682, %v3689
        %v3710 = vadd.f32 %v3683, %v3689
        %vm3711 = vcmp.ge.f32.partialorder %v3691, 0.0
        %vm3712 = vcmp.ge.f32.partialorder %v3692, 0.0
        %vm3713 = vcmp.ge.f32.partialorder %v3693, 0.0
        %vm3714 = vcmp.ge.f32.partialorder %v3694, 0.0
        %vm3715 = vcmp.ge.f32.partialorder %v3695, 0.0
        %vm3716 = vcmp.ge.f32.partialorder %v3696, 0.0
        %vm3717 = vcmp.ge.f32.partialorder %v3697, 0.0
        %vm3718 = vcmp.ge.f32.partialorder %v3698, 0.0
        %vm3719 = vcmp.ge.f32.partialorder %v3699, 0.0
        %vm3720 = vcmp.ge.f32.partialorder %v3700, 0.0
        %vm3721 = vcmp.ge.f32.partialorder %v3701, 0.0
        %vm3722 = vcmp.ge.f32.partialorder %v3702, 0.0
        %vm3723 = vcmp.ge.f32.partialorder %v3703, 0.0
        %vm3724 = vcmp.ge.f32.partialorder %v3704, 0.0
        %vm3725 = vcmp.ge.f32.partialorder %v3705, 0.0
        %vm3726 = vcmp.ge.f32.partialorder %v3706, 0.0
        %vm3727 = vcmp.ge.f32.partialorder %v3707, 0.0
        %vm3728 = vcmp.ge.f32.partialorder %v3708, 0.0
        %vm3729 = vcmp.ge.f32.partialorder %v3709, 0.0
        %vm3730 = vcmp.ge.f32.partialorder %v3710, 0.0
        %v3731 = vmul.f32 %v3691, 0.01
        %v3732 = vmul.f32 %v3692, 0.01
        %v3733 = vmul.f32 %v3693, 0.01
        %v3734 = vmul.f32 %v3694, 0.01
        %v3735 = vmul.f32 %v3695, 0.01
        %v3736 = vmul.f32 %v3696, 0.01
        %v3737 = vmul.f32 %v3697, 0.01
        %v3738 = vmul.f32 %v3698, 0.01
        %v3739 = vmul.f32 %v3699, 0.01
        %v3740 = vmul.f32 %v3700, 0.01
        %v3741 = vmul.f32 %v3701, 0.01
        %v3742 = vmul.f32 %v3702, 0.01
        %v3743 = vmul.f32 %v3703, 0.01
        %v3744 = vmul.f32 %v3704, 0.01
        %v3745 = vmul.f32 %v3705, 0.01
        %v3746 = vmul.f32 %v3706, 0.01
        %v3747 = vmul.f32 %v3707, 0.01
        %v3748 = vmul.f32 %v3708, 0.01
        %v3749 = vmul.f32 %v3709, 0.01
        %v3750 = vmul.f32 %v3710, 0.01
        %v3751 = vsel %vm3711, %v3691, %v3731
        %v3752 = vsel %vm3712, %v3692, %v3732
        %v3753 = vsel %vm3713, %v3693, %v3733
        %v3754 = vsel %vm3714, %v3694, %v3734
        %v3755 = vsel %vm3715, %v3695, %v3735
        %v3756 = vsel %vm3716, %v3696, %v3736
        %v3757 = vsel %vm3717, %v3697, %v3737
        %v3758 = vsel %vm3718, %v3698, %v3738
        %v3759 = vsel %vm3719, %v3699, %v3739
        %v3760 = vsel %vm3720, %v3700, %v3740
        %v3761 = vsel %vm3721, %v3701, %v3741
        %v3762 = vsel %vm3722, %v3702, %v3742
        %v3763 = vsel %vm3723, %v3703, %v3743
        %v3764 = vsel %vm3724, %v3704, %v3744
        %v3765 = vsel %vm3725, %v3705, %v3745
        %v3766 = vsel %vm3726, %v3706, %v3746
        %v3767 = vsel %vm3727, %v3707, %v3747
        %v3768 = vsel %vm3728, %v3708, %v3748
        %v3769 = vsel %vm3729, %v3709, %v3749
        %v3770 = vsel %vm3730, %v3710, %v3750
        %v3771 = vpack.c.bf16 %v3752, %v3751
        %v3772 = vpack.c.bf16 %v3754, %v3753
        %v3773 = vpack.c.bf16 %v3756, %v3755
        %v3774 = vpack.c.bf16 %v3758, %v3757
        %v3775 = vpack.c.bf16 %v3760, %v3759
        %v3776 = vpack.c.bf16 %v3762, %v3761
        %v3777 = vpack.c.bf16 %v3764, %v3763
        %v3778 = vpack.c.bf16 %v3766, %v3765
        %v3779 = vpack.c.bf16 %v3768, %v3767
        %v3780 = vpack.c.bf16 %v3770, %v3769
        %v3791 = vunpack.c.l.b16 %v3771
        %v3792 = vunpack.c.h.b16 %v3771
        %v3793 = vunpack.c.l.b16 %v3772
        %v3794 = vunpack.c.h.b16 %v3772
        %v3795 = vunpack.c.l.b16 %v3773
        %v3796 = vunpack.c.h.b16 %v3773
        %v3797 = vunpack.c.l.b16 %v3774
        %v3798 = vunpack.c.h.b16 %v3774
        %v3799 = vunpack.c.l.b16 %v3775
        %v3800 = vunpack.c.h.b16 %v3775
        %v3801 = vunpack.c.l.b16 %v3776
        %v3802 = vunpack.c.h.b16 %v3776
        %v3803 = vunpack.c.l.b16 %v3777
        %v3804 = vunpack.c.h.b16 %v3777
        %v3805 = vunpack.c.l.b16 %v3778
        %v3806 = vunpack.c.h.b16 %v3778
        %v3807 = vunpack.c.l.b16 %v3779
        %v3808 = vunpack.c.h.b16 %v3779
        %v3809 = vunpack.c.l.b16 %v3780
        %v3810 = vunpack.c.h.b16 %v3780
        %v3811 = vpack.c.b16 %v3791, %v3791
        %v3812 = vpack.c.b16 %v3792, %v3792
        %v3813 = vpack.c.b16 %v3793, %v3793
        %v3814 = vpack.c.b16 %v3794, %v3794
        %v3815 = vpack.c.b16 %v3795, %v3795
        %v3816 = vpack.c.b16 %v3796, %v3796
        %v3817 = vpack.c.b16 %v3797, %v3797
        %v3818 = vpack.c.b16 %v3798, %v3798
        %v3819 = vpack.c.b16 %v3799, %v3799
        %v3820 = vpack.c.b16 %v3800, %v3800
        %v3821 = vpack.c.b16 %v3801, %v3801
        %v3822 = vpack.c.b16 %v3802, %v3802
        %v3823 = vpack.c.b16 %v3803, %v3803
        %v3824 = vpack.c.b16 %v3804, %v3804
        %v3825 = vpack.c.b16 %v3805, %v3805
        %v3826 = vpack.c.b16 %v3806, %v3806
        %v3827 = vpack.c.b16 %v3807, %v3807
        %v3828 = vpack.c.b16 %v3808, %v3808
        %v3829 = vpack.c.b16 %v3809, %v3809
        %v3830 = vpack.c.b16 %v3810, %v3810
        %vm3831 = vsmask.f32 256
        %vm3832 = vsmask.f32 4368
        %vm3833 = vmor %vm3831, %vm3832
        %v3835 = vshrl.u32 %v3811, 16
        %v3837 = vrot.slane %v3835, 7
        %v3838 = vshll.u32 %v3811, 16
        %v3840 = vor.u32 %v3837, %v3838
        %v3841 = vrot.slane %v3837, 4
        %v3843 = vshrl.u32 %v3812, 16
        %v3845 = vrot.slane %v3843, 7
        %v3846 = vshll.u32 %v3812, 16
        %v3848 = vor.u32 %v3845, %v3846
        %v3849 = vsel %vm3833, %v3841, %v3848
        %v3850 = vrot.slane %v3845, 4
        %v3852 = vshrl.u32 %v3813, 16
        %v3854 = vrot.slane %v3852, 7
        %v3855 = vshll.u32 %v3813, 16
        %v3857 = vor.u32 %v3854, %v3855
        %v3858 = vrot.slane %v3854, 4
        %v3860 = vshrl.u32 %v3814, 16
        %v3862 = vrot.slane %v3860, 7
        %v3863 = vshll.u32 %v3814, 16
        %v3865 = vor.u32 %v3862, %v3863
        %v3866 = vsel %vm3833, %v3858, %v3865
        %v3867 = vrot.slane %v3862, 4
        %v3869 = vshrl.u32 %v3815, 16
        %v3871 = vrot.slane %v3869, 7
        %v3872 = vshll.u32 %v3815, 16
        %v3874 = vor.u32 %v3871, %v3872
        %v3875 = vrot.slane %v3871, 4
        %v3877 = vshrl.u32 %v3816, 16
        %v3879 = vrot.slane %v3877, 7
        %v3880 = vshll.u32 %v3816, 16
        %v3882 = vor.u32 %v3879, %v3880
        %v3883 = vsel %vm3833, %v3875, %v3882
        %v3884 = vrot.slane %v3879, 4
        %v3886 = vshrl.u32 %v3817, 16
        %v3888 = vrot.slane %v3886, 7
        %v3889 = vshll.u32 %v3817, 16
        %v3891 = vor.u32 %v3888, %v3889
        %v3892 = vrot.slane %v3888, 4
        %v3894 = vshrl.u32 %v3818, 16
        %v3896 = vrot.slane %v3894, 7
        %v3897 = vshll.u32 %v3818, 16
        %v3899 = vor.u32 %v3896, %v3897
        %v3900 = vsel %vm3833, %v3892, %v3899
        %v3901 = vrot.slane %v3896, 4
        %v3903 = vshrl.u32 %v3819, 16
        %v3905 = vrot.slane %v3903, 7
        %v3906 = vshll.u32 %v3819, 16
        %v3908 = vor.u32 %v3905, %v3906
        %v3909 = vrot.slane %v3905, 4
        %v3911 = vshrl.u32 %v3820, 16
        %v3913 = vrot.slane %v3911, 7
        %v3914 = vshll.u32 %v3820, 16
        %v3916 = vor.u32 %v3913, %v3914
        %v3917 = vsel %vm3833, %v3909, %v3916
        %v3918 = vrot.slane %v3913, 4
        %v3920 = vshrl.u32 %v3821, 16
        %v3922 = vrot.slane %v3920, 7
        %v3923 = vshll.u32 %v3821, 16
        %v3925 = vor.u32 %v3922, %v3923
        %v3926 = vrot.slane %v3922, 4
        %v3928 = vshrl.u32 %v3822, 16
        %v3930 = vrot.slane %v3928, 7
        %v3931 = vshll.u32 %v3822, 16
        %v3933 = vor.u32 %v3930, %v3931
        %v3934 = vsel %vm3833, %v3926, %v3933
        %v3935 = vrot.slane %v3930, 4
        %v3937 = vshrl.u32 %v3823, 16
        %v3939 = vrot.slane %v3937, 7
        %v3940 = vshll.u32 %v3823, 16
        %v3942 = vor.u32 %v3939, %v3940
        %v3943 = vrot.slane %v3939, 4
        %v3945 = vshrl.u32 %v3824, 16
        %v3947 = vrot.slane %v3945, 7
        %v3948 = vshll.u32 %v3824, 16
        %v3950 = vor.u32 %v3947, %v3948
        %v3951 = vsel %vm3833, %v3943, %v3950
        %v3952 = vrot.slane %v3947, 4
        %v3954 = vshrl.u32 %v3825, 16
        %v3956 = vrot.slane %v3954, 7
        %v3957 = vshll.u32 %v3825, 16
        %v3959 = vor.u32 %v3956, %v3957
        %v3960 = vrot.slane %v3956, 4
        %v3962 = vshrl.u32 %v3826, 16
        %v3964 = vrot.slane %v3962, 7
        %v3965 = vshll.u32 %v3826, 16
        %v3967 = vor.u32 %v3964, %v3965
        %v3968 = vsel %vm3833, %v3960, %v3967
        %v3969 = vrot.slane %v3964, 4
        %v3971 = vshrl.u32 %v3827, 16
        %v3973 = vrot.slane %v3971, 7
        %v3974 = vshll.u32 %v3827, 16
        %v3976 = vor.u32 %v3973, %v3974
        %v3977 = vrot.slane %v3973, 4
        %v3979 = vshrl.u32 %v3828, 16
        %v3981 = vrot.slane %v3979, 7
        %v3982 = vshll.u32 %v3828, 16
        %v3984 = vor.u32 %v3981, %v3982
        %v3985 = vsel %vm3833, %v3977, %v3984
        %v3986 = vrot.slane %v3981, 4
        %v3988 = vshrl.u32 %v3829, 16
        %v3990 = vrot.slane %v3988, 7
        %v3991 = vshll.u32 %v3829, 16
        %v3993 = vor.u32 %v3990, %v3991
        %v3994 = vrot.slane %v3990, 4
        %v3996 = vshrl.u32 %v3830, 16
        %v3998 = vrot.slane %v3996, 7
        %v3999 = vshll.u32 %v3830, 16
        %v4001 = vor.u32 %v3998, %v3999
        %v4002 = vsel %vm3833, %v3994, %v4001
        %v4003 = vrot.slane %v3998, 4
        %vm4034 = vcmask 1043456
        %vm4035 = vsmask.f32 7938
        %vm4036 = vmand %vm4034, %vm4035
        %v4037 = vld [vmem:[#allocation2] sm:$0xf]
        %v4038 = vsel %vm4036, %v3840, %v4037
        %4039 = vst [vmem:[#allocation2] sm:$0xf] %v4038
        %4040 = vst [vmem:[#allocation2 + $0x4] sm:$0xf] %v3849
        %vm4041 = vcmask 1040384
        %vm4042 = vmand %vm4041, %vm3831
        %v4043 = vld [vmem:[#allocation2 + $0x8] sm:$0x1]
        %v4044 = vsel %vm4042, %v3850, %v4043
        %4045 = vst [vmem:[#allocation2 + $0x8] sm:$0x1] %v4044
        %v4046 = vld [vmem:[#allocation2 + $0xc] sm:$0xf]
        %v4047 = vsel %vm4036, %v3857, %v4046
        %4048 = vst [vmem:[#allocation2 + $0xc] sm:$0xf] %v4047
        %4049 = vst [vmem:[#allocation2 + $0x10] sm:$0xf] %v3866
        %v4050 = vld [vmem:[#allocation2 + $0x14] sm:$0x1]
        %v4051 = vsel %vm4042, %v3867, %v4050
        %4052 = vst [vmem:[#allocation2 + $0x14] sm:$0x1] %v4051
        %v4053 = vld [vmem:[#allocation2 + $0x18] sm:$0xf]
        %v4054 = vsel %vm4036, %v3874, %v4053
        %4055 = vst [vmem:[#allocation2 + $0x18] sm:$0xf] %v4054
        %4056 = vst [vmem:[#allocation2 + $0x1c] sm:$0xf] %v3883
        %v4057 = vld [vmem:[#allocation2 + $0x20] sm:$0x1]
        %v4058 = vsel %vm4042, %v3884, %v4057
        %4059 = vst [vmem:[#allocation2 + $0x20] sm:$0x1] %v4058
        %v4060 = vld [vmem:[#allocation2 + $0x24] sm:$0xf]
        %v4061 = vsel %vm4036, %v3891, %v4060
        %4062 = vst [vmem:[#allocation2 + $0x24] sm:$0xf] %v4061
        %4063 = vst [vmem:[#allocation2 + $0x28] sm:$0xf] %v3900
        %v4064 = vld [vmem:[#allocation2 + $0x2c] sm:$0x1]
        %v4065 = vsel %vm4042, %v3901, %v4064
        %4066 = vst [vmem:[#allocation2 + $0x2c] sm:$0x1] %v4065
        %v4067 = vld [vmem:[#allocation2 + $0x30] sm:$0xf]
        %v4068 = vsel %vm4036, %v3908, %v4067
        %4069 = vst [vmem:[#allocation2 + $0x30] sm:$0xf] %v4068
        %4070 = vst [vmem:[#allocation2 + $0x34] sm:$0xf] %v3917
        %v4071 = vld [vmem:[#allocation2 + $0x38] sm:$0x1]
        %v4072 = vsel %vm4042, %v3918, %v4071
        %4073 = vst [vmem:[#allocation2 + $0x38] sm:$0x1] %v4072
        %v4074 = vld [vmem:[#allocation2 + $0x3c] sm:$0xf]
        %v4075 = vsel %vm4036, %v3925, %v4074
        %4076 = vst [vmem:[#allocation2 + $0x3c] sm:$0xf] %v4075
        %4077 = vst [vmem:[#allocation2 + $0x40] sm:$0xf] %v3934
        %v4078 = vld [vmem:[#allocation2 + $0x44] sm:$0x1]
        %v4079 = vsel %vm4042, %v3935, %v4078
        %4080 = vst [vmem:[#allocation2 + $0x44] sm:$0x1] %v4079
        %v4081 = vld [vmem:[#allocation2 + $0x48] sm:$0xf]
        %v4082 = vsel %vm4036, %v3942, %v4081
        %4083 = vst [vmem:[#allocation2 + $0x48] sm:$0xf] %v4082
        %4084 = vst [vmem:[#allocation2 + $0x4c] sm:$0xf] %v3951
        %v4085 = vld [vmem:[#allocation2 + $0x50] sm:$0x1]
        %v4086 = vsel %vm4042, %v3952, %v4085
        %4087 = vst [vmem:[#allocation2 + $0x50] sm:$0x1] %v4086
        %v4088 = vld [vmem:[#allocation2 + $0x54] sm:$0xf]
        %v4089 = vsel %vm4036, %v3959, %v4088
        %4090 = vst [vmem:[#allocation2 + $0x54] sm:$0xf] %v4089
        %4091 = vst [vmem:[#allocation2 + $0x58] sm:$0xf] %v3968
        %v4092 = vld [vmem:[#allocation2 + $0x5c] sm:$0x1]
        %v4093 = vsel %vm4042, %v3969, %v4092
        %4094 = vst [vmem:[#allocation2 + $0x5c] sm:$0x1] %v4093
        %v4095 = vld [vmem:[#allocation2 + $0x60] sm:$0xf]
        %v4096 = vsel %vm4036, %v3976, %v4095
        %4097 = vst [vmem:[#allocation2 + $0x60] sm:$0xf] %v4096
        %4098 = vst [vmem:[#allocation2 + $0x64] sm:$0xf] %v3985
        %v4099 = vld [vmem:[#allocation2 + $0x68] sm:$0x1]
        %v4100 = vsel %vm4042, %v3986, %v4099
        %4101 = vst [vmem:[#allocation2 + $0x68] sm:$0x1] %v4100
        %v4102 = vld [vmem:[#allocation2 + $0x6c] sm:$0xf]
        %v4103 = vsel %vm4036, %v3993, %v4102
        %4104 = vst [vmem:[#allocation2 + $0x6c] sm:$0xf] %v4103
        %4105 = vst [vmem:[#allocation2 + $0x70] sm:$0xf] %v4002
        %v4106 = vld [vmem:[#allocation2 + $0x74] sm:$0x1]
        %v4107 = vsel %vm4042, %v4003, %v4106
        %4108 = vst [vmem:[#allocation2 + $0x74] sm:$0x1] %v4107
        %v4109 = vld [vmem:[#allocation2] sm:$0x1]
        %v4110 = vsel %vm4042, 0, %v4109
        %4111 = vst [vmem:[#allocation2] sm:$0x1] %v4110
        %v4112 = vld [vmem:[#allocation2 + $0xc] sm:$0x1]
        %v4113 = vsel %vm4042, 0, %v4112
        %4114 = vst [vmem:[#allocation2 + $0xc] sm:$0x1] %v4113
        %v4115 = vld [vmem:[#allocation2 + $0x18] sm:$0x1]
        %v4116 = vsel %vm4042, 0, %v4115
        %4117 = vst [vmem:[#allocation2 + $0x18] sm:$0x1] %v4116
        %v4118 = vld [vmem:[#allocation2 + $0x24] sm:$0x1]
        %v4119 = vsel %vm4042, 0, %v4118
        %4120 = vst [vmem:[#allocation2 + $0x24] sm:$0x1] %v4119
        %v4121 = vld [vmem:[#allocation2 + $0x30] sm:$0x1]
        %v4122 = vsel %vm4042, 0, %v4121
        %4123 = vst [vmem:[#allocation2 + $0x30] sm:$0x1] %v4122
        %v4124 = vld [vmem:[#allocation2 + $0x3c] sm:$0x1]
        %v4125 = vsel %vm4042, 0, %v4124
        %4126 = vst [vmem:[#allocation2 + $0x3c] sm:$0x1] %v4125
        %v4127 = vld [vmem:[#allocation2 + $0x48] sm:$0x1]
        %v4128 = vsel %vm4042, 0, %v4127
        %4129 = vst [vmem:[#allocation2 + $0x48] sm:$0x1] %v4128
        %v4130 = vld [vmem:[#allocation2 + $0x54] sm:$0x1]
        %v4131 = vsel %vm4042, 0, %v4130
        %4132 = vst [vmem:[#allocation2 + $0x54] sm:$0x1] %v4131
        %v4133 = vld [vmem:[#allocation2 + $0x60] sm:$0x1]
        %v4134 = vsel %vm4042, 0, %v4133
        %4135 = vst [vmem:[#allocation2 + $0x60] sm:$0x1] %v4134
        %v4136 = vld [vmem:[#allocation2 + $0x6c] sm:$0x1]
        %v4137 = vsel %vm4042, 0, %v4136
        %4138 = vst [vmem:[#allocation2 + $0x6c] sm:$0x1] %v4137
        %vm4139 = vmand %vm4041, %vm4035
        %v4140 = vld [vmem:[#allocation2 + $0x8] sm:$0x1]
        %v4141 = vsel %vm4139, 0, %v4140
        %4142 = vst [vmem:[#allocation2 + $0x8] sm:$0x1] %v4141
        %v4143 = vld [vmem:[#allocation2 + $0x14] sm:$0x1]
        %v4144 = vsel %vm4139, 0, %v4143
        %4145 = vst [vmem:[#allocation2 + $0x14] sm:$0x1] %v4144
        %v4146 = vld [vmem:[#allocation2 + $0x20] sm:$0x1]
        %v4147 = vsel %vm4139, 0, %v4146
        %4148 = vst [vmem:[#allocation2 + $0x20] sm:$0x1] %v4147
        %v4149 = vld [vmem:[#allocation2 + $0x2c] sm:$0x1]
        %v4150 = vsel %vm4139, 0, %v4149
        %4151 = vst [vmem:[#allocation2 + $0x2c] sm:$0x1] %v4150
        %v4152 = vld [vmem:[#allocation2 + $0x38] sm:$0x1]
        %v4153 = vsel %vm4139, 0, %v4152
        %4154 = vst [vmem:[#allocation2 + $0x38] sm:$0x1] %v4153
        %v4155 = vld [vmem:[#allocation2 + $0x44] sm:$0x1]
        %v4156 = vsel %vm4139, 0, %v4155
        %4157 = vst [vmem:[#allocation2 + $0x44] sm:$0x1] %v4156
        %v4158 = vld [vmem:[#allocation2 + $0x50] sm:$0x1]
        %v4159 = vsel %vm4139, 0, %v4158
        %4160 = vst [vmem:[#allocation2 + $0x50] sm:$0x1] %v4159
        %v4161 = vld [vmem:[#allocation2 + $0x5c] sm:$0x1]
        %v4162 = vsel %vm4139, 0, %v4161
        %4163 = vst [vmem:[#allocation2 + $0x5c] sm:$0x1] %v4162
        %v4164 = vld [vmem:[#allocation2 + $0x68] sm:$0x1]
        %v4165 = vsel %vm4139, 0, %v4164
        %4166 = vst [vmem:[#allocation2 + $0x68] sm:$0x1] %v4165
        %v4167 = vld [vmem:[#allocation2 + $0x74] sm:$0x1]
        %v4168 = vsel %vm4139, 0, %v4167
        %4169 = vst [vmem:[#allocation2 + $0x74] sm:$0x1] %v4168
        %p4170 = scmp.eq.s32.totalorder %s27, 0
        // Predicated region
        $region53: #{tpu_custom_call.1} parent=47 // pred_check
          %p4171 = pneg %p4170
        $region54: #{tpu_custom_call.1} parent=47 // pred_check_branch
          %4173 = sbr.rel (%p4171) target = $region56
        $region55: #{tpu_custom_call.1} parent=47 // pred_region
          %4174 = vst [vmem:[#allocation2] sm:$0xf] 0
          %4175 = vst [vmem:[#allocation2 + $0x4] sm:$0xf] 0
          %4176 = vst [vmem:[#allocation2 + $0x8] sm:$0x1] 0
        $region56: #{tpu_custom_call.1} parent=47 // pred_fallthru
          _
        %p4177 = scmp.eq.s32.totalorder %s27, 1
        // Predicated region
        $region57: #{tpu_custom_call.1} parent=47 // pred_check
          %p4178 = pneg %p4177
        $region58: #{tpu_custom_call.1} parent=47 // pred_check_branch
          %4180 = sbr.rel (%p4178) target = $region60
        $region59: #{tpu_custom_call.1} parent=47 // pred_region
          %s4181 = scalar_lea.vmem [#allocation2], 108
          %4182 = vst [vmem:[%s4181] sm:$0xf] 0
          %4183 = vst [vmem:[%s4181 + $0x4] sm:$0xf] 0
          %4184 = vst [vmem:[%s4181 + $0x8] sm:$0x1] 0
        $region60: #{tpu_custom_call.1} parent=47 // pred_fallthru
          _
        %v4185 = vld [vmem:[#allocation2] sm:$0xf]
        %v4186 = vld [vmem:[#allocation2 + $0x4] sm:$0xf]
        %v4187 = vld [vmem:[#allocation2 + $0xc] sm:$0xf]
        %v4188 = vld [vmem:[#allocation2 + $0x10] sm:$0xf]
        %v4189 = vld [vmem:[#allocation2 + $0x18] sm:$0xf]
        %v4190 = vld [vmem:[#allocation2 + $0x1c] sm:$0xf]
        %v4191 = vld [vmem:[#allocation2 + $0x24] sm:$0xf]
        %v4192 = vld [vmem:[#allocation2 + $0x28] sm:$0xf]
        %v4193 = vld [vmem:[#allocation2 + $0x30] sm:$0xf]
        %v4194 = vld [vmem:[#allocation2 + $0x34] sm:$0xf]
        %v4195 = vld [vmem:[#allocation2 + $0x3c] sm:$0xf]
        %v4196 = vld [vmem:[#allocation2 + $0x40] sm:$0xf]
        %v4197 = vld [vmem:[#allocation2 + $0x48] sm:$0xf]
        %v4198 = vld [vmem:[#allocation2 + $0x4c] sm:$0xf]
        %v4199 = vld [vmem:[#allocation2 + $0x54] sm:$0xf]
        %v4200 = vld [vmem:[#allocation2 + $0x58] sm:$0xf]
        %v4201 = vld [vmem:[#allocation3] sm:$0xf]
        %v4202 = vld [vmem:[#allocation3 + $0x4] sm:$0xf]
        %v4203 = vld [vmem:[#allocation3 + $0x8] sm:$0xf]
        %v4204 = vld [vmem:[#allocation3 + $0xc] sm:$0xf]
        %v4205 = vld [vmem:[#allocation3 + $0x10] sm:$0xf]
        %v4206 = vld [vmem:[#allocation3 + $0x14] sm:$0xf]
        %v4207 = vld [vmem:[#allocation3 + $0x18] sm:$0xf]
        %v4208 = vld [vmem:[#allocation3 + $0x1c] sm:$0xf]
        %v4209 = vld [vmem:[#allocation3 + $0x20] sm:$0xf]
        %v4210 = vld [vmem:[#allocation3 + $0x24] sm:$0xf]
        %v4211 = vld [vmem:[#allocation3 + $0x28] sm:$0xf]
        %v4212 = vld [vmem:[#allocation3 + $0x2c] sm:$0xf]
        %v4213 = vld [vmem:[#allocation3 + $0x30] sm:$0xf]
        %v4214 = vld [vmem:[#allocation3 + $0x34] sm:$0xf]
        %v4215 = vld [vmem:[#allocation3 + $0x38] sm:$0xf]
        %v4216 = vld [vmem:[#allocation3 + $0x3c] sm:$0xf]
        %v4217 = vld [vmem:[#allocation2 + $0x8] sm:$0x1]
        %v4218 = vld [vmem:[#allocation2 + $0x14] sm:$0x1]
        %v4219 = vld [vmem:[#allocation2 + $0x20] sm:$0x1]
        %v4220 = vld [vmem:[#allocation2 + $0x2c] sm:$0x1]
        %v4221 = vld [vmem:[#allocation2 + $0x38] sm:$0x1]
        %v4222 = vld [vmem:[#allocation2 + $0x44] sm:$0x1]
        %v4223 = vld [vmem:[#allocation2 + $0x50] sm:$0x1]
        %v4224 = vld [vmem:[#allocation2 + $0x5c] sm:$0x1]
        %v4226 = vshrl.u32 %v4185, 16
        %v4228 = vrot.slane %v4226, 4
        %v4229 = vshll.u32 %v4185, 16
        %v4231 = vrot.slane %v4229, 5
        %v4232 = vor.u32 %v4228, %v4231
        %v4233 = vrot.slane %v4232, 4
        %v4235 = vshll.u32 %v4186, 16
        %v4237 = vrot.slane %v4235, 5
        %v4238 = vsel %vm360, %v4233, %v4237
        %v4239 = vshrl.u32 %v4186, 16
        %v4241 = vrot.slane %v4239, 4
        %v4242 = vor.u32 %v4241, %v4237
        %v4243 = vrot.slane %v4242, 4
        %v4245 = vshll.u32 %v4217, 16
        %v4247 = vrot.slane %v4245, 5
        %v4248 = vsel %vm360, %v4243, %v4247
        %v4250 = vshrl.u32 %v4187, 16
        %v4252 = vrot.slane %v4250, 4
        %v4253 = vshll.u32 %v4187, 16
        %v4255 = vrot.slane %v4253, 5
        %v4256 = vor.u32 %v4252, %v4255
        %v4257 = vrot.slane %v4256, 4
        %v4259 = vshll.u32 %v4188, 16
        %v4261 = vrot.slane %v4259, 5
        %v4262 = vsel %vm360, %v4257, %v4261
        %v4263 = vshrl.u32 %v4188, 16
        %v4265 = vrot.slane %v4263, 4
        %v4266 = vor.u32 %v4265, %v4261
        %v4267 = vrot.slane %v4266, 4
        %v4269 = vshll.u32 %v4218, 16
        %v4271 = vrot.slane %v4269, 5
        %v4272 = vsel %vm360, %v4267, %v4271
        %v4274 = vshrl.u32 %v4189, 16
        %v4276 = vrot.slane %v4274, 4
        %v4277 = vshll.u32 %v4189, 16
        %v4279 = vrot.slane %v4277, 5
        %v4280 = vor.u32 %v4276, %v4279
        %v4281 = vrot.slane %v4280, 4
        %v4283 = vshll.u32 %v4190, 16
        %v4285 = vrot.slane %v4283, 5
        %v4286 = vsel %vm360, %v4281, %v4285
        %v4287 = vshrl.u32 %v4190, 16
        %v4289 = vrot.slane %v4287, 4
        %v4290 = vor.u32 %v4289, %v4285
        %v4291 = vrot.slane %v4290, 4
        %v4293 = vshll.u32 %v4219, 16
        %v4295 = vrot.slane %v4293, 5
        %v4296 = vsel %vm360, %v4291, %v4295
        %v4298 = vshrl.u32 %v4191, 16
        %v4300 = vrot.slane %v4298, 4
        %v4301 = vshll.u32 %v4191, 16
        %v4303 = vrot.slane %v4301, 5
        %v4304 = vor.u32 %v4300, %v4303
        %v4305 = vrot.slane %v4304, 4
        %v4307 = vshll.u32 %v4192, 16
        %v4309 = vrot.slane %v4307, 5
        %v4310 = vsel %vm360, %v4305, %v4309
        %v4311 = vshrl.u32 %v4192, 16
        %v4313 = vrot.slane %v4311, 4
        %v4314 = vor.u32 %v4313, %v4309
        %v4315 = vrot.slane %v4314, 4
        %v4317 = vshll.u32 %v4220, 16
        %v4319 = vrot.slane %v4317, 5
        %v4320 = vsel %vm360, %v4315, %v4319
        %v4322 = vshrl.u32 %v4193, 16
        %v4324 = vrot.slane %v4322, 4
        %v4325 = vshll.u32 %v4193, 16
        %v4327 = vrot.slane %v4325, 5
        %v4328 = vor.u32 %v4324, %v4327
        %v4329 = vrot.slane %v4328, 4
        %v4331 = vshll.u32 %v4194, 16
        %v4333 = vrot.slane %v4331, 5
        %v4334 = vsel %vm360, %v4329, %v4333
        %v4335 = vshrl.u32 %v4194, 16
        %v4337 = vrot.slane %v4335, 4
        %v4338 = vor.u32 %v4337, %v4333
        %v4339 = vrot.slane %v4338, 4
        %v4341 = vshll.u32 %v4221, 16
        %v4343 = vrot.slane %v4341, 5
        %v4344 = vsel %vm360, %v4339, %v4343
        %v4346 = vshrl.u32 %v4195, 16
        %v4348 = vrot.slane %v4346, 4
        %v4349 = vshll.u32 %v4195, 16
        %v4351 = vrot.slane %v4349, 5
        %v4352 = vor.u32 %v4348, %v4351
        %v4353 = vrot.slane %v4352, 4
        %v4355 = vshll.u32 %v4196, 16
        %v4357 = vrot.slane %v4355, 5
        %v4358 = vsel %vm360, %v4353, %v4357
        %v4359 = vshrl.u32 %v4196, 16
        %v4361 = vrot.slane %v4359, 4
        %v4362 = vor.u32 %v4361, %v4357
        %v4363 = vrot.slane %v4362, 4
        %v4365 = vshll.u32 %v4222, 16
        %v4367 = vrot.slane %v4365, 5
        %v4368 = vsel %vm360, %v4363, %v4367
        %v4370 = vshrl.u32 %v4197, 16
        %v4372 = vrot.slane %v4370, 4
        %v4373 = vshll.u32 %v4197, 16
        %v4375 = vrot.slane %v4373, 5
        %v4376 = vor.u32 %v4372, %v4375
        %v4377 = vrot.slane %v4376, 4
        %v4379 = vshll.u32 %v4198, 16
        %v4381 = vrot.slane %v4379, 5
        %v4382 = vsel %vm360, %v4377, %v4381
        %v4383 = vshrl.u32 %v4198, 16
        %v4385 = vrot.slane %v4383, 4
        %v4386 = vor.u32 %v4385, %v4381
        %v4387 = vrot.slane %v4386, 4
        %v4389 = vshll.u32 %v4223, 16
        %v4391 = vrot.slane %v4389, 5
        %v4392 = vsel %vm360, %v4387, %v4391
        %v4394 = vshrl.u32 %v4199, 16
        %v4396 = vrot.slane %v4394, 4
        %v4397 = vshll.u32 %v4199, 16
        %v4399 = vrot.slane %v4397, 5
        %v4400 = vor.u32 %v4396, %v4399
        %v4401 = vrot.slane %v4400, 4
        %v4403 = vshll.u32 %v4200, 16
        %v4405 = vrot.slane %v4403, 5
        %v4406 = vsel %vm360, %v4401, %v4405
        %v4407 = vshrl.u32 %v4200, 16
        %v4409 = vrot.slane %v4407, 4
        %v4410 = vor.u32 %v4409, %v4405
        %v4411 = vrot.slane %v4410, 4
        %v4413 = vshll.u32 %v4224, 16
        %v4415 = vrot.slane %v4413, 5
        %v4416 = vsel %vm360, %v4411, %v4415
        %s4417 = scalar_lea.vmem [#allocation3], 64
        %v4418 = vld [vmem:[%s4417] sm:$0xf]
        %v4419 = vld [vmem:[%s4417 + $0x4] sm:$0xf]
        %v4420 = vld [vmem:[%s4417 + $0x8] sm:$0xf]
        %v4421 = vld [vmem:[%s4417 + $0xc] sm:$0xf]
        %v4422 = vld [vmem:[%s4417 + $0x10] sm:$0xf]
        %v4423 = vld [vmem:[%s4417 + $0x14] sm:$0xf]
        %v4424 = vld [vmem:[%s4417 + $0x18] sm:$0xf]
        %v4425 = vld [vmem:[%s4417 + $0x1c] sm:$0xf]
        %v4426 = vld [vmem:[%s4417 + $0x20] sm:$0xf]
        %v4427 = vld [vmem:[%s4417 + $0x24] sm:$0xf]
        %v4428 = vld [vmem:[%s4417 + $0x28] sm:$0xf]
        %v4429 = vld [vmem:[%s4417 + $0x2c] sm:$0xf]
        %v4430 = vld [vmem:[%s4417 + $0x30] sm:$0xf]
        %v4431 = vld [vmem:[%s4417 + $0x34] sm:$0xf]
        %v4432 = vld [vmem:[%s4417 + $0x38] sm:$0xf]
        %v4433 = vld [vmem:[%s4417 + $0x3c] sm:$0xf]
        %v4434 = vunpack.c.l.b16 %v4238
        %v4435 = vunpack.c.l.b16 %v4248
        %v4436 = vunpack.c.l.b16 %v4262
        %v4437 = vunpack.c.l.b16 %v4272
        %v4438 = vunpack.c.l.b16 %v4286
        %v4439 = vunpack.c.l.b16 %v4296
        %v4440 = vunpack.c.l.b16 %v4310
        %v4441 = vunpack.c.l.b16 %v4320
        %v4442 = vunpack.c.l.b16 %v4334
        %v4443 = vunpack.c.l.b16 %v4344
        %v4444 = vunpack.c.l.b16 %v4358
        %v4445 = vunpack.c.l.b16 %v4368
        %v4446 = vunpack.c.l.b16 %v4382
        %v4447 = vunpack.c.l.b16 %v4392
        %v4448 = vunpack.c.l.b16 %v4406
        %v4449 = vunpack.c.l.b16 %v4416
        %v4450 = vpack.c.b16 %v4435, %v4434
        %v4451 = vpack.c.b16 %v4437, %v4436
        %v4452 = vpack.c.b16 %v4439, %v4438
        %v4453 = vpack.c.b16 %v4441, %v4440
        %v4454 = vpack.c.b16 %v4443, %v4442
        %v4455 = vpack.c.b16 %v4445, %v4444
        %v4456 = vpack.c.b16 %v4447, %v4446
        %v4457 = vpack.c.b16 %v4449, %v4448
        %v4482 = vunpack.c.l.b16 %v4418
        %v4483 = vunpack.c.l.b16 %v4419
        %v4484 = vunpack.c.l.b16 %v4420
        %v4485 = vunpack.c.l.b16 %v4421
        %v4486 = vunpack.c.l.b16 %v4422
        %v4487 = vunpack.c.l.b16 %v4423
        %v4488 = vunpack.c.l.b16 %v4424
        %v4489 = vunpack.c.l.b16 %v4425
        %v4490 = vunpack.c.l.b16 %v4426
        %v4491 = vunpack.c.l.b16 %v4427
        %v4492 = vunpack.c.l.b16 %v4428
        %v4493 = vunpack.c.l.b16 %v4429
        %v4494 = vunpack.c.l.b16 %v4430
        %v4495 = vunpack.c.l.b16 %v4431
        %v4496 = vunpack.c.l.b16 %v4432
        %v4497 = vunpack.c.l.b16 %v4433
        %v4498 = vpack.c.b16 %v4483, %v4482
        %v4499 = vpack.c.b16 %v4485, %v4484
        %v4500 = vpack.c.b16 %v4487, %v4486
        %v4501 = vpack.c.b16 %v4489, %v4488
        %v4502 = vpack.c.b16 %v4491, %v4490
        %v4503 = vpack.c.b16 %v4493, %v4492
        %v4504 = vpack.c.b16 %v4495, %v4494
        %v4505 = vpack.c.b16 %v4497, %v4496
        %4514 = vmatprep.subr.bf16.mxu0 0
        %4515 = vmatpush1.bf16.msra.mxu0 %v4505
        %4516 = vmatprep.subr.bf16.mxu0 0
        %4517 = vmatpush1.bf16.msra.mxu0 %v4504
        %4518 = vmatprep.subr.bf16.mxu0 0
        %4519 = vmatpush1.bf16.msra.mxu0 %v4503
        %4520 = vmatprep.subr.bf16.mxu0 0
        %4521 = vmatpush1.bf16.msra.mxu0 %v4502
        %4522 = vmatprep.subr.bf16.mxu0 0
        %4523 = vmatpush1.bf16.msra.mxu0 %v4501
        %4524 = vmatprep.subr.bf16.mxu0 0
        %4525 = vmatpush1.bf16.msra.mxu0 %v4500
        %4526 = vmatprep.subr.bf16.mxu0 0
        %4527 = vmatpush1.bf16.msra.mxu0 %v4499
        %4528 = vmatprep.subr.bf16.mxu0 0
        %4529 = vmatpush1.bf16.msra.mxu0 %v4498
        %4530 = vmatprep.subr.bf16.mxu0 0
        %4531 = vmatpush2.bf16.msra.mxu0 0
        %4532 = vmatprep.subr.bf16.mxu0 0
        %4533 = vmatpush2.bf16.msra.mxu0 0
        %4534 = vmatprep.subr.bf16.mxu0 0
        %4535 = vmatpush2.bf16.msra.mxu0 0
        %4536 = vmatprep.subr.bf16.mxu0 0
        %4537 = vmatpush2.bf16.msra.mxu0 0
        %4538 = vmatprep.subr.bf16.mxu0 0
        %4539 = vmatpush2.bf16.msra.mxu0 0
        %4540 = vmatprep.subr.bf16.mxu0 0
        %4541 = vmatpush2.bf16.msra.mxu0 0
        %4542 = vmatprep.subr.bf16.mxu0 0
        %4543 = vmatpush2.bf16.msra.mxu0 0
        %4544 = vmatprep.subr.bf16.mxu0 0
        %4545 = vmatpush2.bf16.msra.mxu0 0
        %4546 = vmatprep.mubr.bf16.mxu0 0
        %4547 = vmatmul.mubr.bf16.gmra.mxu0 %v4450
        %v4548 = vpop.f32.mrf.mxu0
        %v4549 = vadd.f32 0.0, %v4548
        %v4550 = vpop.f32.mrf.mxu0
        %v4551 = vpop.f32.mrf.mxu0
        %v4552 = vadd.f32 0.0, %v4551
        %v4553 = vpop.f32.mrf.mxu0
        %4554 = vmatprep.mubr.bf16.mxu0 0
        %4555 = vmatmul.mubr.bf16.gmra.mxu0 %v4451
        %v4556 = vpop.f32.mrf.mxu0
        %v4557 = vadd.f32 0.0, %v4556
        %v4558 = vpop.f32.mrf.mxu0
        %v4559 = vpop.f32.mrf.mxu0
        %v4560 = vadd.f32 0.0, %v4559
        %v4561 = vpop.f32.mrf.mxu0
        %4562 = vmatprep.mubr.bf16.mxu0 0
        %4563 = vmatmul.mubr.bf16.gmra.mxu0 %v4452
        %v4564 = vpop.f32.mrf.mxu0
        %v4565 = vadd.f32 0.0, %v4564
        %v4566 = vpop.f32.mrf.mxu0
        %v4567 = vpop.f32.mrf.mxu0
        %v4568 = vadd.f32 0.0, %v4567
        %v4569 = vpop.f32.mrf.mxu0
        %4570 = vmatprep.mubr.bf16.mxu0 0
        %4571 = vmatmul.mubr.bf16.gmra.mxu0 %v4453
        %v4572 = vpop.f32.mrf.mxu0
        %v4573 = vadd.f32 0.0, %v4572
        %v4574 = vpop.f32.mrf.mxu0
        %v4575 = vpop.f32.mrf.mxu0
        %v4576 = vadd.f32 0.0, %v4575
        %v4577 = vpop.f32.mrf.mxu0
        %4578 = vmatprep.mubr.bf16.mxu0 0
        %4579 = vmatmul.mubr.bf16.gmra.mxu0 %v4454
        %v4580 = vpop.f32.mrf.mxu0
        %v4581 = vadd.f32 0.0, %v4580
        %v4582 = vpop.f32.mrf.mxu0
        %v4583 = vpop.f32.mrf.mxu0
        %v4584 = vadd.f32 0.0, %v4583
        %v4585 = vpop.f32.mrf.mxu0
        %4586 = vmatprep.mubr.bf16.mxu0 0
        %4587 = vmatmul.mubr.bf16.gmra.mxu0 %v4455
        %v4588 = vpop.f32.mrf.mxu0
        %v4589 = vadd.f32 0.0, %v4588
        %v4590 = vpop.f32.mrf.mxu0
        %v4591 = vpop.f32.mrf.mxu0
        %v4592 = vadd.f32 0.0, %v4591
        %v4593 = vpop.f32.mrf.mxu0
        %4594 = vmatprep.mubr.bf16.mxu0 0
        %4595 = vmatmul.mubr.bf16.gmra.mxu0 %v4456
        %v4596 = vpop.f32.mrf.mxu0
        %v4597 = vadd.f32 0.0, %v4596
        %v4598 = vpop.f32.mrf.mxu0
        %v4599 = vpop.f32.mrf.mxu0
        %v4600 = vadd.f32 0.0, %v4599
        %v4601 = vpop.f32.mrf.mxu0
        %4602 = vmatprep.mubr.bf16.mxu0 0
        %4603 = vmatmul.mubr.bf16.gmra.mxu0 %v4457
        %v4604 = vpop.f32.mrf.mxu0
        %v4605 = vadd.f32 0.0, %v4604
        %v4606 = vpop.f32.mrf.mxu0
        %v4607 = vpop.f32.mrf.mxu0
        %v4608 = vadd.f32 0.0, %v4607
        %v4609 = vpop.f32.mrf.mxu0
        %4610 = vdwg.mxu0
        %v4627 = vunpack.c.l.b16 %v4185
        %v4628 = vunpack.c.l.b16 %v4186
        %v4629 = vunpack.c.l.b16 %v4187
        %v4630 = vunpack.c.l.b16 %v4188
        %v4631 = vunpack.c.l.b16 %v4189
        %v4632 = vunpack.c.l.b16 %v4190
        %v4633 = vunpack.c.l.b16 %v4191
        %v4634 = vunpack.c.l.b16 %v4192
        %v4635 = vunpack.c.l.b16 %v4193
        %v4636 = vunpack.c.l.b16 %v4194
        %v4637 = vunpack.c.l.b16 %v4195
        %v4638 = vunpack.c.l.b16 %v4196
        %v4639 = vunpack.c.l.b16 %v4197
        %v4640 = vunpack.c.l.b16 %v4198
        %v4641 = vunpack.c.l.b16 %v4199
        %v4642 = vunpack.c.l.b16 %v4200
        %v4643 = vpack.c.b16 %v4628, %v4627
        %v4644 = vpack.c.b16 %v4630, %v4629
        %v4645 = vpack.c.b16 %v4632, %v4631
        %v4646 = vpack.c.b16 %v4634, %v4633
        %v4647 = vpack.c.b16 %v4636, %v4635
        %v4648 = vpack.c.b16 %v4638, %v4637
        %v4649 = vpack.c.b16 %v4640, %v4639
        %v4650 = vpack.c.b16 %v4642, %v4641
        %v4675 = vunpack.c.l.b16 %v4201
        %v4676 = vunpack.c.l.b16 %v4202
        %v4677 = vunpack.c.l.b16 %v4203
        %v4678 = vunpack.c.l.b16 %v4204
        %v4679 = vunpack.c.l.b16 %v4205
        %v4680 = vunpack.c.l.b16 %v4206
        %v4681 = vunpack.c.l.b16 %v4207
        %v4682 = vunpack.c.l.b16 %v4208
        %v4683 = vunpack.c.l.b16 %v4209
        %v4684 = vunpack.c.l.b16 %v4210
        %v4685 = vunpack.c.l.b16 %v4211
        %v4686 = vunpack.c.l.b16 %v4212
        %v4687 = vunpack.c.l.b16 %v4213
        %v4688 = vunpack.c.l.b16 %v4214
        %v4689 = vunpack.c.l.b16 %v4215
        %v4690 = vunpack.c.l.b16 %v4216
        %v4691 = vpack.c.b16 %v4676, %v4675
        %v4692 = vpack.c.b16 %v4678, %v4677
        %v4693 = vpack.c.b16 %v4680, %v4679
        %v4694 = vpack.c.b16 %v4682, %v4681
        %v4695 = vpack.c.b16 %v4684, %v4683
        %v4696 = vpack.c.b16 %v4686, %v4685
        %v4697 = vpack.c.b16 %v4688, %v4687
        %v4698 = vpack.c.b16 %v4690, %v4689
        %4707 = vmatprep.subr.bf16.mxu0 0
        %4708 = vmatpush1.bf16.msra.mxu0 %v4698
        %4709 = vmatprep.subr.bf16.mxu0 0
        %4710 = vmatpush1.bf16.msra.mxu0 %v4697
        %4711 = vmatprep.subr.bf16.mxu0 0
        %4712 = vmatpush1.bf16.msra.mxu0 %v4696
        %4713 = vmatprep.subr.bf16.mxu0 0
        %4714 = vmatpush1.bf16.msra.mxu0 %v4695
        %4715 = vmatprep.subr.bf16.mxu0 0
        %4716 = vmatpush1.bf16.msra.mxu0 %v4694
        %4717 = vmatprep.subr.bf16.mxu0 0
        %4718 = vmatpush1.bf16.msra.mxu0 %v4693
        %4719 = vmatprep.subr.bf16.mxu0 0
        %4720 = vmatpush1.bf16.msra.mxu0 %v4692
        %4721 = vmatprep.subr.bf16.mxu0 0
        %4722 = vmatpush1.bf16.msra.mxu0 %v4691
        %4723 = vmatprep.subr.bf16.mxu0 0
        %4724 = vmatpush2.bf16.msra.mxu0 0
        %4725 = vmatprep.subr.bf16.mxu0 0
        %4726 = vmatpush2.bf16.msra.mxu0 0
        %4727 = vmatprep.subr.bf16.mxu0 0
        %4728 = vmatpush2.bf16.msra.mxu0 0
        %4729 = vmatprep.subr.bf16.mxu0 0
        %4730 = vmatpush2.bf16.msra.mxu0 0
        %4731 = vmatprep.subr.bf16.mxu0 0
        %4732 = vmatpush2.bf16.msra.mxu0 0
        %4733 = vmatprep.subr.bf16.mxu0 0
        %4734 = vmatpush2.bf16.msra.mxu0 0
        %4735 = vmatprep.subr.bf16.mxu0 0
        %4736 = vmatpush2.bf16.msra.mxu0 0
        %4737 = vmatprep.subr.bf16.mxu0 0
        %4738 = vmatpush2.bf16.msra.mxu0 0
        %4739 = vmatprep.mubr.bf16.mxu0 0
        %4740 = vmatmul.mubr.bf16.gmra.mxu0 %v4643
        %v4741 = vpop.f32.mrf.mxu0
        %v4742 = vadd.f32 %v4549, %v4741
        %v4743 = vpop.f32.mrf.mxu0
        %v4744 = vpop.f32.mrf.mxu0
        %v4745 = vadd.f32 %v4552, %v4744
        %v4746 = vpop.f32.mrf.mxu0
        %4747 = vmatprep.mubr.bf16.mxu0 0
        %4748 = vmatmul.mubr.bf16.gmra.mxu0 %v4644
        %v4749 = vpop.f32.mrf.mxu0
        %v4750 = vadd.f32 %v4557, %v4749
        %v4751 = vpop.f32.mrf.mxu0
        %v4752 = vpop.f32.mrf.mxu0
        %v4753 = vadd.f32 %v4560, %v4752
        %v4754 = vpop.f32.mrf.mxu0
        %4755 = vmatprep.mubr.bf16.mxu0 0
        %4756 = vmatmul.mubr.bf16.gmra.mxu0 %v4645
        %v4757 = vpop.f32.mrf.mxu0
        %v4758 = vadd.f32 %v4565, %v4757
        %v4759 = vpop.f32.mrf.mxu0
        %v4760 = vpop.f32.mrf.mxu0
        %v4761 = vadd.f32 %v4568, %v4760
        %v4762 = vpop.f32.mrf.mxu0
        %4763 = vmatprep.mubr.bf16.mxu0 0
        %4764 = vmatmul.mubr.bf16.gmra.mxu0 %v4646
        %v4765 = vpop.f32.mrf.mxu0
        %v4766 = vadd.f32 %v4573, %v4765
        %v4767 = vpop.f32.mrf.mxu0
        %v4768 = vpop.f32.mrf.mxu0
        %v4769 = vadd.f32 %v4576, %v4768
        %v4770 = vpop.f32.mrf.mxu0
        %4771 = vmatprep.mubr.bf16.mxu0 0
        %4772 = vmatmul.mubr.bf16.gmra.mxu0 %v4647
        %v4773 = vpop.f32.mrf.mxu0
        %v4774 = vadd.f32 %v4581, %v4773
        %v4775 = vpop.f32.mrf.mxu0
        %v4776 = vpop.f32.mrf.mxu0
        %v4777 = vadd.f32 %v4584, %v4776
        %v4778 = vpop.f32.mrf.mxu0
        %4779 = vmatprep.mubr.bf16.mxu0 0
        %4780 = vmatmul.mubr.bf16.gmra.mxu0 %v4648
        %v4781 = vpop.f32.mrf.mxu0
        %v4782 = vadd.f32 %v4589, %v4781
        %v4783 = vpop.f32.mrf.mxu0
        %v4784 = vpop.f32.mrf.mxu0
        %v4785 = vadd.f32 %v4592, %v4784
        %v4786 = vpop.f32.mrf.mxu0
        %4787 = vmatprep.mubr.bf16.mxu0 0
        %4788 = vmatmul.mubr.bf16.gmra.mxu0 %v4649
        %v4789 = vpop.f32.mrf.mxu0
        %v4790 = vadd.f32 %v4597, %v4789
        %v4791 = vpop.f32.mrf.mxu0
        %v4792 = vpop.f32.mrf.mxu0
        %v4793 = vadd.f32 %v4600, %v4792
        %v4794 = vpop.f32.mrf.mxu0
        %4795 = vmatprep.mubr.bf16.mxu0 0
        %4796 = vmatmul.mubr.bf16.gmra.mxu0 %v4650
        %v4797 = vpop.f32.mrf.mxu0
        %v4798 = vadd.f32 %v4605, %v4797
        %v4799 = vpop.f32.mrf.mxu0
        %v4800 = vpop.f32.mrf.mxu0
        %v4801 = vadd.f32 %v4608, %v4800
        %v4802 = vpop.f32.mrf.mxu0
        %4803 = vdwg.mxu0
        %v4804 = vld [vmem:[#allocation2] sm:$0xe]
        %v4805 = vld [vmem:[#allocation2 + $0xc] sm:$0xe]
        %v4806 = vld [vmem:[#allocation2 + $0x18] sm:$0xe]
        %v4807 = vld [vmem:[#allocation2 + $0x24] sm:$0xe]
        %v4808 = vld [vmem:[#allocation2 + $0x30] sm:$0xe]
        %v4809 = vld [vmem:[#allocation2 + $0x3c] sm:$0xe]
        %v4810 = vld [vmem:[#allocation2 + $0x48] sm:$0xe]
        %v4811 = vld [vmem:[#allocation2 + $0x54] sm:$0xe]
        %v4828 = vrot.slane %v4804, 5
        %v4829 = vrot.slane %v4828, 4
        %v4830 = vrot.slane %v4186, 5
        %v4831 = vsel %vm1072, %v4829, %v4830
        %v4832 = vrot.slane %v4830, 4
        %v4833 = vrot.slane %v4217, 5
        %v4834 = vsel %vm1072, %v4832, %v4833
        %v4835 = vrot.slane %v4805, 5
        %v4836 = vrot.slane %v4835, 4
        %v4837 = vrot.slane %v4188, 5
        %v4838 = vsel %vm1072, %v4836, %v4837
        %v4839 = vrot.slane %v4837, 4
        %v4840 = vrot.slane %v4218, 5
        %v4841 = vsel %vm1072, %v4839, %v4840
        %v4842 = vrot.slane %v4806, 5
        %v4843 = vrot.slane %v4842, 4
        %v4844 = vrot.slane %v4190, 5
        %v4845 = vsel %vm1072, %v4843, %v4844
        %v4846 = vrot.slane %v4844, 4
        %v4847 = vrot.slane %v4219, 5
        %v4848 = vsel %vm1072, %v4846, %v4847
        %v4849 = vrot.slane %v4807, 5
        %v4850 = vrot.slane %v4849, 4
        %v4851 = vrot.slane %v4192, 5
        %v4852 = vsel %vm1072, %v4850, %v4851
        %v4853 = vrot.slane %v4851, 4
        %v4854 = vrot.slane %v4220, 5
        %v4855 = vsel %vm1072, %v4853, %v4854
        %v4856 = vrot.slane %v4808, 5
        %v4857 = vrot.slane %v4856, 4
        %v4858 = vrot.slane %v4194, 5
        %v4859 = vsel %vm1072, %v4857, %v4858
        %v4860 = vrot.slane %v4858, 4
        %v4861 = vrot.slane %v4221, 5
        %v4862 = vsel %vm1072, %v4860, %v4861
        %v4863 = vrot.slane %v4809, 5
        %v4864 = vrot.slane %v4863, 4
        %v4865 = vrot.slane %v4196, 5
        %v4866 = vsel %vm1072, %v4864, %v4865
        %v4867 = vrot.slane %v4865, 4
        %v4868 = vrot.slane %v4222, 5
        %v4869 = vsel %vm1072, %v4867, %v4868
        %v4870 = vrot.slane %v4810, 5
        %v4871 = vrot.slane %v4870, 4
        %v4872 = vrot.slane %v4198, 5
        %v4873 = vsel %vm1072, %v4871, %v4872
        %v4874 = vrot.slane %v4872, 4
        %v4875 = vrot.slane %v4223, 5
        %v4876 = vsel %vm1072, %v4874, %v4875
        %v4877 = vrot.slane %v4811, 5
        %v4878 = vrot.slane %v4877, 4
        %v4879 = vrot.slane %v4200, 5
        %v4880 = vsel %vm1072, %v4878, %v4879
        %v4881 = vrot.slane %v4879, 4
        %v4882 = vrot.slane %v4224, 5
        %v4883 = vsel %vm1072, %v4881, %v4882
        %s4884 = scalar_lea.vmem [#allocation3], 128
        %v4885 = vld [vmem:[%s4884] sm:$0xf]
        %v4886 = vld [vmem:[%s4884 + $0x4] sm:$0xf]
        %v4887 = vld [vmem:[%s4884 + $0x8] sm:$0xf]
        %v4888 = vld [vmem:[%s4884 + $0xc] sm:$0xf]
        %v4889 = vld [vmem:[%s4884 + $0x10] sm:$0xf]
        %v4890 = vld [vmem:[%s4884 + $0x14] sm:$0xf]
        %v4891 = vld [vmem:[%s4884 + $0x18] sm:$0xf]
        %v4892 = vld [vmem:[%s4884 + $0x1c] sm:$0xf]
        %v4893 = vld [vmem:[%s4884 + $0x20] sm:$0xf]
        %v4894 = vld [vmem:[%s4884 + $0x24] sm:$0xf]
        %v4895 = vld [vmem:[%s4884 + $0x28] sm:$0xf]
        %v4896 = vld [vmem:[%s4884 + $0x2c] sm:$0xf]
        %v4897 = vld [vmem:[%s4884 + $0x30] sm:$0xf]
        %v4898 = vld [vmem:[%s4884 + $0x34] sm:$0xf]
        %v4899 = vld [vmem:[%s4884 + $0x38] sm:$0xf]
        %v4900 = vld [vmem:[%s4884 + $0x3c] sm:$0xf]
        %v4901 = vunpack.c.l.b16 %v4831
        %v4902 = vunpack.c.l.b16 %v4834
        %v4903 = vunpack.c.l.b16 %v4838
        %v4904 = vunpack.c.l.b16 %v4841
        %v4905 = vunpack.c.l.b16 %v4845
        %v4906 = vunpack.c.l.b16 %v4848
        %v4907 = vunpack.c.l.b16 %v4852
        %v4908 = vunpack.c.l.b16 %v4855
        %v4909 = vunpack.c.l.b16 %v4859
        %v4910 = vunpack.c.l.b16 %v4862
        %v4911 = vunpack.c.l.b16 %v4866
        %v4912 = vunpack.c.l.b16 %v4869
        %v4913 = vunpack.c.l.b16 %v4873
        %v4914 = vunpack.c.l.b16 %v4876
        %v4915 = vunpack.c.l.b16 %v4880
        %v4916 = vunpack.c.l.b16 %v4883
        %v4917 = vpack.c.b16 %v4902, %v4901
        %v4918 = vpack.c.b16 %v4904, %v4903
        %v4919 = vpack.c.b16 %v4906, %v4905
        %v4920 = vpack.c.b16 %v4908, %v4907
        %v4921 = vpack.c.b16 %v4910, %v4909
        %v4922 = vpack.c.b16 %v4912, %v4911
        %v4923 = vpack.c.b16 %v4914, %v4913
        %v4924 = vpack.c.b16 %v4916, %v4915
        %v4949 = vunpack.c.l.b16 %v4885
        %v4950 = vunpack.c.l.b16 %v4886
        %v4951 = vunpack.c.l.b16 %v4887
        %v4952 = vunpack.c.l.b16 %v4888
        %v4953 = vunpack.c.l.b16 %v4889
        %v4954 = vunpack.c.l.b16 %v4890
        %v4955 = vunpack.c.l.b16 %v4891
        %v4956 = vunpack.c.l.b16 %v4892
        %v4957 = vunpack.c.l.b16 %v4893
        %v4958 = vunpack.c.l.b16 %v4894
        %v4959 = vunpack.c.l.b16 %v4895
        %v4960 = vunpack.c.l.b16 %v4896
        %v4961 = vunpack.c.l.b16 %v4897
        %v4962 = vunpack.c.l.b16 %v4898
        %v4963 = vunpack.c.l.b16 %v4899
        %v4964 = vunpack.c.l.b16 %v4900
        %v4965 = vpack.c.b16 %v4950, %v4949
        %v4966 = vpack.c.b16 %v4952, %v4951
        %v4967 = vpack.c.b16 %v4954, %v4953
        %v4968 = vpack.c.b16 %v4956, %v4955
        %v4969 = vpack.c.b16 %v4958, %v4957
        %v4970 = vpack.c.b16 %v4960, %v4959
        %v4971 = vpack.c.b16 %v4962, %v4961
        %v4972 = vpack.c.b16 %v4964, %v4963
        %4981 = vmatprep.subr.bf16.mxu0 0
        %4982 = vmatpush1.bf16.msra.mxu0 %v4972
        %4983 = vmatprep.subr.bf16.mxu0 0
        %4984 = vmatpush1.bf16.msra.mxu0 %v4971
        %4985 = vmatprep.subr.bf16.mxu0 0
        %4986 = vmatpush1.bf16.msra.mxu0 %v4970
        %4987 = vmatprep.subr.bf16.mxu0 0
        %4988 = vmatpush1.bf16.msra.mxu0 %v4969
        %4989 = vmatprep.subr.bf16.mxu0 0
        %4990 = vmatpush1.bf16.msra.mxu0 %v4968
        %4991 = vmatprep.subr.bf16.mxu0 0
        %4992 = vmatpush1.bf16.msra.mxu0 %v4967
        %4993 = vmatprep.subr.bf16.mxu0 0
        %4994 = vmatpush1.bf16.msra.mxu0 %v4966
        %4995 = vmatprep.subr.bf16.mxu0 0
        %4996 = vmatpush1.bf16.msra.mxu0 %v4965
        %4997 = vmatprep.subr.bf16.mxu0 0
        %4998 = vmatpush2.bf16.msra.mxu0 0
        %4999 = vmatprep.subr.bf16.mxu0 0
        %5000 = vmatpush2.bf16.msra.mxu0 0
        %5001 = vmatprep.subr.bf16.mxu0 0
        %5002 = vmatpush2.bf16.msra.mxu0 0
        %5003 = vmatprep.subr.bf16.mxu0 0
        %5004 = vmatpush2.bf16.msra.mxu0 0
        %5005 = vmatprep.subr.bf16.mxu0 0
        %5006 = vmatpush2.bf16.msra.mxu0 0
        %5007 = vmatprep.subr.bf16.mxu0 0
        %5008 = vmatpush2.bf16.msra.mxu0 0
        %5009 = vmatprep.subr.bf16.mxu0 0
        %5010 = vmatpush2.bf16.msra.mxu0 0
        %5011 = vmatprep.subr.bf16.mxu0 0
        %5012 = vmatpush2.bf16.msra.mxu0 0
        %5013 = vmatprep.mubr.bf16.mxu0 0
        %5014 = vmatmul.mubr.bf16.gmra.mxu0 %v4917
        %v5015 = vpop.f32.mrf.mxu0
        %v5016 = vadd.f32 0.0, %v5015
        %v5017 = vpop.f32.mrf.mxu0
        %v5018 = vpop.f32.mrf.mxu0
        %v5019 = vadd.f32 0.0, %v5018
        %v5020 = vpop.f32.mrf.mxu0
        %5021 = vmatprep.mubr.bf16.mxu0 0
        %5022 = vmatmul.mubr.bf16.gmra.mxu0 %v4918
        %v5023 = vpop.f32.mrf.mxu0
        %v5024 = vadd.f32 0.0, %v5023
        %v5025 = vpop.f32.mrf.mxu0
        %v5026 = vpop.f32.mrf.mxu0
        %v5027 = vadd.f32 0.0, %v5026
        %v5028 = vpop.f32.mrf.mxu0
        %5029 = vmatprep.mubr.bf16.mxu0 0
        %5030 = vmatmul.mubr.bf16.gmra.mxu0 %v4919
        %v5031 = vpop.f32.mrf.mxu0
        %v5032 = vadd.f32 0.0, %v5031
        %v5033 = vpop.f32.mrf.mxu0
        %v5034 = vpop.f32.mrf.mxu0
        %v5035 = vadd.f32 0.0, %v5034
        %v5036 = vpop.f32.mrf.mxu0
        %5037 = vmatprep.mubr.bf16.mxu0 0
        %5038 = vmatmul.mubr.bf16.gmra.mxu0 %v4920
        %v5039 = vpop.f32.mrf.mxu0
        %v5040 = vadd.f32 0.0, %v5039
        %v5041 = vpop.f32.mrf.mxu0
        %v5042 = vpop.f32.mrf.mxu0
        %v5043 = vadd.f32 0.0, %v5042
        %v5044 = vpop.f32.mrf.mxu0
        %5045 = vmatprep.mubr.bf16.mxu0 0
        %5046 = vmatmul.mubr.bf16.gmra.mxu0 %v4921
        %v5047 = vpop.f32.mrf.mxu0
        %v5048 = vadd.f32 0.0, %v5047
        %v5049 = vpop.f32.mrf.mxu0
        %v5050 = vpop.f32.mrf.mxu0
        %v5051 = vadd.f32 0.0, %v5050
        %v5052 = vpop.f32.mrf.mxu0
        %5053 = vmatprep.mubr.bf16.mxu0 0
        %5054 = vmatmul.mubr.bf16.gmra.mxu0 %v4922
        %v5055 = vpop.f32.mrf.mxu0
        %v5056 = vadd.f32 0.0, %v5055
        %v5057 = vpop.f32.mrf.mxu0
        %v5058 = vpop.f32.mrf.mxu0
        %v5059 = vadd.f32 0.0, %v5058
        %v5060 = vpop.f32.mrf.mxu0
        %5061 = vmatprep.mubr.bf16.mxu0 0
        %5062 = vmatmul.mubr.bf16.gmra.mxu0 %v4923
        %v5063 = vpop.f32.mrf.mxu0
        %v5064 = vadd.f32 0.0, %v5063
        %v5065 = vpop.f32.mrf.mxu0
        %v5066 = vpop.f32.mrf.mxu0
        %v5067 = vadd.f32 0.0, %v5066
        %v5068 = vpop.f32.mrf.mxu0
        %5069 = vmatprep.mubr.bf16.mxu0 0
        %5070 = vmatmul.mubr.bf16.gmra.mxu0 %v4924
        %v5071 = vpop.f32.mrf.mxu0
        %v5072 = vadd.f32 0.0, %v5071
        %v5073 = vpop.f32.mrf.mxu0
        %v5074 = vpop.f32.mrf.mxu0
        %v5075 = vadd.f32 0.0, %v5074
        %v5076 = vpop.f32.mrf.mxu0
        %5077 = vdwg.mxu0
        %v5078 = vadd.f32 %v4742, %v5016
        %v5079 = vadd.f32 %v4745, %v5019
        %v5080 = vadd.f32 %v4750, %v5024
        %v5081 = vadd.f32 %v4753, %v5027
        %v5082 = vadd.f32 %v4758, %v5032
        %v5083 = vadd.f32 %v4761, %v5035
        %v5084 = vadd.f32 %v4766, %v5040
        %v5085 = vadd.f32 %v4769, %v5043
        %v5086 = vadd.f32 %v4774, %v5048
        %v5087 = vadd.f32 %v4777, %v5051
        %v5088 = vadd.f32 %v4782, %v5056
        %v5089 = vadd.f32 %v4785, %v5059
        %v5090 = vadd.f32 %v4790, %v5064
        %v5091 = vadd.f32 %v4793, %v5067
        %v5092 = vadd.f32 %v4798, %v5072
        %v5093 = vadd.f32 %v4801, %v5075
        %s5094 = scalar_lea.vmem [#allocation2], 12
        %v5095 = vld [vmem:[%s5094] sm:$0xf]
        %v5096 = vld [vmem:[%s5094 + $0x4] sm:$0xf]
        %v5097 = vld [vmem:[%s5094 + $0xc] sm:$0xf]
        %v5098 = vld [vmem:[%s5094 + $0x10] sm:$0xf]
        %v5099 = vld [vmem:[%s5094 + $0x18] sm:$0xf]
        %v5100 = vld [vmem:[%s5094 + $0x1c] sm:$0xf]
        %v5101 = vld [vmem:[%s5094 + $0x24] sm:$0xf]
        %v5102 = vld [vmem:[%s5094 + $0x28] sm:$0xf]
        %v5103 = vld [vmem:[%s5094 + $0x30] sm:$0xf]
        %v5104 = vld [vmem:[%s5094 + $0x34] sm:$0xf]
        %v5105 = vld [vmem:[%s5094 + $0x3c] sm:$0xf]
        %v5106 = vld [vmem:[%s5094 + $0x40] sm:$0xf]
        %v5107 = vld [vmem:[%s5094 + $0x48] sm:$0xf]
        %v5108 = vld [vmem:[%s5094 + $0x4c] sm:$0xf]
        %v5109 = vld [vmem:[%s5094 + $0x54] sm:$0xf]
        %v5110 = vld [vmem:[%s5094 + $0x58] sm:$0xf]
        %s5111 = scalar_lea.vmem [#allocation3], 192
        %v5112 = vld [vmem:[%s5111] sm:$0xf]
        %v5113 = vld [vmem:[%s5111 + $0x4] sm:$0xf]
        %v5114 = vld [vmem:[%s5111 + $0x8] sm:$0xf]
        %v5115 = vld [vmem:[%s5111 + $0xc] sm:$0xf]
        %v5116 = vld [vmem:[%s5111 + $0x10] sm:$0xf]
        %v5117 = vld [vmem:[%s5111 + $0x14] sm:$0xf]
        %v5118 = vld [vmem:[%s5111 + $0x18] sm:$0xf]
        %v5119 = vld [vmem:[%s5111 + $0x1c] sm:$0xf]
        %v5120 = vld [vmem:[%s5111 + $0x20] sm:$0xf]
        %v5121 = vld [vmem:[%s5111 + $0x24] sm:$0xf]
        %v5122 = vld [vmem:[%s5111 + $0x28] sm:$0xf]
        %v5123 = vld [vmem:[%s5111 + $0x2c] sm:$0xf]
        %v5124 = vld [vmem:[%s5111 + $0x30] sm:$0xf]
        %v5125 = vld [vmem:[%s5111 + $0x34] sm:$0xf]
        %v5126 = vld [vmem:[%s5111 + $0x38] sm:$0xf]
        %v5127 = vld [vmem:[%s5111 + $0x3c] sm:$0xf]
        %v5144 = vunpack.c.l.b16 %v5095
        %v5145 = vunpack.c.l.b16 %v5096
        %v5146 = vunpack.c.l.b16 %v5097
        %v5147 = vunpack.c.l.b16 %v5098
        %v5148 = vunpack.c.l.b16 %v5099
        %v5149 = vunpack.c.l.b16 %v5100
        %v5150 = vunpack.c.l.b16 %v5101
        %v5151 = vunpack.c.l.b16 %v5102
        %v5152 = vunpack.c.l.b16 %v5103
        %v5153 = vunpack.c.l.b16 %v5104
        %v5154 = vunpack.c.l.b16 %v5105
        %v5155 = vunpack.c.l.b16 %v5106
        %v5156 = vunpack.c.l.b16 %v5107
        %v5157 = vunpack.c.l.b16 %v5108
        %v5158 = vunpack.c.l.b16 %v5109
        %v5159 = vunpack.c.l.b16 %v5110
        %v5160 = vpack.c.b16 %v5145, %v5144
        %v5161 = vpack.c.b16 %v5147, %v5146
        %v5162 = vpack.c.b16 %v5149, %v5148
        %v5163 = vpack.c.b16 %v5151, %v5150
        %v5164 = vpack.c.b16 %v5153, %v5152
        %v5165 = vpack.c.b16 %v5155, %v5154
        %v5166 = vpack.c.b16 %v5157, %v5156
        %v5167 = vpack.c.b16 %v5159, %v5158
        %v5192 = vunpack.c.l.b16 %v5112
        %v5193 = vunpack.c.l.b16 %v5113
        %v5194 = vunpack.c.l.b16 %v5114
        %v5195 = vunpack.c.l.b16 %v5115
        %v5196 = vunpack.c.l.b16 %v5116
        %v5197 = vunpack.c.l.b16 %v5117
        %v5198 = vunpack.c.l.b16 %v5118
        %v5199 = vunpack.c.l.b16 %v5119
        %v5200 = vunpack.c.l.b16 %v5120
        %v5201 = vunpack.c.l.b16 %v5121
        %v5202 = vunpack.c.l.b16 %v5122
        %v5203 = vunpack.c.l.b16 %v5123
        %v5204 = vunpack.c.l.b16 %v5124
        %v5205 = vunpack.c.l.b16 %v5125
        %v5206 = vunpack.c.l.b16 %v5126
        %v5207 = vunpack.c.l.b16 %v5127
        %v5208 = vpack.c.b16 %v5193, %v5192
        %v5209 = vpack.c.b16 %v5195, %v5194
        %v5210 = vpack.c.b16 %v5197, %v5196
        %v5211 = vpack.c.b16 %v5199, %v5198
        %v5212 = vpack.c.b16 %v5201, %v5200
        %v5213 = vpack.c.b16 %v5203, %v5202
        %v5214 = vpack.c.b16 %v5205, %v5204
        %v5215 = vpack.c.b16 %v5207, %v5206
        %5224 = vmatprep.subr.bf16.mxu0 0
        %5225 = vmatpush1.bf16.msra.mxu0 %v5215
        %5226 = vmatprep.subr.bf16.mxu0 0
        %5227 = vmatpush1.bf16.msra.mxu0 %v5214
        %5228 = vmatprep.subr.bf16.mxu0 0
        %5229 = vmatpush1.bf16.msra.mxu0 %v5213
        %5230 = vmatprep.subr.bf16.mxu0 0
        %5231 = vmatpush1.bf16.msra.mxu0 %v5212
        %5232 = vmatprep.subr.bf16.mxu0 0
        %5233 = vmatpush1.bf16.msra.mxu0 %v5211
        %5234 = vmatprep.subr.bf16.mxu0 0
        %5235 = vmatpush1.bf16.msra.mxu0 %v5210
        %5236 = vmatprep.subr.bf16.mxu0 0
        %5237 = vmatpush1.bf16.msra.mxu0 %v5209
        %5238 = vmatprep.subr.bf16.mxu0 0
        %5239 = vmatpush1.bf16.msra.mxu0 %v5208
        %5240 = vmatprep.subr.bf16.mxu0 0
        %5241 = vmatpush2.bf16.msra.mxu0 0
        %5242 = vmatprep.subr.bf16.mxu0 0
        %5243 = vmatpush2.bf16.msra.mxu0 0
        %5244 = vmatprep.subr.bf16.mxu0 0
        %5245 = vmatpush2.bf16.msra.mxu0 0
        %5246 = vmatprep.subr.bf16.mxu0 0
        %5247 = vmatpush2.bf16.msra.mxu0 0
        %5248 = vmatprep.subr.bf16.mxu0 0
        %5249 = vmatpush2.bf16.msra.mxu0 0
        %5250 = vmatprep.subr.bf16.mxu0 0
        %5251 = vmatpush2.bf16.msra.mxu0 0
        %5252 = vmatprep.subr.bf16.mxu0 0
        %5253 = vmatpush2.bf16.msra.mxu0 0
        %5254 = vmatprep.subr.bf16.mxu0 0
        %5255 = vmatpush2.bf16.msra.mxu0 0
        %5256 = vmatprep.mubr.bf16.mxu0 0
        %5257 = vmatmul.mubr.bf16.gmra.mxu0 %v5160
        %v5258 = vpop.f32.mrf.mxu0
        %v5259 = vadd.f32 0.0, %v5258
        %v5260 = vpop.f32.mrf.mxu0
        %v5261 = vpop.f32.mrf.mxu0
        %v5262 = vadd.f32 0.0, %v5261
        %v5263 = vpop.f32.mrf.mxu0
        %5264 = vmatprep.mubr.bf16.mxu0 0
        %5265 = vmatmul.mubr.bf16.gmra.mxu0 %v5161
        %v5266 = vpop.f32.mrf.mxu0
        %v5267 = vadd.f32 0.0, %v5266
        %v5268 = vpop.f32.mrf.mxu0
        %v5269 = vpop.f32.mrf.mxu0
        %v5270 = vadd.f32 0.0, %v5269
        %v5271 = vpop.f32.mrf.mxu0
        %5272 = vmatprep.mubr.bf16.mxu0 0
        %5273 = vmatmul.mubr.bf16.gmra.mxu0 %v5162
        %v5274 = vpop.f32.mrf.mxu0
        %v5275 = vadd.f32 0.0, %v5274
        %v5276 = vpop.f32.mrf.mxu0
        %v5277 = vpop.f32.mrf.mxu0
        %v5278 = vadd.f32 0.0, %v5277
        %v5279 = vpop.f32.mrf.mxu0
        %5280 = vmatprep.mubr.bf16.mxu0 0
        %5281 = vmatmul.mubr.bf16.gmra.mxu0 %v5163
        %v5282 = vpop.f32.mrf.mxu0
        %v5283 = vadd.f32 0.0, %v5282
        %v5284 = vpop.f32.mrf.mxu0
        %v5285 = vpop.f32.mrf.mxu0
        %v5286 = vadd.f32 0.0, %v5285
        %v5287 = vpop.f32.mrf.mxu0
        %5288 = vmatprep.mubr.bf16.mxu0 0
        %5289 = vmatmul.mubr.bf16.gmra.mxu0 %v5164
        %v5290 = vpop.f32.mrf.mxu0
        %v5291 = vadd.f32 0.0, %v5290
        %v5292 = vpop.f32.mrf.mxu0
        %v5293 = vpop.f32.mrf.mxu0
        %v5294 = vadd.f32 0.0, %v5293
        %v5295 = vpop.f32.mrf.mxu0
        %5296 = vmatprep.mubr.bf16.mxu0 0
        %5297 = vmatmul.mubr.bf16.gmra.mxu0 %v5165
        %v5298 = vpop.f32.mrf.mxu0
        %v5299 = vadd.f32 0.0, %v5298
        %v5300 = vpop.f32.mrf.mxu0
        %v5301 = vpop.f32.mrf.mxu0
        %v5302 = vadd.f32 0.0, %v5301
        %v5303 = vpop.f32.mrf.mxu0
        %5304 = vmatprep.mubr.bf16.mxu0 0
        %5305 = vmatmul.mubr.bf16.gmra.mxu0 %v5166
        %v5306 = vpop.f32.mrf.mxu0
        %v5307 = vadd.f32 0.0, %v5306
        %v5308 = vpop.f32.mrf.mxu0
        %v5309 = vpop.f32.mrf.mxu0
        %v5310 = vadd.f32 0.0, %v5309
        %v5311 = vpop.f32.mrf.mxu0
        %5312 = vmatprep.mubr.bf16.mxu0 0
        %5313 = vmatmul.mubr.bf16.gmra.mxu0 %v5167
        %v5314 = vpop.f32.mrf.mxu0
        %v5315 = vadd.f32 0.0, %v5314
        %v5316 = vpop.f32.mrf.mxu0
        %v5317 = vpop.f32.mrf.mxu0
        %v5318 = vadd.f32 0.0, %v5317
        %v5319 = vpop.f32.mrf.mxu0
        %5320 = vdwg.mxu0
        %v5321 = vadd.f32 %v5078, %v5259
        %v5322 = vadd.f32 %v5079, %v5262
        %v5323 = vadd.f32 %v5080, %v5267
        %v5324 = vadd.f32 %v5081, %v5270
        %v5325 = vadd.f32 %v5082, %v5275
        %v5326 = vadd.f32 %v5083, %v5278
        %v5327 = vadd.f32 %v5084, %v5283
        %v5328 = vadd.f32 %v5085, %v5286
        %v5329 = vadd.f32 %v5086, %v5291
        %v5330 = vadd.f32 %v5087, %v5294
        %v5331 = vadd.f32 %v5088, %v5299
        %v5332 = vadd.f32 %v5089, %v5302
        %v5333 = vadd.f32 %v5090, %v5307
        %v5334 = vadd.f32 %v5091, %v5310
        %v5335 = vadd.f32 %v5092, %v5315
        %v5336 = vadd.f32 %v5093, %v5318
        %v5337 = vld [vmem:[%s5094] sm:$0xf]
        %v5338 = vld [vmem:[%s5094 + $0x4] sm:$0xf]
        %v5339 = vld [vmem:[%s5094 + $0x8] sm:$0x1]
        %v5340 = vld [vmem:[%s5094 + $0xc] sm:$0xf]
        %v5341 = vld [vmem:[%s5094 + $0x10] sm:$0xf]
        %v5342 = vld [vmem:[%s5094 + $0x14] sm:$0x1]
        %v5343 = vld [vmem:[%s5094 + $0x18] sm:$0xf]
        %v5344 = vld [vmem:[%s5094 + $0x1c] sm:$0xf]
        %v5345 = vld [vmem:[%s5094 + $0x20] sm:$0x1]
        %v5346 = vld [vmem:[%s5094 + $0x24] sm:$0xf]
        %v5347 = vld [vmem:[%s5094 + $0x28] sm:$0xf]
        %v5348 = vld [vmem:[%s5094 + $0x2c] sm:$0x1]
        %v5349 = vld [vmem:[%s5094 + $0x30] sm:$0xf]
        %v5350 = vld [vmem:[%s5094 + $0x34] sm:$0xf]
        %v5351 = vld [vmem:[%s5094 + $0x38] sm:$0x1]
        %v5352 = vld [vmem:[%s5094 + $0x3c] sm:$0xf]
        %v5353 = vld [vmem:[%s5094 + $0x40] sm:$0xf]
        %v5354 = vld [vmem:[%s5094 + $0x44] sm:$0x1]
        %v5355 = vld [vmem:[%s5094 + $0x48] sm:$0xf]
        %v5356 = vld [vmem:[%s5094 + $0x4c] sm:$0xf]
        %v5357 = vld [vmem:[%s5094 + $0x50] sm:$0x1]
        %v5358 = vld [vmem:[%s5094 + $0x54] sm:$0xf]
        %v5359 = vld [vmem:[%s5094 + $0x58] sm:$0xf]
        %v5360 = vld [vmem:[%s5094 + $0x5c] sm:$0x1]
        %v5362 = vshrl.u32 %v5337, 16
        %v5364 = vrot.slane %v5362, 4
        %v5365 = vshll.u32 %v5337, 16
        %v5367 = vrot.slane %v5365, 5
        %v5368 = vor.u32 %v5364, %v5367
        %v5369 = vrot.slane %v5368, 4
        %v5371 = vshll.u32 %v5338, 16
        %v5373 = vrot.slane %v5371, 5
        %v5374 = vsel %vm360, %v5369, %v5373
        %v5375 = vshrl.u32 %v5338, 16
        %v5377 = vrot.slane %v5375, 4
        %v5378 = vor.u32 %v5377, %v5373
        %v5379 = vrot.slane %v5378, 4
        %v5381 = vshll.u32 %v5339, 16
        %v5383 = vrot.slane %v5381, 5
        %v5384 = vsel %vm360, %v5379, %v5383
        %v5386 = vshrl.u32 %v5340, 16
        %v5388 = vrot.slane %v5386, 4
        %v5389 = vshll.u32 %v5340, 16
        %v5391 = vrot.slane %v5389, 5
        %v5392 = vor.u32 %v5388, %v5391
        %v5393 = vrot.slane %v5392, 4
        %v5395 = vshll.u32 %v5341, 16
        %v5397 = vrot.slane %v5395, 5
        %v5398 = vsel %vm360, %v5393, %v5397
        %v5399 = vshrl.u32 %v5341, 16
        %v5401 = vrot.slane %v5399, 4
        %v5402 = vor.u32 %v5401, %v5397
        %v5403 = vrot.slane %v5402, 4
        %v5405 = vshll.u32 %v5342, 16
        %v5407 = vrot.slane %v5405, 5
        %v5408 = vsel %vm360, %v5403, %v5407
        %v5410 = vshrl.u32 %v5343, 16
        %v5412 = vrot.slane %v5410, 4
        %v5413 = vshll.u32 %v5343, 16
        %v5415 = vrot.slane %v5413, 5
        %v5416 = vor.u32 %v5412, %v5415
        %v5417 = vrot.slane %v5416, 4
        %v5419 = vshll.u32 %v5344, 16
        %v5421 = vrot.slane %v5419, 5
        %v5422 = vsel %vm360, %v5417, %v5421
        %v5423 = vshrl.u32 %v5344, 16
        %v5425 = vrot.slane %v5423, 4
        %v5426 = vor.u32 %v5425, %v5421
        %v5427 = vrot.slane %v5426, 4
        %v5429 = vshll.u32 %v5345, 16
        %v5431 = vrot.slane %v5429, 5
        %v5432 = vsel %vm360, %v5427, %v5431
        %v5434 = vshrl.u32 %v5346, 16
        %v5436 = vrot.slane %v5434, 4
        %v5437 = vshll.u32 %v5346, 16
        %v5439 = vrot.slane %v5437, 5
        %v5440 = vor.u32 %v5436, %v5439
        %v5441 = vrot.slane %v5440, 4
        %v5443 = vshll.u32 %v5347, 16
        %v5445 = vrot.slane %v5443, 5
        %v5446 = vsel %vm360, %v5441, %v5445
        %v5447 = vshrl.u32 %v5347, 16
        %v5449 = vrot.slane %v5447, 4
        %v5450 = vor.u32 %v5449, %v5445
        %v5451 = vrot.slane %v5450, 4
        %v5453 = vshll.u32 %v5348, 16
        %v5455 = vrot.slane %v5453, 5
        %v5456 = vsel %vm360, %v5451, %v5455
        %v5458 = vshrl.u32 %v5349, 16
        %v5460 = vrot.slane %v5458, 4
        %v5461 = vshll.u32 %v5349, 16
        %v5463 = vrot.slane %v5461, 5
        %v5464 = vor.u32 %v5460, %v5463
        %v5465 = vrot.slane %v5464, 4
        %v5467 = vshll.u32 %v5350, 16
        %v5469 = vrot.slane %v5467, 5
        %v5470 = vsel %vm360, %v5465, %v5469
        %v5471 = vshrl.u32 %v5350, 16
        %v5473 = vrot.slane %v5471, 4
        %v5474 = vor.u32 %v5473, %v5469
        %v5475 = vrot.slane %v5474, 4
        %v5477 = vshll.u32 %v5351, 16
        %v5479 = vrot.slane %v5477, 5
        %v5480 = vsel %vm360, %v5475, %v5479
        %v5482 = vshrl.u32 %v5352, 16
        %v5484 = vrot.slane %v5482, 4
        %v5485 = vshll.u32 %v5352, 16
        %v5487 = vrot.slane %v5485, 5
        %v5488 = vor.u32 %v5484, %v5487
        %v5489 = vrot.slane %v5488, 4
        %v5491 = vshll.u32 %v5353, 16
        %v5493 = vrot.slane %v5491, 5
        %v5494 = vsel %vm360, %v5489, %v5493
        %v5495 = vshrl.u32 %v5353, 16
        %v5497 = vrot.slane %v5495, 4
        %v5498 = vor.u32 %v5497, %v5493
        %v5499 = vrot.slane %v5498, 4
        %v5501 = vshll.u32 %v5354, 16
        %v5503 = vrot.slane %v5501, 5
        %v5504 = vsel %vm360, %v5499, %v5503
        %v5506 = vshrl.u32 %v5355, 16
        %v5508 = vrot.slane %v5506, 4
        %v5509 = vshll.u32 %v5355, 16
        %v5511 = vrot.slane %v5509, 5
        %v5512 = vor.u32 %v5508, %v5511
        %v5513 = vrot.slane %v5512, 4
        %v5515 = vshll.u32 %v5356, 16
        %v5517 = vrot.slane %v5515, 5
        %v5518 = vsel %vm360, %v5513, %v5517
        %v5519 = vshrl.u32 %v5356, 16
        %v5521 = vrot.slane %v5519, 4
        %v5522 = vor.u32 %v5521, %v5517
        %v5523 = vrot.slane %v5522, 4
        %v5525 = vshll.u32 %v5357, 16
        %v5527 = vrot.slane %v5525, 5
        %v5528 = vsel %vm360, %v5523, %v5527
        %v5530 = vshrl.u32 %v5358, 16
        %v5532 = vrot.slane %v5530, 4
        %v5533 = vshll.u32 %v5358, 16
        %v5535 = vrot.slane %v5533, 5
        %v5536 = vor.u32 %v5532, %v5535
        %v5537 = vrot.slane %v5536, 4
        %v5539 = vshll.u32 %v5359, 16
        %v5541 = vrot.slane %v5539, 5
        %v5542 = vsel %vm360, %v5537, %v5541
        %v5543 = vshrl.u32 %v5359, 16
        %v5545 = vrot.slane %v5543, 4
        %v5546 = vor.u32 %v5545, %v5541
        %v5547 = vrot.slane %v5546, 4
        %v5549 = vshll.u32 %v5360, 16
        %v5551 = vrot.slane %v5549, 5
        %v5552 = vsel %vm360, %v5547, %v5551
        %s5553 = scalar_lea.vmem [#allocation3], 256
        %v5554 = vld [vmem:[%s5553] sm:$0xf]
        %v5555 = vld [vmem:[%s5553 + $0x4] sm:$0xf]
        %v5556 = vld [vmem:[%s5553 + $0x8] sm:$0xf]
        %v5557 = vld [vmem:[%s5553 + $0xc] sm:$0xf]
        %v5558 = vld [vmem:[%s5553 + $0x10] sm:$0xf]
        %v5559 = vld [vmem:[%s5553 + $0x14] sm:$0xf]
        %v5560 = vld [vmem:[%s5553 + $0x18] sm:$0xf]
        %v5561 = vld [vmem:[%s5553 + $0x1c] sm:$0xf]
        %v5562 = vld [vmem:[%s5553 + $0x20] sm:$0xf]
        %v5563 = vld [vmem:[%s5553 + $0x24] sm:$0xf]
        %v5564 = vld [vmem:[%s5553 + $0x28] sm:$0xf]
        %v5565 = vld [vmem:[%s5553 + $0x2c] sm:$0xf]
        %v5566 = vld [vmem:[%s5553 + $0x30] sm:$0xf]
        %v5567 = vld [vmem:[%s5553 + $0x34] sm:$0xf]
        %v5568 = vld [vmem:[%s5553 + $0x38] sm:$0xf]
        %v5569 = vld [vmem:[%s5553 + $0x3c] sm:$0xf]
        %v5570 = vunpack.c.l.b16 %v5374
        %v5571 = vunpack.c.l.b16 %v5384
        %v5572 = vunpack.c.l.b16 %v5398
        %v5573 = vunpack.c.l.b16 %v5408
        %v5574 = vunpack.c.l.b16 %v5422
        %v5575 = vunpack.c.l.b16 %v5432
        %v5576 = vunpack.c.l.b16 %v5446
        %v5577 = vunpack.c.l.b16 %v5456
        %v5578 = vunpack.c.l.b16 %v5470
        %v5579 = vunpack.c.l.b16 %v5480
        %v5580 = vunpack.c.l.b16 %v5494
        %v5581 = vunpack.c.l.b16 %v5504
        %v5582 = vunpack.c.l.b16 %v5518
        %v5583 = vunpack.c.l.b16 %v5528
        %v5584 = vunpack.c.l.b16 %v5542
        %v5585 = vunpack.c.l.b16 %v5552
        %v5586 = vpack.c.b16 %v5571, %v5570
        %v5587 = vpack.c.b16 %v5573, %v5572
        %v5588 = vpack.c.b16 %v5575, %v5574
        %v5589 = vpack.c.b16 %v5577, %v5576
        %v5590 = vpack.c.b16 %v5579, %v5578
        %v5591 = vpack.c.b16 %v5581, %v5580
        %v5592 = vpack.c.b16 %v5583, %v5582
        %v5593 = vpack.c.b16 %v5585, %v5584
        %v5618 = vunpack.c.l.b16 %v5554
        %v5619 = vunpack.c.l.b16 %v5555
        %v5620 = vunpack.c.l.b16 %v5556
        %v5621 = vunpack.c.l.b16 %v5557
        %v5622 = vunpack.c.l.b16 %v5558
        %v5623 = vunpack.c.l.b16 %v5559
        %v5624 = vunpack.c.l.b16 %v5560
        %v5625 = vunpack.c.l.b16 %v5561
        %v5626 = vunpack.c.l.b16 %v5562
        %v5627 = vunpack.c.l.b16 %v5563
        %v5628 = vunpack.c.l.b16 %v5564
        %v5629 = vunpack.c.l.b16 %v5565
        %v5630 = vunpack.c.l.b16 %v5566
        %v5631 = vunpack.c.l.b16 %v5567
        %v5632 = vunpack.c.l.b16 %v5568
        %v5633 = vunpack.c.l.b16 %v5569
        %v5634 = vpack.c.b16 %v5619, %v5618
        %v5635 = vpack.c.b16 %v5621, %v5620
        %v5636 = vpack.c.b16 %v5623, %v5622
        %v5637 = vpack.c.b16 %v5625, %v5624
        %v5638 = vpack.c.b16 %v5627, %v5626
        %v5639 = vpack.c.b16 %v5629, %v5628
        %v5640 = vpack.c.b16 %v5631, %v5630
        %v5641 = vpack.c.b16 %v5633, %v5632
        %5650 = vmatprep.subr.bf16.mxu0 0
        %5651 = vmatpush1.bf16.msra.mxu0 %v5641
        %5652 = vmatprep.subr.bf16.mxu0 0
        %5653 = vmatpush1.bf16.msra.mxu0 %v5640
        %5654 = vmatprep.subr.bf16.mxu0 0
        %5655 = vmatpush1.bf16.msra.mxu0 %v5639
        %5656 = vmatprep.subr.bf16.mxu0 0
        %5657 = vmatpush1.bf16.msra.mxu0 %v5638
        %5658 = vmatprep.subr.bf16.mxu0 0
        %5659 = vmatpush1.bf16.msra.mxu0 %v5637
        %5660 = vmatprep.subr.bf16.mxu0 0
        %5661 = vmatpush1.bf16.msra.mxu0 %v5636
        %5662 = vmatprep.subr.bf16.mxu0 0
        %5663 = vmatpush1.bf16.msra.mxu0 %v5635
        %5664 = vmatprep.subr.bf16.mxu0 0
        %5665 = vmatpush1.bf16.msra.mxu0 %v5634
        %5666 = vmatprep.subr.bf16.mxu0 0
        %5667 = vmatpush2.bf16.msra.mxu0 0
        %5668 = vmatprep.subr.bf16.mxu0 0
        %5669 = vmatpush2.bf16.msra.mxu0 0
        %5670 = vmatprep.subr.bf16.mxu0 0
        %5671 = vmatpush2.bf16.msra.mxu0 0
        %5672 = vmatprep.subr.bf16.mxu0 0
        %5673 = vmatpush2.bf16.msra.mxu0 0
        %5674 = vmatprep.subr.bf16.mxu0 0
        %5675 = vmatpush2.bf16.msra.mxu0 0
        %5676 = vmatprep.subr.bf16.mxu0 0
        %5677 = vmatpush2.bf16.msra.mxu0 0
        %5678 = vmatprep.subr.bf16.mxu0 0
        %5679 = vmatpush2.bf16.msra.mxu0 0
        %5680 = vmatprep.subr.bf16.mxu0 0
        %5681 = vmatpush2.bf16.msra.mxu0 0
        %5682 = vmatprep.mubr.bf16.mxu0 0
        %5683 = vmatmul.mubr.bf16.gmra.mxu0 %v5586
        %v5684 = vpop.f32.mrf.mxu0
        %v5685 = vadd.f32 0.0, %v5684
        %v5686 = vpop.f32.mrf.mxu0
        %v5687 = vpop.f32.mrf.mxu0
        %v5688 = vadd.f32 0.0, %v5687
        %v5689 = vpop.f32.mrf.mxu0
        %5690 = vmatprep.mubr.bf16.mxu0 0
        %5691 = vmatmul.mubr.bf16.gmra.mxu0 %v5587
        %v5692 = vpop.f32.mrf.mxu0
        %v5693 = vadd.f32 0.0, %v5692
        %v5694 = vpop.f32.mrf.mxu0
        %v5695 = vpop.f32.mrf.mxu0
        %v5696 = vadd.f32 0.0, %v5695
        %v5697 = vpop.f32.mrf.mxu0
        %5698 = vmatprep.mubr.bf16.mxu0 0
        %5699 = vmatmul.mubr.bf16.gmra.mxu0 %v5588
        %v5700 = vpop.f32.mrf.mxu0
        %v5701 = vadd.f32 0.0, %v5700
        %v5702 = vpop.f32.mrf.mxu0
        %v5703 = vpop.f32.mrf.mxu0
        %v5704 = vadd.f32 0.0, %v5703
        %v5705 = vpop.f32.mrf.mxu0
        %5706 = vmatprep.mubr.bf16.mxu0 0
        %5707 = vmatmul.mubr.bf16.gmra.mxu0 %v5589
        %v5708 = vpop.f32.mrf.mxu0
        %v5709 = vadd.f32 0.0, %v5708
        %v5710 = vpop.f32.mrf.mxu0
        %v5711 = vpop.f32.mrf.mxu0
        %v5712 = vadd.f32 0.0, %v5711
        %v5713 = vpop.f32.mrf.mxu0
        %5714 = vmatprep.mubr.bf16.mxu0 0
        %5715 = vmatmul.mubr.bf16.gmra.mxu0 %v5590
        %v5716 = vpop.f32.mrf.mxu0
        %v5717 = vadd.f32 0.0, %v5716
        %v5718 = vpop.f32.mrf.mxu0
        %v5719 = vpop.f32.mrf.mxu0
        %v5720 = vadd.f32 0.0, %v5719
        %v5721 = vpop.f32.mrf.mxu0
        %5722 = vmatprep.mubr.bf16.mxu0 0
        %5723 = vmatmul.mubr.bf16.gmra.mxu0 %v5591
        %v5724 = vpop.f32.mrf.mxu0
        %v5725 = vadd.f32 0.0, %v5724
        %v5726 = vpop.f32.mrf.mxu0
        %v5727 = vpop.f32.mrf.mxu0
        %v5728 = vadd.f32 0.0, %v5727
        %v5729 = vpop.f32.mrf.mxu0
        %5730 = vmatprep.mubr.bf16.mxu0 0
        %5731 = vmatmul.mubr.bf16.gmra.mxu0 %v5592
        %v5732 = vpop.f32.mrf.mxu0
        %v5733 = vadd.f32 0.0, %v5732
        %v5734 = vpop.f32.mrf.mxu0
        %v5735 = vpop.f32.mrf.mxu0
        %v5736 = vadd.f32 0.0, %v5735
        %v5737 = vpop.f32.mrf.mxu0
        %5738 = vmatprep.mubr.bf16.mxu0 0
        %5739 = vmatmul.mubr.bf16.gmra.mxu0 %v5593
        %v5740 = vpop.f32.mrf.mxu0
        %v5741 = vadd.f32 0.0, %v5740
        %v5742 = vpop.f32.mrf.mxu0
        %v5743 = vpop.f32.mrf.mxu0
        %v5744 = vadd.f32 0.0, %v5743
        %v5745 = vpop.f32.mrf.mxu0
        %5746 = vdwg.mxu0
        %v5747 = vadd.f32 %v5321, %v5685
        %v5748 = vadd.f32 %v5322, %v5688
        %v5749 = vadd.f32 %v5323, %v5693
        %v5750 = vadd.f32 %v5324, %v5696
        %v5751 = vadd.f32 %v5325, %v5701
        %v5752 = vadd.f32 %v5326, %v5704
        %v5753 = vadd.f32 %v5327, %v5709
        %v5754 = vadd.f32 %v5328, %v5712
        %v5755 = vadd.f32 %v5329, %v5717
        %v5756 = vadd.f32 %v5330, %v5720
        %v5757 = vadd.f32 %v5331, %v5725
        %v5758 = vadd.f32 %v5332, %v5728
        %v5759 = vadd.f32 %v5333, %v5733
        %v5760 = vadd.f32 %v5334, %v5736
        %v5761 = vadd.f32 %v5335, %v5741
        %v5762 = vadd.f32 %v5336, %v5744
        %v5763 = vld [vmem:[%s5094] sm:$0xe]
        %v5764 = vld [vmem:[%s5094 + $0xc] sm:$0xe]
        %v5765 = vld [vmem:[%s5094 + $0x18] sm:$0xe]
        %v5766 = vld [vmem:[%s5094 + $0x24] sm:$0xe]
        %v5767 = vld [vmem:[%s5094 + $0x30] sm:$0xe]
        %v5768 = vld [vmem:[%s5094 + $0x3c] sm:$0xe]
        %v5769 = vld [vmem:[%s5094 + $0x48] sm:$0xe]
        %v5770 = vld [vmem:[%s5094 + $0x54] sm:$0xe]
        %v5795 = vrot.slane %v5763, 5
        %v5796 = vrot.slane %v5795, 4
        %v5797 = vrot.slane %v5338, 5
        %v5798 = vsel %vm1072, %v5796, %v5797
        %v5799 = vrot.slane %v5797, 4
        %v5800 = vrot.slane %v5339, 5
        %v5801 = vsel %vm1072, %v5799, %v5800
        %v5802 = vrot.slane %v5764, 5
        %v5803 = vrot.slane %v5802, 4
        %v5804 = vrot.slane %v5341, 5
        %v5805 = vsel %vm1072, %v5803, %v5804
        %v5806 = vrot.slane %v5804, 4
        %v5807 = vrot.slane %v5342, 5
        %v5808 = vsel %vm1072, %v5806, %v5807
        %v5809 = vrot.slane %v5765, 5
        %v5810 = vrot.slane %v5809, 4
        %v5811 = vrot.slane %v5344, 5
        %v5812 = vsel %vm1072, %v5810, %v5811
        %v5813 = vrot.slane %v5811, 4
        %v5814 = vrot.slane %v5345, 5
        %v5815 = vsel %vm1072, %v5813, %v5814
        %v5816 = vrot.slane %v5766, 5
        %v5817 = vrot.slane %v5816, 4
        %v5818 = vrot.slane %v5347, 5
        %v5819 = vsel %vm1072, %v5817, %v5818
        %v5820 = vrot.slane %v5818, 4
        %v5821 = vrot.slane %v5348, 5
        %v5822 = vsel %vm1072, %v5820, %v5821
        %v5823 = vrot.slane %v5767, 5
        %v5824 = vrot.slane %v5823, 4
        %v5825 = vrot.slane %v5350, 5
        %v5826 = vsel %vm1072, %v5824, %v5825
        %v5827 = vrot.slane %v5825, 4
        %v5828 = vrot.slane %v5351, 5
        %v5829 = vsel %vm1072, %v5827, %v5828
        %v5830 = vrot.slane %v5768, 5
        %v5831 = vrot.slane %v5830, 4
        %v5832 = vrot.slane %v5353, 5
        %v5833 = vsel %vm1072, %v5831, %v5832
        %v5834 = vrot.slane %v5832, 4
        %v5835 = vrot.slane %v5354, 5
        %v5836 = vsel %vm1072, %v5834, %v5835
        %v5837 = vrot.slane %v5769, 5
        %v5838 = vrot.slane %v5837, 4
        %v5839 = vrot.slane %v5356, 5
        %v5840 = vsel %vm1072, %v5838, %v5839
        %v5841 = vrot.slane %v5839, 4
        %v5842 = vrot.slane %v5357, 5
        %v5843 = vsel %vm1072, %v5841, %v5842
        %v5844 = vrot.slane %v5770, 5
        %v5845 = vrot.slane %v5844, 4
        %v5846 = vrot.slane %v5359, 5
        %v5847 = vsel %vm1072, %v5845, %v5846
        %v5848 = vrot.slane %v5846, 4
        %v5849 = vrot.slane %v5360, 5
        %v5850 = vsel %vm1072, %v5848, %v5849
        %s5851 = scalar_lea.vmem [#allocation3], 320
        %v5852 = vld [vmem:[%s5851] sm:$0xf]
        %v5853 = vld [vmem:[%s5851 + $0x4] sm:$0xf]
        %v5854 = vld [vmem:[%s5851 + $0x8] sm:$0xf]
        %v5855 = vld [vmem:[%s5851 + $0xc] sm:$0xf]
        %v5856 = vld [vmem:[%s5851 + $0x10] sm:$0xf]
        %v5857 = vld [vmem:[%s5851 + $0x14] sm:$0xf]
        %v5858 = vld [vmem:[%s5851 + $0x18] sm:$0xf]
        %v5859 = vld [vmem:[%s5851 + $0x1c] sm:$0xf]
        %v5860 = vld [vmem:[%s5851 + $0x20] sm:$0xf]
        %v5861 = vld [vmem:[%s5851 + $0x24] sm:$0xf]
        %v5862 = vld [vmem:[%s5851 + $0x28] sm:$0xf]
        %v5863 = vld [vmem:[%s5851 + $0x2c] sm:$0xf]
        %v5864 = vld [vmem:[%s5851 + $0x30] sm:$0xf]
        %v5865 = vld [vmem:[%s5851 + $0x34] sm:$0xf]
        %v5866 = vld [vmem:[%s5851 + $0x38] sm:$0xf]
        %v5867 = vld [vmem:[%s5851 + $0x3c] sm:$0xf]
        %v5868 = vunpack.c.l.b16 %v5798
        %v5869 = vunpack.c.l.b16 %v5801
        %v5870 = vunpack.c.l.b16 %v5805
        %v5871 = vunpack.c.l.b16 %v5808
        %v5872 = vunpack.c.l.b16 %v5812
        %v5873 = vunpack.c.l.b16 %v5815
        %v5874 = vunpack.c.l.b16 %v5819
        %v5875 = vunpack.c.l.b16 %v5822
        %v5876 = vunpack.c.l.b16 %v5826
        %v5877 = vunpack.c.l.b16 %v5829
        %v5878 = vunpack.c.l.b16 %v5833
        %v5879 = vunpack.c.l.b16 %v5836
        %v5880 = vunpack.c.l.b16 %v5840
        %v5881 = vunpack.c.l.b16 %v5843
        %v5882 = vunpack.c.l.b16 %v5847
        %v5883 = vunpack.c.l.b16 %v5850
        %v5884 = vpack.c.b16 %v5869, %v5868
        %v5885 = vpack.c.b16 %v5871, %v5870
        %v5886 = vpack.c.b16 %v5873, %v5872
        %v5887 = vpack.c.b16 %v5875, %v5874
        %v5888 = vpack.c.b16 %v5877, %v5876
        %v5889 = vpack.c.b16 %v5879, %v5878
        %v5890 = vpack.c.b16 %v5881, %v5880
        %v5891 = vpack.c.b16 %v5883, %v5882
        %v5916 = vunpack.c.l.b16 %v5852
        %v5917 = vunpack.c.l.b16 %v5853
        %v5918 = vunpack.c.l.b16 %v5854
        %v5919 = vunpack.c.l.b16 %v5855
        %v5920 = vunpack.c.l.b16 %v5856
        %v5921 = vunpack.c.l.b16 %v5857
        %v5922 = vunpack.c.l.b16 %v5858
        %v5923 = vunpack.c.l.b16 %v5859
        %v5924 = vunpack.c.l.b16 %v5860
        %v5925 = vunpack.c.l.b16 %v5861
        %v5926 = vunpack.c.l.b16 %v5862
        %v5927 = vunpack.c.l.b16 %v5863
        %v5928 = vunpack.c.l.b16 %v5864
        %v5929 = vunpack.c.l.b16 %v5865
        %v5930 = vunpack.c.l.b16 %v5866
        %v5931 = vunpack.c.l.b16 %v5867
        %v5932 = vpack.c.b16 %v5917, %v5916
        %v5933 = vpack.c.b16 %v5919, %v5918
        %v5934 = vpack.c.b16 %v5921, %v5920
        %v5935 = vpack.c.b16 %v5923, %v5922
        %v5936 = vpack.c.b16 %v5925, %v5924
        %v5937 = vpack.c.b16 %v5927, %v5926
        %v5938 = vpack.c.b16 %v5929, %v5928
        %v5939 = vpack.c.b16 %v5931, %v5930
        %5948 = vmatprep.subr.bf16.mxu0 0
        %5949 = vmatpush1.bf16.msra.mxu0 %v5939
        %5950 = vmatprep.subr.bf16.mxu0 0
        %5951 = vmatpush1.bf16.msra.mxu0 %v5938
        %5952 = vmatprep.subr.bf16.mxu0 0
        %5953 = vmatpush1.bf16.msra.mxu0 %v5937
        %5954 = vmatprep.subr.bf16.mxu0 0
        %5955 = vmatpush1.bf16.msra.mxu0 %v5936
        %5956 = vmatprep.subr.bf16.mxu0 0
        %5957 = vmatpush1.bf16.msra.mxu0 %v5935
        %5958 = vmatprep.subr.bf16.mxu0 0
        %5959 = vmatpush1.bf16.msra.mxu0 %v5934
        %5960 = vmatprep.subr.bf16.mxu0 0
        %5961 = vmatpush1.bf16.msra.mxu0 %v5933
        %5962 = vmatprep.subr.bf16.mxu0 0
        %5963 = vmatpush1.bf16.msra.mxu0 %v5932
        %5964 = vmatprep.subr.bf16.mxu0 0
        %5965 = vmatpush2.bf16.msra.mxu0 0
        %5966 = vmatprep.subr.bf16.mxu0 0
        %5967 = vmatpush2.bf16.msra.mxu0 0
        %5968 = vmatprep.subr.bf16.mxu0 0
        %5969 = vmatpush2.bf16.msra.mxu0 0
        %5970 = vmatprep.subr.bf16.mxu0 0
        %5971 = vmatpush2.bf16.msra.mxu0 0
        %5972 = vmatprep.subr.bf16.mxu0 0
        %5973 = vmatpush2.bf16.msra.mxu0 0
        %5974 = vmatprep.subr.bf16.mxu0 0
        %5975 = vmatpush2.bf16.msra.mxu0 0
        %5976 = vmatprep.subr.bf16.mxu0 0
        %5977 = vmatpush2.bf16.msra.mxu0 0
        %5978 = vmatprep.subr.bf16.mxu0 0
        %5979 = vmatpush2.bf16.msra.mxu0 0
        %5980 = vmatprep.mubr.bf16.mxu0 0
        %5981 = vmatmul.mubr.bf16.gmra.mxu0 %v5884
        %v5982 = vpop.f32.mrf.mxu0
        %v5983 = vadd.f32 0.0, %v5982
        %v5984 = vpop.f32.mrf.mxu0
        %v5985 = vpop.f32.mrf.mxu0
        %v5986 = vadd.f32 0.0, %v5985
        %v5987 = vpop.f32.mrf.mxu0
        %5988 = vmatprep.mubr.bf16.mxu0 0
        %5989 = vmatmul.mubr.bf16.gmra.mxu0 %v5885
        %v5990 = vpop.f32.mrf.mxu0
        %v5991 = vadd.f32 0.0, %v5990
        %v5992 = vpop.f32.mrf.mxu0
        %v5993 = vpop.f32.mrf.mxu0
        %v5994 = vadd.f32 0.0, %v5993
        %v5995 = vpop.f32.mrf.mxu0
        %5996 = vmatprep.mubr.bf16.mxu0 0
        %5997 = vmatmul.mubr.bf16.gmra.mxu0 %v5886
        %v5998 = vpop.f32.mrf.mxu0
        %v5999 = vadd.f32 0.0, %v5998
        %v6000 = vpop.f32.mrf.mxu0
        %v6001 = vpop.f32.mrf.mxu0
        %v6002 = vadd.f32 0.0, %v6001
        %v6003 = vpop.f32.mrf.mxu0
        %6004 = vmatprep.mubr.bf16.mxu0 0
        %6005 = vmatmul.mubr.bf16.gmra.mxu0 %v5887
        %v6006 = vpop.f32.mrf.mxu0
        %v6007 = vadd.f32 0.0, %v6006
        %v6008 = vpop.f32.mrf.mxu0
        %v6009 = vpop.f32.mrf.mxu0
        %v6010 = vadd.f32 0.0, %v6009
        %v6011 = vpop.f32.mrf.mxu0
        %6012 = vmatprep.mubr.bf16.mxu0 0
        %6013 = vmatmul.mubr.bf16.gmra.mxu0 %v5888
        %v6014 = vpop.f32.mrf.mxu0
        %v6015 = vadd.f32 0.0, %v6014
        %v6016 = vpop.f32.mrf.mxu0
        %v6017 = vpop.f32.mrf.mxu0
        %v6018 = vadd.f32 0.0, %v6017
        %v6019 = vpop.f32.mrf.mxu0
        %6020 = vmatprep.mubr.bf16.mxu0 0
        %6021 = vmatmul.mubr.bf16.gmra.mxu0 %v5889
        %v6022 = vpop.f32.mrf.mxu0
        %v6023 = vadd.f32 0.0, %v6022
        %v6024 = vpop.f32.mrf.mxu0
        %v6025 = vpop.f32.mrf.mxu0
        %v6026 = vadd.f32 0.0, %v6025
        %v6027 = vpop.f32.mrf.mxu0
        %6028 = vmatprep.mubr.bf16.mxu0 0
        %6029 = vmatmul.mubr.bf16.gmra.mxu0 %v5890
        %v6030 = vpop.f32.mrf.mxu0
        %v6031 = vadd.f32 0.0, %v6030
        %v6032 = vpop.f32.mrf.mxu0
        %v6033 = vpop.f32.mrf.mxu0
        %v6034 = vadd.f32 0.0, %v6033
        %v6035 = vpop.f32.mrf.mxu0
        %6036 = vmatprep.mubr.bf16.mxu0 0
        %6037 = vmatmul.mubr.bf16.gmra.mxu0 %v5891
        %v6038 = vpop.f32.mrf.mxu0
        %v6039 = vadd.f32 0.0, %v6038
        %v6040 = vpop.f32.mrf.mxu0
        %v6041 = vpop.f32.mrf.mxu0
        %v6042 = vadd.f32 0.0, %v6041
        %v6043 = vpop.f32.mrf.mxu0
        %6044 = vdwg.mxu0
        %v6045 = vadd.f32 %v5747, %v5983
        %v6046 = vadd.f32 %v5748, %v5986
        %v6047 = vadd.f32 %v5749, %v5991
        %v6048 = vadd.f32 %v5750, %v5994
        %v6049 = vadd.f32 %v5751, %v5999
        %v6050 = vadd.f32 %v5752, %v6002
        %v6051 = vadd.f32 %v5753, %v6007
        %v6052 = vadd.f32 %v5754, %v6010
        %v6053 = vadd.f32 %v5755, %v6015
        %v6054 = vadd.f32 %v5756, %v6018
        %v6055 = vadd.f32 %v5757, %v6023
        %v6056 = vadd.f32 %v5758, %v6026
        %v6057 = vadd.f32 %v5759, %v6031
        %v6058 = vadd.f32 %v5760, %v6034
        %v6059 = vadd.f32 %v5761, %v6039
        %v6060 = vadd.f32 %v5762, %v6042
        %s6061 = scalar_lea.vmem [#allocation2], 24
        %v6062 = vld [vmem:[%s6061] sm:$0xf]
        %v6063 = vld [vmem:[%s6061 + $0x4] sm:$0xf]
        %v6064 = vld [vmem:[%s6061 + $0xc] sm:$0xf]
        %v6065 = vld [vmem:[%s6061 + $0x10] sm:$0xf]
        %v6066 = vld [vmem:[%s6061 + $0x18] sm:$0xf]
        %v6067 = vld [vmem:[%s6061 + $0x1c] sm:$0xf]
        %v6068 = vld [vmem:[%s6061 + $0x24] sm:$0xf]
        %v6069 = vld [vmem:[%s6061 + $0x28] sm:$0xf]
        %v6070 = vld [vmem:[%s6061 + $0x30] sm:$0xf]
        %v6071 = vld [vmem:[%s6061 + $0x34] sm:$0xf]
        %v6072 = vld [vmem:[%s6061 + $0x3c] sm:$0xf]
        %v6073 = vld [vmem:[%s6061 + $0x40] sm:$0xf]
        %v6074 = vld [vmem:[%s6061 + $0x48] sm:$0xf]
        %v6075 = vld [vmem:[%s6061 + $0x4c] sm:$0xf]
        %v6076 = vld [vmem:[%s6061 + $0x54] sm:$0xf]
        %v6077 = vld [vmem:[%s6061 + $0x58] sm:$0xf]
        %s6078 = scalar_lea.vmem [#allocation3], 384
        %v6079 = vld [vmem:[%s6078] sm:$0xf]
        %v6080 = vld [vmem:[%s6078 + $0x4] sm:$0xf]
        %v6081 = vld [vmem:[%s6078 + $0x8] sm:$0xf]
        %v6082 = vld [vmem:[%s6078 + $0xc] sm:$0xf]
        %v6083 = vld [vmem:[%s6078 + $0x10] sm:$0xf]
        %v6084 = vld [vmem:[%s6078 + $0x14] sm:$0xf]
        %v6085 = vld [vmem:[%s6078 + $0x18] sm:$0xf]
        %v6086 = vld [vmem:[%s6078 + $0x1c] sm:$0xf]
        %v6087 = vld [vmem:[%s6078 + $0x20] sm:$0xf]
        %v6088 = vld [vmem:[%s6078 + $0x24] sm:$0xf]
        %v6089 = vld [vmem:[%s6078 + $0x28] sm:$0xf]
        %v6090 = vld [vmem:[%s6078 + $0x2c] sm:$0xf]
        %v6091 = vld [vmem:[%s6078 + $0x30] sm:$0xf]
        %v6092 = vld [vmem:[%s6078 + $0x34] sm:$0xf]
        %v6093 = vld [vmem:[%s6078 + $0x38] sm:$0xf]
        %v6094 = vld [vmem:[%s6078 + $0x3c] sm:$0xf]
        %v6111 = vunpack.c.l.b16 %v6062
        %v6112 = vunpack.c.l.b16 %v6063
        %v6113 = vunpack.c.l.b16 %v6064
        %v6114 = vunpack.c.l.b16 %v6065
        %v6115 = vunpack.c.l.b16 %v6066
        %v6116 = vunpack.c.l.b16 %v6067
        %v6117 = vunpack.c.l.b16 %v6068
        %v6118 = vunpack.c.l.b16 %v6069
        %v6119 = vunpack.c.l.b16 %v6070
        %v6120 = vunpack.c.l.b16 %v6071
        %v6121 = vunpack.c.l.b16 %v6072
        %v6122 = vunpack.c.l.b16 %v6073
        %v6123 = vunpack.c.l.b16 %v6074
        %v6124 = vunpack.c.l.b16 %v6075
        %v6125 = vunpack.c.l.b16 %v6076
        %v6126 = vunpack.c.l.b16 %v6077
        %v6127 = vpack.c.b16 %v6112, %v6111
        %v6128 = vpack.c.b16 %v6114, %v6113
        %v6129 = vpack.c.b16 %v6116, %v6115
        %v6130 = vpack.c.b16 %v6118, %v6117
        %v6131 = vpack.c.b16 %v6120, %v6119
        %v6132 = vpack.c.b16 %v6122, %v6121
        %v6133 = vpack.c.b16 %v6124, %v6123
        %v6134 = vpack.c.b16 %v6126, %v6125
        %v6159 = vunpack.c.l.b16 %v6079
        %v6160 = vunpack.c.l.b16 %v6080
        %v6161 = vunpack.c.l.b16 %v6081
        %v6162 = vunpack.c.l.b16 %v6082
        %v6163 = vunpack.c.l.b16 %v6083
        %v6164 = vunpack.c.l.b16 %v6084
        %v6165 = vunpack.c.l.b16 %v6085
        %v6166 = vunpack.c.l.b16 %v6086
        %v6167 = vunpack.c.l.b16 %v6087
        %v6168 = vunpack.c.l.b16 %v6088
        %v6169 = vunpack.c.l.b16 %v6089
        %v6170 = vunpack.c.l.b16 %v6090
        %v6171 = vunpack.c.l.b16 %v6091
        %v6172 = vunpack.c.l.b16 %v6092
        %v6173 = vunpack.c.l.b16 %v6093
        %v6174 = vunpack.c.l.b16 %v6094
        %v6175 = vpack.c.b16 %v6160, %v6159
        %v6176 = vpack.c.b16 %v6162, %v6161
        %v6177 = vpack.c.b16 %v6164, %v6163
        %v6178 = vpack.c.b16 %v6166, %v6165
        %v6179 = vpack.c.b16 %v6168, %v6167
        %v6180 = vpack.c.b16 %v6170, %v6169
        %v6181 = vpack.c.b16 %v6172, %v6171
        %v6182 = vpack.c.b16 %v6174, %v6173
        %6191 = vmatprep.subr.bf16.mxu0 0
        %6192 = vmatpush1.bf16.msra.mxu0 %v6182
        %6193 = vmatprep.subr.bf16.mxu0 0
        %6194 = vmatpush1.bf16.msra.mxu0 %v6181
        %6195 = vmatprep.subr.bf16.mxu0 0
        %6196 = vmatpush1.bf16.msra.mxu0 %v6180
        %6197 = vmatprep.subr.bf16.mxu0 0
        %6198 = vmatpush1.bf16.msra.mxu0 %v6179
        %6199 = vmatprep.subr.bf16.mxu0 0
        %6200 = vmatpush1.bf16.msra.mxu0 %v6178
        %6201 = vmatprep.subr.bf16.mxu0 0
        %6202 = vmatpush1.bf16.msra.mxu0 %v6177
        %6203 = vmatprep.subr.bf16.mxu0 0
        %6204 = vmatpush1.bf16.msra.mxu0 %v6176
        %6205 = vmatprep.subr.bf16.mxu0 0
        %6206 = vmatpush1.bf16.msra.mxu0 %v6175
        %6207 = vmatprep.subr.bf16.mxu0 0
        %6208 = vmatpush2.bf16.msra.mxu0 0
        %6209 = vmatprep.subr.bf16.mxu0 0
        %6210 = vmatpush2.bf16.msra.mxu0 0
        %6211 = vmatprep.subr.bf16.mxu0 0
        %6212 = vmatpush2.bf16.msra.mxu0 0
        %6213 = vmatprep.subr.bf16.mxu0 0
        %6214 = vmatpush2.bf16.msra.mxu0 0
        %6215 = vmatprep.subr.bf16.mxu0 0
        %6216 = vmatpush2.bf16.msra.mxu0 0
        %6217 = vmatprep.subr.bf16.mxu0 0
        %6218 = vmatpush2.bf16.msra.mxu0 0
        %6219 = vmatprep.subr.bf16.mxu0 0
        %6220 = vmatpush2.bf16.msra.mxu0 0
        %6221 = vmatprep.subr.bf16.mxu0 0
        %6222 = vmatpush2.bf16.msra.mxu0 0
        %6223 = vmatprep.mubr.bf16.mxu0 0
        %6224 = vmatmul.mubr.bf16.gmra.mxu0 %v6127
        %v6225 = vpop.f32.mrf.mxu0
        %v6226 = vadd.f32 0.0, %v6225
        %v6227 = vpop.f32.mrf.mxu0
        %v6228 = vpop.f32.mrf.mxu0
        %v6229 = vadd.f32 0.0, %v6228
        %v6230 = vpop.f32.mrf.mxu0
        %6231 = vmatprep.mubr.bf16.mxu0 0
        %6232 = vmatmul.mubr.bf16.gmra.mxu0 %v6128
        %v6233 = vpop.f32.mrf.mxu0
        %v6234 = vadd.f32 0.0, %v6233
        %v6235 = vpop.f32.mrf.mxu0
        %v6236 = vpop.f32.mrf.mxu0
        %v6237 = vadd.f32 0.0, %v6236
        %v6238 = vpop.f32.mrf.mxu0
        %6239 = vmatprep.mubr.bf16.mxu0 0
        %6240 = vmatmul.mubr.bf16.gmra.mxu0 %v6129
        %v6241 = vpop.f32.mrf.mxu0
        %v6242 = vadd.f32 0.0, %v6241
        %v6243 = vpop.f32.mrf.mxu0
        %v6244 = vpop.f32.mrf.mxu0
        %v6245 = vadd.f32 0.0, %v6244
        %v6246 = vpop.f32.mrf.mxu0
        %6247 = vmatprep.mubr.bf16.mxu0 0
        %6248 = vmatmul.mubr.bf16.gmra.mxu0 %v6130
        %v6249 = vpop.f32.mrf.mxu0
        %v6250 = vadd.f32 0.0, %v6249
        %v6251 = vpop.f32.mrf.mxu0
        %v6252 = vpop.f32.mrf.mxu0
        %v6253 = vadd.f32 0.0, %v6252
        %v6254 = vpop.f32.mrf.mxu0
        %6255 = vmatprep.mubr.bf16.mxu0 0
        %6256 = vmatmul.mubr.bf16.gmra.mxu0 %v6131
        %v6257 = vpop.f32.mrf.mxu0
        %v6258 = vadd.f32 0.0, %v6257
        %v6259 = vpop.f32.mrf.mxu0
        %v6260 = vpop.f32.mrf.mxu0
        %v6261 = vadd.f32 0.0, %v6260
        %v6262 = vpop.f32.mrf.mxu0
        %6263 = vmatprep.mubr.bf16.mxu0 0
        %6264 = vmatmul.mubr.bf16.gmra.mxu0 %v6132
        %v6265 = vpop.f32.mrf.mxu0
        %v6266 = vadd.f32 0.0, %v6265
        %v6267 = vpop.f32.mrf.mxu0
        %v6268 = vpop.f32.mrf.mxu0
        %v6269 = vadd.f32 0.0, %v6268
        %v6270 = vpop.f32.mrf.mxu0
        %6271 = vmatprep.mubr.bf16.mxu0 0
        %6272 = vmatmul.mubr.bf16.gmra.mxu0 %v6133
        %v6273 = vpop.f32.mrf.mxu0
        %v6274 = vadd.f32 0.0, %v6273
        %v6275 = vpop.f32.mrf.mxu0
        %v6276 = vpop.f32.mrf.mxu0
        %v6277 = vadd.f32 0.0, %v6276
        %v6278 = vpop.f32.mrf.mxu0
        %6279 = vmatprep.mubr.bf16.mxu0 0
        %6280 = vmatmul.mubr.bf16.gmra.mxu0 %v6134
        %v6281 = vpop.f32.mrf.mxu0
        %v6282 = vadd.f32 0.0, %v6281
        %v6283 = vpop.f32.mrf.mxu0
        %v6284 = vpop.f32.mrf.mxu0
        %v6285 = vadd.f32 0.0, %v6284
        %v6286 = vpop.f32.mrf.mxu0
        %6287 = vdwg.mxu0
        %v6288 = vadd.f32 %v6045, %v6226
        %v6289 = vadd.f32 %v6046, %v6229
        %v6290 = vadd.f32 %v6047, %v6234
        %v6291 = vadd.f32 %v6048, %v6237
        %v6292 = vadd.f32 %v6049, %v6242
        %v6293 = vadd.f32 %v6050, %v6245
        %v6294 = vadd.f32 %v6051, %v6250
        %v6295 = vadd.f32 %v6052, %v6253
        %v6296 = vadd.f32 %v6053, %v6258
        %v6297 = vadd.f32 %v6054, %v6261
        %v6298 = vadd.f32 %v6055, %v6266
        %v6299 = vadd.f32 %v6056, %v6269
        %v6300 = vadd.f32 %v6057, %v6274
        %v6301 = vadd.f32 %v6058, %v6277
        %v6302 = vadd.f32 %v6059, %v6282
        %v6303 = vadd.f32 %v6060, %v6285
        %v6304 = vld [vmem:[%s6061] sm:$0xf]
        %v6305 = vld [vmem:[%s6061 + $0x4] sm:$0xf]
        %v6306 = vld [vmem:[%s6061 + $0x8] sm:$0x1]
        %v6307 = vld [vmem:[%s6061 + $0xc] sm:$0xf]
        %v6308 = vld [vmem:[%s6061 + $0x10] sm:$0xf]
        %v6309 = vld [vmem:[%s6061 + $0x14] sm:$0x1]
        %v6310 = vld [vmem:[%s6061 + $0x18] sm:$0xf]
        %v6311 = vld [vmem:[%s6061 + $0x1c] sm:$0xf]
        %v6312 = vld [vmem:[%s6061 + $0x20] sm:$0x1]
        %v6313 = vld [vmem:[%s6061 + $0x24] sm:$0xf]
        %v6314 = vld [vmem:[%s6061 + $0x28] sm:$0xf]
        %v6315 = vld [vmem:[%s6061 + $0x2c] sm:$0x1]
        %v6316 = vld [vmem:[%s6061 + $0x30] sm:$0xf]
        %v6317 = vld [vmem:[%s6061 + $0x34] sm:$0xf]
        %v6318 = vld [vmem:[%s6061 + $0x38] sm:$0x1]
        %v6319 = vld [vmem:[%s6061 + $0x3c] sm:$0xf]
        %v6320 = vld [vmem:[%s6061 + $0x40] sm:$0xf]
        %v6321 = vld [vmem:[%s6061 + $0x44] sm:$0x1]
        %v6322 = vld [vmem:[%s6061 + $0x48] sm:$0xf]
        %v6323 = vld [vmem:[%s6061 + $0x4c] sm:$0xf]
        %v6324 = vld [vmem:[%s6061 + $0x50] sm:$0x1]
        %v6325 = vld [vmem:[%s6061 + $0x54] sm:$0xf]
        %v6326 = vld [vmem:[%s6061 + $0x58] sm:$0xf]
        %v6327 = vld [vmem:[%s6061 + $0x5c] sm:$0x1]
        %v6329 = vshrl.u32 %v6304, 16
        %v6331 = vrot.slane %v6329, 4
        %v6332 = vshll.u32 %v6304, 16
        %v6334 = vrot.slane %v6332, 5
        %v6335 = vor.u32 %v6331, %v6334
        %v6336 = vrot.slane %v6335, 4
        %v6338 = vshll.u32 %v6305, 16
        %v6340 = vrot.slane %v6338, 5
        %v6341 = vsel %vm360, %v6336, %v6340
        %v6342 = vshrl.u32 %v6305, 16
        %v6344 = vrot.slane %v6342, 4
        %v6345 = vor.u32 %v6344, %v6340
        %v6346 = vrot.slane %v6345, 4
        %v6348 = vshll.u32 %v6306, 16
        %v6350 = vrot.slane %v6348, 5
        %v6351 = vsel %vm360, %v6346, %v6350
        %v6353 = vshrl.u32 %v6307, 16
        %v6355 = vrot.slane %v6353, 4
        %v6356 = vshll.u32 %v6307, 16
        %v6358 = vrot.slane %v6356, 5
        %v6359 = vor.u32 %v6355, %v6358
        %v6360 = vrot.slane %v6359, 4
        %v6362 = vshll.u32 %v6308, 16
        %v6364 = vrot.slane %v6362, 5
        %v6365 = vsel %vm360, %v6360, %v6364
        %v6366 = vshrl.u32 %v6308, 16
        %v6368 = vrot.slane %v6366, 4
        %v6369 = vor.u32 %v6368, %v6364
        %v6370 = vrot.slane %v6369, 4
        %v6372 = vshll.u32 %v6309, 16
        %v6374 = vrot.slane %v6372, 5
        %v6375 = vsel %vm360, %v6370, %v6374
        %v6377 = vshrl.u32 %v6310, 16
        %v6379 = vrot.slane %v6377, 4
        %v6380 = vshll.u32 %v6310, 16
        %v6382 = vrot.slane %v6380, 5
        %v6383 = vor.u32 %v6379, %v6382
        %v6384 = vrot.slane %v6383, 4
        %v6386 = vshll.u32 %v6311, 16
        %v6388 = vrot.slane %v6386, 5
        %v6389 = vsel %vm360, %v6384, %v6388
        %v6390 = vshrl.u32 %v6311, 16
        %v6392 = vrot.slane %v6390, 4
        %v6393 = vor.u32 %v6392, %v6388
        %v6394 = vrot.slane %v6393, 4
        %v6396 = vshll.u32 %v6312, 16
        %v6398 = vrot.slane %v6396, 5
        %v6399 = vsel %vm360, %v6394, %v6398
        %v6401 = vshrl.u32 %v6313, 16
        %v6403 = vrot.slane %v6401, 4
        %v6404 = vshll.u32 %v6313, 16
        %v6406 = vrot.slane %v6404, 5
        %v6407 = vor.u32 %v6403, %v6406
        %v6408 = vrot.slane %v6407, 4
        %v6410 = vshll.u32 %v6314, 16
        %v6412 = vrot.slane %v6410, 5
        %v6413 = vsel %vm360, %v6408, %v6412
        %v6414 = vshrl.u32 %v6314, 16
        %v6416 = vrot.slane %v6414, 4
        %v6417 = vor.u32 %v6416, %v6412
        %v6418 = vrot.slane %v6417, 4
        %v6420 = vshll.u32 %v6315, 16
        %v6422 = vrot.slane %v6420, 5
        %v6423 = vsel %vm360, %v6418, %v6422
        %v6425 = vshrl.u32 %v6316, 16
        %v6427 = vrot.slane %v6425, 4
        %v6428 = vshll.u32 %v6316, 16
        %v6430 = vrot.slane %v6428, 5
        %v6431 = vor.u32 %v6427, %v6430
        %v6432 = vrot.slane %v6431, 4
        %v6434 = vshll.u32 %v6317, 16
        %v6436 = vrot.slane %v6434, 5
        %v6437 = vsel %vm360, %v6432, %v6436
        %v6438 = vshrl.u32 %v6317, 16
        %v6440 = vrot.slane %v6438, 4
        %v6441 = vor.u32 %v6440, %v6436
        %v6442 = vrot.slane %v6441, 4
        %v6444 = vshll.u32 %v6318, 16
        %v6446 = vrot.slane %v6444, 5
        %v6447 = vsel %vm360, %v6442, %v6446
        %v6449 = vshrl.u32 %v6319, 16
        %v6451 = vrot.slane %v6449, 4
        %v6452 = vshll.u32 %v6319, 16
        %v6454 = vrot.slane %v6452, 5
        %v6455 = vor.u32 %v6451, %v6454
        %v6456 = vrot.slane %v6455, 4
        %v6458 = vshll.u32 %v6320, 16
        %v6460 = vrot.slane %v6458, 5
        %v6461 = vsel %vm360, %v6456, %v6460
        %v6462 = vshrl.u32 %v6320, 16
        %v6464 = vrot.slane %v6462, 4
        %v6465 = vor.u32 %v6464, %v6460
        %v6466 = vrot.slane %v6465, 4
        %v6468 = vshll.u32 %v6321, 16
        %v6470 = vrot.slane %v6468, 5
        %v6471 = vsel %vm360, %v6466, %v6470
        %v6473 = vshrl.u32 %v6322, 16
        %v6475 = vrot.slane %v6473, 4
        %v6476 = vshll.u32 %v6322, 16
        %v6478 = vrot.slane %v6476, 5
        %v6479 = vor.u32 %v6475, %v6478
        %v6480 = vrot.slane %v6479, 4
        %v6482 = vshll.u32 %v6323, 16
        %v6484 = vrot.slane %v6482, 5
        %v6485 = vsel %vm360, %v6480, %v6484
        %v6486 = vshrl.u32 %v6323, 16
        %v6488 = vrot.slane %v6486, 4
        %v6489 = vor.u32 %v6488, %v6484
        %v6490 = vrot.slane %v6489, 4
        %v6492 = vshll.u32 %v6324, 16
        %v6494 = vrot.slane %v6492, 5
        %v6495 = vsel %vm360, %v6490, %v6494
        %v6497 = vshrl.u32 %v6325, 16
        %v6499 = vrot.slane %v6497, 4
        %v6500 = vshll.u32 %v6325, 16
        %v6502 = vrot.slane %v6500, 5
        %v6503 = vor.u32 %v6499, %v6502
        %v6504 = vrot.slane %v6503, 4
        %v6506 = vshll.u32 %v6326, 16
        %v6508 = vrot.slane %v6506, 5
        %v6509 = vsel %vm360, %v6504, %v6508
        %v6510 = vshrl.u32 %v6326, 16
        %v6512 = vrot.slane %v6510, 4
        %v6513 = vor.u32 %v6512, %v6508
        %v6514 = vrot.slane %v6513, 4
        %v6516 = vshll.u32 %v6327, 16
        %v6518 = vrot.slane %v6516, 5
        %v6519 = vsel %vm360, %v6514, %v6518
        %s6520 = scalar_lea.vmem [#allocation3], 448
        %v6521 = vld [vmem:[%s6520] sm:$0xf]
        %v6522 = vld [vmem:[%s6520 + $0x4] sm:$0xf]
        %v6523 = vld [vmem:[%s6520 + $0x8] sm:$0xf]
        %v6524 = vld [vmem:[%s6520 + $0xc] sm:$0xf]
        %v6525 = vld [vmem:[%s6520 + $0x10] sm:$0xf]
        %v6526 = vld [vmem:[%s6520 + $0x14] sm:$0xf]
        %v6527 = vld [vmem:[%s6520 + $0x18] sm:$0xf]
        %v6528 = vld [vmem:[%s6520 + $0x1c] sm:$0xf]
        %v6529 = vld [vmem:[%s6520 + $0x20] sm:$0xf]
        %v6530 = vld [vmem:[%s6520 + $0x24] sm:$0xf]
        %v6531 = vld [vmem:[%s6520 + $0x28] sm:$0xf]
        %v6532 = vld [vmem:[%s6520 + $0x2c] sm:$0xf]
        %v6533 = vld [vmem:[%s6520 + $0x30] sm:$0xf]
        %v6534 = vld [vmem:[%s6520 + $0x34] sm:$0xf]
        %v6535 = vld [vmem:[%s6520 + $0x38] sm:$0xf]
        %v6536 = vld [vmem:[%s6520 + $0x3c] sm:$0xf]
        %v6537 = vunpack.c.l.b16 %v6341
        %v6538 = vunpack.c.l.b16 %v6351
        %v6539 = vunpack.c.l.b16 %v6365
        %v6540 = vunpack.c.l.b16 %v6375
        %v6541 = vunpack.c.l.b16 %v6389
        %v6542 = vunpack.c.l.b16 %v6399
        %v6543 = vunpack.c.l.b16 %v6413
        %v6544 = vunpack.c.l.b16 %v6423
        %v6545 = vunpack.c.l.b16 %v6437
        %v6546 = vunpack.c.l.b16 %v6447
        %v6547 = vunpack.c.l.b16 %v6461
        %v6548 = vunpack.c.l.b16 %v6471
        %v6549 = vunpack.c.l.b16 %v6485
        %v6550 = vunpack.c.l.b16 %v6495
        %v6551 = vunpack.c.l.b16 %v6509
        %v6552 = vunpack.c.l.b16 %v6519
        %v6553 = vpack.c.b16 %v6538, %v6537
        %v6554 = vpack.c.b16 %v6540, %v6539
        %v6555 = vpack.c.b16 %v6542, %v6541
        %v6556 = vpack.c.b16 %v6544, %v6543
        %v6557 = vpack.c.b16 %v6546, %v6545
        %v6558 = vpack.c.b16 %v6548, %v6547
        %v6559 = vpack.c.b16 %v6550, %v6549
        %v6560 = vpack.c.b16 %v6552, %v6551
        %v6585 = vunpack.c.l.b16 %v6521
        %v6586 = vunpack.c.l.b16 %v6522
        %v6587 = vunpack.c.l.b16 %v6523
        %v6588 = vunpack.c.l.b16 %v6524
        %v6589 = vunpack.c.l.b16 %v6525
        %v6590 = vunpack.c.l.b16 %v6526
        %v6591 = vunpack.c.l.b16 %v6527
        %v6592 = vunpack.c.l.b16 %v6528
        %v6593 = vunpack.c.l.b16 %v6529
        %v6594 = vunpack.c.l.b16 %v6530
        %v6595 = vunpack.c.l.b16 %v6531
        %v6596 = vunpack.c.l.b16 %v6532
        %v6597 = vunpack.c.l.b16 %v6533
        %v6598 = vunpack.c.l.b16 %v6534
        %v6599 = vunpack.c.l.b16 %v6535
        %v6600 = vunpack.c.l.b16 %v6536
        %v6601 = vpack.c.b16 %v6586, %v6585
        %v6602 = vpack.c.b16 %v6588, %v6587
        %v6603 = vpack.c.b16 %v6590, %v6589
        %v6604 = vpack.c.b16 %v6592, %v6591
        %v6605 = vpack.c.b16 %v6594, %v6593
        %v6606 = vpack.c.b16 %v6596, %v6595
        %v6607 = vpack.c.b16 %v6598, %v6597
        %v6608 = vpack.c.b16 %v6600, %v6599
        %6617 = vmatprep.subr.bf16.mxu0 0
        %6618 = vmatpush1.bf16.msra.mxu0 %v6608
        %6619 = vmatprep.subr.bf16.mxu0 0
        %6620 = vmatpush1.bf16.msra.mxu0 %v6607
        %6621 = vmatprep.subr.bf16.mxu0 0
        %6622 = vmatpush1.bf16.msra.mxu0 %v6606
        %6623 = vmatprep.subr.bf16.mxu0 0
        %6624 = vmatpush1.bf16.msra.mxu0 %v6605
        %6625 = vmatprep.subr.bf16.mxu0 0
        %6626 = vmatpush1.bf16.msra.mxu0 %v6604
        %6627 = vmatprep.subr.bf16.mxu0 0
        %6628 = vmatpush1.bf16.msra.mxu0 %v6603
        %6629 = vmatprep.subr.bf16.mxu0 0
        %6630 = vmatpush1.bf16.msra.mxu0 %v6602
        %6631 = vmatprep.subr.bf16.mxu0 0
        %6632 = vmatpush1.bf16.msra.mxu0 %v6601
        %6633 = vmatprep.subr.bf16.mxu0 0
        %6634 = vmatpush2.bf16.msra.mxu0 0
        %6635 = vmatprep.subr.bf16.mxu0 0
        %6636 = vmatpush2.bf16.msra.mxu0 0
        %6637 = vmatprep.subr.bf16.mxu0 0
        %6638 = vmatpush2.bf16.msra.mxu0 0
        %6639 = vmatprep.subr.bf16.mxu0 0
        %6640 = vmatpush2.bf16.msra.mxu0 0
        %6641 = vmatprep.subr.bf16.mxu0 0
        %6642 = vmatpush2.bf16.msra.mxu0 0
        %6643 = vmatprep.subr.bf16.mxu0 0
        %6644 = vmatpush2.bf16.msra.mxu0 0
        %6645 = vmatprep.subr.bf16.mxu0 0
        %6646 = vmatpush2.bf16.msra.mxu0 0
        %6647 = vmatprep.subr.bf16.mxu0 0
        %6648 = vmatpush2.bf16.msra.mxu0 0
        %6649 = vmatprep.mubr.bf16.mxu0 0
        %6650 = vmatmul.mubr.bf16.gmra.mxu0 %v6553
        %v6651 = vpop.f32.mrf.mxu0
        %v6652 = vadd.f32 0.0, %v6651
        %v6653 = vpop.f32.mrf.mxu0
        %v6654 = vpop.f32.mrf.mxu0
        %v6655 = vadd.f32 0.0, %v6654
        %v6656 = vpop.f32.mrf.mxu0
        %6657 = vmatprep.mubr.bf16.mxu0 0
        %6658 = vmatmul.mubr.bf16.gmra.mxu0 %v6554
        %v6659 = vpop.f32.mrf.mxu0
        %v6660 = vadd.f32 0.0, %v6659
        %v6661 = vpop.f32.mrf.mxu0
        %v6662 = vpop.f32.mrf.mxu0
        %v6663 = vadd.f32 0.0, %v6662
        %v6664 = vpop.f32.mrf.mxu0
        %6665 = vmatprep.mubr.bf16.mxu0 0
        %6666 = vmatmul.mubr.bf16.gmra.mxu0 %v6555
        %v6667 = vpop.f32.mrf.mxu0
        %v6668 = vadd.f32 0.0, %v6667
        %v6669 = vpop.f32.mrf.mxu0
        %v6670 = vpop.f32.mrf.mxu0
        %v6671 = vadd.f32 0.0, %v6670
        %v6672 = vpop.f32.mrf.mxu0
        %6673 = vmatprep.mubr.bf16.mxu0 0
        %6674 = vmatmul.mubr.bf16.gmra.mxu0 %v6556
        %v6675 = vpop.f32.mrf.mxu0
        %v6676 = vadd.f32 0.0, %v6675
        %v6677 = vpop.f32.mrf.mxu0
        %v6678 = vpop.f32.mrf.mxu0
        %v6679 = vadd.f32 0.0, %v6678
        %v6680 = vpop.f32.mrf.mxu0
        %6681 = vmatprep.mubr.bf16.mxu0 0
        %6682 = vmatmul.mubr.bf16.gmra.mxu0 %v6557
        %v6683 = vpop.f32.mrf.mxu0
        %v6684 = vadd.f32 0.0, %v6683
        %v6685 = vpop.f32.mrf.mxu0
        %v6686 = vpop.f32.mrf.mxu0
        %v6687 = vadd.f32 0.0, %v6686
        %v6688 = vpop.f32.mrf.mxu0
        %6689 = vmatprep.mubr.bf16.mxu0 0
        %6690 = vmatmul.mubr.bf16.gmra.mxu0 %v6558
        %v6691 = vpop.f32.mrf.mxu0
        %v6692 = vadd.f32 0.0, %v6691
        %v6693 = vpop.f32.mrf.mxu0
        %v6694 = vpop.f32.mrf.mxu0
        %v6695 = vadd.f32 0.0, %v6694
        %v6696 = vpop.f32.mrf.mxu0
        %6697 = vmatprep.mubr.bf16.mxu0 0
        %6698 = vmatmul.mubr.bf16.gmra.mxu0 %v6559
        %v6699 = vpop.f32.mrf.mxu0
        %v6700 = vadd.f32 0.0, %v6699
        %v6701 = vpop.f32.mrf.mxu0
        %v6702 = vpop.f32.mrf.mxu0
        %v6703 = vadd.f32 0.0, %v6702
        %v6704 = vpop.f32.mrf.mxu0
        %6705 = vmatprep.mubr.bf16.mxu0 0
        %6706 = vmatmul.mubr.bf16.gmra.mxu0 %v6560
        %v6707 = vpop.f32.mrf.mxu0
        %v6708 = vadd.f32 0.0, %v6707
        %v6709 = vpop.f32.mrf.mxu0
        %v6710 = vpop.f32.mrf.mxu0
        %v6711 = vadd.f32 0.0, %v6710
        %v6712 = vpop.f32.mrf.mxu0
        %6713 = vdwg.mxu0
        %v6714 = vadd.f32 %v6288, %v6652
        %v6715 = vadd.f32 %v6289, %v6655
        %v6716 = vadd.f32 %v6290, %v6660
        %v6717 = vadd.f32 %v6291, %v6663
        %v6718 = vadd.f32 %v6292, %v6668
        %v6719 = vadd.f32 %v6293, %v6671
        %v6720 = vadd.f32 %v6294, %v6676
        %v6721 = vadd.f32 %v6295, %v6679
        %v6722 = vadd.f32 %v6296, %v6684
        %v6723 = vadd.f32 %v6297, %v6687
        %v6724 = vadd.f32 %v6298, %v6692
        %v6725 = vadd.f32 %v6299, %v6695
        %v6726 = vadd.f32 %v6300, %v6700
        %v6727 = vadd.f32 %v6301, %v6703
        %v6728 = vadd.f32 %v6302, %v6708
        %v6729 = vadd.f32 %v6303, %v6711
        %v6730 = vld [vmem:[%s6061] sm:$0xe]
        %v6731 = vld [vmem:[%s6061 + $0xc] sm:$0xe]
        %v6732 = vld [vmem:[%s6061 + $0x18] sm:$0xe]
        %v6733 = vld [vmem:[%s6061 + $0x24] sm:$0xe]
        %v6734 = vld [vmem:[%s6061 + $0x30] sm:$0xe]
        %v6735 = vld [vmem:[%s6061 + $0x3c] sm:$0xe]
        %v6736 = vld [vmem:[%s6061 + $0x48] sm:$0xe]
        %v6737 = vld [vmem:[%s6061 + $0x54] sm:$0xe]
        %v6762 = vrot.slane %v6730, 5
        %v6763 = vrot.slane %v6762, 4
        %v6764 = vrot.slane %v6305, 5
        %v6765 = vsel %vm1072, %v6763, %v6764
        %v6766 = vrot.slane %v6764, 4
        %v6767 = vrot.slane %v6306, 5
        %v6768 = vsel %vm1072, %v6766, %v6767
        %v6769 = vrot.slane %v6731, 5
        %v6770 = vrot.slane %v6769, 4
        %v6771 = vrot.slane %v6308, 5
        %v6772 = vsel %vm1072, %v6770, %v6771
        %v6773 = vrot.slane %v6771, 4
        %v6774 = vrot.slane %v6309, 5
        %v6775 = vsel %vm1072, %v6773, %v6774
        %v6776 = vrot.slane %v6732, 5
        %v6777 = vrot.slane %v6776, 4
        %v6778 = vrot.slane %v6311, 5
        %v6779 = vsel %vm1072, %v6777, %v6778
        %v6780 = vrot.slane %v6778, 4
        %v6781 = vrot.slane %v6312, 5
        %v6782 = vsel %vm1072, %v6780, %v6781
        %v6783 = vrot.slane %v6733, 5
        %v6784 = vrot.slane %v6783, 4
        %v6785 = vrot.slane %v6314, 5
        %v6786 = vsel %vm1072, %v6784, %v6785
        %v6787 = vrot.slane %v6785, 4
        %v6788 = vrot.slane %v6315, 5
        %v6789 = vsel %vm1072, %v6787, %v6788
        %v6790 = vrot.slane %v6734, 5
        %v6791 = vrot.slane %v6790, 4
        %v6792 = vrot.slane %v6317, 5
        %v6793 = vsel %vm1072, %v6791, %v6792
        %v6794 = vrot.slane %v6792, 4
        %v6795 = vrot.slane %v6318, 5
        %v6796 = vsel %vm1072, %v6794, %v6795
        %v6797 = vrot.slane %v6735, 5
        %v6798 = vrot.slane %v6797, 4
        %v6799 = vrot.slane %v6320, 5
        %v6800 = vsel %vm1072, %v6798, %v6799
        %v6801 = vrot.slane %v6799, 4
        %v6802 = vrot.slane %v6321, 5
        %v6803 = vsel %vm1072, %v6801, %v6802
        %v6804 = vrot.slane %v6736, 5
        %v6805 = vrot.slane %v6804, 4
        %v6806 = vrot.slane %v6323, 5
        %v6807 = vsel %vm1072, %v6805, %v6806
        %v6808 = vrot.slane %v6806, 4
        %v6809 = vrot.slane %v6324, 5
        %v6810 = vsel %vm1072, %v6808, %v6809
        %v6811 = vrot.slane %v6737, 5
        %v6812 = vrot.slane %v6811, 4
        %v6813 = vrot.slane %v6326, 5
        %v6814 = vsel %vm1072, %v6812, %v6813
        %v6815 = vrot.slane %v6813, 4
        %v6816 = vrot.slane %v6327, 5
        %v6817 = vsel %vm1072, %v6815, %v6816
        %s6818 = scalar_lea.vmem [#allocation3], 512
        %v6819 = vld [vmem:[%s6818] sm:$0xf]
        %v6820 = vld [vmem:[%s6818 + $0x4] sm:$0xf]
        %v6821 = vld [vmem:[%s6818 + $0x8] sm:$0xf]
        %v6822 = vld [vmem:[%s6818 + $0xc] sm:$0xf]
        %v6823 = vld [vmem:[%s6818 + $0x10] sm:$0xf]
        %v6824 = vld [vmem:[%s6818 + $0x14] sm:$0xf]
        %v6825 = vld [vmem:[%s6818 + $0x18] sm:$0xf]
        %v6826 = vld [vmem:[%s6818 + $0x1c] sm:$0xf]
        %v6827 = vld [vmem:[%s6818 + $0x20] sm:$0xf]
        %v6828 = vld [vmem:[%s6818 + $0x24] sm:$0xf]
        %v6829 = vld [vmem:[%s6818 + $0x28] sm:$0xf]
        %v6830 = vld [vmem:[%s6818 + $0x2c] sm:$0xf]
        %v6831 = vld [vmem:[%s6818 + $0x30] sm:$0xf]
        %v6832 = vld [vmem:[%s6818 + $0x34] sm:$0xf]
        %v6833 = vld [vmem:[%s6818 + $0x38] sm:$0xf]
        %v6834 = vld [vmem:[%s6818 + $0x3c] sm:$0xf]
        %v6835 = vunpack.c.l.b16 %v6765
        %v6836 = vunpack.c.l.b16 %v6768
        %v6837 = vunpack.c.l.b16 %v6772
        %v6838 = vunpack.c.l.b16 %v6775
        %v6839 = vunpack.c.l.b16 %v6779
        %v6840 = vunpack.c.l.b16 %v6782
        %v6841 = vunpack.c.l.b16 %v6786
        %v6842 = vunpack.c.l.b16 %v6789
        %v6843 = vunpack.c.l.b16 %v6793
        %v6844 = vunpack.c.l.b16 %v6796
        %v6845 = vunpack.c.l.b16 %v6800
        %v6846 = vunpack.c.l.b16 %v6803
        %v6847 = vunpack.c.l.b16 %v6807
        %v6848 = vunpack.c.l.b16 %v6810
        %v6849 = vunpack.c.l.b16 %v6814
        %v6850 = vunpack.c.l.b16 %v6817
        %v6851 = vpack.c.b16 %v6836, %v6835
        %v6852 = vpack.c.b16 %v6838, %v6837
        %v6853 = vpack.c.b16 %v6840, %v6839
        %v6854 = vpack.c.b16 %v6842, %v6841
        %v6855 = vpack.c.b16 %v6844, %v6843
        %v6856 = vpack.c.b16 %v6846, %v6845
        %v6857 = vpack.c.b16 %v6848, %v6847
        %v6858 = vpack.c.b16 %v6850, %v6849
        %v6883 = vunpack.c.l.b16 %v6819
        %v6884 = vunpack.c.l.b16 %v6820
        %v6885 = vunpack.c.l.b16 %v6821
        %v6886 = vunpack.c.l.b16 %v6822
        %v6887 = vunpack.c.l.b16 %v6823
        %v6888 = vunpack.c.l.b16 %v6824
        %v6889 = vunpack.c.l.b16 %v6825
        %v6890 = vunpack.c.l.b16 %v6826
        %v6891 = vunpack.c.l.b16 %v6827
        %v6892 = vunpack.c.l.b16 %v6828
        %v6893 = vunpack.c.l.b16 %v6829
        %v6894 = vunpack.c.l.b16 %v6830
        %v6895 = vunpack.c.l.b16 %v6831
        %v6896 = vunpack.c.l.b16 %v6832
        %v6897 = vunpack.c.l.b16 %v6833
        %v6898 = vunpack.c.l.b16 %v6834
        %v6899 = vpack.c.b16 %v6884, %v6883
        %v6900 = vpack.c.b16 %v6886, %v6885
        %v6901 = vpack.c.b16 %v6888, %v6887
        %v6902 = vpack.c.b16 %v6890, %v6889
        %v6903 = vpack.c.b16 %v6892, %v6891
        %v6904 = vpack.c.b16 %v6894, %v6893
        %v6905 = vpack.c.b16 %v6896, %v6895
        %v6906 = vpack.c.b16 %v6898, %v6897
        %6915 = vmatprep.subr.bf16.mxu0 0
        %6916 = vmatpush1.bf16.msra.mxu0 %v6906
        %6917 = vmatprep.subr.bf16.mxu0 0
        %6918 = vmatpush1.bf16.msra.mxu0 %v6905
        %6919 = vmatprep.subr.bf16.mxu0 0
        %6920 = vmatpush1.bf16.msra.mxu0 %v6904
        %6921 = vmatprep.subr.bf16.mxu0 0
        %6922 = vmatpush1.bf16.msra.mxu0 %v6903
        %6923 = vmatprep.subr.bf16.mxu0 0
        %6924 = vmatpush1.bf16.msra.mxu0 %v6902
        %6925 = vmatprep.subr.bf16.mxu0 0
        %6926 = vmatpush1.bf16.msra.mxu0 %v6901
        %6927 = vmatprep.subr.bf16.mxu0 0
        %6928 = vmatpush1.bf16.msra.mxu0 %v6900
        %6929 = vmatprep.subr.bf16.mxu0 0
        %6930 = vmatpush1.bf16.msra.mxu0 %v6899
        %6931 = vmatprep.subr.bf16.mxu0 0
        %6932 = vmatpush2.bf16.msra.mxu0 0
        %6933 = vmatprep.subr.bf16.mxu0 0
        %6934 = vmatpush2.bf16.msra.mxu0 0
        %6935 = vmatprep.subr.bf16.mxu0 0
        %6936 = vmatpush2.bf16.msra.mxu0 0
        %6937 = vmatprep.subr.bf16.mxu0 0
        %6938 = vmatpush2.bf16.msra.mxu0 0
        %6939 = vmatprep.subr.bf16.mxu0 0
        %6940 = vmatpush2.bf16.msra.mxu0 0
        %6941 = vmatprep.subr.bf16.mxu0 0
        %6942 = vmatpush2.bf16.msra.mxu0 0
        %6943 = vmatprep.subr.bf16.mxu0 0
        %6944 = vmatpush2.bf16.msra.mxu0 0
        %6945 = vmatprep.subr.bf16.mxu0 0
        %6946 = vmatpush2.bf16.msra.mxu0 0
        %6947 = vmatprep.mubr.bf16.mxu0 0
        %6948 = vmatmul.mubr.bf16.gmra.mxu0 %v6851
        %v6949 = vpop.f32.mrf.mxu0
        %v6950 = vadd.f32 0.0, %v6949
        %v6951 = vpop.f32.mrf.mxu0
        %v6952 = vpop.f32.mrf.mxu0
        %v6953 = vadd.f32 0.0, %v6952
        %v6954 = vpop.f32.mrf.mxu0
        %6955 = vmatprep.mubr.bf16.mxu0 0
        %6956 = vmatmul.mubr.bf16.gmra.mxu0 %v6852
        %v6957 = vpop.f32.mrf.mxu0
        %v6958 = vadd.f32 0.0, %v6957
        %v6959 = vpop.f32.mrf.mxu0
        %v6960 = vpop.f32.mrf.mxu0
        %v6961 = vadd.f32 0.0, %v6960
        %v6962 = vpop.f32.mrf.mxu0
        %6963 = vmatprep.mubr.bf16.mxu0 0
        %6964 = vmatmul.mubr.bf16.gmra.mxu0 %v6853
        %v6965 = vpop.f32.mrf.mxu0
        %v6966 = vadd.f32 0.0, %v6965
        %v6967 = vpop.f32.mrf.mxu0
        %v6968 = vpop.f32.mrf.mxu0
        %v6969 = vadd.f32 0.0, %v6968
        %v6970 = vpop.f32.mrf.mxu0
        %6971 = vmatprep.mubr.bf16.mxu0 0
        %6972 = vmatmul.mubr.bf16.gmra.mxu0 %v6854
        %v6973 = vpop.f32.mrf.mxu0
        %v6974 = vadd.f32 0.0, %v6973
        %v6975 = vpop.f32.mrf.mxu0
        %v6976 = vpop.f32.mrf.mxu0
        %v6977 = vadd.f32 0.0, %v6976
        %v6978 = vpop.f32.mrf.mxu0
        %6979 = vmatprep.mubr.bf16.mxu0 0
        %6980 = vmatmul.mubr.bf16.gmra.mxu0 %v6855
        %v6981 = vpop.f32.mrf.mxu0
        %v6982 = vadd.f32 0.0, %v6981
        %v6983 = vpop.f32.mrf.mxu0
        %v6984 = vpop.f32.mrf.mxu0
        %v6985 = vadd.f32 0.0, %v6984
        %v6986 = vpop.f32.mrf.mxu0
        %6987 = vmatprep.mubr.bf16.mxu0 0
        %6988 = vmatmul.mubr.bf16.gmra.mxu0 %v6856
        %v6989 = vpop.f32.mrf.mxu0
        %v6990 = vadd.f32 0.0, %v6989
        %v6991 = vpop.f32.mrf.mxu0
        %v6992 = vpop.f32.mrf.mxu0
        %v6993 = vadd.f32 0.0, %v6992
        %v6994 = vpop.f32.mrf.mxu0
        %6995 = vmatprep.mubr.bf16.mxu0 0
        %6996 = vmatmul.mubr.bf16.gmra.mxu0 %v6857
        %v6997 = vpop.f32.mrf.mxu0
        %v6998 = vadd.f32 0.0, %v6997
        %v6999 = vpop.f32.mrf.mxu0
        %v7000 = vpop.f32.mrf.mxu0
        %v7001 = vadd.f32 0.0, %v7000
        %v7002 = vpop.f32.mrf.mxu0
        %7003 = vmatprep.mubr.bf16.mxu0 0
        %7004 = vmatmul.mubr.bf16.gmra.mxu0 %v6858
        %v7005 = vpop.f32.mrf.mxu0
        %v7006 = vadd.f32 0.0, %v7005
        %v7007 = vpop.f32.mrf.mxu0
        %v7008 = vpop.f32.mrf.mxu0
        %v7009 = vadd.f32 0.0, %v7008
        %v7010 = vpop.f32.mrf.mxu0
        %7011 = vdwg.mxu0
        %v7012 = vadd.f32 %v6714, %v6950
        %v7013 = vadd.f32 %v6715, %v6953
        %v7014 = vadd.f32 %v6716, %v6958
        %v7015 = vadd.f32 %v6717, %v6961
        %v7016 = vadd.f32 %v6718, %v6966
        %v7017 = vadd.f32 %v6719, %v6969
        %v7018 = vadd.f32 %v6720, %v6974
        %v7019 = vadd.f32 %v6721, %v6977
        %v7020 = vadd.f32 %v6722, %v6982
        %v7021 = vadd.f32 %v6723, %v6985
        %v7022 = vadd.f32 %v6724, %v6990
        %v7023 = vadd.f32 %v6725, %v6993
        %v7024 = vadd.f32 %v6726, %v6998
        %v7025 = vadd.f32 %v6727, %v7001
        %v7026 = vadd.f32 %v6728, %v7006
        %v7027 = vadd.f32 %v6729, %v7009
        %v7028 = vld [vmem:[%s5] sm:$0x1]
        %v7030 = vlaneseq
        %v7031 = vshrl.u32 %v7030, 7
        %v7032 = vsub.s32 0, %v7031
        %v7033 = vrot.slane %v7028, %v7032
        %v7035 = vmul.f32 %v7012, %v7033
        %v7036 = vmul.f32 %v7013, %v7033
        %v7037 = vmul.f32 %v7014, %v7033
        %v7038 = vmul.f32 %v7015, %v7033
        %v7039 = vmul.f32 %v7016, %v7033
        %v7040 = vmul.f32 %v7017, %v7033
        %v7041 = vmul.f32 %v7018, %v7033
        %v7042 = vmul.f32 %v7019, %v7033
        %v7043 = vmul.f32 %v7020, %v7033
        %v7044 = vmul.f32 %v7021, %v7033
        %v7045 = vmul.f32 %v7022, %v7033
        %v7046 = vmul.f32 %v7023, %v7033
        %v7047 = vmul.f32 %v7024, %v7033
        %v7048 = vmul.f32 %v7025, %v7033
        %v7049 = vmul.f32 %v7026, %v7033
        %v7050 = vmul.f32 %v7027, %v7033
        %v7051 = vld [vmem:[%s6] sm:$0x1]
        %v7053 = vlaneseq
        %v7054 = vshrl.u32 %v7053, 7
        %v7055 = vsub.s32 0, %v7054
        %v7056 = vrot.slane %v7051, %v7055
        %v7058 = vadd.f32 %v7035, %v7056
        %v7059 = vadd.f32 %v7036, %v7056
        %v7060 = vadd.f32 %v7037, %v7056
        %v7061 = vadd.f32 %v7038, %v7056
        %v7062 = vadd.f32 %v7039, %v7056
        %v7063 = vadd.f32 %v7040, %v7056
        %v7064 = vadd.f32 %v7041, %v7056
        %v7065 = vadd.f32 %v7042, %v7056
        %v7066 = vadd.f32 %v7043, %v7056
        %v7067 = vadd.f32 %v7044, %v7056
        %v7068 = vadd.f32 %v7045, %v7056
        %v7069 = vadd.f32 %v7046, %v7056
        %v7070 = vadd.f32 %v7047, %v7056
        %v7071 = vadd.f32 %v7048, %v7056
        %v7072 = vadd.f32 %v7049, %v7056
        %v7073 = vadd.f32 %v7050, %v7056
        %vm7074 = vcmp.ge.f32.partialorder %v7058, 0.0
        %vm7075 = vcmp.ge.f32.partialorder %v7059, 0.0
        %vm7076 = vcmp.ge.f32.partialorder %v7060, 0.0
        %vm7077 = vcmp.ge.f32.partialorder %v7061, 0.0
        %vm7078 = vcmp.ge.f32.partialorder %v7062, 0.0
        %vm7079 = vcmp.ge.f32.partialorder %v7063, 0.0
        %vm7080 = vcmp.ge.f32.partialorder %v7064, 0.0
        %vm7081 = vcmp.ge.f32.partialorder %v7065, 0.0
        %vm7082 = vcmp.ge.f32.partialorder %v7066, 0.0
        %vm7083 = vcmp.ge.f32.partialorder %v7067, 0.0
        %vm7084 = vcmp.ge.f32.partialorder %v7068, 0.0
        %vm7085 = vcmp.ge.f32.partialorder %v7069, 0.0
        %vm7086 = vcmp.ge.f32.partialorder %v7070, 0.0
        %vm7087 = vcmp.ge.f32.partialorder %v7071, 0.0
        %vm7088 = vcmp.ge.f32.partialorder %v7072, 0.0
        %vm7089 = vcmp.ge.f32.partialorder %v7073, 0.0
        %v7090 = vmul.f32 %v7058, 0.01
        %v7091 = vmul.f32 %v7059, 0.01
        %v7092 = vmul.f32 %v7060, 0.01
        %v7093 = vmul.f32 %v7061, 0.01
        %v7094 = vmul.f32 %v7062, 0.01
        %v7095 = vmul.f32 %v7063, 0.01
        %v7096 = vmul.f32 %v7064, 0.01
        %v7097 = vmul.f32 %v7065, 0.01
        %v7098 = vmul.f32 %v7066, 0.01
        %v7099 = vmul.f32 %v7067, 0.01
        %v7100 = vmul.f32 %v7068, 0.01
        %v7101 = vmul.f32 %v7069, 0.01
        %v7102 = vmul.f32 %v7070, 0.01
        %v7103 = vmul.f32 %v7071, 0.01
        %v7104 = vmul.f32 %v7072, 0.01
        %v7105 = vmul.f32 %v7073, 0.01
        %v7106 = vsel %vm7074, %v7058, %v7090
        %v7107 = vsel %vm7075, %v7059, %v7091
        %v7108 = vsel %vm7076, %v7060, %v7092
        %v7109 = vsel %vm7077, %v7061, %v7093
        %v7110 = vsel %vm7078, %v7062, %v7094
        %v7111 = vsel %vm7079, %v7063, %v7095
        %v7112 = vsel %vm7080, %v7064, %v7096
        %v7113 = vsel %vm7081, %v7065, %v7097
        %v7114 = vsel %vm7082, %v7066, %v7098
        %v7115 = vsel %vm7083, %v7067, %v7099
        %v7116 = vsel %vm7084, %v7068, %v7100
        %v7117 = vsel %vm7085, %v7069, %v7101
        %v7118 = vsel %vm7086, %v7070, %v7102
        %v7119 = vsel %vm7087, %v7071, %v7103
        %v7120 = vsel %vm7088, %v7072, %v7104
        %v7121 = vsel %vm7089, %v7073, %v7105
        %7122 = vst [vmem:[%s300] sm:$0xff] %v7106
        %7123 = vst [vmem:[%s300 + $0x8] sm:$0xff] %v7107
        %7124 = vst [vmem:[%s300 + $0x10] sm:$0xff] %v7108
        %7125 = vst [vmem:[%s300 + $0x18] sm:$0xff] %v7109
        %7126 = vst [vmem:[%s300 + $0x20] sm:$0xff] %v7110
        %7127 = vst [vmem:[%s300 + $0x28] sm:$0xff] %v7111
        %7128 = vst [vmem:[%s300 + $0x30] sm:$0xff] %v7112
        %7129 = vst [vmem:[%s300 + $0x38] sm:$0xff] %v7113
        %7130 = vst [vmem:[%s300 + $0x40] sm:$0xff] %v7114
        %7131 = vst [vmem:[%s300 + $0x48] sm:$0xff] %v7115
        %7132 = vst [vmem:[%s300 + $0x50] sm:$0xff] %v7116
        %7133 = vst [vmem:[%s300 + $0x58] sm:$0xff] %v7117
        %7134 = vst [vmem:[%s300 + $0x60] sm:$0xff] %v7118
        %7135 = vst [vmem:[%s300 + $0x68] sm:$0xff] %v7119
        %7136 = vst [vmem:[%s300 + $0x70] sm:$0xff] %v7120
        %7137 = vst [vmem:[%s300 + $0x78] sm:$0xff] %v7121
        %s7138 = sand.u32 %s196, 1
        %s7139 = scalar_lea.sflag [#allocation5], %s7138
        %s7140 = sand.u32 %s196, 1
        %s7141 = smul.addr %s7140, 128
        %s7142 = scalar_lea.vmem [#allocation6], %s7141
        // Predicated region
        $region61: #{tpu_custom_call.1} parent=47 // pred_check
          %p7143 = pneg %p206
        $region62: #{tpu_custom_call.1} parent=47 // pred_check_branch
          %7145 = sbr.rel (%p7143) target = $region64
        $region63: #{tpu_custom_call.1} parent=47 // pred_region
          %s7146 = smul.u32 8, %s27
          %s7148 = ssub.s32 2048, 2048
          %7149 = vsyncadd %s7139, %s7148
          %s7150 = smul.addr %s7146, 2
          %s7151 = smul.addr %s26, 32
          %s7152 = sadd.s32 %s7150, %s7151
          %s7153 = smul.addr %s7152, 128
          %s7154 = scalar_lea.hbm %s7, %s7153
          %s7155 = sshll.u32 %s7142, 4
          %s7156 = int_to_ptr.vmem [resolvable:$true] %s7155
          %7161 = dma.vmem_to_hbm [thread:$0]  %s7156, 2048, %s7154, %s7139, 128, 128, 8
        $region64: #{tpu_custom_call.1} parent=47 // pred_fallthru
          _
      $region48: #{tpu_custom_call.1} parent=5 // pred_fallthru
        _
      %p7162 = scmp.le.s32.totalorder 2, %s17
      // Predicated region
      $region65: #{tpu_custom_call.1} parent=5 // pred_check
        %p7163 = pneg %p7162
      $region66: #{tpu_custom_call.1} parent=5 // pred_check_branch
        %7165 = sbr.rel (%p7163) target = $region68
      $region67: #{tpu_custom_call.1} parent=5 // pred_region
        %s7166 = ssub.s32 %s17, 2
        // Predicated region
        $region69: #{tpu_custom_call.1} parent=67 // pred_check
          %p7167 = pneg %p212
        $region70: #{tpu_custom_call.1} parent=67 // pred_check_branch
          %7169 = sbr.rel (%p7167) target = $region72
        $region71: #{tpu_custom_call.1} parent=67 // pred_region
          %s7170 = sand.u32 %s197, 1
          %s7171 = scalar_lea.sflag [#allocation5], %s7170
          %s7172 = sand.u32 %s197, 1
          %s7173 = smul.addr %s7172, 128
          %s7174 = scalar_lea.vmem [#allocation6], %s7173
          %7175 = dma.done %s7171, 2048
        $region72: #{tpu_custom_call.1} parent=67 // pred_fallthru
          _
      $region68: #{tpu_custom_call.1} parent=5 // pred_fallthru
        _
    $region6: #{tpu_custom_call.1} parent=1 // loop_footer
      %s21 = sadd.s32 1, %s17
    $region7: #{tpu_custom_call.1} parent=1 // loop_footer_branch
      %16 = sbr.rel target = $region3
    $region8: #{tpu_custom_call.1} parent=1 // loop_exit
      _
    %7176 = vsyncpa [#allocation4], 1
    %s7177 = scalar_lea.sflag [#allocation4], 1
    %7178 = vsyncpa %s7177, 1
    %7179 = vsyncpa [#allocation5], 1
    %s7180 = scalar_lea.sflag [#allocation5], 1
    %7181 = vsyncpa %s7180, 1

</llo_original>
